<compile_context>
chip_gen: v7x
topology: tpu7x:2x2x1
jax: 0.10.0
libtpu: 0.0.40
codegen_flags: <defaults>
</compile_context>

<pallas_src>
import functools

import jax
import jax.numpy as jnp
import numpy as np
from jax import lax
from jax.experimental import pallas as pl
from jax.experimental.pallas import tpu as pltpu

RES_SCALE = 0.1
_LANE = 128
_BISECT_ITERS = 12          # bracket [-1, 0] -> width 2^-12 before the Newton finish
_NEWTON_ITERS = 2           # exact once the support stabilises (typical case: exact)
_NEG_LARGE = -1e30


# --------------------------- in-kernel sparsemax --------------------------- #
def _sparsemax_rows(sim, n_bisect, n_newton):
    """Row-wise sparsemax (== softThresholdingOperation forward).

    tau solves sum_j relu(s_j - tau) == 1 with tau in [max-1, max).  Bracketed
    bisection (pure VPU + one lane reduce per iteration) narrows the bracket,
    then a closed-form Newton step  tau = (sum_{s_j > tau} s_j - 1) / count
    (same compare mask reused for sum and count) finishes exactly once the
    bracket no longer crosses a breakpoint.
    """
    s = sim - jnp.max(sim, axis=-1, keepdims=True)           # row max -> 0
    rows = s.shape[0]
    lo = jnp.full((rows, 1), -1.0, jnp.float32)
    hi = jnp.zeros((rows, 1), jnp.float32)
    for _ in range(n_bisect):
        mid = 0.5 * (lo + hi)
        f = jnp.sum(jnp.maximum(s - mid, 0.0), axis=-1, keepdims=True)
        go_up = f >= 1.0
        lo = jnp.where(go_up, mid, lo)
        hi = jnp.where(go_up, hi, mid)
    tau = 0.5 * (lo + hi)
    for _ in range(n_newton):
        in_supp = s > tau
        cnt = jnp.sum(in_supp.astype(jnp.float32), axis=-1, keepdims=True)
        ssum = jnp.sum(jnp.where(in_supp, s, 0.0), axis=-1, keepdims=True)
        tau = (ssum - 1.0) / cnt      # cnt >= 1: the row max (s == 0) is always > tau < 0
    return jnp.maximum(s - tau, 0.0)


# ----------------------------- Pallas kernel ------------------------------ #
def _hspa_kernel(*refs, res_scale, tq, n_row_tiles, has_mask, n_bisect,
                 n_newton):
    """One (batch, row-tile) grid step.

    refs (in order):
      [mask_ref]  (1, Npad) f32      additive lane-pad bias (only if has_mask)
      xe_ref      (1, Cr, Npad) f32  embedding, resident across the row axis
      xa_ref      (1, C, TQ)  bf16   assembly columns of this row tile
      xin_ref     (1, C, Npad) f32   residual input, resident
      o_ref       (1, C, Npad) f32   output (same block across the row axis)
      [acc_ref]   (C, Npad) f32      VMEM accumulator (only if n_row_tiles > 1)
    """
    if has_mask:
        mask_ref, *refs = refs
    else:
        mask_ref = None
    if n_row_tiles > 1:
        xe_ref, xa_ref, xin_ref, o_ref, acc_ref = refs
    else:
        xe_ref, xa_ref, xin_ref, o_ref = refs
        acc_ref = None

    kt = pl.program_id(1)

    xe_full = xe_ref[0]                                     # (Cr, Npad)
    if n_row_tiles > 1:
        start = pl.multiple_of(kt * tq, tq)                 # lane-aligned offset
        xe_rows = xe_ref[0, :, pl.ds(start, tq)]            # (Cr, TQ)
    else:
        xe_rows = xe_full                                   # TQ == Npad

    # sim[q, j] = sum_c xe[c, row_tile[q]] * xe[c, j]  -- transposed-lhs matmul.
    # K = Cr is tiny so MXU utilisation is poor, but this is nowhere near the
    # bottleneck and it avoids any explicit transpose / extra HBM input.
    sim = lax.dot_general(xe_rows, xe_full,
                          dimension_numbers=(((0,), (0,)), ((), ())),
                          preferred_element_type=jnp.float32)
    if has_mask:
        sim = sim + mask_ref[...]        # 0 on real columns, -1e30 on lane pad

    p = _sparsemax_rows(sim, n_bisect, n_newton)             # (TQ, Npad) in [0,1]

    # out[:, j] (+)= sum_{k in tile} xa[:, k] * p[k, j]   (bf16 MXU, f32 acc;
    # xa is pre-cast to bf16 in the wrapper, sparsemax weights live in [0, 1]).
    contrib = jnp.dot(xa_ref[0], p.astype(jnp.bfloat16),
                      preferred_element_type=jnp.float32)

    if n_row_tiles == 1:
        # Single-shot path: no accumulator, no init/finalize.
        o_ref[0] = xin_ref[0] + res_scale * contrib
    else:
        @pl.when(kt == 0)
        def _init():
            acc_ref[...] = jnp.zeros_like(acc_ref)

        acc_ref[...] += contrib

        @pl.when(kt == pl.num_programs(1) - 1)
        def _finalize():
            o_ref[0] = xin_ref[0] + res_scale * acc_ref[...]


def _tpu_vmem_bytes():
    """Physical VMEM per core (v5e/v6e: 128 MiB, v7x: 64 MiB)."""
    try:
        return int(pltpu.get_tpu_info().vmem_capacity_bytes)
    except Exception:                         # conservative (v7x-sized) fallback
        return 64 << 20


def _pick_tiles(n_pad):
    """Largest lane-multiple row tile whose live sim/s/p working set
    (~3*TQ*Npad*4 B) fits a per-generation VMEM budget, plus the scoped limit
    to request.  v7x gets half the budget of v5e/v6e."""
    vmem_limit = min(_tpu_vmem_bytes() // 2, 64 << 20)   # 32 MiB v7x, 64 MiB else
    live_budget = vmem_limit // 3
    tq = _LANE
    cand = _LANE
    while cand <= n_pad:
        if n_pad % cand == 0 and 3 * cand * n_pad * 4 <= live_budget:
            tq = cand
        cand += _LANE
    return tq, vmem_limit


def hspa_core(xe, xa, xin, *, n_real, res_scale=RES_SCALE,
              n_bisect=_BISECT_ITERS, n_newton=_NEWTON_ITERS):
    """out = xin + res_scale * (xa @ sparsemax_rows(xe^T xe))  on padded N."""
    B, cr, n_pad = xe.shape
    C = xa.shape[1]
    tq, vmem_limit = _pick_tiles(n_pad)
    n_row_tiles = n_pad // tq
    has_mask = n_real != n_pad

    operands = []
    in_specs = []
    if has_mask:
        col = jnp.arange(n_pad, dtype=jnp.int32)[None, :]
        mask = jnp.where(col < n_real, 0.0, _NEG_LARGE).astype(jnp.float32)
        operands.append(mask)
        in_specs.append(pl.BlockSpec((1, n_pad), lambda b, k: (0, 0)))
    operands += [xe, xa, xin]
    in_specs += [
        pl.BlockSpec((1, cr, n_pad), lambda b, k: (b, 0, 0)),   # xe (resident)
        pl.BlockSpec((1, C, tq), lambda b, k: (b, 0, k)),       # xa row-tile cols
        pl.BlockSpec((1, C, n_pad), lambda b, k: (b, 0, 0)),    # residual
    ]
    xin_idx = len(operands) - 1
    scratch = ([] if n_row_tiles == 1
               else [pltpu.VMEM((C, n_pad), jnp.float32)])

    kernel = functools.partial(
        _hspa_kernel, res_scale=res_scale, tq=tq, n_row_tiles=n_row_tiles,
        has_mask=has_mask, n_bisect=n_bisect, n_newton=n_newton)

    # TODO(synk): for B==1 on v7x a column-parallel output axis would use the
    # second TensorCore, but it needs per-row tau reuse to avoid duplicating
    # the sparsemax work per column tile; not implemented here.
    return pl.pallas_call(
        kernel,
        out_shape=jax.ShapeDtypeStruct((B, C, n_pad), jnp.float32),
        grid=(B, n_row_tiles),
        in_specs=in_specs,
        out_specs=pl.BlockSpec((1, C, n_pad), lambda b, k: (b, 0, 0)),
        scratch_shapes=scratch,
        input_output_aliases={xin_idx: 0},    # output reuses the residual buffer
        compiler_params=pltpu.CompilerParams(
            dimension_semantics=("parallel", "arbitrary"),
            vmem_limit_bytes=vmem_limit),
    )(*operands)


# ------------------------------- JAX glue ---------------------------------- #
def _batchnorm_eval(x, g, b, mean, var, eps=1e-5):
    shape = (1, -1) + (1,) * (x.ndim - 2)
    return (x - mean.reshape(shape)) / jnp.sqrt(var.reshape(shape) + eps) * \
        g.reshape(shape) + b.reshape(shape)


def _prelu(x, a):
    return jnp.maximum(x, 0.0) + a * jnp.minimum(x, 0.0)


def init_params(key, channel=8, reduction=4):
    cr = channel // reduction
    cm = channel // 4
    ks = jax.random.split(key, 6)
    nrm = lambda k, shape, s=0.1: s * jax.random.normal(k, shape, jnp.float32)
    ones = lambda n: jnp.ones((n,), jnp.float32)
    zeros = lambda n: jnp.zeros((n,), jnp.float32)
    return {
        # conv_match: Conv2d(C, C//r, 1) + BN + PReLU
        "match_w": nrm(ks[0], (cr, channel)),
        "match_b": nrm(ks[1], (cr,), 0.01),
        "match_bn_g": ones(cr), "match_bn_b": zeros(cr),
        "match_bn_m": zeros(cr), "match_bn_v": ones(cr),
        "match_prelu": jnp.float32(0.25),
        # topk_predict: AvgPool(1) + Conv 1x1 (C->C//4) + ReLU + Conv 1x1 + Sigmoid
        "tp1_w": nrm(ks[2], (cm, channel)),
        "tp1_b": zeros(cm),
        "tp2_w": nrm(ks[3], (1, cm)),
        "tp2_b": zeros(1),
        # conv_assembly: Conv2d(C, C, 3, padding=1) + BN + PReLU
        "asm_w": nrm(ks[4], (channel, channel, 3, 3)),
        "asm_b": nrm(ks[5], (channel,), 0.01),
        "asm_bn_g": ones(channel), "asm_bn_b": zeros(channel),
        "asm_bn_m": zeros(channel), "asm_bn_v": ones(channel),
        "asm_prelu": jnp.float32(0.25),
    }


def _features(params, x):
    B, C, H, W = x.shape
    N = H * W
    xf = x.reshape(B, C, N)

    # topk_predict branch: only picks the top-k truncation size in the
    # reference; the recursion converges to the full sparsemax, so the forward
    # value does not depend on it.  Kept on device (no host sync, jittable).
    xm = jnp.mean(x, axis=(2, 3))                                   # (B, C)
    h = jnp.maximum(xm @ params["tp1_w"].T + params["tp1_b"], 0.0)
    ratio = jax.nn.sigmoid(h @ params["tp2_w"].T + params["tp2_b"])  # (B, 1)

    # conv_match: 1x1 conv + BN(eval) + PReLU
    xe = jnp.einsum("oc,bcn->bon", params["match_w"], xf) \
        + params["match_b"][None, :, None]
    xe = _batchnorm_eval(xe, params["match_bn_g"], params["match_bn_b"],
                         params["match_bn_m"], params["match_bn_v"])
    xe = _prelu(xe, params["match_prelu"])                          # (B, Cr, N)

    # conv_assembly: 3x3 conv (pad=1) + BN(eval) + PReLU
    xa = lax.conv_general_dilated(
        x, params["asm_w"], (1, 1), "SAME",
        dimension_numbers=("NCHW", "OIHW", "NCHW"))
    xa = xa + params["asm_b"][None, :, None, None]
    xa = _batchnorm_eval(xa, params["asm_bn_g"], params["asm_bn_b"],
                         params["asm_bn_m"], params["asm_bn_v"])
    xa = _prelu(xa, params["asm_prelu"]).reshape(B, C, N)           # (B, C, N)
    return xf, xe, xa, ratio


def tracking_hspa_forward(params, x, res_scale=RES_SCALE):
    B, C, H, W = x.shape
    N = H * W
    xf, xe, xa, ratio = _features(params, x)
    # TODO(synk): top-k truncation only changes the reference's compute
    # strategy, not its forward value (recursion converges to full sparsemax),
    # so `ratio` is unused here (DCE'd under jit); BatchNorm is eval-mode.
    del ratio

    # Pad the spatial axis to a lane-dense multiple of 128.
    n_pad = max(_LANE, ((N + _LANE - 1) // _LANE) * _LANE)
    pad = n_pad - N
    if pad:
        # TODO(synk): for lane-unaligned N these three jnp.pad HBM copies could
        # be folded into the kernel (pad into VMEM scratch); padded xa columns
        # MUST stay zero so padded query rows contribute nothing.
        padw = ((0, 0), (0, 0), (0, pad))
        xf = jnp.pad(xf, padw)
        xe = jnp.pad(xe, padw)
        xa = jnp.pad(xa, padw)
    xa = xa.astype(jnp.bfloat16)        # pre-cast: halves xa DMA, drops a per-step pack

    out = hspa_core(xe, xa, xf, n_real=N, res_scale=res_scale)       # Pallas
    return out[:, :, :N].reshape(B, C, H, W)


# --------------------------- pure-JAX reference ----------------------------- #
def _sparsemax_ref(s):
    s = s - jnp.max(s, axis=-1, keepdims=True)
    z = jnp.sort(s, axis=-1)[..., ::-1]
    cs = jnp.cumsum(z, axis=-1) - 1.0
    ar = jnp.arange(1, s.shape[-1] + 1, dtype=s.dtype)
    support = ar * z > cs
    k = jnp.sum(support, axis=-1, keepdims=True)
    tau = jnp.take_along_axis(cs, k - 1, axis=-1) / k.astype(s.dtype)
    return jnp.maximum(s - tau, 0.0)


def tracking_hspa_forward_ref(params, x, res_scale=RES_SCALE):
    B, C, H, W = x.shape
    xf, xe, xa, _ = _features(params, x)
    sim = jnp.einsum("bcp,bcq->bpq", xe, xe)
    sim = _sparsemax_ref(sim)
    out = jnp.einsum("bcn,bnq->bcq", xa, sim)
    return (xf + res_scale * out).reshape(B, C, H, W)


# ---------------------------------- main ------------------------------------ #
if __name__ == "__main__":
    key = jax.random.PRNGKey(0)
    kx, kp = jax.random.split(key)
    # channel=8, reduction=4 -> Cr=2; H=W=16 -> N=256 (lane-dense), B=2 so both
    # TensorCores get work on megacore parts.
    B, C, H, W = 2, 8, 16, 16
    x = jax.random.normal(kx, (B, C, H, W), jnp.float32)
    params = init_params(kp, channel=C, reduction=4)

    fwd = jax.jit(tracking_hspa_forward)
    y = jax.block_until_ready(fwd(params, x))

    y_ref = tracking_hspa_forward_ref(params, x)
    assert y.shape == (B, C, H, W)
    # Tolerance accounts for the bf16 assembly matmul (sparsemax weights are in
    # [0, 1]; residual scale 0.1 keeps drift well under 5e-3).
    assert np.allclose(np.asarray(y), np.asarray(y_ref), atol=5e-3, rtol=5e-3)
    print("KERNEL_OK")
</pallas_src>

<mosaic_0001>
module attributes {stable_mosaic.version = 11 : i64} {
  func.func @_hspa_kernel(%arg0: i32, %arg1: i32, %arg2: memref<1x2x256xf32, #tpu.memory_space<vmem>>, %arg3: memref<1x8x256xbf16, #tpu.memory_space<vmem>>, %arg4: memref<1x8x256xf32, #tpu.memory_space<vmem>>, %arg5: memref<1x8x256xf32, #tpu.memory_space<vmem>>) attributes {dimension_semantics = [#tpu.dimension_semantics<parallel>, #tpu.dimension_semantics<arbitrary>], iteration_bounds = array<i64: 2, 1>, scalar_prefetch = 0 : i64, scratch_operands = 0 : i64, tpu.core_type = #tpu.core_type<tc>, window_params = [{transform_indices = @transform_0, window_bounds = array<i64: 1, 2, 256>}, {transform_indices = @transform_1, window_bounds = array<i64: 1, 8, 256>}, {transform_indices = @transform_2, window_bounds = array<i64: 1, 8, 256>}, {transform_indices = @transform_3, window_bounds = array<i64: 1, 8, 256>}]} {
    %c0 = arith.constant 0 : index
    %c0_0 = arith.constant 0 : index
    %c0_1 = arith.constant 0 : index
    %0 = vector.load %arg2[%c0, %c0_0, %c0_1] : memref<1x2x256xf32, #tpu.memory_space<vmem>>, vector<1x2x256xf32>
    %1 = vector.shape_cast %0 : vector<1x2x256xf32> to vector<2x256xf32>
    %cst = arith.constant dense<0.000000e+00> : vector<256x256xf32>
    %2 = tpu.matmul %1, %1, %cst {dimension_numbers = #tpu.dot_dimension_numbers<[0], [0], [1], [1], [0, 1, 1, 1], [], []>} : vector<2x256xf32>, vector<2x256xf32>, vector<256x256xf32> -> vector<256x256xf32>
    %cst_2 = arith.constant dense<0xFF800000> : vector<256xf32>
    %3 = vector.multi_reduction <maximumf>, %2, %cst_2 [1] : vector<256x256xf32> to vector<256xf32>
    %4 = vector.shape_cast %3 : vector<256xf32> to vector<256x1xf32>
    %5 = vector.broadcast %4 : vector<256x1xf32> to vector<256x256xf32>
    %6 = arith.subf %2, %5 : vector<256x256xf32>
    %cst_3 = arith.constant -1.000000e+00 : f32
    %7 = vector.broadcast %cst_3 : f32 to vector<256x1xf32>
    %cst_4 = arith.constant 0.000000e+00 : f32
    %8 = vector.broadcast %cst_4 : f32 to vector<256x1xf32>
    %9 = arith.addf %7, %8 : vector<256x1xf32>
    %cst_5 = arith.constant 5.000000e-01 : f32
    %10 = vector.broadcast %cst_5 : f32 to vector<256x1xf32>
    %11 = arith.mulf %10, %9 : vector<256x1xf32>
    %12 = vector.broadcast %11 : vector<256x1xf32> to vector<256x256xf32>
    %13 = arith.subf %6, %12 : vector<256x256xf32>
    %cst_6 = arith.constant 0.000000e+00 : f32
    %14 = vector.broadcast %cst_6 : f32 to vector<256x256xf32>
    %15 = arith.maximumf %13, %14 : vector<256x256xf32>
    %cst_7 = arith.constant dense<0.000000e+00> : vector<256xf32>
    %16 = vector.multi_reduction <add>, %15, %cst_7 [1] : vector<256x256xf32> to vector<256xf32>
    %17 = vector.shape_cast %16 : vector<256xf32> to vector<256x1xf32>
    %cst_8 = arith.constant 1.000000e+00 : f32
    %18 = vector.broadcast %cst_8 : f32 to vector<256x1xf32>
    %19 = arith.cmpf oge, %17, %18 : vector<256x1xf32>
    %20 = arith.select %19, %11, %7 : vector<256x1xi1>, vector<256x1xf32>
    %21 = arith.select %19, %8, %11 : vector<256x1xi1>, vector<256x1xf32>
    %22 = arith.addf %20, %21 : vector<256x1xf32>
    %cst_9 = arith.constant 5.000000e-01 : f32
    %23 = vector.broadcast %cst_9 : f32 to vector<256x1xf32>
    %24 = arith.mulf %23, %22 : vector<256x1xf32>
    %25 = vector.broadcast %24 : vector<256x1xf32> to vector<256x256xf32>
    %26 = arith.subf %6, %25 : vector<256x256xf32>
    %cst_10 = arith.constant 0.000000e+00 : f32
    %27 = vector.broadcast %cst_10 : f32 to vector<256x256xf32>
    %28 = arith.maximumf %26, %27 : vector<256x256xf32>
    %cst_11 = arith.constant dense<0.000000e+00> : vector<256xf32>
    %29 = vector.multi_reduction <add>, %28, %cst_11 [1] : vector<256x256xf32> to vector<256xf32>
    %30 = vector.shape_cast %29 : vector<256xf32> to vector<256x1xf32>
    %cst_12 = arith.constant 1.000000e+00 : f32
    %31 = vector.broadcast %cst_12 : f32 to vector<256x1xf32>
    %32 = arith.cmpf oge, %30, %31 : vector<256x1xf32>
    %33 = arith.select %32, %24, %20 : vector<256x1xi1>, vector<256x1xf32>
    %34 = arith.select %32, %21, %24 : vector<256x1xi1>, vector<256x1xf32>
    %35 = arith.addf %33, %34 : vector<256x1xf32>
    %cst_13 = arith.constant 5.000000e-01 : f32
    %36 = vector.broadcast %cst_13 : f32 to vector<256x1xf32>
    %37 = arith.mulf %36, %35 : vector<256x1xf32>
    %38 = vector.broadcast %37 : vector<256x1xf32> to vector<256x256xf32>
    %39 = arith.subf %6, %38 : vector<256x256xf32>
    %cst_14 = arith.constant 0.000000e+00 : f32
    %40 = vector.broadcast %cst_14 : f32 to vector<256x256xf32>
    %41 = arith.maximumf %39, %40 : vector<256x256xf32>
    %cst_15 = arith.constant dense<0.000000e+00> : vector<256xf32>
    %42 = vector.multi_reduction <add>, %41, %cst_15 [1] : vector<256x256xf32> to vector<256xf32>
    %43 = vector.shape_cast %42 : vector<256xf32> to vector<256x1xf32>
    %cst_16 = arith.constant 1.000000e+00 : f32
    %44 = vector.broadcast %cst_16 : f32 to vector<256x1xf32>
    %45 = arith.cmpf oge, %43, %44 : vector<256x1xf32>
    %46 = arith.select %45, %37, %33 : vector<256x1xi1>, vector<256x1xf32>
    %47 = arith.select %45, %34, %37 : vector<256x1xi1>, vector<256x1xf32>
    %48 = arith.addf %46, %47 : vector<256x1xf32>
    %cst_17 = arith.constant 5.000000e-01 : f32
    %49 = vector.broadcast %cst_17 : f32 to vector<256x1xf32>
    %50 = arith.mulf %49, %48 : vector<256x1xf32>
    %51 = vector.broadcast %50 : vector<256x1xf32> to vector<256x256xf32>
    %52 = arith.subf %6, %51 : vector<256x256xf32>
    %cst_18 = arith.constant 0.000000e+00 : f32
    %53 = vector.broadcast %cst_18 : f32 to vector<256x256xf32>
    %54 = arith.maximumf %52, %53 : vector<256x256xf32>
    %cst_19 = arith.constant dense<0.000000e+00> : vector<256xf32>
    %55 = vector.multi_reduction <add>, %54, %cst_19 [1] : vector<256x256xf32> to vector<256xf32>
    %56 = vector.shape_cast %55 : vector<256xf32> to vector<256x1xf32>
    %cst_20 = arith.constant 1.000000e+00 : f32
    %57 = vector.broadcast %cst_20 : f32 to vector<256x1xf32>
    %58 = arith.cmpf oge, %56, %57 : vector<256x1xf32>
    %59 = arith.select %58, %50, %46 : vector<256x1xi1>, vector<256x1xf32>
    %60 = arith.select %58, %47, %50 : vector<256x1xi1>, vector<256x1xf32>
    %61 = arith.addf %59, %60 : vector<256x1xf32>
    %cst_21 = arith.constant 5.000000e-01 : f32
    %62 = vector.broadcast %cst_21 : f32 to vector<256x1xf32>
    %63 = arith.mulf %62, %61 : vector<256x1xf32>
    %64 = vector.broadcast %63 : vector<256x1xf32> to vector<256x256xf32>
    %65 = arith.subf %6, %64 : vector<256x256xf32>
    %cst_22 = arith.constant 0.000000e+00 : f32
    %66 = vector.broadcast %cst_22 : f32 to vector<256x256xf32>
    %67 = arith.maximumf %65, %66 : vector<256x256xf32>
    %cst_23 = arith.constant dense<0.000000e+00> : vector<256xf32>
    %68 = vector.multi_reduction <add>, %67, %cst_23 [1] : vector<256x256xf32> to vector<256xf32>
    %69 = vector.shape_cast %68 : vector<256xf32> to vector<256x1xf32>
    %cst_24 = arith.constant 1.000000e+00 : f32
    %70 = vector.broadcast %cst_24 : f32 to vector<256x1xf32>
    %71 = arith.cmpf oge, %69, %70 : vector<256x1xf32>
    %72 = arith.select %71, %63, %59 : vector<256x1xi1>, vector<256x1xf32>
    %73 = arith.select %71, %60, %63 : vector<256x1xi1>, vector<256x1xf32>
    %74 = arith.addf %72, %73 : vector<256x1xf32>
    %cst_25 = arith.constant 5.000000e-01 : f32
    %75 = vector.broadcast %cst_25 : f32 to vector<256x1xf32>
    %76 = arith.mulf %75, %74 : vector<256x1xf32>
    %77 = vector.broadcast %76 : vector<256x1xf32> to vector<256x256xf32>
    %78 = arith.subf %6, %77 : vector<256x256xf32>
    %cst_26 = arith.constant 0.000000e+00 : f32
    %79 = vector.broadcast %cst_26 : f32 to vector<256x256xf32>
    %80 = arith.maximumf %78, %79 : vector<256x256xf32>
    %cst_27 = arith.constant dense<0.000000e+00> : vector<256xf32>
    %81 = vector.multi_reduction <add>, %80, %cst_27 [1] : vector<256x256xf32> to vector<256xf32>
    %82 = vector.shape_cast %81 : vector<256xf32> to vector<256x1xf32>
    %cst_28 = arith.constant 1.000000e+00 : f32
    %83 = vector.broadcast %cst_28 : f32 to vector<256x1xf32>
    %84 = arith.cmpf oge, %82, %83 : vector<256x1xf32>
    %85 = arith.select %84, %76, %72 : vector<256x1xi1>, vector<256x1xf32>
    %86 = arith.select %84, %73, %76 : vector<256x1xi1>, vector<256x1xf32>
    %87 = arith.addf %85, %86 : vector<256x1xf32>
    %cst_29 = arith.constant 5.000000e-01 : f32
    %88 = vector.broadcast %cst_29 : f32 to vector<256x1xf32>
    %89 = arith.mulf %88, %87 : vector<256x1xf32>
    %90 = vector.broadcast %89 : vector<256x1xf32> to vector<256x256xf32>
    %91 = arith.subf %6, %90 : vector<256x256xf32>
    %cst_30 = arith.constant 0.000000e+00 : f32
    %92 = vector.broadcast %cst_30 : f32 to vector<256x256xf32>
    %93 = arith.maximumf %91, %92 : vector<256x256xf32>
    %cst_31 = arith.constant dense<0.000000e+00> : vector<256xf32>
    %94 = vector.multi_reduction <add>, %93, %cst_31 [1] : vector<256x256xf32> to vector<256xf32>
    %95 = vector.shape_cast %94 : vector<256xf32> to vector<256x1xf32>
    %cst_32 = arith.constant 1.000000e+00 : f32
    %96 = vector.broadcast %cst_32 : f32 to vector<256x1xf32>
    %97 = arith.cmpf oge, %95, %96 : vector<256x1xf32>
    %98 = arith.select %97, %89, %85 : vector<256x1xi1>, vector<256x1xf32>
    %99 = arith.select %97, %86, %89 : vector<256x1xi1>, vector<256x1xf32>
    %100 = arith.addf %98, %99 : vector<256x1xf32>
    %cst_33 = arith.constant 5.000000e-01 : f32
    %101 = vector.broadcast %cst_33 : f32 to vector<256x1xf32>
    %102 = arith.mulf %101, %100 : vector<256x1xf32>
    %103 = vector.broadcast %102 : vector<256x1xf32> to vector<256x256xf32>
    %104 = arith.subf %6, %103 : vector<256x256xf32>
    %cst_34 = arith.constant 0.000000e+00 : f32
    %105 = vector.broadcast %cst_34 : f32 to vector<256x256xf32>
    %106 = arith.maximumf %104, %105 : vector<256x256xf32>
    %cst_35 = arith.constant dense<0.000000e+00> : vector<256xf32>
    %107 = vector.multi_reduction <add>, %106, %cst_35 [1] : vector<256x256xf32> to vector<256xf32>
    %108 = vector.shape_cast %107 : vector<256xf32> to vector<256x1xf32>
    %cst_36 = arith.constant 1.000000e+00 : f32
    %109 = vector.broadcast %cst_36 : f32 to vector<256x1xf32>
    %110 = arith.cmpf oge, %108, %109 : vector<256x1xf32>
    %111 = arith.select %110, %102, %98 : vector<256x1xi1>, vector<256x1xf32>
    %112 = arith.select %110, %99, %102 : vector<256x1xi1>, vector<256x1xf32>
    %113 = arith.addf %111, %112 : vector<256x1xf32>
    %cst_37 = arith.constant 5.000000e-01 : f32
    %114 = vector.broadcast %cst_37 : f32 to vector<256x1xf32>
    %115 = arith.mulf %114, %113 : vector<256x1xf32>
    %116 = vector.broadcast %115 : vector<256x1xf32> to vector<256x256xf32>
    %117 = arith.subf %6, %116 : vector<256x256xf32>
    %cst_38 = arith.constant 0.000000e+00 : f32
    %118 = vector.broadcast %cst_38 : f32 to vector<256x256xf32>
    %119 = arith.maximumf %117, %118 : vector<256x256xf32>
    %cst_39 = arith.constant dense<0.000000e+00> : vector<256xf32>
    %120 = vector.multi_reduction <add>, %119, %cst_39 [1] : vector<256x256xf32> to vector<256xf32>
    %121 = vector.shape_cast %120 : vector<256xf32> to vector<256x1xf32>
    %cst_40 = arith.constant 1.000000e+00 : f32
    %122 = vector.broadcast %cst_40 : f32 to vector<256x1xf32>
    %123 = arith.cmpf oge, %121, %122 : vector<256x1xf32>
    %124 = arith.select %123, %115, %111 : vector<256x1xi1>, vector<256x1xf32>
    %125 = arith.select %123, %112, %115 : vector<256x1xi1>, vector<256x1xf32>
    %126 = arith.addf %124, %125 : vector<256x1xf32>
    %cst_41 = arith.constant 5.000000e-01 : f32
    %127 = vector.broadcast %cst_41 : f32 to vector<256x1xf32>
    %128 = arith.mulf %127, %126 : vector<256x1xf32>
    %129 = vector.broadcast %128 : vector<256x1xf32> to vector<256x256xf32>
    %130 = arith.subf %6, %129 : vector<256x256xf32>
    %cst_42 = arith.constant 0.000000e+00 : f32
    %131 = vector.broadcast %cst_42 : f32 to vector<256x256xf32>
    %132 = arith.maximumf %130, %131 : vector<256x256xf32>
    %cst_43 = arith.constant dense<0.000000e+00> : vector<256xf32>
    %133 = vector.multi_reduction <add>, %132, %cst_43 [1] : vector<256x256xf32> to vector<256xf32>
    %134 = vector.shape_cast %133 : vector<256xf32> to vector<256x1xf32>
    %cst_44 = arith.constant 1.000000e+00 : f32
    %135 = vector.broadcast %cst_44 : f32 to vector<256x1xf32>
    %136 = arith.cmpf oge, %134, %135 : vector<256x1xf32>
    %137 = arith.select %136, %128, %124 : vector<256x1xi1>, vector<256x1xf32>
    %138 = arith.select %136, %125, %128 : vector<256x1xi1>, vector<256x1xf32>
    %139 = arith.addf %137, %138 : vector<256x1xf32>
    %cst_45 = arith.constant 5.000000e-01 : f32
    %140 = vector.broadcast %cst_45 : f32 to vector<256x1xf32>
    %141 = arith.mulf %140, %139 : vector<256x1xf32>
    %142 = vector.broadcast %141 : vector<256x1xf32> to vector<256x256xf32>
    %143 = arith.subf %6, %142 : vector<256x256xf32>
    %cst_46 = arith.constant 0.000000e+00 : f32
    %144 = vector.broadcast %cst_46 : f32 to vector<256x256xf32>
    %145 = arith.maximumf %143, %144 : vector<256x256xf32>
    %cst_47 = arith.constant dense<0.000000e+00> : vector<256xf32>
    %146 = vector.multi_reduction <add>, %145, %cst_47 [1] : vector<256x256xf32> to vector<256xf32>
    %147 = vector.shape_cast %146 : vector<256xf32> to vector<256x1xf32>
    %cst_48 = arith.constant 1.000000e+00 : f32
    %148 = vector.broadcast %cst_48 : f32 to vector<256x1xf32>
    %149 = arith.cmpf oge, %147, %148 : vector<256x1xf32>
    %150 = arith.select %149, %141, %137 : vector<256x1xi1>, vector<256x1xf32>
    %151 = arith.select %149, %138, %141 : vector<256x1xi1>, vector<256x1xf32>
    %152 = arith.addf %150, %151 : vector<256x1xf32>
    %cst_49 = arith.constant 5.000000e-01 : f32
    %153 = vector.broadcast %cst_49 : f32 to vector<256x1xf32>
    %154 = arith.mulf %153, %152 : vector<256x1xf32>
    %155 = vector.broadcast %154 : vector<256x1xf32> to vector<256x256xf32>
    %156 = arith.subf %6, %155 : vector<256x256xf32>
    %cst_50 = arith.constant 0.000000e+00 : f32
    %157 = vector.broadcast %cst_50 : f32 to vector<256x256xf32>
    %158 = arith.maximumf %156, %157 : vector<256x256xf32>
    %cst_51 = arith.constant dense<0.000000e+00> : vector<256xf32>
    %159 = vector.multi_reduction <add>, %158, %cst_51 [1] : vector<256x256xf32> to vector<256xf32>
    %160 = vector.shape_cast %159 : vector<256xf32> to vector<256x1xf32>
    %cst_52 = arith.constant 1.000000e+00 : f32
    %161 = vector.broadcast %cst_52 : f32 to vector<256x1xf32>
    %162 = arith.cmpf oge, %160, %161 : vector<256x1xf32>
    %163 = arith.select %162, %154, %150 : vector<256x1xi1>, vector<256x1xf32>
    %164 = arith.select %162, %151, %154 : vector<256x1xi1>, vector<256x1xf32>
    %165 = arith.addf %163, %164 : vector<256x1xf32>
    %cst_53 = arith.constant 5.000000e-01 : f32
    %166 = vector.broadcast %cst_53 : f32 to vector<256x1xf32>
    %167 = arith.mulf %166, %165 : vector<256x1xf32>
    %168 = vector.broadcast %167 : vector<256x1xf32> to vector<256x256xf32>
    %169 = arith.cmpf ogt, %6, %168 : vector<256x256xf32>
    %170 = arith.extui %169 : vector<256x256xi1> to vector<256x256xi32>
    %171 = arith.sitofp %170 : vector<256x256xi32> to vector<256x256xf32>
    %cst_54 = arith.constant dense<0.000000e+00> : vector<256xf32>
    %172 = vector.multi_reduction <add>, %171, %cst_54 [1] : vector<256x256xf32> to vector<256xf32>
    %173 = vector.shape_cast %172 : vector<256xf32> to vector<256x1xf32>
    %cst_55 = arith.constant 0.000000e+00 : f32
    %174 = vector.broadcast %cst_55 : f32 to vector<256x256xf32>
    %175 = arith.select %169, %6, %174 : vector<256x256xi1>, vector<256x256xf32>
    %cst_56 = arith.constant dense<0.000000e+00> : vector<256xf32>
    %176 = vector.multi_reduction <add>, %175, %cst_56 [1] : vector<256x256xf32> to vector<256xf32>
    %177 = vector.shape_cast %176 : vector<256xf32> to vector<256x1xf32>
    %cst_57 = arith.constant 1.000000e+00 : f32
    %178 = vector.broadcast %cst_57 : f32 to vector<256x1xf32>
    %179 = arith.subf %177, %178 : vector<256x1xf32>
    %180 = arith.divf %179, %173 : vector<256x1xf32>
    %181 = vector.broadcast %180 : vector<256x1xf32> to vector<256x256xf32>
    %182 = arith.cmpf ogt, %6, %181 : vector<256x256xf32>
    %183 = arith.extui %182 : vector<256x256xi1> to vector<256x256xi32>
    %184 = arith.sitofp %183 : vector<256x256xi32> to vector<256x256xf32>
    %cst_58 = arith.constant dense<0.000000e+00> : vector<256xf32>
    %185 = vector.multi_reduction <add>, %184, %cst_58 [1] : vector<256x256xf32> to vector<256xf32>
    %186 = vector.shape_cast %185 : vector<256xf32> to vector<256x1xf32>
    %cst_59 = arith.constant 0.000000e+00 : f32
    %187 = vector.broadcast %cst_59 : f32 to vector<256x256xf32>
    %188 = arith.select %182, %6, %187 : vector<256x256xi1>, vector<256x256xf32>
    %cst_60 = arith.constant dense<0.000000e+00> : vector<256xf32>
    %189 = vector.multi_reduction <add>, %188, %cst_60 [1] : vector<256x256xf32> to vector<256xf32>
    %190 = vector.shape_cast %189 : vector<256xf32> to vector<256x1xf32>
    %cst_61 = arith.constant 1.000000e+00 : f32
    %191 = vector.broadcast %cst_61 : f32 to vector<256x1xf32>
    %192 = arith.subf %190, %191 : vector<256x1xf32>
    %193 = arith.divf %192, %186 : vector<256x1xf32>
    %194 = vector.broadcast %193 : vector<256x1xf32> to vector<256x256xf32>
    %195 = arith.subf %6, %194 : vector<256x256xf32>
    %cst_62 = arith.constant 0.000000e+00 : f32
    %196 = vector.broadcast %cst_62 : f32 to vector<256x256xf32>
    %197 = arith.maximumf %195, %196 : vector<256x256xf32>
    %c0_63 = arith.constant 0 : index
    %c0_64 = arith.constant 0 : index
    %c0_65 = arith.constant 0 : index
    %198 = vector.load %arg3[%c0_63, %c0_64, %c0_65] : memref<1x8x256xbf16, #tpu.memory_space<vmem>>, vector<1x8x256xbf16>
    %199 = vector.shape_cast %198 : vector<1x8x256xbf16> to vector<8x256xbf16>
    %200 = arith.truncf %197 : vector<256x256xf32> to vector<256x256xbf16>
    %cst_66 = arith.constant dense<0.000000e+00> : vector<8x256xf32>
    %201 = tpu.matmul %199, %200, %cst_66 {dimension_numbers = #tpu.dot_dimension_numbers<[1], [0], [0], [1], [0, 0, 1, 1], [], []>} : vector<8x256xbf16>, vector<256x256xbf16>, vector<8x256xf32> -> vector<8x256xf32>
    %c0_67 = arith.constant 0 : index
    %c0_68 = arith.constant 0 : index
    %c0_69 = arith.constant 0 : index
    %202 = vector.load %arg4[%c0_67, %c0_68, %c0_69] : memref<1x8x256xf32, #tpu.memory_space<vmem>>, vector<1x8x256xf32>
    %203 = vector.shape_cast %202 : vector<1x8x256xf32> to vector<8x256xf32>
    %cst_70 = arith.constant 1.000000e-01 : f32
    %204 = vector.broadcast %cst_70 : f32 to vector<8x256xf32>
    %205 = arith.mulf %204, %201 : vector<8x256xf32>
    %206 = arith.addf %203, %205 : vector<8x256xf32>
    %c0_71 = arith.constant 0 : index
    %c0_72 = arith.constant 0 : index
    %c0_73 = arith.constant 0 : index
    %207 = vector.load %arg5[%c0_71, %c0_72, %c0_73] : memref<1x8x256xf32, #tpu.memory_space<vmem>>, vector<1x8x256xf32>
    %208 = vector.shape_cast %207 : vector<1x8x256xf32> to vector<8x256xf32>
    %209 = vector.shape_cast %206 : vector<8x256xf32> to vector<1x8x256xf32>
    tpu.vector_store %arg5[%c0_71, %c0_72, %c0_73], %209 {strides = array<i32>} : memref<1x8x256xf32, #tpu.memory_space<vmem>>, vector<1x8x256xf32>,
    return
  }
  func.func @transform_0(%arg0: i32, %arg1: i32) -> (i32, i32, i32) {
    %c0_i32 = arith.constant 0 : i32
    %c0_i32_0 = arith.constant 0 : i32
    %c0_i32_1 = arith.constant 0 : i32
    return %arg0, %c0_i32, %c0_i32_0 : i32, i32, i32
  }
  func.func @transform_1(%arg0: i32, %arg1: i32) -> (i32, i32, i32) {
    %c0_i32 = arith.constant 0 : i32
    %c0_i32_0 = arith.constant 0 : i32
    return %arg0, %c0_i32, %arg1 : i32, i32, i32
  }
  func.func @transform_2(%arg0: i32, %arg1: i32) -> (i32, i32, i32) {
    %c0_i32 = arith.constant 0 : i32
    %c0_i32_0 = arith.constant 0 : i32
    %c0_i32_1 = arith.constant 0 : i32
    return %arg0, %c0_i32, %c0_i32_0 : i32, i32, i32
  }
  func.func @transform_3(%arg0: i32, %arg1: i32) -> (i32, i32, i32) {
    %c0_i32 = arith.constant 0 : i32
    %c0_i32_0 = arith.constant 0 : i32
    %c0_i32_1 = arith.constant 0 : i32
    return %arg0, %c0_i32, %c0_i32_0 : i32, i32, i32
  }
}

</mosaic_0001>

<llo_original>
// kernel: tracking_hspa_forward.1
$region0: #{tracking_hspa_forward.1}
  #allocation0 [shape = 'u32[]', space=smem, size = 0x4, offset = 0x4, fixed_abs, tag = 'smem constant byte address 0x4 - core index']
  #allocation1 [shape = 'u32[144,128]{1,0:T(1,128)}', space=vmem, size = 0x12000, scoped, tag = 'internal scratch']
  %s0 = inlined_call_operand.vmem [shape: f32[2,2,256], index: 0, kind: input, shape index: {}]
  %s1 = inlined_call_operand.vmem [shape: bf16[2,8,256], index: 1, kind: input, shape index: {}]
  %s2 = inlined_call_operand.vmem [shape: f32[2,8,256], index: 2, kind: input, shape index: {}, may-alias: {2,3}]
  %s3 = inlined_call_operand.vmem [shape: f32[2,8,256], index: 3, kind: output, shape index: {}, may-alias: {2,3}]
  %s4 = sld [smem:[#allocation0]]
  $region45: #{tracking_hspa_forward.1} parent=0
    _
  %s6 = ssub.s32 1, %s4
  %s7 = scalar_select 0, %s6, %s4
  loop: start=0, step=1, limit=4
  $region2: #{tracking_hspa_forward.1} parent=0 // loop_pre_header
    _
  $region3: #{tracking_hspa_forward.1} parent=0 // loop_header
    %s9 = sphi 0, %s13
    %p10 = scmp.ge.s32.totalorder %s9, 4
    %s16 = sphi 0, %s28
    %s17 = sphi 0, %s24
    %s18 = sphi 0, %s16
    %s19 = sphi 0, %s17
    %s20 = sphi 0, %s18
    %s21 = sphi 0, %s19
    %s31 = sphi 0, %s33
    %s34 = sphi 0, %s31
    %s35 = sphi 0, %s34
    %s51 = sphi 0, %s35
    %s59 = sphi 0, %s61
    %s62 = sphi 0, %s59
    %s63 = sphi 0, %s62
    %s79 = sphi 0, %s63
    %s85 = sphi 0, %s87
    %s88 = sphi 0, %s85
    %s89 = sphi 0, %s88
    %s105 = sphi 0, %s89
    %s111 = sphi 0, %s113
    %s114 = sphi 0, %s111
    %s115 = sphi 0, %s114
    %s131 = sphi 0, %s115
  $region4: #{tracking_hspa_forward.1} parent=0 // loop_header_branch
    %12 = sbr.rel (%p10) target = $region8
  $region5: #{tracking_hspa_forward.1} parent=0 // loop_body
    %s14 = ssub.s32 %s9, 1
    %s15 = ssub.s32 %s9, 2
    %s22 = sadd.s32 1, %s17
    %p23 = scmp.ge.s32.totalorder %s22, 1
    %s24 = scalar_select %p23, 0, %s22
    %s25 = sadd.s32 1, %s16
    %s26 = scalar_select %p23, %s25, %s16
    %p27 = scmp.ge.s32.totalorder %s26, 2
    %s28 = scalar_select %p27, 0, %s26
    %s29 = ssub.s32 %s16, %s28
    %p30 = scmp.eq.s32.totalorder %s29, 0
    %s32 = sadd.s32 %s31, 1
    %s33 = scalar_select %p30, %s31, %s32
    %p36 = pneg %p30
    %p37 = scmp.eq.s32.totalorder %s9, 1
    %p38 = por %p36, %p37
    %p39 = scmp.ne.s32.totalorder %s31, %s34
    %p40 = scmp.eq.s32.totalorder %s9, 0
    %p41 = por %p39, %p40
    %p42 = scmp.ne.s32.totalorder %s31, %s34
    %p43 = scmp.eq.s32.totalorder %s14, 1
    %p44 = por %p42, %p43
    %p45 = scmp.ne.s32.totalorder %s34, %s35
    %p46 = scmp.eq.s32.totalorder %s14, 0
    %p47 = por %p45, %p46
    %p48 = scmp.ne.s32.totalorder %s34, %s35
    %p49 = scmp.eq.s32.totalorder %s15, 1
    %p50 = por %p48, %p49
    %p52 = scmp.ne.s32.totalorder %s35, %s51
    %p53 = scmp.eq.s32.totalorder %s15, 0
    %p54 = por %p52, %p53
    %s55 = ssub.s32 %s16, %s28
    %s56 = ssub.s32 %s17, %s24
    %s57 = sor.u32 %s55, %s56
    %p58 = scmp.eq.s32.totalorder %s57, 0
    %s60 = sadd.s32 %s59, 1
    %s61 = scalar_select %p58, %s59, %s60
    %p64 = pneg %p58
    %p65 = scmp.eq.s32.totalorder %s9, 1
    %p66 = por %p64, %p65
    %p67 = scmp.ne.s32.totalorder %s59, %s62
    %p68 = scmp.eq.s32.totalorder %s9, 0
    %p69 = por %p67, %p68
    %p70 = scmp.ne.s32.totalorder %s59, %s62
    %p71 = scmp.eq.s32.totalorder %s14, 1
    %p72 = por %p70, %p71
    %p73 = scmp.ne.s32.totalorder %s62, %s63
    %p74 = scmp.eq.s32.totalorder %s14, 0
    %p75 = por %p73, %p74
    %p76 = scmp.ne.s32.totalorder %s62, %s63
    %p77 = scmp.eq.s32.totalorder %s15, 1
    %p78 = por %p76, %p77
    %p80 = scmp.ne.s32.totalorder %s63, %s79
    %p81 = scmp.eq.s32.totalorder %s15, 0
    %p82 = por %p80, %p81
    %s83 = ssub.s32 %s16, %s28
    %p84 = scmp.eq.s32.totalorder %s83, 0
    %s86 = sadd.s32 %s85, 1
    %s87 = scalar_select %p84, %s85, %s86
    %p90 = pneg %p84
    %p91 = scmp.eq.s32.totalorder %s9, 1
    %p92 = por %p90, %p91
    %p93 = scmp.ne.s32.totalorder %s85, %s88
    %p94 = scmp.eq.s32.totalorder %s9, 0
    %p95 = por %p93, %p94
    %p96 = scmp.ne.s32.totalorder %s85, %s88
    %p97 = scmp.eq.s32.totalorder %s14, 1
    %p98 = por %p96, %p97
    %p99 = scmp.ne.s32.totalorder %s88, %s89
    %p100 = scmp.eq.s32.totalorder %s14, 0
    %p101 = por %p99, %p100
    %p102 = scmp.ne.s32.totalorder %s88, %s89
    %p103 = scmp.eq.s32.totalorder %s15, 1
    %p104 = por %p102, %p103
    %p106 = scmp.ne.s32.totalorder %s89, %s105
    %p107 = scmp.eq.s32.totalorder %s15, 0
    %p108 = por %p106, %p107
    %s109 = ssub.s32 %s16, %s28
    %p110 = scmp.eq.s32.totalorder %s109, 0
    %s112 = sadd.s32 %s111, 1
    %s113 = scalar_select %p110, %s111, %s112
    %p116 = pneg %p110
    %p117 = scmp.eq.s32.totalorder %s9, 1
    %p118 = por %p116, %p117
    %p119 = scmp.ne.s32.totalorder %s111, %s114
    %p120 = scmp.eq.s32.totalorder %s9, 0
    %p121 = por %p119, %p120
    %p122 = scmp.ne.s32.totalorder %s111, %s114
    %p123 = scmp.eq.s32.totalorder %s14, 1
    %p124 = por %p122, %p123
    %p125 = scmp.ne.s32.totalorder %s114, %s115
    %p126 = scmp.eq.s32.totalorder %s14, 0
    %p127 = por %p125, %p126
    %p128 = scmp.ne.s32.totalorder %s114, %s115
    %p129 = scmp.eq.s32.totalorder %s15, 1
    %p130 = por %p128, %p129
    %p132 = scmp.ne.s32.totalorder %s115, %s131
    %p133 = scmp.eq.s32.totalorder %s15, 0
    %p134 = por %p132, %p133
    %p135 = scmp.le.s32.totalorder 1, %s9
    %p136 = scmp.lt.s32.totalorder %s9, 3
    %p137 = pnand %p135, %p136
    %p138 = pneg %p137
    // Predicated region
    $region9: #{tracking_hspa_forward.1} parent=5 // pred_check
      _
    $region10: #{tracking_hspa_forward.1} parent=5 // pred_check_branch
      %140 = sbr.rel (%p137) target = $region12
    $region11: #{tracking_hspa_forward.1} parent=5 // pred_region
      %s141 = ssub.s32 %s9, 1
    $region12: #{tracking_hspa_forward.1} parent=5 // pred_fallthru
      _
    %p142 = scmp.lt.s32.totalorder %s9, 2
    // Predicated region
    $region13: #{tracking_hspa_forward.1} parent=5 // pred_check
      %p143 = pneg %p142
    $region14: #{tracking_hspa_forward.1} parent=5 // pred_check_branch
      %145 = sbr.rel (%p143) target = $region16
    $region15: #{tracking_hspa_forward.1} parent=5 // pred_region
      // Predicated region
      $region17: #{tracking_hspa_forward.1} parent=15 // pred_check
        %p146 = pneg %p41
      $region18: #{tracking_hspa_forward.1} parent=15 // pred_check_branch
        %148 = sbr.rel (%p146) target = $region20
      $region19: #{tracking_hspa_forward.1} parent=15 // pred_region
        %p149 = scmp.lt.s32.totalorder %s16, 1
        %s150 = scalar_select %p149, %s16, 1
        %s151 = smul.addr %s150, 2
        %s152 = smul.addr %s151, 2
        %s153 = scalar_lea.vmem %s0, %s152
      $region20: #{tracking_hspa_forward.1} parent=15 // pred_fallthru
        _
      // Predicated region
      $region21: #{tracking_hspa_forward.1} parent=15 // pred_check
        %p154 = pneg %p69
      $region22: #{tracking_hspa_forward.1} parent=15 // pred_check_branch
        %156 = sbr.rel (%p154) target = $region24
      $region23: #{tracking_hspa_forward.1} parent=15 // pred_region
        %s157 = smul.u32 2, %s17
        %p158 = scmp.lt.s32.totalorder %s16, 1
        %s159 = scalar_select %p158, %s16, 1
        %p160 = scmp.lt.s32.totalorder %s157, 1
        %s161 = scalar_select %p160, %s157, 1
        %s162 = smul.addr %s159, 2
        %s163 = sadd.s32 %s161, %s162
        %s164 = smul.addr %s163, 4
        %s165 = scalar_lea.vmem %s1, %s164
        %s166 = smul.u32 2, %s17
      $region24: #{tracking_hspa_forward.1} parent=15 // pred_fallthru
        _
      // Predicated region
      $region25: #{tracking_hspa_forward.1} parent=15 // pred_check
        %p167 = pneg %p95
      $region26: #{tracking_hspa_forward.1} parent=15 // pred_check_branch
        %169 = sbr.rel (%p167) target = $region28
      $region27: #{tracking_hspa_forward.1} parent=15 // pred_region
        %p170 = scmp.lt.s32.totalorder %s16, 1
        %s171 = scalar_select %p170, %s16, 1
        %s172 = smul.addr %s171, 2
        %s173 = smul.addr %s172, 8
        %s174 = scalar_lea.vmem %s2, %s173
      $region28: #{tracking_hspa_forward.1} parent=15 // pred_fallthru
        _
    $region16: #{tracking_hspa_forward.1} parent=5 // pred_fallthru
      _
    %p175 = scmp.le.s32.totalorder 1, %s9
    %p176 = scmp.lt.s32.totalorder %s9, 3
    %p177 = pnand %p175, %p176
    %p178 = pneg %p177
    // Predicated region
    $region29: #{tracking_hspa_forward.1} parent=5 // pred_check
      _
    $region30: #{tracking_hspa_forward.1} parent=5 // pred_check_branch
      %180 = sbr.rel (%p177) target = $region32
    $region31: #{tracking_hspa_forward.1} parent=5 // pred_region
      %s181 = ssub.s32 %s9, 1
      %p182 = scmp.lt.s32.totalorder %s18, 1
      %s183 = scalar_select %p182, %s18, 1
      %s184 = smul.addr %s183, 2
      %s185 = smul.addr %s184, 2
      %s186 = scalar_lea.vmem %s0, %s185
      %p187 = pneg %p47
      %p188 = pneg %p44
      %s189 = smul.u32 2, %s19
      %p190 = scmp.lt.s32.totalorder %s18, 1
      %s191 = scalar_select %p190, %s18, 1
      %p192 = scmp.lt.s32.totalorder %s189, 1
      %s193 = scalar_select %p192, %s189, 1
      %s194 = smul.addr %s191, 2
      %s195 = sadd.s32 %s193, %s194
      %s196 = smul.addr %s195, 4
      %s197 = scalar_lea.vmem %s1, %s196
      %p198 = pneg %p75
      %p199 = pneg %p72
      %p200 = scmp.lt.s32.totalorder %s18, 1
      %s201 = scalar_select %p200, %s18, 1
      %s202 = smul.addr %s201, 2
      %s203 = smul.addr %s202, 8
      %s204 = scalar_lea.vmem %s2, %s203
      %p205 = pneg %p101
      %p206 = pneg %p98
      %p207 = pneg %p127
      %p208 = pneg %p124
      %p209 = scmp.lt.s32.totalorder %s18, 1
      %s210 = scalar_select %p209, %s18, 1
      %s211 = smul.addr %s210, 2
      %s212 = smul.addr %s211, 8
      %s213 = scalar_lea.vmem %s3, %s212
      %p214 = scmp.lt.s32.totalorder %s18, 1
      %s215 = scalar_select %p214, %s18, 1
      %s216 = smul.addr %s215, 2
      %s217 = smul.addr %s216, 2
      %s218 = scalar_lea.vmem %s0, %s217
      %s219 = smul.u32 2, %s19
      %p220 = scmp.lt.s32.totalorder %s18, 1
      %s221 = scalar_select %p220, %s18, 1
      %p222 = scmp.lt.s32.totalorder %s219, 1
      %s223 = scalar_select %p222, %s219, 1
      %s224 = smul.addr %s221, 2
      %s225 = sadd.s32 %s223, %s224
      %s226 = smul.addr %s225, 4
      %s227 = scalar_lea.vmem %s1, %s226
      %s228 = smul.u32 2, %s19
      %p229 = scmp.lt.s32.totalorder %s18, 1
      %s230 = scalar_select %p229, %s18, 1
      %s231 = smul.addr %s230, 2
      %s232 = smul.addr %s231, 8
      %s233 = scalar_lea.vmem %s2, %s232
      %p234 = scmp.lt.s32.totalorder %s18, 1
      %s235 = scalar_select %p234, %s18, 1
      %s236 = smul.addr %s235, 2
      %s237 = smul.addr %s236, 8
      %s238 = scalar_lea.vmem %s3, %s237
      %v239 = vld [vmem:[%s218] sm:$0xf]
      %v242 = vunpack.c.l.s4 1983009808
      %v243 = vunpack.c.0.s8 %v242
      %v244 = vlaneseq
      %v245 = vshrl.u32 %v244, 7
      %v246 = vsub.s32 %v243, %v245
      %v247 = vrot.slane %v239, %v246
      %v248 = vcombine.high %v247, %v247
      %251 = vxpose.xlu0.b32.start [1/16] %v247, 128
      %252 = vxpose.xlu0.b32.cont [2/16] 0.0, 128
      %253 = vxpose.xlu0.b32.cont [3/16] 0.0, 128
      %254 = vxpose.xlu0.b32.cont [4/16] 0.0, 128
      %255 = vxpose.xlu0.b32.cont [5/16] 0.0, 128
      %256 = vxpose.xlu0.b32.cont [6/16] 0.0, 128
      %257 = vxpose.xlu0.b32.cont [7/16] 0.0, 128
      %258 = vxpose.xlu0.b32.cont [8/16] 0.0, 128
      %259 = vxpose.xlu0.b32.cont [9/16] 0.0, 128
      %260 = vxpose.xlu0.b32.cont [10/16] 0.0, 128
      %261 = vxpose.xlu0.b32.cont [11/16] 0.0, 128
      %262 = vxpose.xlu0.b32.cont [12/16] 0.0, 128
      %263 = vxpose.xlu0.b32.cont [13/16] 0.0, 128
      %264 = vxpose.xlu0.b32.cont [14/16] 0.0, 128
      %265 = vxpose.xlu0.b32.cont [15/16] 0.0, 128
      %266 = vxpose.xlu0.b32.end [16/16] 0.0, 128
      %v267 = vpop.trf.xlu0
      %v268 = vpop.trf.xlu0
      %v269 = vpop.trf.xlu0
      %v270 = vpop.trf.xlu0
      %v271 = vpop.trf.xlu0
      %v272 = vpop.trf.xlu0
      %v273 = vpop.trf.xlu0
      %v274 = vpop.trf.xlu0
      %v275 = vpop.trf.xlu0
      %v276 = vpop.trf.xlu0
      %v277 = vpop.trf.xlu0
      %v278 = vpop.trf.xlu0
      %v279 = vpop.trf.xlu0
      %v280 = vpop.trf.xlu0
      %v281 = vpop.trf.xlu0
      %v282 = vpop.trf.xlu0
      %283 = vxpose.xlu0.b32.start [1/16] %v248, 128
      %284 = vxpose.xlu0.b32.cont [2/16] 0.0, 128
      %285 = vxpose.xlu0.b32.cont [3/16] 0.0, 128
      %286 = vxpose.xlu0.b32.cont [4/16] 0.0, 128
      %287 = vxpose.xlu0.b32.cont [5/16] 0.0, 128
      %288 = vxpose.xlu0.b32.cont [6/16] 0.0, 128
      %289 = vxpose.xlu0.b32.cont [7/16] 0.0, 128
      %290 = vxpose.xlu0.b32.cont [8/16] 0.0, 128
      %291 = vxpose.xlu0.b32.cont [9/16] 0.0, 128
      %292 = vxpose.xlu0.b32.cont [10/16] 0.0, 128
      %293 = vxpose.xlu0.b32.cont [11/16] 0.0, 128
      %294 = vxpose.xlu0.b32.cont [12/16] 0.0, 128
      %295 = vxpose.xlu0.b32.cont [13/16] 0.0, 128
      %296 = vxpose.xlu0.b32.cont [14/16] 0.0, 128
      %297 = vxpose.xlu0.b32.cont [15/16] 0.0, 128
      %298 = vxpose.xlu0.b32.end [16/16] 0.0, 128
      %v299 = vpop.trf.xlu0
      %v300 = vpop.trf.xlu0
      %v301 = vpop.trf.xlu0
      %v302 = vpop.trf.xlu0
      %v303 = vpop.trf.xlu0
      %v304 = vpop.trf.xlu0
      %v305 = vpop.trf.xlu0
      %v306 = vpop.trf.xlu0
      %v307 = vpop.trf.xlu0
      %v308 = vpop.trf.xlu0
      %v309 = vpop.trf.xlu0
      %v310 = vpop.trf.xlu0
      %v311 = vpop.trf.xlu0
      %v312 = vpop.trf.xlu0
      %v313 = vpop.trf.xlu0
      %v314 = vpop.trf.xlu0
      %vm315 = vcmask 15360
      %v317 = vsel %vm315, %v267, 0
      %v320 = vsel %vm315, %v268, 0
      %v323 = vsel %vm315, %v269, 0
      %v326 = vsel %vm315, %v270, 0
      %v329 = vsel %vm315, %v271, 0
      %v332 = vsel %vm315, %v272, 0
      %v335 = vsel %vm315, %v273, 0
      %v338 = vsel %vm315, %v274, 0
      %v341 = vsel %vm315, %v275, 0
      %v344 = vsel %vm315, %v276, 0
      %v347 = vsel %vm315, %v277, 0
      %v350 = vsel %vm315, %v278, 0
      %v353 = vsel %vm315, %v279, 0
      %v356 = vsel %vm315, %v280, 0
      %v359 = vsel %vm315, %v281, 0
      %v362 = vsel %vm315, %v282, 0
      %v365 = vsel %vm315, %v299, 0
      %v368 = vsel %vm315, %v300, 0
      %v371 = vsel %vm315, %v301, 0
      %v374 = vsel %vm315, %v302, 0
      %v377 = vsel %vm315, %v303, 0
      %v380 = vsel %vm315, %v304, 0
      %v383 = vsel %vm315, %v305, 0
      %v386 = vsel %vm315, %v306, 0
      %v389 = vsel %vm315, %v307, 0
      %v392 = vsel %vm315, %v308, 0
      %v395 = vsel %vm315, %v309, 0
      %v398 = vsel %vm315, %v310, 0
      %v401 = vsel %vm315, %v311, 0
      %v404 = vsel %vm315, %v312, 0
      %v407 = vsel %vm315, %v313, 0
      %v410 = vsel %vm315, %v314, 0
      %vm412 = vcmask 1041408
      %v413 = vsel %vm412, %v247, 0
      %v415 = vsel %vm412, %v248, 0
      %417 = vmatprep.subr.mxu0 %v415
      %418 = vmatpush1.msra.mxu0 %v413
      %419 = vmatprep.subr.mxu0 0.0
      %420 = vmatpush1.msra.mxu0 0.0
      %421 = vmatprep.subr.mxu0 0.0
      %422 = vmatpush1.msra.mxu0 0.0
      %423 = vmatprep.subr.mxu0 0.0
      %424 = vmatpush1.msra.mxu0 0.0
      %425 = vmatprep.subr.mxu0 0.0
      %426 = vmatpush1.msra.mxu0 0.0
      %427 = vmatprep.subr.mxu0 0.0
      %428 = vmatpush1.msra.mxu0 0.0
      %429 = vmatprep.subr.mxu0 0.0
      %430 = vmatpush1.msra.mxu0 0.0
      %431 = vmatprep.subr.mxu0 0.0
      %432 = vmatpush1.msra.mxu0 0.0
      %433 = vmatprep.subr.mxu0 0.0
      %434 = vmatpush1.msra.mxu0 0.0
      %435 = vmatprep.subr.mxu0 0.0
      %436 = vmatpush1.msra.mxu0 0.0
      %437 = vmatprep.subr.mxu0 0.0
      %438 = vmatpush1.msra.mxu0 0.0
      %439 = vmatprep.subr.mxu0 0.0
      %440 = vmatpush1.msra.mxu0 0.0
      %441 = vmatprep.subr.mxu0 0.0
      %442 = vmatpush1.msra.mxu0 0.0
      %443 = vmatprep.subr.mxu0 0.0
      %444 = vmatpush1.msra.mxu0 0.0
      %445 = vmatprep.subr.mxu0 0.0
      %446 = vmatpush1.msra.mxu0 0.0
      %447 = vmatprep.subr.mxu0 0.0
      %448 = vmatpush1.msra.mxu0 0.0
      %449 = vmatprep.subr.mxu0 0.0
      %450 = vmatpush1.msra.mxu0 0.0
      %451 = vmatprep.subr.mxu0 0.0
      %452 = vmatpush1.msra.mxu0 0.0
      %453 = vmatprep.subr.mxu0 0.0
      %454 = vmatpush1.msra.mxu0 0.0
      %455 = vmatprep.subr.mxu0 0.0
      %456 = vmatpush1.msra.mxu0 0.0
      %457 = vmatprep.subr.mxu0 0.0
      %458 = vmatpush1.msra.mxu0 0.0
      %459 = vmatprep.subr.mxu0 0.0
      %460 = vmatpush1.msra.mxu0 0.0
      %461 = vmatprep.subr.mxu0 0.0
      %462 = vmatpush1.msra.mxu0 0.0
      %463 = vmatprep.subr.mxu0 0.0
      %464 = vmatpush1.msra.mxu0 0.0
      %465 = vmatprep.subr.mxu0 0.0
      %466 = vmatpush1.msra.mxu0 0.0
      %467 = vmatprep.subr.mxu0 0.0
      %468 = vmatpush1.msra.mxu0 0.0
      %469 = vmatprep.subr.mxu0 0.0
      %470 = vmatpush1.msra.mxu0 0.0
      %471 = vmatprep.subr.mxu0 0.0
      %472 = vmatpush1.msra.mxu0 0.0
      %473 = vmatprep.subr.mxu0 0.0
      %474 = vmatpush1.msra.mxu0 0.0
      %475 = vmatprep.subr.mxu0 0.0
      %476 = vmatpush1.msra.mxu0 0.0
      %477 = vmatprep.subr.mxu0 0.0
      %478 = vmatpush1.msra.mxu0 0.0
      %479 = vmatprep.subr.mxu0 0.0
      %480 = vmatpush1.msra.mxu0 0.0
      %481 = vmatprep.mubr.f32.mxu0 0.0
      %482 = vmatmul.mubr.f32.gmra.mrb[0].mxu0 %v317
      %v483 = vpop.f32.mrb[0].mxu0
      %v484 = vadd.f32 0.0, %v483
      %v485 = vpop.f32.mrb[0].mxu0
      %v486 = vadd.f32 0.0, %v485
      %487 = vmatprep.mubr.f32.mxu0 0.0
      %488 = vmatmul.mubr.f32.gmra.mrb[0].mxu0 %v320
      %v489 = vpop.f32.mrb[0].mxu0
      %v490 = vadd.f32 0.0, %v489
      %v491 = vpop.f32.mrb[0].mxu0
      %v492 = vadd.f32 0.0, %v491
      %493 = vmatprep.mubr.f32.mxu0 0.0
      %494 = vmatmul.mubr.f32.gmra.mrb[0].mxu0 %v323
      %v495 = vpop.f32.mrb[0].mxu0
      %v496 = vadd.f32 0.0, %v495
      %v497 = vpop.f32.mrb[0].mxu0
      %v498 = vadd.f32 0.0, %v497
      %499 = vmatprep.mubr.f32.mxu0 0.0
      %500 = vmatmul.mubr.f32.gmra.mrb[0].mxu0 %v326
      %v501 = vpop.f32.mrb[0].mxu0
      %v502 = vadd.f32 0.0, %v501
      %v503 = vpop.f32.mrb[0].mxu0
      %v504 = vadd.f32 0.0, %v503
      %505 = vmatprep.mubr.f32.mxu0 0.0
      %506 = vmatmul.mubr.f32.gmra.mrb[0].mxu0 %v329
      %v507 = vpop.f32.mrb[0].mxu0
      %v508 = vadd.f32 0.0, %v507
      %v509 = vpop.f32.mrb[0].mxu0
      %v510 = vadd.f32 0.0, %v509
      %511 = vmatprep.mubr.f32.mxu0 0.0
      %512 = vmatmul.mubr.f32.gmra.mrb[0].mxu0 %v332
      %v513 = vpop.f32.mrb[0].mxu0
      %v514 = vadd.f32 0.0, %v513
      %v515 = vpop.f32.mrb[0].mxu0
      %v516 = vadd.f32 0.0, %v515
      %517 = vmatprep.mubr.f32.mxu0 0.0
      %518 = vmatmul.mubr.f32.gmra.mrb[0].mxu0 %v335
      %v519 = vpop.f32.mrb[0].mxu0
      %v520 = vadd.f32 0.0, %v519
      %v521 = vpop.f32.mrb[0].mxu0
      %v522 = vadd.f32 0.0, %v521
      %523 = vmatprep.mubr.f32.mxu0 0.0
      %524 = vmatmul.mubr.f32.gmra.mrb[0].mxu0 %v338
      %v525 = vpop.f32.mrb[0].mxu0
      %v526 = vadd.f32 0.0, %v525
      %v527 = vpop.f32.mrb[0].mxu0
      %v528 = vadd.f32 0.0, %v527
      %529 = vmatprep.mubr.f32.mxu0 0.0
      %530 = vmatmul.mubr.f32.gmra.mrb[0].mxu0 %v341
      %v531 = vpop.f32.mrb[0].mxu0
      %v532 = vadd.f32 0.0, %v531
      %v533 = vpop.f32.mrb[0].mxu0
      %v534 = vadd.f32 0.0, %v533
      %535 = vmatprep.mubr.f32.mxu0 0.0
      %536 = vmatmul.mubr.f32.gmra.mrb[0].mxu0 %v344
      %v537 = vpop.f32.mrb[0].mxu0
      %v538 = vadd.f32 0.0, %v537
      %v539 = vpop.f32.mrb[0].mxu0
      %v540 = vadd.f32 0.0, %v539
      %541 = vmatprep.mubr.f32.mxu0 0.0
      %542 = vmatmul.mubr.f32.gmra.mrb[0].mxu0 %v347
      %v543 = vpop.f32.mrb[0].mxu0
      %v544 = vadd.f32 0.0, %v543
      %v545 = vpop.f32.mrb[0].mxu0
      %v546 = vadd.f32 0.0, %v545
      %547 = vmatprep.mubr.f32.mxu0 0.0
      %548 = vmatmul.mubr.f32.gmra.mrb[0].mxu0 %v350
      %v549 = vpop.f32.mrb[0].mxu0
      %v550 = vadd.f32 0.0, %v549
      %v551 = vpop.f32.mrb[0].mxu0
      %v552 = vadd.f32 0.0, %v551
      %553 = vmatprep.mubr.f32.mxu0 0.0
      %554 = vmatmul.mubr.f32.gmra.mrb[0].mxu0 %v353
      %v555 = vpop.f32.mrb[0].mxu0
      %v556 = vadd.f32 0.0, %v555
      %v557 = vpop.f32.mrb[0].mxu0
      %v558 = vadd.f32 0.0, %v557
      %559 = vmatprep.mubr.f32.mxu0 0.0
      %560 = vmatmul.mubr.f32.gmra.mrb[0].mxu0 %v356
      %v561 = vpop.f32.mrb[0].mxu0
      %v562 = vadd.f32 0.0, %v561
      %v563 = vpop.f32.mrb[0].mxu0
      %v564 = vadd.f32 0.0, %v563
      %565 = vmatprep.mubr.f32.mxu0 0.0
      %566 = vmatmul.mubr.f32.gmra.mrb[0].mxu0 %v359
      %v567 = vpop.f32.mrb[0].mxu0
      %v568 = vadd.f32 0.0, %v567
      %v569 = vpop.f32.mrb[0].mxu0
      %v570 = vadd.f32 0.0, %v569
      %571 = vmatprep.mubr.f32.mxu0 0.0
      %572 = vmatmul.mubr.f32.gmra.mrb[0].mxu0 %v362
      %v573 = vpop.f32.mrb[0].mxu0
      %v574 = vadd.f32 0.0, %v573
      %v575 = vpop.f32.mrb[0].mxu0
      %v576 = vadd.f32 0.0, %v575
      %577 = vmatprep.mubr.f32.mxu0 0.0
      %578 = vmatmul.mubr.f32.gmra.mrb[0].mxu0 %v365
      %v579 = vpop.f32.mrb[0].mxu0
      %v580 = vadd.f32 0.0, %v579
      %v581 = vpop.f32.mrb[0].mxu0
      %v582 = vadd.f32 0.0, %v581
      %583 = vmatprep.mubr.f32.mxu0 0.0
      %584 = vmatmul.mubr.f32.gmra.mrb[0].mxu0 %v368
      %v585 = vpop.f32.mrb[0].mxu0
      %v586 = vadd.f32 0.0, %v585
      %v587 = vpop.f32.mrb[0].mxu0
      %v588 = vadd.f32 0.0, %v587
      %589 = vmatprep.mubr.f32.mxu0 0.0
      %590 = vmatmul.mubr.f32.gmra.mrb[0].mxu0 %v371
      %v591 = vpop.f32.mrb[0].mxu0
      %v592 = vadd.f32 0.0, %v591
      %v593 = vpop.f32.mrb[0].mxu0
      %v594 = vadd.f32 0.0, %v593
      %595 = vmatprep.mubr.f32.mxu0 0.0
      %596 = vmatmul.mubr.f32.gmra.mrb[0].mxu0 %v374
      %v597 = vpop.f32.mrb[0].mxu0
      %v598 = vadd.f32 0.0, %v597
      %v599 = vpop.f32.mrb[0].mxu0
      %v600 = vadd.f32 0.0, %v599
      %601 = vmatprep.mubr.f32.mxu0 0.0
      %602 = vmatmul.mubr.f32.gmra.mrb[0].mxu0 %v377
      %v603 = vpop.f32.mrb[0].mxu0
      %v604 = vadd.f32 0.0, %v603
      %v605 = vpop.f32.mrb[0].mxu0
      %v606 = vadd.f32 0.0, %v605
      %607 = vmatprep.mubr.f32.mxu0 0.0
      %608 = vmatmul.mubr.f32.gmra.mrb[0].mxu0 %v380
      %v609 = vpop.f32.mrb[0].mxu0
      %v610 = vadd.f32 0.0, %v609
      %v611 = vpop.f32.mrb[0].mxu0
      %v612 = vadd.f32 0.0, %v611
      %613 = vmatprep.mubr.f32.mxu0 0.0
      %614 = vmatmul.mubr.f32.gmra.mrb[0].mxu0 %v383
      %v615 = vpop.f32.mrb[0].mxu0
      %v616 = vadd.f32 0.0, %v615
      %v617 = vpop.f32.mrb[0].mxu0
      %v618 = vadd.f32 0.0, %v617
      %619 = vmatprep.mubr.f32.mxu0 0.0
      %620 = vmatmul.mubr.f32.gmra.mrb[0].mxu0 %v386
      %v621 = vpop.f32.mrb[0].mxu0
      %v622 = vadd.f32 0.0, %v621
      %v623 = vpop.f32.mrb[0].mxu0
      %v624 = vadd.f32 0.0, %v623
      %625 = vmatprep.mubr.f32.mxu0 0.0
      %626 = vmatmul.mubr.f32.gmra.mrb[0].mxu0 %v389
      %v627 = vpop.f32.mrb[0].mxu0
      %v628 = vadd.f32 0.0, %v627
      %v629 = vpop.f32.mrb[0].mxu0
      %v630 = vadd.f32 0.0, %v629
      %631 = vmatprep.mubr.f32.mxu0 0.0
      %632 = vmatmul.mubr.f32.gmra.mrb[0].mxu0 %v392
      %v633 = vpop.f32.mrb[0].mxu0
      %v634 = vadd.f32 0.0, %v633
      %v635 = vpop.f32.mrb[0].mxu0
      %v636 = vadd.f32 0.0, %v635
      %637 = vmatprep.mubr.f32.mxu0 0.0
      %638 = vmatmul.mubr.f32.gmra.mrb[0].mxu0 %v395
      %v639 = vpop.f32.mrb[0].mxu0
      %v640 = vadd.f32 0.0, %v639
      %v641 = vpop.f32.mrb[0].mxu0
      %v642 = vadd.f32 0.0, %v641
      %643 = vmatprep.mubr.f32.mxu0 0.0
      %644 = vmatmul.mubr.f32.gmra.mrb[0].mxu0 %v398
      %v645 = vpop.f32.mrb[0].mxu0
      %v646 = vadd.f32 0.0, %v645
      %v647 = vpop.f32.mrb[0].mxu0
      %v648 = vadd.f32 0.0, %v647
      %649 = vmatprep.mubr.f32.mxu0 0.0
      %650 = vmatmul.mubr.f32.gmra.mrb[0].mxu0 %v401
      %v651 = vpop.f32.mrb[0].mxu0
      %v652 = vadd.f32 0.0, %v651
      %v653 = vpop.f32.mrb[0].mxu0
      %v654 = vadd.f32 0.0, %v653
      %655 = vmatprep.mubr.f32.mxu0 0.0
      %656 = vmatmul.mubr.f32.gmra.mrb[0].mxu0 %v404
      %v657 = vpop.f32.mrb[0].mxu0
      %v658 = vadd.f32 0.0, %v657
      %v659 = vpop.f32.mrb[0].mxu0
      %v660 = vadd.f32 0.0, %v659
      %661 = vmatprep.mubr.f32.mxu0 0.0
      %662 = vmatmul.mubr.f32.gmra.mrb[0].mxu0 %v407
      %v663 = vpop.f32.mrb[0].mxu0
      %v664 = vadd.f32 0.0, %v663
      %v665 = vpop.f32.mrb[0].mxu0
      %v666 = vadd.f32 0.0, %v665
      %667 = vmatprep.mubr.f32.mxu0 0.0
      %668 = vmatmul.mubr.f32.gmra.mrb[0].mxu0 %v410
      %v669 = vpop.f32.mrb[0].mxu0
      %v670 = vadd.f32 0.0, %v669
      %v671 = vpop.f32.mrb[0].mxu0
      %v672 = vadd.f32 0.0, %v671
      %673 = vdwg.mxu0
      %v674 = vmax.f32 %v484, %v486
      %675 = vmax.xlane.f32.xlu0 %v674
      %v676 = vpop.xlane.xlu0 %675
      %v677 = vmax.f32 %v490, %v492
      %678 = vmax.xlane.f32.xlu0 %v677
      %v679 = vpop.xlane.xlu0 %678
      %v680 = vmax.f32 %v496, %v498
      %681 = vmax.xlane.f32.xlu0 %v680
      %v682 = vpop.xlane.xlu0 %681
      %v683 = vmax.f32 %v502, %v504
      %684 = vmax.xlane.f32.xlu0 %v683
      %v685 = vpop.xlane.xlu0 %684
      %v686 = vmax.f32 %v508, %v510
      %687 = vmax.xlane.f32.xlu0 %v686
      %v688 = vpop.xlane.xlu0 %687
      %v689 = vmax.f32 %v514, %v516
      %690 = vmax.xlane.f32.xlu0 %v689
      %v691 = vpop.xlane.xlu0 %690
      %v692 = vmax.f32 %v520, %v522
      %693 = vmax.xlane.f32.xlu0 %v692
      %v694 = vpop.xlane.xlu0 %693
      %v695 = vmax.f32 %v526, %v528
      %696 = vmax.xlane.f32.xlu0 %v695
      %v697 = vpop.xlane.xlu0 %696
      %v698 = vmax.f32 %v532, %v534
      %699 = vmax.xlane.f32.xlu0 %v698
      %v700 = vpop.xlane.xlu0 %699
      %v701 = vmax.f32 %v538, %v540
      %702 = vmax.xlane.f32.xlu0 %v701
      %v703 = vpop.xlane.xlu0 %702
      %v704 = vmax.f32 %v544, %v546
      %705 = vmax.xlane.f32.xlu0 %v704
      %v706 = vpop.xlane.xlu0 %705
      %v707 = vmax.f32 %v550, %v552
      %708 = vmax.xlane.f32.xlu0 %v707
      %v709 = vpop.xlane.xlu0 %708
      %v710 = vmax.f32 %v556, %v558
      %711 = vmax.xlane.f32.xlu0 %v710
      %v712 = vpop.xlane.xlu0 %711
      %v713 = vmax.f32 %v562, %v564
      %714 = vmax.xlane.f32.xlu0 %v713
      %v715 = vpop.xlane.xlu0 %714
      %v716 = vmax.f32 %v568, %v570
      %717 = vmax.xlane.f32.xlu0 %v716
      %v718 = vpop.xlane.xlu0 %717
      %v719 = vmax.f32 %v574, %v576
      %720 = vmax.xlane.f32.xlu0 %v719
      %v721 = vpop.xlane.xlu0 %720
      %v722 = vmax.f32 %v580, %v582
      %723 = vmax.xlane.f32.xlu0 %v722
      %v724 = vpop.xlane.xlu0 %723
      %v725 = vmax.f32 %v586, %v588
      %726 = vmax.xlane.f32.xlu0 %v725
      %v727 = vpop.xlane.xlu0 %726
      %v728 = vmax.f32 %v592, %v594
      %729 = vmax.xlane.f32.xlu0 %v728
      %v730 = vpop.xlane.xlu0 %729
      %v731 = vmax.f32 %v598, %v600
      %732 = vmax.xlane.f32.xlu0 %v731
      %v733 = vpop.xlane.xlu0 %732
      %v734 = vmax.f32 %v604, %v606
      %735 = vmax.xlane.f32.xlu0 %v734
      %v736 = vpop.xlane.xlu0 %735
      %v737 = vmax.f32 %v610, %v612
      %738 = vmax.xlane.f32.xlu0 %v737
      %v739 = vpop.xlane.xlu0 %738
      %v740 = vmax.f32 %v616, %v618
      %741 = vmax.xlane.f32.xlu0 %v740
      %v742 = vpop.xlane.xlu0 %741
      %v743 = vmax.f32 %v622, %v624
      %744 = vmax.xlane.f32.xlu0 %v743
      %v745 = vpop.xlane.xlu0 %744
      %v746 = vmax.f32 %v628, %v630
      %747 = vmax.xlane.f32.xlu0 %v746
      %v748 = vpop.xlane.xlu0 %747
      %v749 = vmax.f32 %v634, %v636
      %750 = vmax.xlane.f32.xlu0 %v749
      %v751 = vpop.xlane.xlu0 %750
      %v752 = vmax.f32 %v640, %v642
      %753 = vmax.xlane.f32.xlu0 %v752
      %v754 = vpop.xlane.xlu0 %753
      %v755 = vmax.f32 %v646, %v648
      %756 = vmax.xlane.f32.xlu0 %v755
      %v757 = vpop.xlane.xlu0 %756
      %v758 = vmax.f32 %v652, %v654
      %759 = vmax.xlane.f32.xlu0 %v758
      %v760 = vpop.xlane.xlu0 %759
      %v761 = vmax.f32 %v658, %v660
      %762 = vmax.xlane.f32.xlu0 %v761
      %v763 = vpop.xlane.xlu0 %762
      %v764 = vmax.f32 %v664, %v666
      %765 = vmax.xlane.f32.xlu0 %v764
      %v766 = vpop.xlane.xlu0 %765
      %v767 = vmax.f32 %v670, %v672
      %768 = vmax.xlane.f32.xlu0 %v767
      %v769 = vpop.xlane.xlu0 %768
      %v770 = vsub.f32 %v484, %v676
      %v771 = vsub.f32 %v486, %v676
      %v772 = vsub.f32 %v490, %v679
      %v773 = vsub.f32 %v492, %v679
      %v774 = vsub.f32 %v496, %v682
      %v775 = vsub.f32 %v498, %v682
      %v776 = vsub.f32 %v502, %v685
      %v777 = vsub.f32 %v504, %v685
      %v778 = vsub.f32 %v508, %v688
      %v779 = vsub.f32 %v510, %v688
      %v780 = vsub.f32 %v514, %v691
      %v781 = vsub.f32 %v516, %v691
      %v782 = vsub.f32 %v520, %v694
      %v783 = vsub.f32 %v522, %v694
      %v784 = vsub.f32 %v526, %v697
      %v785 = vsub.f32 %v528, %v697
      %v786 = vsub.f32 %v532, %v700
      %v787 = vsub.f32 %v534, %v700
      %v788 = vsub.f32 %v538, %v703
      %v789 = vsub.f32 %v540, %v703
      %v790 = vsub.f32 %v544, %v706
      %v791 = vsub.f32 %v546, %v706
      %v792 = vsub.f32 %v550, %v709
      %v793 = vsub.f32 %v552, %v709
      %v794 = vsub.f32 %v556, %v712
      %v795 = vsub.f32 %v558, %v712
      %v796 = vsub.f32 %v562, %v715
      %v797 = vsub.f32 %v564, %v715
      %v798 = vsub.f32 %v568, %v718
      %v799 = vsub.f32 %v570, %v718
      %v800 = vsub.f32 %v574, %v721
      %v801 = vsub.f32 %v576, %v721
      %v802 = vsub.f32 %v580, %v724
      %v803 = vsub.f32 %v582, %v724
      %v804 = vsub.f32 %v586, %v727
      %v805 = vsub.f32 %v588, %v727
      %v806 = vsub.f32 %v592, %v730
      %v807 = vsub.f32 %v594, %v730
      %v808 = vsub.f32 %v598, %v733
      %v809 = vsub.f32 %v600, %v733
      %v810 = vsub.f32 %v604, %v736
      %v811 = vsub.f32 %v606, %v736
      %v812 = vsub.f32 %v610, %v739
      %v813 = vsub.f32 %v612, %v739
      %v814 = vsub.f32 %v616, %v742
      %v815 = vsub.f32 %v618, %v742
      %v816 = vsub.f32 %v622, %v745
      %v817 = vsub.f32 %v624, %v745
      %v818 = vsub.f32 %v628, %v748
      %v819 = vsub.f32 %v630, %v748
      %v820 = vsub.f32 %v634, %v751
      %v821 = vsub.f32 %v636, %v751
      %v822 = vsub.f32 %v640, %v754
      %v823 = vsub.f32 %v642, %v754
      %v824 = vsub.f32 %v646, %v757
      %v825 = vsub.f32 %v648, %v757
      %v826 = vsub.f32 %v652, %v760
      %v827 = vsub.f32 %v654, %v760
      %v828 = vsub.f32 %v658, %v763
      %v829 = vsub.f32 %v660, %v763
      %v830 = vsub.f32 %v664, %v766
      %v831 = vsub.f32 %v666, %v766
      %v832 = vsub.f32 %v670, %v769
      %v833 = vsub.f32 %v672, %v769
      %v834 = vsub.f32 %v770, -0.5
      %v835 = vsub.f32 %v771, -0.5
      %v836 = vsub.f32 %v772, -0.5
      %v837 = vsub.f32 %v773, -0.5
      %v838 = vsub.f32 %v774, -0.5
      %v839 = vsub.f32 %v775, -0.5
      %v840 = vsub.f32 %v776, -0.5
      %v841 = vsub.f32 %v777, -0.5
      %v842 = vsub.f32 %v778, -0.5
      %v843 = vsub.f32 %v779, -0.5
      %v844 = vsub.f32 %v780, -0.5
      %v845 = vsub.f32 %v781, -0.5
      %v846 = vsub.f32 %v782, -0.5
      %v847 = vsub.f32 %v783, -0.5
      %v848 = vsub.f32 %v784, -0.5
      %v849 = vsub.f32 %v785, -0.5
      %v850 = vsub.f32 %v786, -0.5
      %v851 = vsub.f32 %v787, -0.5
      %v852 = vsub.f32 %v788, -0.5
      %v853 = vsub.f32 %v789, -0.5
      %v854 = vsub.f32 %v790, -0.5
      %v855 = vsub.f32 %v791, -0.5
      %v856 = vsub.f32 %v792, -0.5
      %v857 = vsub.f32 %v793, -0.5
      %v858 = vsub.f32 %v794, -0.5
      %v859 = vsub.f32 %v795, -0.5
      %v860 = vsub.f32 %v796, -0.5
      %v861 = vsub.f32 %v797, -0.5
      %v862 = vsub.f32 %v798, -0.5
      %v863 = vsub.f32 %v799, -0.5
      %v864 = vsub.f32 %v800, -0.5
      %v865 = vsub.f32 %v801, -0.5
      %v866 = vsub.f32 %v802, -0.5
      %v867 = vsub.f32 %v803, -0.5
      %v868 = vsub.f32 %v804, -0.5
      %v869 = vsub.f32 %v805, -0.5
      %v870 = vsub.f32 %v806, -0.5
      %v871 = vsub.f32 %v807, -0.5
      %v872 = vsub.f32 %v808, -0.5
      %v873 = vsub.f32 %v809, -0.5
      %v874 = vsub.f32 %v810, -0.5
      %v875 = vsub.f32 %v811, -0.5
      %v876 = vsub.f32 %v812, -0.5
      %v877 = vsub.f32 %v813, -0.5
      %v878 = vsub.f32 %v814, -0.5
      %v879 = vsub.f32 %v815, -0.5
      %v880 = vsub.f32 %v816, -0.5
      %v881 = vsub.f32 %v817, -0.5
      %v882 = vsub.f32 %v818, -0.5
      %v883 = vsub.f32 %v819, -0.5
      %v884 = vsub.f32 %v820, -0.5
      %v885 = vsub.f32 %v821, -0.5
      %v886 = vsub.f32 %v822, -0.5
      %v887 = vsub.f32 %v823, -0.5
      %v888 = vsub.f32 %v824, -0.5
      %v889 = vsub.f32 %v825, -0.5
      %v890 = vsub.f32 %v826, -0.5
      %v891 = vsub.f32 %v827, -0.5
      %v892 = vsub.f32 %v828, -0.5
      %v893 = vsub.f32 %v829, -0.5
      %v894 = vsub.f32 %v830, -0.5
      %v895 = vsub.f32 %v831, -0.5
      %v896 = vsub.f32 %v832, -0.5
      %v897 = vsub.f32 %v833, -0.5
      %v898 = vmax.f32 %v834, 0.0
      %v899 = vmax.f32 %v835, 0.0
      %v900 = vmax.f32 %v836, 0.0
      %v901 = vmax.f32 %v837, 0.0
      %v902 = vmax.f32 %v838, 0.0
      %v903 = vmax.f32 %v839, 0.0
      %v904 = vmax.f32 %v840, 0.0
      %v905 = vmax.f32 %v841, 0.0
      %v906 = vmax.f32 %v842, 0.0
      %v907 = vmax.f32 %v843, 0.0
      %v908 = vmax.f32 %v844, 0.0
      %v909 = vmax.f32 %v845, 0.0
      %v910 = vmax.f32 %v846, 0.0
      %v911 = vmax.f32 %v847, 0.0
      %v912 = vmax.f32 %v848, 0.0
      %v913 = vmax.f32 %v849, 0.0
      %v914 = vmax.f32 %v850, 0.0
      %v915 = vmax.f32 %v851, 0.0
      %v916 = vmax.f32 %v852, 0.0
      %v917 = vmax.f32 %v853, 0.0
      %v918 = vmax.f32 %v854, 0.0
      %v919 = vmax.f32 %v855, 0.0
      %v920 = vmax.f32 %v856, 0.0
      %v921 = vmax.f32 %v857, 0.0
      %v922 = vmax.f32 %v858, 0.0
      %v923 = vmax.f32 %v859, 0.0
      %v924 = vmax.f32 %v860, 0.0
      %v925 = vmax.f32 %v861, 0.0
      %v926 = vmax.f32 %v862, 0.0
      %v927 = vmax.f32 %v863, 0.0
      %v928 = vmax.f32 %v864, 0.0
      %v929 = vmax.f32 %v865, 0.0
      %v930 = vmax.f32 %v866, 0.0
      %v931 = vmax.f32 %v867, 0.0
      %v932 = vmax.f32 %v868, 0.0
      %v933 = vmax.f32 %v869, 0.0
      %v934 = vmax.f32 %v870, 0.0
      %v935 = vmax.f32 %v871, 0.0
      %v936 = vmax.f32 %v872, 0.0
      %v937 = vmax.f32 %v873, 0.0
      %v938 = vmax.f32 %v874, 0.0
      %v939 = vmax.f32 %v875, 0.0
      %v940 = vmax.f32 %v876, 0.0
      %v941 = vmax.f32 %v877, 0.0
      %v942 = vmax.f32 %v878, 0.0
      %v943 = vmax.f32 %v879, 0.0
      %v944 = vmax.f32 %v880, 0.0
      %v945 = vmax.f32 %v881, 0.0
      %v946 = vmax.f32 %v882, 0.0
      %v947 = vmax.f32 %v883, 0.0
      %v948 = vmax.f32 %v884, 0.0
      %v949 = vmax.f32 %v885, 0.0
      %v950 = vmax.f32 %v886, 0.0
      %v951 = vmax.f32 %v887, 0.0
      %v952 = vmax.f32 %v888, 0.0
      %v953 = vmax.f32 %v889, 0.0
      %v954 = vmax.f32 %v890, 0.0
      %v955 = vmax.f32 %v891, 0.0
      %v956 = vmax.f32 %v892, 0.0
      %v957 = vmax.f32 %v893, 0.0
      %v958 = vmax.f32 %v894, 0.0
      %v959 = vmax.f32 %v895, 0.0
      %v960 = vmax.f32 %v896, 0.0
      %v961 = vmax.f32 %v897, 0.0
      %v962 = vadd.f32 %v898, %v899
      %963 = vadd.xlane.f32.xlu0 %v962
      %v964 = vpop.xlane.xlu0 %963
      %v965 = vadd.f32 %v900, %v901
      %966 = vadd.xlane.f32.xlu0 %v965
      %v967 = vpop.xlane.xlu0 %966
      %v968 = vadd.f32 %v902, %v903
      %969 = vadd.xlane.f32.xlu0 %v968
      %v970 = vpop.xlane.xlu0 %969
      %v971 = vadd.f32 %v904, %v905
      %972 = vadd.xlane.f32.xlu0 %v971
      %v973 = vpop.xlane.xlu0 %972
      %v974 = vadd.f32 %v906, %v907
      %975 = vadd.xlane.f32.xlu0 %v974
      %v976 = vpop.xlane.xlu0 %975
      %v977 = vadd.f32 %v908, %v909
      %978 = vadd.xlane.f32.xlu0 %v977
      %v979 = vpop.xlane.xlu0 %978
      %v980 = vadd.f32 %v910, %v911
      %981 = vadd.xlane.f32.xlu0 %v980
      %v982 = vpop.xlane.xlu0 %981
      %v983 = vadd.f32 %v912, %v913
      %984 = vadd.xlane.f32.xlu0 %v983
      %v985 = vpop.xlane.xlu0 %984
      %v986 = vadd.f32 %v914, %v915
      %987 = vadd.xlane.f32.xlu0 %v986
      %v988 = vpop.xlane.xlu0 %987
      %v989 = vadd.f32 %v916, %v917
      %990 = vadd.xlane.f32.xlu0 %v989
      %v991 = vpop.xlane.xlu0 %990
      %v992 = vadd.f32 %v918, %v919
      %993 = vadd.xlane.f32.xlu0 %v992
      %v994 = vpop.xlane.xlu0 %993
      %v995 = vadd.f32 %v920, %v921
      %996 = vadd.xlane.f32.xlu0 %v995
      %v997 = vpop.xlane.xlu0 %996
      %v998 = vadd.f32 %v922, %v923
      %999 = vadd.xlane.f32.xlu0 %v998
      %v1000 = vpop.xlane.xlu0 %999
      %v1001 = vadd.f32 %v924, %v925
      %1002 = vadd.xlane.f32.xlu0 %v1001
      %v1003 = vpop.xlane.xlu0 %1002
      %v1004 = vadd.f32 %v926, %v927
      %1005 = vadd.xlane.f32.xlu0 %v1004
      %v1006 = vpop.xlane.xlu0 %1005
      %v1007 = vadd.f32 %v928, %v929
      %1008 = vadd.xlane.f32.xlu0 %v1007
      %v1009 = vpop.xlane.xlu0 %1008
      %v1010 = vadd.f32 %v930, %v931
      %1011 = vadd.xlane.f32.xlu0 %v1010
      %v1012 = vpop.xlane.xlu0 %1011
      %v1013 = vadd.f32 %v932, %v933
      %1014 = vadd.xlane.f32.xlu0 %v1013
      %v1015 = vpop.xlane.xlu0 %1014
      %v1016 = vadd.f32 %v934, %v935
      %1017 = vadd.xlane.f32.xlu0 %v1016
      %v1018 = vpop.xlane.xlu0 %1017
      %v1019 = vadd.f32 %v936, %v937
      %1020 = vadd.xlane.f32.xlu0 %v1019
      %v1021 = vpop.xlane.xlu0 %1020
      %v1022 = vadd.f32 %v938, %v939
      %1023 = vadd.xlane.f32.xlu0 %v1022
      %v1024 = vpop.xlane.xlu0 %1023
      %v1025 = vadd.f32 %v940, %v941
      %1026 = vadd.xlane.f32.xlu0 %v1025
      %v1027 = vpop.xlane.xlu0 %1026
      %v1028 = vadd.f32 %v942, %v943
      %1029 = vadd.xlane.f32.xlu0 %v1028
      %v1030 = vpop.xlane.xlu0 %1029
      %v1031 = vadd.f32 %v944, %v945
      %1032 = vadd.xlane.f32.xlu0 %v1031
      %v1033 = vpop.xlane.xlu0 %1032
      %v1034 = vadd.f32 %v946, %v947
      %1035 = vadd.xlane.f32.xlu0 %v1034
      %v1036 = vpop.xlane.xlu0 %1035
      %v1037 = vadd.f32 %v948, %v949
      %1038 = vadd.xlane.f32.xlu0 %v1037
      %v1039 = vpop.xlane.xlu0 %1038
      %v1040 = vadd.f32 %v950, %v951
      %1041 = vadd.xlane.f32.xlu0 %v1040
      %v1042 = vpop.xlane.xlu0 %1041
      %v1043 = vadd.f32 %v952, %v953
      %1044 = vadd.xlane.f32.xlu0 %v1043
      %v1045 = vpop.xlane.xlu0 %1044
      %v1046 = vadd.f32 %v954, %v955
      %1047 = vadd.xlane.f32.xlu0 %v1046
      %v1048 = vpop.xlane.xlu0 %1047
      %v1049 = vadd.f32 %v956, %v957
      %1050 = vadd.xlane.f32.xlu0 %v1049
      %v1051 = vpop.xlane.xlu0 %1050
      %v1052 = vadd.f32 %v958, %v959
      %1053 = vadd.xlane.f32.xlu0 %v1052
      %v1054 = vpop.xlane.xlu0 %1053
      %v1055 = vadd.f32 %v960, %v961
      %1056 = vadd.xlane.f32.xlu0 %v1055
      %v1057 = vpop.xlane.xlu0 %1056
      %vm1058 = vcmp.ge.f32.partialorder %v964, 1.0
      %vm1059 = vcmp.ge.f32.partialorder %v967, 1.0
      %vm1060 = vcmp.ge.f32.partialorder %v970, 1.0
      %vm1061 = vcmp.ge.f32.partialorder %v973, 1.0
      %vm1062 = vcmp.ge.f32.partialorder %v976, 1.0
      %vm1063 = vcmp.ge.f32.partialorder %v979, 1.0
      %vm1064 = vcmp.ge.f32.partialorder %v982, 1.0
      %vm1065 = vcmp.ge.f32.partialorder %v985, 1.0
      %vm1066 = vcmp.ge.f32.partialorder %v988, 1.0
      %vm1067 = vcmp.ge.f32.partialorder %v991, 1.0
      %vm1068 = vcmp.ge.f32.partialorder %v994, 1.0
      %vm1069 = vcmp.ge.f32.partialorder %v997, 1.0
      %vm1070 = vcmp.ge.f32.partialorder %v1000, 1.0
      %vm1071 = vcmp.ge.f32.partialorder %v1003, 1.0
      %vm1072 = vcmp.ge.f32.partialorder %v1006, 1.0
      %vm1073 = vcmp.ge.f32.partialorder %v1009, 1.0
      %vm1074 = vcmp.ge.f32.partialorder %v1012, 1.0
      %vm1075 = vcmp.ge.f32.partialorder %v1015, 1.0
      %vm1076 = vcmp.ge.f32.partialorder %v1018, 1.0
      %vm1077 = vcmp.ge.f32.partialorder %v1021, 1.0
      %vm1078 = vcmp.ge.f32.partialorder %v1024, 1.0
      %vm1079 = vcmp.ge.f32.partialorder %v1027, 1.0
      %vm1080 = vcmp.ge.f32.partialorder %v1030, 1.0
      %vm1081 = vcmp.ge.f32.partialorder %v1033, 1.0
      %vm1082 = vcmp.ge.f32.partialorder %v1036, 1.0
      %vm1083 = vcmp.ge.f32.partialorder %v1039, 1.0
      %vm1084 = vcmp.ge.f32.partialorder %v1042, 1.0
      %vm1085 = vcmp.ge.f32.partialorder %v1045, 1.0
      %vm1086 = vcmp.ge.f32.partialorder %v1048, 1.0
      %vm1087 = vcmp.ge.f32.partialorder %v1051, 1.0
      %vm1088 = vcmp.ge.f32.partialorder %v1054, 1.0
      %vm1089 = vcmp.ge.f32.partialorder %v1057, 1.0
      %v1090 = vsel %vm1058, -0.5, -1.0
      %v1091 = vsel %vm1059, -0.5, -1.0
      %v1092 = vsel %vm1060, -0.5, -1.0
      %v1093 = vsel %vm1061, -0.5, -1.0
      %v1094 = vsel %vm1062, -0.5, -1.0
      %v1095 = vsel %vm1063, -0.5, -1.0
      %v1096 = vsel %vm1064, -0.5, -1.0
      %v1097 = vsel %vm1065, -0.5, -1.0
      %v1098 = vsel %vm1066, -0.5, -1.0
      %v1099 = vsel %vm1067, -0.5, -1.0
      %v1100 = vsel %vm1068, -0.5, -1.0
      %v1101 = vsel %vm1069, -0.5, -1.0
      %v1102 = vsel %vm1070, -0.5, -1.0
      %v1103 = vsel %vm1071, -0.5, -1.0
      %v1104 = vsel %vm1072, -0.5, -1.0
      %v1105 = vsel %vm1073, -0.5, -1.0
      %v1106 = vsel %vm1074, -0.5, -1.0
      %v1107 = vsel %vm1075, -0.5, -1.0
      %v1108 = vsel %vm1076, -0.5, -1.0
      %v1109 = vsel %vm1077, -0.5, -1.0
      %v1110 = vsel %vm1078, -0.5, -1.0
      %v1111 = vsel %vm1079, -0.5, -1.0
      %v1112 = vsel %vm1080, -0.5, -1.0
      %v1113 = vsel %vm1081, -0.5, -1.0
      %v1114 = vsel %vm1082, -0.5, -1.0
      %v1115 = vsel %vm1083, -0.5, -1.0
      %v1116 = vsel %vm1084, -0.5, -1.0
      %v1117 = vsel %vm1085, -0.5, -1.0
      %v1118 = vsel %vm1086, -0.5, -1.0
      %v1119 = vsel %vm1087, -0.5, -1.0
      %v1120 = vsel %vm1088, -0.5, -1.0
      %v1121 = vsel %vm1089, -0.5, -1.0
      %v1122 = vsel %vm1058, 0.0, -0.5
      %v1123 = vsel %vm1059, 0.0, -0.5
      %v1124 = vsel %vm1060, 0.0, -0.5
      %v1125 = vsel %vm1061, 0.0, -0.5
      %v1126 = vsel %vm1062, 0.0, -0.5
      %v1127 = vsel %vm1063, 0.0, -0.5
      %v1128 = vsel %vm1064, 0.0, -0.5
      %v1129 = vsel %vm1065, 0.0, -0.5
      %v1130 = vsel %vm1066, 0.0, -0.5
      %v1131 = vsel %vm1067, 0.0, -0.5
      %v1132 = vsel %vm1068, 0.0, -0.5
      %v1133 = vsel %vm1069, 0.0, -0.5
      %v1134 = vsel %vm1070, 0.0, -0.5
      %v1135 = vsel %vm1071, 0.0, -0.5
      %v1136 = vsel %vm1072, 0.0, -0.5
      %v1137 = vsel %vm1073, 0.0, -0.5
      %v1138 = vsel %vm1074, 0.0, -0.5
      %v1139 = vsel %vm1075, 0.0, -0.5
      %v1140 = vsel %vm1076, 0.0, -0.5
      %v1141 = vsel %vm1077, 0.0, -0.5
      %v1142 = vsel %vm1078, 0.0, -0.5
      %v1143 = vsel %vm1079, 0.0, -0.5
      %v1144 = vsel %vm1080, 0.0, -0.5
      %v1145 = vsel %vm1081, 0.0, -0.5
      %v1146 = vsel %vm1082, 0.0, -0.5
      %v1147 = vsel %vm1083, 0.0, -0.5
      %v1148 = vsel %vm1084, 0.0, -0.5
      %v1149 = vsel %vm1085, 0.0, -0.5
      %v1150 = vsel %vm1086, 0.0, -0.5
      %v1151 = vsel %vm1087, 0.0, -0.5
      %v1152 = vsel %vm1088, 0.0, -0.5
      %v1153 = vsel %vm1089, 0.0, -0.5
      %v1154 = vadd.f32 %v1090, %v1122
      %v1155 = vadd.f32 %v1091, %v1123
      %v1156 = vadd.f32 %v1092, %v1124
      %v1157 = vadd.f32 %v1093, %v1125
      %v1158 = vadd.f32 %v1094, %v1126
      %v1159 = vadd.f32 %v1095, %v1127
      %v1160 = vadd.f32 %v1096, %v1128
      %v1161 = vadd.f32 %v1097, %v1129
      %v1162 = vadd.f32 %v1098, %v1130
      %v1163 = vadd.f32 %v1099, %v1131
      %v1164 = vadd.f32 %v1100, %v1132
      %v1165 = vadd.f32 %v1101, %v1133
      %v1166 = vadd.f32 %v1102, %v1134
      %v1167 = vadd.f32 %v1103, %v1135
      %v1168 = vadd.f32 %v1104, %v1136
      %v1169 = vadd.f32 %v1105, %v1137
      %v1170 = vadd.f32 %v1106, %v1138
      %v1171 = vadd.f32 %v1107, %v1139
      %v1172 = vadd.f32 %v1108, %v1140
      %v1173 = vadd.f32 %v1109, %v1141
      %v1174 = vadd.f32 %v1110, %v1142
      %v1175 = vadd.f32 %v1111, %v1143
      %v1176 = vadd.f32 %v1112, %v1144
      %v1177 = vadd.f32 %v1113, %v1145
      %v1178 = vadd.f32 %v1114, %v1146
      %v1179 = vadd.f32 %v1115, %v1147
      %v1180 = vadd.f32 %v1116, %v1148
      %v1181 = vadd.f32 %v1117, %v1149
      %v1182 = vadd.f32 %v1118, %v1150
      %v1183 = vadd.f32 %v1119, %v1151
      %v1184 = vadd.f32 %v1120, %v1152
      %v1185 = vadd.f32 %v1121, %v1153
      %v1186 = vmul.f32 %v1154, 0.5
      %v1187 = vmul.f32 %v1155, 0.5
      %v1188 = vmul.f32 %v1156, 0.5
      %v1189 = vmul.f32 %v1157, 0.5
      %v1190 = vmul.f32 %v1158, 0.5
      %v1191 = vmul.f32 %v1159, 0.5
      %v1192 = vmul.f32 %v1160, 0.5
      %v1193 = vmul.f32 %v1161, 0.5
      %v1194 = vmul.f32 %v1162, 0.5
      %v1195 = vmul.f32 %v1163, 0.5
      %v1196 = vmul.f32 %v1164, 0.5
      %v1197 = vmul.f32 %v1165, 0.5
      %v1198 = vmul.f32 %v1166, 0.5
      %v1199 = vmul.f32 %v1167, 0.5
      %v1200 = vmul.f32 %v1168, 0.5
      %v1201 = vmul.f32 %v1169, 0.5
      %v1202 = vmul.f32 %v1170, 0.5
      %v1203 = vmul.f32 %v1171, 0.5
      %v1204 = vmul.f32 %v1172, 0.5
      %v1205 = vmul.f32 %v1173, 0.5
      %v1206 = vmul.f32 %v1174, 0.5
      %v1207 = vmul.f32 %v1175, 0.5
      %v1208 = vmul.f32 %v1176, 0.5
      %v1209 = vmul.f32 %v1177, 0.5
      %v1210 = vmul.f32 %v1178, 0.5
      %v1211 = vmul.f32 %v1179, 0.5
      %v1212 = vmul.f32 %v1180, 0.5
      %v1213 = vmul.f32 %v1181, 0.5
      %v1214 = vmul.f32 %v1182, 0.5
      %v1215 = vmul.f32 %v1183, 0.5
      %v1216 = vmul.f32 %v1184, 0.5
      %v1217 = vmul.f32 %v1185, 0.5
      %v1218 = vsub.f32 %v770, %v1186
      %v1219 = vsub.f32 %v771, %v1186
      %v1220 = vsub.f32 %v772, %v1187
      %v1221 = vsub.f32 %v773, %v1187
      %v1222 = vsub.f32 %v774, %v1188
      %v1223 = vsub.f32 %v775, %v1188
      %v1224 = vsub.f32 %v776, %v1189
      %v1225 = vsub.f32 %v777, %v1189
      %v1226 = vsub.f32 %v778, %v1190
      %v1227 = vsub.f32 %v779, %v1190
      %v1228 = vsub.f32 %v780, %v1191
      %v1229 = vsub.f32 %v781, %v1191
      %v1230 = vsub.f32 %v782, %v1192
      %v1231 = vsub.f32 %v783, %v1192
      %v1232 = vsub.f32 %v784, %v1193
      %v1233 = vsub.f32 %v785, %v1193
      %v1234 = vsub.f32 %v786, %v1194
      %v1235 = vsub.f32 %v787, %v1194
      %v1236 = vsub.f32 %v788, %v1195
      %v1237 = vsub.f32 %v789, %v1195
      %v1238 = vsub.f32 %v790, %v1196
      %v1239 = vsub.f32 %v791, %v1196
      %v1240 = vsub.f32 %v792, %v1197
      %v1241 = vsub.f32 %v793, %v1197
      %v1242 = vsub.f32 %v794, %v1198
      %v1243 = vsub.f32 %v795, %v1198
      %v1244 = vsub.f32 %v796, %v1199
      %v1245 = vsub.f32 %v797, %v1199
      %v1246 = vsub.f32 %v798, %v1200
      %v1247 = vsub.f32 %v799, %v1200
      %v1248 = vsub.f32 %v800, %v1201
      %v1249 = vsub.f32 %v801, %v1201
      %v1250 = vsub.f32 %v802, %v1202
      %v1251 = vsub.f32 %v803, %v1202
      %v1252 = vsub.f32 %v804, %v1203
      %v1253 = vsub.f32 %v805, %v1203
      %v1254 = vsub.f32 %v806, %v1204
      %v1255 = vsub.f32 %v807, %v1204
      %v1256 = vsub.f32 %v808, %v1205
      %v1257 = vsub.f32 %v809, %v1205
      %v1258 = vsub.f32 %v810, %v1206
      %v1259 = vsub.f32 %v811, %v1206
      %v1260 = vsub.f32 %v812, %v1207
      %v1261 = vsub.f32 %v813, %v1207
      %v1262 = vsub.f32 %v814, %v1208
      %v1263 = vsub.f32 %v815, %v1208
      %v1264 = vsub.f32 %v816, %v1209
      %v1265 = vsub.f32 %v817, %v1209
      %v1266 = vsub.f32 %v818, %v1210
      %v1267 = vsub.f32 %v819, %v1210
      %v1268 = vsub.f32 %v820, %v1211
      %v1269 = vsub.f32 %v821, %v1211
      %v1270 = vsub.f32 %v822, %v1212
      %v1271 = vsub.f32 %v823, %v1212
      %v1272 = vsub.f32 %v824, %v1213
      %v1273 = vsub.f32 %v825, %v1213
      %v1274 = vsub.f32 %v826, %v1214
      %v1275 = vsub.f32 %v827, %v1214
      %v1276 = vsub.f32 %v828, %v1215
      %v1277 = vsub.f32 %v829, %v1215
      %v1278 = vsub.f32 %v830, %v1216
      %v1279 = vsub.f32 %v831, %v1216
      %v1280 = vsub.f32 %v832, %v1217
      %v1281 = vsub.f32 %v833, %v1217
      %v1282 = vmax.f32 %v1218, 0.0
      %v1283 = vmax.f32 %v1219, 0.0
      %v1284 = vmax.f32 %v1220, 0.0
      %v1285 = vmax.f32 %v1221, 0.0
      %v1286 = vmax.f32 %v1222, 0.0
      %v1287 = vmax.f32 %v1223, 0.0
      %v1288 = vmax.f32 %v1224, 0.0
      %v1289 = vmax.f32 %v1225, 0.0
      %v1290 = vmax.f32 %v1226, 0.0
      %v1291 = vmax.f32 %v1227, 0.0
      %v1292 = vmax.f32 %v1228, 0.0
      %v1293 = vmax.f32 %v1229, 0.0
      %v1294 = vmax.f32 %v1230, 0.0
      %v1295 = vmax.f32 %v1231, 0.0
      %v1296 = vmax.f32 %v1232, 0.0
      %v1297 = vmax.f32 %v1233, 0.0
      %v1298 = vmax.f32 %v1234, 0.0
      %v1299 = vmax.f32 %v1235, 0.0
      %v1300 = vmax.f32 %v1236, 0.0
      %v1301 = vmax.f32 %v1237, 0.0
      %v1302 = vmax.f32 %v1238, 0.0
      %v1303 = vmax.f32 %v1239, 0.0
      %v1304 = vmax.f32 %v1240, 0.0
      %v1305 = vmax.f32 %v1241, 0.0
      %v1306 = vmax.f32 %v1242, 0.0
      %v1307 = vmax.f32 %v1243, 0.0
      %v1308 = vmax.f32 %v1244, 0.0
      %v1309 = vmax.f32 %v1245, 0.0
      %v1310 = vmax.f32 %v1246, 0.0
      %v1311 = vmax.f32 %v1247, 0.0
      %v1312 = vmax.f32 %v1248, 0.0
      %v1313 = vmax.f32 %v1249, 0.0
      %v1314 = vmax.f32 %v1250, 0.0
      %v1315 = vmax.f32 %v1251, 0.0
      %v1316 = vmax.f32 %v1252, 0.0
      %v1317 = vmax.f32 %v1253, 0.0
      %v1318 = vmax.f32 %v1254, 0.0
      %v1319 = vmax.f32 %v1255, 0.0
      %v1320 = vmax.f32 %v1256, 0.0
      %v1321 = vmax.f32 %v1257, 0.0
      %v1322 = vmax.f32 %v1258, 0.0
      %v1323 = vmax.f32 %v1259, 0.0
      %v1324 = vmax.f32 %v1260, 0.0
      %v1325 = vmax.f32 %v1261, 0.0
      %v1326 = vmax.f32 %v1262, 0.0
      %v1327 = vmax.f32 %v1263, 0.0
      %v1328 = vmax.f32 %v1264, 0.0
      %v1329 = vmax.f32 %v1265, 0.0
      %v1330 = vmax.f32 %v1266, 0.0
      %v1331 = vmax.f32 %v1267, 0.0
      %v1332 = vmax.f32 %v1268, 0.0
      %v1333 = vmax.f32 %v1269, 0.0
      %v1334 = vmax.f32 %v1270, 0.0
      %v1335 = vmax.f32 %v1271, 0.0
      %v1336 = vmax.f32 %v1272, 0.0
      %v1337 = vmax.f32 %v1273, 0.0
      %v1338 = vmax.f32 %v1274, 0.0
      %v1339 = vmax.f32 %v1275, 0.0
      %v1340 = vmax.f32 %v1276, 0.0
      %v1341 = vmax.f32 %v1277, 0.0
      %v1342 = vmax.f32 %v1278, 0.0
      %v1343 = vmax.f32 %v1279, 0.0
      %v1344 = vmax.f32 %v1280, 0.0
      %v1345 = vmax.f32 %v1281, 0.0
      %v1346 = vadd.f32 %v1282, %v1283
      %1347 = vadd.xlane.f32.xlu0 %v1346
      %v1348 = vpop.xlane.xlu0 %1347
      %v1349 = vadd.f32 %v1284, %v1285
      %1350 = vadd.xlane.f32.xlu0 %v1349
      %v1351 = vpop.xlane.xlu0 %1350
      %v1352 = vadd.f32 %v1286, %v1287
      %1353 = vadd.xlane.f32.xlu0 %v1352
      %v1354 = vpop.xlane.xlu0 %1353
      %v1355 = vadd.f32 %v1288, %v1289
      %1356 = vadd.xlane.f32.xlu0 %v1355
      %v1357 = vpop.xlane.xlu0 %1356
      %v1358 = vadd.f32 %v1290, %v1291
      %1359 = vadd.xlane.f32.xlu0 %v1358
      %v1360 = vpop.xlane.xlu0 %1359
      %v1361 = vadd.f32 %v1292, %v1293
      %1362 = vadd.xlane.f32.xlu0 %v1361
      %v1363 = vpop.xlane.xlu0 %1362
      %v1364 = vadd.f32 %v1294, %v1295
      %1365 = vadd.xlane.f32.xlu0 %v1364
      %v1366 = vpop.xlane.xlu0 %1365
      %v1367 = vadd.f32 %v1296, %v1297
      %1368 = vadd.xlane.f32.xlu0 %v1367
      %v1369 = vpop.xlane.xlu0 %1368
      %v1370 = vadd.f32 %v1298, %v1299
      %1371 = vadd.xlane.f32.xlu0 %v1370
      %v1372 = vpop.xlane.xlu0 %1371
      %v1373 = vadd.f32 %v1300, %v1301
      %1374 = vadd.xlane.f32.xlu0 %v1373
      %v1375 = vpop.xlane.xlu0 %1374
      %v1376 = vadd.f32 %v1302, %v1303
      %1377 = vadd.xlane.f32.xlu0 %v1376
      %v1378 = vpop.xlane.xlu0 %1377
      %v1379 = vadd.f32 %v1304, %v1305
      %1380 = vadd.xlane.f32.xlu0 %v1379
      %v1381 = vpop.xlane.xlu0 %1380
      %v1382 = vadd.f32 %v1306, %v1307
      %1383 = vadd.xlane.f32.xlu0 %v1382
      %v1384 = vpop.xlane.xlu0 %1383
      %v1385 = vadd.f32 %v1308, %v1309
      %1386 = vadd.xlane.f32.xlu0 %v1385
      %v1387 = vpop.xlane.xlu0 %1386
      %v1388 = vadd.f32 %v1310, %v1311
      %1389 = vadd.xlane.f32.xlu0 %v1388
      %v1390 = vpop.xlane.xlu0 %1389
      %v1391 = vadd.f32 %v1312, %v1313
      %1392 = vadd.xlane.f32.xlu0 %v1391
      %v1393 = vpop.xlane.xlu0 %1392
      %v1394 = vadd.f32 %v1314, %v1315
      %1395 = vadd.xlane.f32.xlu0 %v1394
      %v1396 = vpop.xlane.xlu0 %1395
      %v1397 = vadd.f32 %v1316, %v1317
      %1398 = vadd.xlane.f32.xlu0 %v1397
      %v1399 = vpop.xlane.xlu0 %1398
      %v1400 = vadd.f32 %v1318, %v1319
      %1401 = vadd.xlane.f32.xlu0 %v1400
      %v1402 = vpop.xlane.xlu0 %1401
      %v1403 = vadd.f32 %v1320, %v1321
      %1404 = vadd.xlane.f32.xlu0 %v1403
      %v1405 = vpop.xlane.xlu0 %1404
      %v1406 = vadd.f32 %v1322, %v1323
      %1407 = vadd.xlane.f32.xlu0 %v1406
      %v1408 = vpop.xlane.xlu0 %1407
      %v1409 = vadd.f32 %v1324, %v1325
      %1410 = vadd.xlane.f32.xlu0 %v1409
      %v1411 = vpop.xlane.xlu0 %1410
      %v1412 = vadd.f32 %v1326, %v1327
      %1413 = vadd.xlane.f32.xlu0 %v1412
      %v1414 = vpop.xlane.xlu0 %1413
      %v1415 = vadd.f32 %v1328, %v1329
      %1416 = vadd.xlane.f32.xlu0 %v1415
      %v1417 = vpop.xlane.xlu0 %1416
      %v1418 = vadd.f32 %v1330, %v1331
      %1419 = vadd.xlane.f32.xlu0 %v1418
      %v1420 = vpop.xlane.xlu0 %1419
      %v1421 = vadd.f32 %v1332, %v1333
      %1422 = vadd.xlane.f32.xlu0 %v1421
      %v1423 = vpop.xlane.xlu0 %1422
      %v1424 = vadd.f32 %v1334, %v1335
      %1425 = vadd.xlane.f32.xlu0 %v1424
      %v1426 = vpop.xlane.xlu0 %1425
      %v1427 = vadd.f32 %v1336, %v1337
      %1428 = vadd.xlane.f32.xlu0 %v1427
      %v1429 = vpop.xlane.xlu0 %1428
      %v1430 = vadd.f32 %v1338, %v1339
      %1431 = vadd.xlane.f32.xlu0 %v1430
      %v1432 = vpop.xlane.xlu0 %1431
      %v1433 = vadd.f32 %v1340, %v1341
      %1434 = vadd.xlane.f32.xlu0 %v1433
      %v1435 = vpop.xlane.xlu0 %1434
      %v1436 = vadd.f32 %v1342, %v1343
      %1437 = vadd.xlane.f32.xlu0 %v1436
      %v1438 = vpop.xlane.xlu0 %1437
      %v1439 = vadd.f32 %v1344, %v1345
      %1440 = vadd.xlane.f32.xlu0 %v1439
      %v1441 = vpop.xlane.xlu0 %1440
      %vm1442 = vcmp.ge.f32.partialorder %v1348, 1.0
      %vm1443 = vcmp.ge.f32.partialorder %v1351, 1.0
      %vm1444 = vcmp.ge.f32.partialorder %v1354, 1.0
      %vm1445 = vcmp.ge.f32.partialorder %v1357, 1.0
      %vm1446 = vcmp.ge.f32.partialorder %v1360, 1.0
      %vm1447 = vcmp.ge.f32.partialorder %v1363, 1.0
      %vm1448 = vcmp.ge.f32.partialorder %v1366, 1.0
      %vm1449 = vcmp.ge.f32.partialorder %v1369, 1.0
      %vm1450 = vcmp.ge.f32.partialorder %v1372, 1.0
      %vm1451 = vcmp.ge.f32.partialorder %v1375, 1.0
      %vm1452 = vcmp.ge.f32.partialorder %v1378, 1.0
      %vm1453 = vcmp.ge.f32.partialorder %v1381, 1.0
      %vm1454 = vcmp.ge.f32.partialorder %v1384, 1.0
      %vm1455 = vcmp.ge.f32.partialorder %v1387, 1.0
      %vm1456 = vcmp.ge.f32.partialorder %v1390, 1.0
      %vm1457 = vcmp.ge.f32.partialorder %v1393, 1.0
      %vm1458 = vcmp.ge.f32.partialorder %v1396, 1.0
      %vm1459 = vcmp.ge.f32.partialorder %v1399, 1.0
      %vm1460 = vcmp.ge.f32.partialorder %v1402, 1.0
      %vm1461 = vcmp.ge.f32.partialorder %v1405, 1.0
      %vm1462 = vcmp.ge.f32.partialorder %v1408, 1.0
      %vm1463 = vcmp.ge.f32.partialorder %v1411, 1.0
      %vm1464 = vcmp.ge.f32.partialorder %v1414, 1.0
      %vm1465 = vcmp.ge.f32.partialorder %v1417, 1.0
      %vm1466 = vcmp.ge.f32.partialorder %v1420, 1.0
      %vm1467 = vcmp.ge.f32.partialorder %v1423, 1.0
      %vm1468 = vcmp.ge.f32.partialorder %v1426, 1.0
      %vm1469 = vcmp.ge.f32.partialorder %v1429, 1.0
      %vm1470 = vcmp.ge.f32.partialorder %v1432, 1.0
      %vm1471 = vcmp.ge.f32.partialorder %v1435, 1.0
      %vm1472 = vcmp.ge.f32.partialorder %v1438, 1.0
      %vm1473 = vcmp.ge.f32.partialorder %v1441, 1.0
      %v1474 = vsel %vm1442, %v1186, %v1090
      %v1475 = vsel %vm1443, %v1187, %v1091
      %v1476 = vsel %vm1444, %v1188, %v1092
      %v1477 = vsel %vm1445, %v1189, %v1093
      %v1478 = vsel %vm1446, %v1190, %v1094
      %v1479 = vsel %vm1447, %v1191, %v1095
      %v1480 = vsel %vm1448, %v1192, %v1096
      %v1481 = vsel %vm1449, %v1193, %v1097
      %v1482 = vsel %vm1450, %v1194, %v1098
      %v1483 = vsel %vm1451, %v1195, %v1099
      %v1484 = vsel %vm1452, %v1196, %v1100
      %v1485 = vsel %vm1453, %v1197, %v1101
      %v1486 = vsel %vm1454, %v1198, %v1102
      %v1487 = vsel %vm1455, %v1199, %v1103
      %v1488 = vsel %vm1456, %v1200, %v1104
      %v1489 = vsel %vm1457, %v1201, %v1105
      %v1490 = vsel %vm1458, %v1202, %v1106
      %v1491 = vsel %vm1459, %v1203, %v1107
      %v1492 = vsel %vm1460, %v1204, %v1108
      %v1493 = vsel %vm1461, %v1205, %v1109
      %v1494 = vsel %vm1462, %v1206, %v1110
      %v1495 = vsel %vm1463, %v1207, %v1111
      %v1496 = vsel %vm1464, %v1208, %v1112
      %v1497 = vsel %vm1465, %v1209, %v1113
      %v1498 = vsel %vm1466, %v1210, %v1114
      %v1499 = vsel %vm1467, %v1211, %v1115
      %v1500 = vsel %vm1468, %v1212, %v1116
      %v1501 = vsel %vm1469, %v1213, %v1117
      %v1502 = vsel %vm1470, %v1214, %v1118
      %v1503 = vsel %vm1471, %v1215, %v1119
      %v1504 = vsel %vm1472, %v1216, %v1120
      %v1505 = vsel %vm1473, %v1217, %v1121
      %v1506 = vsel %vm1442, %v1122, %v1186
      %v1507 = vsel %vm1443, %v1123, %v1187
      %v1508 = vsel %vm1444, %v1124, %v1188
      %v1509 = vsel %vm1445, %v1125, %v1189
      %v1510 = vsel %vm1446, %v1126, %v1190
      %v1511 = vsel %vm1447, %v1127, %v1191
      %v1512 = vsel %vm1448, %v1128, %v1192
      %v1513 = vsel %vm1449, %v1129, %v1193
      %v1514 = vsel %vm1450, %v1130, %v1194
      %v1515 = vsel %vm1451, %v1131, %v1195
      %v1516 = vsel %vm1452, %v1132, %v1196
      %v1517 = vsel %vm1453, %v1133, %v1197
      %v1518 = vsel %vm1454, %v1134, %v1198
      %v1519 = vsel %vm1455, %v1135, %v1199
      %v1520 = vsel %vm1456, %v1136, %v1200
      %v1521 = vsel %vm1457, %v1137, %v1201
      %v1522 = vsel %vm1458, %v1138, %v1202
      %v1523 = vsel %vm1459, %v1139, %v1203
      %v1524 = vsel %vm1460, %v1140, %v1204
      %v1525 = vsel %vm1461, %v1141, %v1205
      %v1526 = vsel %vm1462, %v1142, %v1206
      %v1527 = vsel %vm1463, %v1143, %v1207
      %v1528 = vsel %vm1464, %v1144, %v1208
      %v1529 = vsel %vm1465, %v1145, %v1209
      %v1530 = vsel %vm1466, %v1146, %v1210
      %v1531 = vsel %vm1467, %v1147, %v1211
      %v1532 = vsel %vm1468, %v1148, %v1212
      %v1533 = vsel %vm1469, %v1149, %v1213
      %v1534 = vsel %vm1470, %v1150, %v1214
      %v1535 = vsel %vm1471, %v1151, %v1215
      %v1536 = vsel %vm1472, %v1152, %v1216
      %v1537 = vsel %vm1473, %v1153, %v1217
      %v1538 = vadd.f32 %v1474, %v1506
      %v1539 = vadd.f32 %v1475, %v1507
      %v1540 = vadd.f32 %v1476, %v1508
      %v1541 = vadd.f32 %v1477, %v1509
      %v1542 = vadd.f32 %v1478, %v1510
      %v1543 = vadd.f32 %v1479, %v1511
      %v1544 = vadd.f32 %v1480, %v1512
      %v1545 = vadd.f32 %v1481, %v1513
      %v1546 = vadd.f32 %v1482, %v1514
      %v1547 = vadd.f32 %v1483, %v1515
      %v1548 = vadd.f32 %v1484, %v1516
      %v1549 = vadd.f32 %v1485, %v1517
      %v1550 = vadd.f32 %v1486, %v1518
      %v1551 = vadd.f32 %v1487, %v1519
      %v1552 = vadd.f32 %v1488, %v1520
      %v1553 = vadd.f32 %v1489, %v1521
      %v1554 = vadd.f32 %v1490, %v1522
      %v1555 = vadd.f32 %v1491, %v1523
      %v1556 = vadd.f32 %v1492, %v1524
      %v1557 = vadd.f32 %v1493, %v1525
      %v1558 = vadd.f32 %v1494, %v1526
      %v1559 = vadd.f32 %v1495, %v1527
      %v1560 = vadd.f32 %v1496, %v1528
      %v1561 = vadd.f32 %v1497, %v1529
      %v1562 = vadd.f32 %v1498, %v1530
      %v1563 = vadd.f32 %v1499, %v1531
      %v1564 = vadd.f32 %v1500, %v1532
      %v1565 = vadd.f32 %v1501, %v1533
      %v1566 = vadd.f32 %v1502, %v1534
      %v1567 = vadd.f32 %v1503, %v1535
      %v1568 = vadd.f32 %v1504, %v1536
      %v1569 = vadd.f32 %v1505, %v1537
      %v1570 = vmul.f32 %v1538, 0.5
      %v1571 = vmul.f32 %v1539, 0.5
      %v1572 = vmul.f32 %v1540, 0.5
      %v1573 = vmul.f32 %v1541, 0.5
      %v1574 = vmul.f32 %v1542, 0.5
      %v1575 = vmul.f32 %v1543, 0.5
      %v1576 = vmul.f32 %v1544, 0.5
      %v1577 = vmul.f32 %v1545, 0.5
      %v1578 = vmul.f32 %v1546, 0.5
      %v1579 = vmul.f32 %v1547, 0.5
      %v1580 = vmul.f32 %v1548, 0.5
      %v1581 = vmul.f32 %v1549, 0.5
      %v1582 = vmul.f32 %v1550, 0.5
      %v1583 = vmul.f32 %v1551, 0.5
      %v1584 = vmul.f32 %v1552, 0.5
      %v1585 = vmul.f32 %v1553, 0.5
      %v1586 = vmul.f32 %v1554, 0.5
      %v1587 = vmul.f32 %v1555, 0.5
      %v1588 = vmul.f32 %v1556, 0.5
      %v1589 = vmul.f32 %v1557, 0.5
      %v1590 = vmul.f32 %v1558, 0.5
      %v1591 = vmul.f32 %v1559, 0.5
      %v1592 = vmul.f32 %v1560, 0.5
      %v1593 = vmul.f32 %v1561, 0.5
      %v1594 = vmul.f32 %v1562, 0.5
      %v1595 = vmul.f32 %v1563, 0.5
      %v1596 = vmul.f32 %v1564, 0.5
      %v1597 = vmul.f32 %v1565, 0.5
      %v1598 = vmul.f32 %v1566, 0.5
      %v1599 = vmul.f32 %v1567, 0.5
      %v1600 = vmul.f32 %v1568, 0.5
      %v1601 = vmul.f32 %v1569, 0.5
      %v1602 = vsub.f32 %v770, %v1570
      %v1603 = vsub.f32 %v771, %v1570
      %v1604 = vsub.f32 %v772, %v1571
      %v1605 = vsub.f32 %v773, %v1571
      %v1606 = vsub.f32 %v774, %v1572
      %v1607 = vsub.f32 %v775, %v1572
      %v1608 = vsub.f32 %v776, %v1573
      %v1609 = vsub.f32 %v777, %v1573
      %v1610 = vsub.f32 %v778, %v1574
      %v1611 = vsub.f32 %v779, %v1574
      %v1612 = vsub.f32 %v780, %v1575
      %v1613 = vsub.f32 %v781, %v1575
      %v1614 = vsub.f32 %v782, %v1576
      %v1615 = vsub.f32 %v783, %v1576
      %v1616 = vsub.f32 %v784, %v1577
      %v1617 = vsub.f32 %v785, %v1577
      %v1618 = vsub.f32 %v786, %v1578
      %v1619 = vsub.f32 %v787, %v1578
      %v1620 = vsub.f32 %v788, %v1579
      %v1621 = vsub.f32 %v789, %v1579
      %v1622 = vsub.f32 %v790, %v1580
      %v1623 = vsub.f32 %v791, %v1580
      %v1624 = vsub.f32 %v792, %v1581
      %v1625 = vsub.f32 %v793, %v1581
      %v1626 = vsub.f32 %v794, %v1582
      %v1627 = vsub.f32 %v795, %v1582
      %v1628 = vsub.f32 %v796, %v1583
      %v1629 = vsub.f32 %v797, %v1583
      %v1630 = vsub.f32 %v798, %v1584
      %v1631 = vsub.f32 %v799, %v1584
      %v1632 = vsub.f32 %v800, %v1585
      %v1633 = vsub.f32 %v801, %v1585
      %v1634 = vsub.f32 %v802, %v1586
      %v1635 = vsub.f32 %v803, %v1586
      %v1636 = vsub.f32 %v804, %v1587
      %v1637 = vsub.f32 %v805, %v1587
      %v1638 = vsub.f32 %v806, %v1588
      %v1639 = vsub.f32 %v807, %v1588
      %v1640 = vsub.f32 %v808, %v1589
      %v1641 = vsub.f32 %v809, %v1589
      %v1642 = vsub.f32 %v810, %v1590
      %v1643 = vsub.f32 %v811, %v1590
      %v1644 = vsub.f32 %v812, %v1591
      %v1645 = vsub.f32 %v813, %v1591
      %v1646 = vsub.f32 %v814, %v1592
      %v1647 = vsub.f32 %v815, %v1592
      %v1648 = vsub.f32 %v816, %v1593
      %v1649 = vsub.f32 %v817, %v1593
      %v1650 = vsub.f32 %v818, %v1594
      %v1651 = vsub.f32 %v819, %v1594
      %v1652 = vsub.f32 %v820, %v1595
      %v1653 = vsub.f32 %v821, %v1595
      %v1654 = vsub.f32 %v822, %v1596
      %v1655 = vsub.f32 %v823, %v1596
      %v1656 = vsub.f32 %v824, %v1597
      %v1657 = vsub.f32 %v825, %v1597
      %v1658 = vsub.f32 %v826, %v1598
      %v1659 = vsub.f32 %v827, %v1598
      %v1660 = vsub.f32 %v828, %v1599
      %v1661 = vsub.f32 %v829, %v1599
      %v1662 = vsub.f32 %v830, %v1600
      %v1663 = vsub.f32 %v831, %v1600
      %v1664 = vsub.f32 %v832, %v1601
      %v1665 = vsub.f32 %v833, %v1601
      %v1666 = vmax.f32 %v1602, 0.0
      %v1667 = vmax.f32 %v1603, 0.0
      %v1668 = vmax.f32 %v1604, 0.0
      %v1669 = vmax.f32 %v1605, 0.0
      %v1670 = vmax.f32 %v1606, 0.0
      %v1671 = vmax.f32 %v1607, 0.0
      %v1672 = vmax.f32 %v1608, 0.0
      %v1673 = vmax.f32 %v1609, 0.0
      %v1674 = vmax.f32 %v1610, 0.0
      %v1675 = vmax.f32 %v1611, 0.0
      %v1676 = vmax.f32 %v1612, 0.0
      %v1677 = vmax.f32 %v1613, 0.0
      %v1678 = vmax.f32 %v1614, 0.0
      %v1679 = vmax.f32 %v1615, 0.0
      %v1680 = vmax.f32 %v1616, 0.0
      %v1681 = vmax.f32 %v1617, 0.0
      %v1682 = vmax.f32 %v1618, 0.0
      %v1683 = vmax.f32 %v1619, 0.0
      %v1684 = vmax.f32 %v1620, 0.0
      %v1685 = vmax.f32 %v1621, 0.0
      %v1686 = vmax.f32 %v1622, 0.0
      %v1687 = vmax.f32 %v1623, 0.0
      %v1688 = vmax.f32 %v1624, 0.0
      %v1689 = vmax.f32 %v1625, 0.0
      %v1690 = vmax.f32 %v1626, 0.0
      %v1691 = vmax.f32 %v1627, 0.0
      %v1692 = vmax.f32 %v1628, 0.0
      %v1693 = vmax.f32 %v1629, 0.0
      %v1694 = vmax.f32 %v1630, 0.0
      %v1695 = vmax.f32 %v1631, 0.0
      %v1696 = vmax.f32 %v1632, 0.0
      %v1697 = vmax.f32 %v1633, 0.0
      %v1698 = vmax.f32 %v1634, 0.0
      %v1699 = vmax.f32 %v1635, 0.0
      %v1700 = vmax.f32 %v1636, 0.0
      %v1701 = vmax.f32 %v1637, 0.0
      %v1702 = vmax.f32 %v1638, 0.0
      %v1703 = vmax.f32 %v1639, 0.0
      %v1704 = vmax.f32 %v1640, 0.0
      %v1705 = vmax.f32 %v1641, 0.0
      %v1706 = vmax.f32 %v1642, 0.0
      %v1707 = vmax.f32 %v1643, 0.0
      %v1708 = vmax.f32 %v1644, 0.0
      %v1709 = vmax.f32 %v1645, 0.0
      %v1710 = vmax.f32 %v1646, 0.0
      %v1711 = vmax.f32 %v1647, 0.0
      %v1712 = vmax.f32 %v1648, 0.0
      %v1713 = vmax.f32 %v1649, 0.0
      %v1714 = vmax.f32 %v1650, 0.0
      %v1715 = vmax.f32 %v1651, 0.0
      %v1716 = vmax.f32 %v1652, 0.0
      %v1717 = vmax.f32 %v1653, 0.0
      %v1718 = vmax.f32 %v1654, 0.0
      %v1719 = vmax.f32 %v1655, 0.0
      %v1720 = vmax.f32 %v1656, 0.0
      %v1721 = vmax.f32 %v1657, 0.0
      %v1722 = vmax.f32 %v1658, 0.0
      %v1723 = vmax.f32 %v1659, 0.0
      %v1724 = vmax.f32 %v1660, 0.0
      %v1725 = vmax.f32 %v1661, 0.0
      %v1726 = vmax.f32 %v1662, 0.0
      %v1727 = vmax.f32 %v1663, 0.0
      %v1728 = vmax.f32 %v1664, 0.0
      %v1729 = vmax.f32 %v1665, 0.0
      %v1730 = vadd.f32 %v1666, %v1667
      %1731 = vadd.xlane.f32.xlu0 %v1730
      %v1732 = vpop.xlane.xlu0 %1731
      %v1733 = vadd.f32 %v1668, %v1669
      %1734 = vadd.xlane.f32.xlu0 %v1733
      %v1735 = vpop.xlane.xlu0 %1734
      %v1736 = vadd.f32 %v1670, %v1671
      %1737 = vadd.xlane.f32.xlu0 %v1736
      %v1738 = vpop.xlane.xlu0 %1737
      %v1739 = vadd.f32 %v1672, %v1673
      %1740 = vadd.xlane.f32.xlu0 %v1739
      %v1741 = vpop.xlane.xlu0 %1740
      %v1742 = vadd.f32 %v1674, %v1675
      %1743 = vadd.xlane.f32.xlu0 %v1742
      %v1744 = vpop.xlane.xlu0 %1743
      %v1745 = vadd.f32 %v1676, %v1677
      %1746 = vadd.xlane.f32.xlu0 %v1745
      %v1747 = vpop.xlane.xlu0 %1746
      %v1748 = vadd.f32 %v1678, %v1679
      %1749 = vadd.xlane.f32.xlu0 %v1748
      %v1750 = vpop.xlane.xlu0 %1749
      %v1751 = vadd.f32 %v1680, %v1681
      %1752 = vadd.xlane.f32.xlu0 %v1751
      %v1753 = vpop.xlane.xlu0 %1752
      %v1754 = vadd.f32 %v1682, %v1683
      %1755 = vadd.xlane.f32.xlu0 %v1754
      %v1756 = vpop.xlane.xlu0 %1755
      %v1757 = vadd.f32 %v1684, %v1685
      %1758 = vadd.xlane.f32.xlu0 %v1757
      %v1759 = vpop.xlane.xlu0 %1758
      %v1760 = vadd.f32 %v1686, %v1687
      %1761 = vadd.xlane.f32.xlu0 %v1760
      %v1762 = vpop.xlane.xlu0 %1761
      %v1763 = vadd.f32 %v1688, %v1689
      %1764 = vadd.xlane.f32.xlu0 %v1763
      %v1765 = vpop.xlane.xlu0 %1764
      %v1766 = vadd.f32 %v1690, %v1691
      %1767 = vadd.xlane.f32.xlu0 %v1766
      %v1768 = vpop.xlane.xlu0 %1767
      %v1769 = vadd.f32 %v1692, %v1693
      %1770 = vadd.xlane.f32.xlu0 %v1769
      %v1771 = vpop.xlane.xlu0 %1770
      %v1772 = vadd.f32 %v1694, %v1695
      %1773 = vadd.xlane.f32.xlu0 %v1772
      %v1774 = vpop.xlane.xlu0 %1773
      %v1775 = vadd.f32 %v1696, %v1697
      %1776 = vadd.xlane.f32.xlu0 %v1775
      %v1777 = vpop.xlane.xlu0 %1776
      %v1778 = vadd.f32 %v1698, %v1699
      %1779 = vadd.xlane.f32.xlu0 %v1778
      %v1780 = vpop.xlane.xlu0 %1779
      %v1781 = vadd.f32 %v1700, %v1701
      %1782 = vadd.xlane.f32.xlu0 %v1781
      %v1783 = vpop.xlane.xlu0 %1782
      %v1784 = vadd.f32 %v1702, %v1703
      %1785 = vadd.xlane.f32.xlu0 %v1784
      %v1786 = vpop.xlane.xlu0 %1785
      %v1787 = vadd.f32 %v1704, %v1705
      %1788 = vadd.xlane.f32.xlu0 %v1787
      %v1789 = vpop.xlane.xlu0 %1788
      %v1790 = vadd.f32 %v1706, %v1707
      %1791 = vadd.xlane.f32.xlu0 %v1790
      %v1792 = vpop.xlane.xlu0 %1791
      %v1793 = vadd.f32 %v1708, %v1709
      %1794 = vadd.xlane.f32.xlu0 %v1793
      %v1795 = vpop.xlane.xlu0 %1794
      %v1796 = vadd.f32 %v1710, %v1711
      %1797 = vadd.xlane.f32.xlu0 %v1796
      %v1798 = vpop.xlane.xlu0 %1797
      %v1799 = vadd.f32 %v1712, %v1713
      %1800 = vadd.xlane.f32.xlu0 %v1799
      %v1801 = vpop.xlane.xlu0 %1800
      %v1802 = vadd.f32 %v1714, %v1715
      %1803 = vadd.xlane.f32.xlu0 %v1802
      %v1804 = vpop.xlane.xlu0 %1803
      %v1805 = vadd.f32 %v1716, %v1717
      %1806 = vadd.xlane.f32.xlu0 %v1805
      %v1807 = vpop.xlane.xlu0 %1806
      %v1808 = vadd.f32 %v1718, %v1719
      %1809 = vadd.xlane.f32.xlu0 %v1808
      %v1810 = vpop.xlane.xlu0 %1809
      %v1811 = vadd.f32 %v1720, %v1721
      %1812 = vadd.xlane.f32.xlu0 %v1811
      %v1813 = vpop.xlane.xlu0 %1812
      %v1814 = vadd.f32 %v1722, %v1723
      %1815 = vadd.xlane.f32.xlu0 %v1814
      %v1816 = vpop.xlane.xlu0 %1815
      %v1817 = vadd.f32 %v1724, %v1725
      %1818 = vadd.xlane.f32.xlu0 %v1817
      %v1819 = vpop.xlane.xlu0 %1818
      %v1820 = vadd.f32 %v1726, %v1727
      %1821 = vadd.xlane.f32.xlu0 %v1820
      %v1822 = vpop.xlane.xlu0 %1821
      %v1823 = vadd.f32 %v1728, %v1729
      %1824 = vadd.xlane.f32.xlu0 %v1823
      %v1825 = vpop.xlane.xlu0 %1824
      %vm1826 = vcmp.ge.f32.partialorder %v1732, 1.0
      %vm1827 = vcmp.ge.f32.partialorder %v1735, 1.0
      %vm1828 = vcmp.ge.f32.partialorder %v1738, 1.0
      %vm1829 = vcmp.ge.f32.partialorder %v1741, 1.0
      %vm1830 = vcmp.ge.f32.partialorder %v1744, 1.0
      %vm1831 = vcmp.ge.f32.partialorder %v1747, 1.0
      %vm1832 = vcmp.ge.f32.partialorder %v1750, 1.0
      %vm1833 = vcmp.ge.f32.partialorder %v1753, 1.0
      %vm1834 = vcmp.ge.f32.partialorder %v1756, 1.0
      %vm1835 = vcmp.ge.f32.partialorder %v1759, 1.0
      %vm1836 = vcmp.ge.f32.partialorder %v1762, 1.0
      %vm1837 = vcmp.ge.f32.partialorder %v1765, 1.0
      %vm1838 = vcmp.ge.f32.partialorder %v1768, 1.0
      %vm1839 = vcmp.ge.f32.partialorder %v1771, 1.0
      %vm1840 = vcmp.ge.f32.partialorder %v1774, 1.0
      %vm1841 = vcmp.ge.f32.partialorder %v1777, 1.0
      %vm1842 = vcmp.ge.f32.partialorder %v1780, 1.0
      %vm1843 = vcmp.ge.f32.partialorder %v1783, 1.0
      %vm1844 = vcmp.ge.f32.partialorder %v1786, 1.0
      %vm1845 = vcmp.ge.f32.partialorder %v1789, 1.0
      %vm1846 = vcmp.ge.f32.partialorder %v1792, 1.0
      %vm1847 = vcmp.ge.f32.partialorder %v1795, 1.0
      %vm1848 = vcmp.ge.f32.partialorder %v1798, 1.0
      %vm1849 = vcmp.ge.f32.partialorder %v1801, 1.0
      %vm1850 = vcmp.ge.f32.partialorder %v1804, 1.0
      %vm1851 = vcmp.ge.f32.partialorder %v1807, 1.0
      %vm1852 = vcmp.ge.f32.partialorder %v1810, 1.0
      %vm1853 = vcmp.ge.f32.partialorder %v1813, 1.0
      %vm1854 = vcmp.ge.f32.partialorder %v1816, 1.0
      %vm1855 = vcmp.ge.f32.partialorder %v1819, 1.0
      %vm1856 = vcmp.ge.f32.partialorder %v1822, 1.0
      %vm1857 = vcmp.ge.f32.partialorder %v1825, 1.0
      %v1858 = vsel %vm1826, %v1570, %v1474
      %v1859 = vsel %vm1827, %v1571, %v1475
      %v1860 = vsel %vm1828, %v1572, %v1476
      %v1861 = vsel %vm1829, %v1573, %v1477
      %v1862 = vsel %vm1830, %v1574, %v1478
      %v1863 = vsel %vm1831, %v1575, %v1479
      %v1864 = vsel %vm1832, %v1576, %v1480
      %v1865 = vsel %vm1833, %v1577, %v1481
      %v1866 = vsel %vm1834, %v1578, %v1482
      %v1867 = vsel %vm1835, %v1579, %v1483
      %v1868 = vsel %vm1836, %v1580, %v1484
      %v1869 = vsel %vm1837, %v1581, %v1485
      %v1870 = vsel %vm1838, %v1582, %v1486
      %v1871 = vsel %vm1839, %v1583, %v1487
      %v1872 = vsel %vm1840, %v1584, %v1488
      %v1873 = vsel %vm1841, %v1585, %v1489
      %v1874 = vsel %vm1842, %v1586, %v1490
      %v1875 = vsel %vm1843, %v1587, %v1491
      %v1876 = vsel %vm1844, %v1588, %v1492
      %v1877 = vsel %vm1845, %v1589, %v1493
      %v1878 = vsel %vm1846, %v1590, %v1494
      %v1879 = vsel %vm1847, %v1591, %v1495
      %v1880 = vsel %vm1848, %v1592, %v1496
      %v1881 = vsel %vm1849, %v1593, %v1497
      %v1882 = vsel %vm1850, %v1594, %v1498
      %v1883 = vsel %vm1851, %v1595, %v1499
      %v1884 = vsel %vm1852, %v1596, %v1500
      %v1885 = vsel %vm1853, %v1597, %v1501
      %v1886 = vsel %vm1854, %v1598, %v1502
      %v1887 = vsel %vm1855, %v1599, %v1503
      %v1888 = vsel %vm1856, %v1600, %v1504
      %v1889 = vsel %vm1857, %v1601, %v1505
      %v1890 = vsel %vm1826, %v1506, %v1570
      %v1891 = vsel %vm1827, %v1507, %v1571
      %v1892 = vsel %vm1828, %v1508, %v1572
      %v1893 = vsel %vm1829, %v1509, %v1573
      %v1894 = vsel %vm1830, %v1510, %v1574
      %v1895 = vsel %vm1831, %v1511, %v1575
      %v1896 = vsel %vm1832, %v1512, %v1576
      %v1897 = vsel %vm1833, %v1513, %v1577
      %v1898 = vsel %vm1834, %v1514, %v1578
      %v1899 = vsel %vm1835, %v1515, %v1579
      %v1900 = vsel %vm1836, %v1516, %v1580
      %v1901 = vsel %vm1837, %v1517, %v1581
      %v1902 = vsel %vm1838, %v1518, %v1582
      %v1903 = vsel %vm1839, %v1519, %v1583
      %v1904 = vsel %vm1840, %v1520, %v1584
      %v1905 = vsel %vm1841, %v1521, %v1585
      %v1906 = vsel %vm1842, %v1522, %v1586
      %v1907 = vsel %vm1843, %v1523, %v1587
      %v1908 = vsel %vm1844, %v1524, %v1588
      %v1909 = vsel %vm1845, %v1525, %v1589
      %v1910 = vsel %vm1846, %v1526, %v1590
      %v1911 = vsel %vm1847, %v1527, %v1591
      %v1912 = vsel %vm1848, %v1528, %v1592
      %v1913 = vsel %vm1849, %v1529, %v1593
      %v1914 = vsel %vm1850, %v1530, %v1594
      %v1915 = vsel %vm1851, %v1531, %v1595
      %v1916 = vsel %vm1852, %v1532, %v1596
      %v1917 = vsel %vm1853, %v1533, %v1597
      %v1918 = vsel %vm1854, %v1534, %v1598
      %v1919 = vsel %vm1855, %v1535, %v1599
      %v1920 = vsel %vm1856, %v1536, %v1600
      %v1921 = vsel %vm1857, %v1537, %v1601
      %v1922 = vadd.f32 %v1858, %v1890
      %v1923 = vadd.f32 %v1859, %v1891
      %v1924 = vadd.f32 %v1860, %v1892
      %v1925 = vadd.f32 %v1861, %v1893
      %v1926 = vadd.f32 %v1862, %v1894
      %v1927 = vadd.f32 %v1863, %v1895
      %v1928 = vadd.f32 %v1864, %v1896
      %v1929 = vadd.f32 %v1865, %v1897
      %v1930 = vadd.f32 %v1866, %v1898
      %v1931 = vadd.f32 %v1867, %v1899
      %v1932 = vadd.f32 %v1868, %v1900
      %v1933 = vadd.f32 %v1869, %v1901
      %v1934 = vadd.f32 %v1870, %v1902
      %v1935 = vadd.f32 %v1871, %v1903
      %v1936 = vadd.f32 %v1872, %v1904
      %v1937 = vadd.f32 %v1873, %v1905
      %v1938 = vadd.f32 %v1874, %v1906
      %v1939 = vadd.f32 %v1875, %v1907
      %v1940 = vadd.f32 %v1876, %v1908
      %v1941 = vadd.f32 %v1877, %v1909
      %v1942 = vadd.f32 %v1878, %v1910
      %v1943 = vadd.f32 %v1879, %v1911
      %v1944 = vadd.f32 %v1880, %v1912
      %v1945 = vadd.f32 %v1881, %v1913
      %v1946 = vadd.f32 %v1882, %v1914
      %v1947 = vadd.f32 %v1883, %v1915
      %v1948 = vadd.f32 %v1884, %v1916
      %v1949 = vadd.f32 %v1885, %v1917
      %v1950 = vadd.f32 %v1886, %v1918
      %v1951 = vadd.f32 %v1887, %v1919
      %v1952 = vadd.f32 %v1888, %v1920
      %v1953 = vadd.f32 %v1889, %v1921
      %v1954 = vmul.f32 %v1922, 0.5
      %v1955 = vmul.f32 %v1923, 0.5
      %v1956 = vmul.f32 %v1924, 0.5
      %v1957 = vmul.f32 %v1925, 0.5
      %v1958 = vmul.f32 %v1926, 0.5
      %v1959 = vmul.f32 %v1927, 0.5
      %v1960 = vmul.f32 %v1928, 0.5
      %v1961 = vmul.f32 %v1929, 0.5
      %v1962 = vmul.f32 %v1930, 0.5
      %v1963 = vmul.f32 %v1931, 0.5
      %v1964 = vmul.f32 %v1932, 0.5
      %v1965 = vmul.f32 %v1933, 0.5
      %v1966 = vmul.f32 %v1934, 0.5
      %v1967 = vmul.f32 %v1935, 0.5
      %v1968 = vmul.f32 %v1936, 0.5
      %v1969 = vmul.f32 %v1937, 0.5
      %v1970 = vmul.f32 %v1938, 0.5
      %v1971 = vmul.f32 %v1939, 0.5
      %v1972 = vmul.f32 %v1940, 0.5
      %v1973 = vmul.f32 %v1941, 0.5
      %v1974 = vmul.f32 %v1942, 0.5
      %v1975 = vmul.f32 %v1943, 0.5
      %v1976 = vmul.f32 %v1944, 0.5
      %v1977 = vmul.f32 %v1945, 0.5
      %v1978 = vmul.f32 %v1946, 0.5
      %v1979 = vmul.f32 %v1947, 0.5
      %v1980 = vmul.f32 %v1948, 0.5
      %v1981 = vmul.f32 %v1949, 0.5
      %v1982 = vmul.f32 %v1950, 0.5
      %v1983 = vmul.f32 %v1951, 0.5
      %v1984 = vmul.f32 %v1952, 0.5
      %v1985 = vmul.f32 %v1953, 0.5
      %v1986 = vsub.f32 %v770, %v1954
      %v1987 = vsub.f32 %v771, %v1954
      %v1988 = vsub.f32 %v772, %v1955
      %v1989 = vsub.f32 %v773, %v1955
      %v1990 = vsub.f32 %v774, %v1956
      %v1991 = vsub.f32 %v775, %v1956
      %v1992 = vsub.f32 %v776, %v1957
      %v1993 = vsub.f32 %v777, %v1957
      %v1994 = vsub.f32 %v778, %v1958
      %v1995 = vsub.f32 %v779, %v1958
      %v1996 = vsub.f32 %v780, %v1959
      %v1997 = vsub.f32 %v781, %v1959
      %v1998 = vsub.f32 %v782, %v1960
      %v1999 = vsub.f32 %v783, %v1960
      %v2000 = vsub.f32 %v784, %v1961
      %v2001 = vsub.f32 %v785, %v1961
      %v2002 = vsub.f32 %v786, %v1962
      %v2003 = vsub.f32 %v787, %v1962
      %v2004 = vsub.f32 %v788, %v1963
      %v2005 = vsub.f32 %v789, %v1963
      %v2006 = vsub.f32 %v790, %v1964
      %v2007 = vsub.f32 %v791, %v1964
      %v2008 = vsub.f32 %v792, %v1965
      %v2009 = vsub.f32 %v793, %v1965
      %v2010 = vsub.f32 %v794, %v1966
      %v2011 = vsub.f32 %v795, %v1966
      %v2012 = vsub.f32 %v796, %v1967
      %v2013 = vsub.f32 %v797, %v1967
      %v2014 = vsub.f32 %v798, %v1968
      %v2015 = vsub.f32 %v799, %v1968
      %v2016 = vsub.f32 %v800, %v1969
      %v2017 = vsub.f32 %v801, %v1969
      %v2018 = vsub.f32 %v802, %v1970
      %v2019 = vsub.f32 %v803, %v1970
      %v2020 = vsub.f32 %v804, %v1971
      %v2021 = vsub.f32 %v805, %v1971
      %v2022 = vsub.f32 %v806, %v1972
      %v2023 = vsub.f32 %v807, %v1972
      %v2024 = vsub.f32 %v808, %v1973
      %v2025 = vsub.f32 %v809, %v1973
      %v2026 = vsub.f32 %v810, %v1974
      %v2027 = vsub.f32 %v811, %v1974
      %v2028 = vsub.f32 %v812, %v1975
      %v2029 = vsub.f32 %v813, %v1975
      %v2030 = vsub.f32 %v814, %v1976
      %v2031 = vsub.f32 %v815, %v1976
      %v2032 = vsub.f32 %v816, %v1977
      %v2033 = vsub.f32 %v817, %v1977
      %v2034 = vsub.f32 %v818, %v1978
      %v2035 = vsub.f32 %v819, %v1978
      %v2036 = vsub.f32 %v820, %v1979
      %v2037 = vsub.f32 %v821, %v1979
      %v2038 = vsub.f32 %v822, %v1980
      %v2039 = vsub.f32 %v823, %v1980
      %v2040 = vsub.f32 %v824, %v1981
      %v2041 = vsub.f32 %v825, %v1981
      %v2042 = vsub.f32 %v826, %v1982
      %v2043 = vsub.f32 %v827, %v1982
      %v2044 = vsub.f32 %v828, %v1983
      %v2045 = vsub.f32 %v829, %v1983
      %v2046 = vsub.f32 %v830, %v1984
      %v2047 = vsub.f32 %v831, %v1984
      %v2048 = vsub.f32 %v832, %v1985
      %v2049 = vsub.f32 %v833, %v1985
      %v2050 = vmax.f32 %v1986, 0.0
      %v2051 = vmax.f32 %v1987, 0.0
      %v2052 = vmax.f32 %v1988, 0.0
      %v2053 = vmax.f32 %v1989, 0.0
      %v2054 = vmax.f32 %v1990, 0.0
      %v2055 = vmax.f32 %v1991, 0.0
      %v2056 = vmax.f32 %v1992, 0.0
      %v2057 = vmax.f32 %v1993, 0.0
      %v2058 = vmax.f32 %v1994, 0.0
      %v2059 = vmax.f32 %v1995, 0.0
      %v2060 = vmax.f32 %v1996, 0.0
      %v2061 = vmax.f32 %v1997, 0.0
      %v2062 = vmax.f32 %v1998, 0.0
      %v2063 = vmax.f32 %v1999, 0.0
      %v2064 = vmax.f32 %v2000, 0.0
      %v2065 = vmax.f32 %v2001, 0.0
      %v2066 = vmax.f32 %v2002, 0.0
      %v2067 = vmax.f32 %v2003, 0.0
      %v2068 = vmax.f32 %v2004, 0.0
      %v2069 = vmax.f32 %v2005, 0.0
      %v2070 = vmax.f32 %v2006, 0.0
      %v2071 = vmax.f32 %v2007, 0.0
      %v2072 = vmax.f32 %v2008, 0.0
      %v2073 = vmax.f32 %v2009, 0.0
      %v2074 = vmax.f32 %v2010, 0.0
      %v2075 = vmax.f32 %v2011, 0.0
      %v2076 = vmax.f32 %v2012, 0.0
      %v2077 = vmax.f32 %v2013, 0.0
      %v2078 = vmax.f32 %v2014, 0.0
      %v2079 = vmax.f32 %v2015, 0.0
      %v2080 = vmax.f32 %v2016, 0.0
      %v2081 = vmax.f32 %v2017, 0.0
      %v2082 = vmax.f32 %v2018, 0.0
      %v2083 = vmax.f32 %v2019, 0.0
      %v2084 = vmax.f32 %v2020, 0.0
      %v2085 = vmax.f32 %v2021, 0.0
      %v2086 = vmax.f32 %v2022, 0.0
      %v2087 = vmax.f32 %v2023, 0.0
      %v2088 = vmax.f32 %v2024, 0.0
      %v2089 = vmax.f32 %v2025, 0.0
      %v2090 = vmax.f32 %v2026, 0.0
      %v2091 = vmax.f32 %v2027, 0.0
      %v2092 = vmax.f32 %v2028, 0.0
      %v2093 = vmax.f32 %v2029, 0.0
      %v2094 = vmax.f32 %v2030, 0.0
      %v2095 = vmax.f32 %v2031, 0.0
      %v2096 = vmax.f32 %v2032, 0.0
      %v2097 = vmax.f32 %v2033, 0.0
      %v2098 = vmax.f32 %v2034, 0.0
      %v2099 = vmax.f32 %v2035, 0.0
      %v2100 = vmax.f32 %v2036, 0.0
      %v2101 = vmax.f32 %v2037, 0.0
      %v2102 = vmax.f32 %v2038, 0.0
      %v2103 = vmax.f32 %v2039, 0.0
      %v2104 = vmax.f32 %v2040, 0.0
      %v2105 = vmax.f32 %v2041, 0.0
      %v2106 = vmax.f32 %v2042, 0.0
      %v2107 = vmax.f32 %v2043, 0.0
      %v2108 = vmax.f32 %v2044, 0.0
      %v2109 = vmax.f32 %v2045, 0.0
      %v2110 = vmax.f32 %v2046, 0.0
      %v2111 = vmax.f32 %v2047, 0.0
      %v2112 = vmax.f32 %v2048, 0.0
      %v2113 = vmax.f32 %v2049, 0.0
      %v2114 = vadd.f32 %v2050, %v2051
      %2115 = vadd.xlane.f32.xlu0 %v2114
      %v2116 = vpop.xlane.xlu0 %2115
      %v2117 = vadd.f32 %v2052, %v2053
      %2118 = vadd.xlane.f32.xlu0 %v2117
      %v2119 = vpop.xlane.xlu0 %2118
      %v2120 = vadd.f32 %v2054, %v2055
      %2121 = vadd.xlane.f32.xlu0 %v2120
      %v2122 = vpop.xlane.xlu0 %2121
      %v2123 = vadd.f32 %v2056, %v2057
      %2124 = vadd.xlane.f32.xlu0 %v2123
      %v2125 = vpop.xlane.xlu0 %2124
      %v2126 = vadd.f32 %v2058, %v2059
      %2127 = vadd.xlane.f32.xlu0 %v2126
      %v2128 = vpop.xlane.xlu0 %2127
      %v2129 = vadd.f32 %v2060, %v2061
      %2130 = vadd.xlane.f32.xlu0 %v2129
      %v2131 = vpop.xlane.xlu0 %2130
      %v2132 = vadd.f32 %v2062, %v2063
      %2133 = vadd.xlane.f32.xlu0 %v2132
      %v2134 = vpop.xlane.xlu0 %2133
      %v2135 = vadd.f32 %v2064, %v2065
      %2136 = vadd.xlane.f32.xlu0 %v2135
      %v2137 = vpop.xlane.xlu0 %2136
      %v2138 = vadd.f32 %v2066, %v2067
      %2139 = vadd.xlane.f32.xlu0 %v2138
      %v2140 = vpop.xlane.xlu0 %2139
      %v2141 = vadd.f32 %v2068, %v2069
      %2142 = vadd.xlane.f32.xlu0 %v2141
      %v2143 = vpop.xlane.xlu0 %2142
      %v2144 = vadd.f32 %v2070, %v2071
      %2145 = vadd.xlane.f32.xlu0 %v2144
      %v2146 = vpop.xlane.xlu0 %2145
      %v2147 = vadd.f32 %v2072, %v2073
      %2148 = vadd.xlane.f32.xlu0 %v2147
      %v2149 = vpop.xlane.xlu0 %2148
      %v2150 = vadd.f32 %v2074, %v2075
      %2151 = vadd.xlane.f32.xlu0 %v2150
      %v2152 = vpop.xlane.xlu0 %2151
      %v2153 = vadd.f32 %v2076, %v2077
      %2154 = vadd.xlane.f32.xlu0 %v2153
      %v2155 = vpop.xlane.xlu0 %2154
      %v2156 = vadd.f32 %v2078, %v2079
      %2157 = vadd.xlane.f32.xlu0 %v2156
      %v2158 = vpop.xlane.xlu0 %2157
      %v2159 = vadd.f32 %v2080, %v2081
      %2160 = vadd.xlane.f32.xlu0 %v2159
      %v2161 = vpop.xlane.xlu0 %2160
      %v2162 = vadd.f32 %v2082, %v2083
      %2163 = vadd.xlane.f32.xlu0 %v2162
      %v2164 = vpop.xlane.xlu0 %2163
      %v2165 = vadd.f32 %v2084, %v2085
      %2166 = vadd.xlane.f32.xlu0 %v2165
      %v2167 = vpop.xlane.xlu0 %2166
      %v2168 = vadd.f32 %v2086, %v2087
      %2169 = vadd.xlane.f32.xlu0 %v2168
      %v2170 = vpop.xlane.xlu0 %2169
      %v2171 = vadd.f32 %v2088, %v2089
      %2172 = vadd.xlane.f32.xlu0 %v2171
      %v2173 = vpop.xlane.xlu0 %2172
      %v2174 = vadd.f32 %v2090, %v2091
      %2175 = vadd.xlane.f32.xlu0 %v2174
      %v2176 = vpop.xlane.xlu0 %2175
      %v2177 = vadd.f32 %v2092, %v2093
      %2178 = vadd.xlane.f32.xlu0 %v2177
      %v2179 = vpop.xlane.xlu0 %2178
      %v2180 = vadd.f32 %v2094, %v2095
      %2181 = vadd.xlane.f32.xlu0 %v2180
      %v2182 = vpop.xlane.xlu0 %2181
      %v2183 = vadd.f32 %v2096, %v2097
      %2184 = vadd.xlane.f32.xlu0 %v2183
      %v2185 = vpop.xlane.xlu0 %2184
      %v2186 = vadd.f32 %v2098, %v2099
      %2187 = vadd.xlane.f32.xlu0 %v2186
      %v2188 = vpop.xlane.xlu0 %2187
      %v2189 = vadd.f32 %v2100, %v2101
      %2190 = vadd.xlane.f32.xlu0 %v2189
      %v2191 = vpop.xlane.xlu0 %2190
      %v2192 = vadd.f32 %v2102, %v2103
      %2193 = vadd.xlane.f32.xlu0 %v2192
      %v2194 = vpop.xlane.xlu0 %2193
      %v2195 = vadd.f32 %v2104, %v2105
      %2196 = vadd.xlane.f32.xlu0 %v2195
      %v2197 = vpop.xlane.xlu0 %2196
      %v2198 = vadd.f32 %v2106, %v2107
      %2199 = vadd.xlane.f32.xlu0 %v2198
      %v2200 = vpop.xlane.xlu0 %2199
      %v2201 = vadd.f32 %v2108, %v2109
      %2202 = vadd.xlane.f32.xlu0 %v2201
      %v2203 = vpop.xlane.xlu0 %2202
      %v2204 = vadd.f32 %v2110, %v2111
      %2205 = vadd.xlane.f32.xlu0 %v2204
      %v2206 = vpop.xlane.xlu0 %2205
      %v2207 = vadd.f32 %v2112, %v2113
      %2208 = vadd.xlane.f32.xlu0 %v2207
      %v2209 = vpop.xlane.xlu0 %2208
      %vm2210 = vcmp.ge.f32.partialorder %v2116, 1.0
      %vm2211 = vcmp.ge.f32.partialorder %v2119, 1.0
      %vm2212 = vcmp.ge.f32.partialorder %v2122, 1.0
      %vm2213 = vcmp.ge.f32.partialorder %v2125, 1.0
      %vm2214 = vcmp.ge.f32.partialorder %v2128, 1.0
      %vm2215 = vcmp.ge.f32.partialorder %v2131, 1.0
      %vm2216 = vcmp.ge.f32.partialorder %v2134, 1.0
      %vm2217 = vcmp.ge.f32.partialorder %v2137, 1.0
      %vm2218 = vcmp.ge.f32.partialorder %v2140, 1.0
      %vm2219 = vcmp.ge.f32.partialorder %v2143, 1.0
      %vm2220 = vcmp.ge.f32.partialorder %v2146, 1.0
      %vm2221 = vcmp.ge.f32.partialorder %v2149, 1.0
      %vm2222 = vcmp.ge.f32.partialorder %v2152, 1.0
      %vm2223 = vcmp.ge.f32.partialorder %v2155, 1.0
      %vm2224 = vcmp.ge.f32.partialorder %v2158, 1.0
      %vm2225 = vcmp.ge.f32.partialorder %v2161, 1.0
      %vm2226 = vcmp.ge.f32.partialorder %v2164, 1.0
      %vm2227 = vcmp.ge.f32.partialorder %v2167, 1.0
      %vm2228 = vcmp.ge.f32.partialorder %v2170, 1.0
      %vm2229 = vcmp.ge.f32.partialorder %v2173, 1.0
      %vm2230 = vcmp.ge.f32.partialorder %v2176, 1.0
      %vm2231 = vcmp.ge.f32.partialorder %v2179, 1.0
      %vm2232 = vcmp.ge.f32.partialorder %v2182, 1.0
      %vm2233 = vcmp.ge.f32.partialorder %v2185, 1.0
      %vm2234 = vcmp.ge.f32.partialorder %v2188, 1.0
      %vm2235 = vcmp.ge.f32.partialorder %v2191, 1.0
      %vm2236 = vcmp.ge.f32.partialorder %v2194, 1.0
      %vm2237 = vcmp.ge.f32.partialorder %v2197, 1.0
      %vm2238 = vcmp.ge.f32.partialorder %v2200, 1.0
      %vm2239 = vcmp.ge.f32.partialorder %v2203, 1.0
      %vm2240 = vcmp.ge.f32.partialorder %v2206, 1.0
      %vm2241 = vcmp.ge.f32.partialorder %v2209, 1.0
      %v2242 = vsel %vm2210, %v1954, %v1858
      %v2243 = vsel %vm2211, %v1955, %v1859
      %v2244 = vsel %vm2212, %v1956, %v1860
      %v2245 = vsel %vm2213, %v1957, %v1861
      %v2246 = vsel %vm2214, %v1958, %v1862
      %v2247 = vsel %vm2215, %v1959, %v1863
      %v2248 = vsel %vm2216, %v1960, %v1864
      %v2249 = vsel %vm2217, %v1961, %v1865
      %v2250 = vsel %vm2218, %v1962, %v1866
      %v2251 = vsel %vm2219, %v1963, %v1867
      %v2252 = vsel %vm2220, %v1964, %v1868
      %v2253 = vsel %vm2221, %v1965, %v1869
      %v2254 = vsel %vm2222, %v1966, %v1870
      %v2255 = vsel %vm2223, %v1967, %v1871
      %v2256 = vsel %vm2224, %v1968, %v1872
      %v2257 = vsel %vm2225, %v1969, %v1873
      %v2258 = vsel %vm2226, %v1970, %v1874
      %v2259 = vsel %vm2227, %v1971, %v1875
      %v2260 = vsel %vm2228, %v1972, %v1876
      %v2261 = vsel %vm2229, %v1973, %v1877
      %v2262 = vsel %vm2230, %v1974, %v1878
      %v2263 = vsel %vm2231, %v1975, %v1879
      %v2264 = vsel %vm2232, %v1976, %v1880
      %v2265 = vsel %vm2233, %v1977, %v1881
      %v2266 = vsel %vm2234, %v1978, %v1882
      %v2267 = vsel %vm2235, %v1979, %v1883
      %v2268 = vsel %vm2236, %v1980, %v1884
      %v2269 = vsel %vm2237, %v1981, %v1885
      %v2270 = vsel %vm2238, %v1982, %v1886
      %v2271 = vsel %vm2239, %v1983, %v1887
      %v2272 = vsel %vm2240, %v1984, %v1888
      %v2273 = vsel %vm2241, %v1985, %v1889
      %v2274 = vsel %vm2210, %v1890, %v1954
      %v2275 = vsel %vm2211, %v1891, %v1955
      %v2276 = vsel %vm2212, %v1892, %v1956
      %v2277 = vsel %vm2213, %v1893, %v1957
      %v2278 = vsel %vm2214, %v1894, %v1958
      %v2279 = vsel %vm2215, %v1895, %v1959
      %v2280 = vsel %vm2216, %v1896, %v1960
      %v2281 = vsel %vm2217, %v1897, %v1961
      %v2282 = vsel %vm2218, %v1898, %v1962
      %v2283 = vsel %vm2219, %v1899, %v1963
      %v2284 = vsel %vm2220, %v1900, %v1964
      %v2285 = vsel %vm2221, %v1901, %v1965
      %v2286 = vsel %vm2222, %v1902, %v1966
      %v2287 = vsel %vm2223, %v1903, %v1967
      %v2288 = vsel %vm2224, %v1904, %v1968
      %v2289 = vsel %vm2225, %v1905, %v1969
      %v2290 = vsel %vm2226, %v1906, %v1970
      %v2291 = vsel %vm2227, %v1907, %v1971
      %v2292 = vsel %vm2228, %v1908, %v1972
      %v2293 = vsel %vm2229, %v1909, %v1973
      %v2294 = vsel %vm2230, %v1910, %v1974
      %v2295 = vsel %vm2231, %v1911, %v1975
      %v2296 = vsel %vm2232, %v1912, %v1976
      %v2297 = vsel %vm2233, %v1913, %v1977
      %v2298 = vsel %vm2234, %v1914, %v1978
      %v2299 = vsel %vm2235, %v1915, %v1979
      %v2300 = vsel %vm2236, %v1916, %v1980
      %v2301 = vsel %vm2237, %v1917, %v1981
      %v2302 = vsel %vm2238, %v1918, %v1982
      %v2303 = vsel %vm2239, %v1919, %v1983
      %v2304 = vsel %vm2240, %v1920, %v1984
      %v2305 = vsel %vm2241, %v1921, %v1985
      %v2306 = vadd.f32 %v2242, %v2274
      %v2307 = vadd.f32 %v2243, %v2275
      %v2308 = vadd.f32 %v2244, %v2276
      %v2309 = vadd.f32 %v2245, %v2277
      %v2310 = vadd.f32 %v2246, %v2278
      %v2311 = vadd.f32 %v2247, %v2279
      %v2312 = vadd.f32 %v2248, %v2280
      %v2313 = vadd.f32 %v2249, %v2281
      %v2314 = vadd.f32 %v2250, %v2282
      %v2315 = vadd.f32 %v2251, %v2283
      %v2316 = vadd.f32 %v2252, %v2284
      %v2317 = vadd.f32 %v2253, %v2285
      %v2318 = vadd.f32 %v2254, %v2286
      %v2319 = vadd.f32 %v2255, %v2287
      %v2320 = vadd.f32 %v2256, %v2288
      %v2321 = vadd.f32 %v2257, %v2289
      %v2322 = vadd.f32 %v2258, %v2290
      %v2323 = vadd.f32 %v2259, %v2291
      %v2324 = vadd.f32 %v2260, %v2292
      %v2325 = vadd.f32 %v2261, %v2293
      %v2326 = vadd.f32 %v2262, %v2294
      %v2327 = vadd.f32 %v2263, %v2295
      %v2328 = vadd.f32 %v2264, %v2296
      %v2329 = vadd.f32 %v2265, %v2297
      %v2330 = vadd.f32 %v2266, %v2298
      %v2331 = vadd.f32 %v2267, %v2299
      %v2332 = vadd.f32 %v2268, %v2300
      %v2333 = vadd.f32 %v2269, %v2301
      %v2334 = vadd.f32 %v2270, %v2302
      %v2335 = vadd.f32 %v2271, %v2303
      %v2336 = vadd.f32 %v2272, %v2304
      %v2337 = vadd.f32 %v2273, %v2305
      %v2338 = vmul.f32 %v2306, 0.5
      %v2339 = vmul.f32 %v2307, 0.5
      %v2340 = vmul.f32 %v2308, 0.5
      %v2341 = vmul.f32 %v2309, 0.5
      %v2342 = vmul.f32 %v2310, 0.5
      %v2343 = vmul.f32 %v2311, 0.5
      %v2344 = vmul.f32 %v2312, 0.5
      %v2345 = vmul.f32 %v2313, 0.5
      %v2346 = vmul.f32 %v2314, 0.5
      %v2347 = vmul.f32 %v2315, 0.5
      %v2348 = vmul.f32 %v2316, 0.5
      %v2349 = vmul.f32 %v2317, 0.5
      %v2350 = vmul.f32 %v2318, 0.5
      %v2351 = vmul.f32 %v2319, 0.5
      %v2352 = vmul.f32 %v2320, 0.5
      %v2353 = vmul.f32 %v2321, 0.5
      %v2354 = vmul.f32 %v2322, 0.5
      %v2355 = vmul.f32 %v2323, 0.5
      %v2356 = vmul.f32 %v2324, 0.5
      %v2357 = vmul.f32 %v2325, 0.5
      %v2358 = vmul.f32 %v2326, 0.5
      %v2359 = vmul.f32 %v2327, 0.5
      %v2360 = vmul.f32 %v2328, 0.5
      %v2361 = vmul.f32 %v2329, 0.5
      %v2362 = vmul.f32 %v2330, 0.5
      %v2363 = vmul.f32 %v2331, 0.5
      %v2364 = vmul.f32 %v2332, 0.5
      %v2365 = vmul.f32 %v2333, 0.5
      %v2366 = vmul.f32 %v2334, 0.5
      %v2367 = vmul.f32 %v2335, 0.5
      %v2368 = vmul.f32 %v2336, 0.5
      %v2369 = vmul.f32 %v2337, 0.5
      %v2370 = vsub.f32 %v770, %v2338
      %v2371 = vsub.f32 %v771, %v2338
      %v2372 = vsub.f32 %v772, %v2339
      %v2373 = vsub.f32 %v773, %v2339
      %v2374 = vsub.f32 %v774, %v2340
      %v2375 = vsub.f32 %v775, %v2340
      %v2376 = vsub.f32 %v776, %v2341
      %v2377 = vsub.f32 %v777, %v2341
      %v2378 = vsub.f32 %v778, %v2342
      %v2379 = vsub.f32 %v779, %v2342
      %v2380 = vsub.f32 %v780, %v2343
      %v2381 = vsub.f32 %v781, %v2343
      %v2382 = vsub.f32 %v782, %v2344
      %v2383 = vsub.f32 %v783, %v2344
      %v2384 = vsub.f32 %v784, %v2345
      %v2385 = vsub.f32 %v785, %v2345
      %v2386 = vsub.f32 %v786, %v2346
      %v2387 = vsub.f32 %v787, %v2346
      %v2388 = vsub.f32 %v788, %v2347
      %v2389 = vsub.f32 %v789, %v2347
      %v2390 = vsub.f32 %v790, %v2348
      %v2391 = vsub.f32 %v791, %v2348
      %v2392 = vsub.f32 %v792, %v2349
      %v2393 = vsub.f32 %v793, %v2349
      %v2394 = vsub.f32 %v794, %v2350
      %v2395 = vsub.f32 %v795, %v2350
      %v2396 = vsub.f32 %v796, %v2351
      %v2397 = vsub.f32 %v797, %v2351
      %v2398 = vsub.f32 %v798, %v2352
      %v2399 = vsub.f32 %v799, %v2352
      %v2400 = vsub.f32 %v800, %v2353
      %v2401 = vsub.f32 %v801, %v2353
      %v2402 = vsub.f32 %v802, %v2354
      %v2403 = vsub.f32 %v803, %v2354
      %v2404 = vsub.f32 %v804, %v2355
      %v2405 = vsub.f32 %v805, %v2355
      %v2406 = vsub.f32 %v806, %v2356
      %v2407 = vsub.f32 %v807, %v2356
      %v2408 = vsub.f32 %v808, %v2357
      %v2409 = vsub.f32 %v809, %v2357
      %v2410 = vsub.f32 %v810, %v2358
      %v2411 = vsub.f32 %v811, %v2358
      %v2412 = vsub.f32 %v812, %v2359
      %v2413 = vsub.f32 %v813, %v2359
      %v2414 = vsub.f32 %v814, %v2360
      %v2415 = vsub.f32 %v815, %v2360
      %v2416 = vsub.f32 %v816, %v2361
      %v2417 = vsub.f32 %v817, %v2361
      %v2418 = vsub.f32 %v818, %v2362
      %v2419 = vsub.f32 %v819, %v2362
      %v2420 = vsub.f32 %v820, %v2363
      %v2421 = vsub.f32 %v821, %v2363
      %v2422 = vsub.f32 %v822, %v2364
      %v2423 = vsub.f32 %v823, %v2364
      %v2424 = vsub.f32 %v824, %v2365
      %v2425 = vsub.f32 %v825, %v2365
      %v2426 = vsub.f32 %v826, %v2366
      %v2427 = vsub.f32 %v827, %v2366
      %v2428 = vsub.f32 %v828, %v2367
      %v2429 = vsub.f32 %v829, %v2367
      %v2430 = vsub.f32 %v830, %v2368
      %v2431 = vsub.f32 %v831, %v2368
      %v2432 = vsub.f32 %v832, %v2369
      %v2433 = vsub.f32 %v833, %v2369
      %v2434 = vmax.f32 %v2370, 0.0
      %v2435 = vmax.f32 %v2371, 0.0
      %v2436 = vmax.f32 %v2372, 0.0
      %v2437 = vmax.f32 %v2373, 0.0
      %v2438 = vmax.f32 %v2374, 0.0
      %v2439 = vmax.f32 %v2375, 0.0
      %v2440 = vmax.f32 %v2376, 0.0
      %v2441 = vmax.f32 %v2377, 0.0
      %v2442 = vmax.f32 %v2378, 0.0
      %v2443 = vmax.f32 %v2379, 0.0
      %v2444 = vmax.f32 %v2380, 0.0
      %v2445 = vmax.f32 %v2381, 0.0
      %v2446 = vmax.f32 %v2382, 0.0
      %v2447 = vmax.f32 %v2383, 0.0
      %v2448 = vmax.f32 %v2384, 0.0
      %v2449 = vmax.f32 %v2385, 0.0
      %v2450 = vmax.f32 %v2386, 0.0
      %v2451 = vmax.f32 %v2387, 0.0
      %v2452 = vmax.f32 %v2388, 0.0
      %v2453 = vmax.f32 %v2389, 0.0
      %v2454 = vmax.f32 %v2390, 0.0
      %v2455 = vmax.f32 %v2391, 0.0
      %v2456 = vmax.f32 %v2392, 0.0
      %v2457 = vmax.f32 %v2393, 0.0
      %v2458 = vmax.f32 %v2394, 0.0
      %v2459 = vmax.f32 %v2395, 0.0
      %v2460 = vmax.f32 %v2396, 0.0
      %v2461 = vmax.f32 %v2397, 0.0
      %v2462 = vmax.f32 %v2398, 0.0
      %v2463 = vmax.f32 %v2399, 0.0
      %v2464 = vmax.f32 %v2400, 0.0
      %v2465 = vmax.f32 %v2401, 0.0
      %v2466 = vmax.f32 %v2402, 0.0
      %v2467 = vmax.f32 %v2403, 0.0
      %v2468 = vmax.f32 %v2404, 0.0
      %v2469 = vmax.f32 %v2405, 0.0
      %v2470 = vmax.f32 %v2406, 0.0
      %v2471 = vmax.f32 %v2407, 0.0
      %v2472 = vmax.f32 %v2408, 0.0
      %v2473 = vmax.f32 %v2409, 0.0
      %v2474 = vmax.f32 %v2410, 0.0
      %v2475 = vmax.f32 %v2411, 0.0
      %v2476 = vmax.f32 %v2412, 0.0
      %v2477 = vmax.f32 %v2413, 0.0
      %v2478 = vmax.f32 %v2414, 0.0
      %v2479 = vmax.f32 %v2415, 0.0
      %v2480 = vmax.f32 %v2416, 0.0
      %v2481 = vmax.f32 %v2417, 0.0
      %v2482 = vmax.f32 %v2418, 0.0
      %v2483 = vmax.f32 %v2419, 0.0
      %v2484 = vmax.f32 %v2420, 0.0
      %v2485 = vmax.f32 %v2421, 0.0
      %v2486 = vmax.f32 %v2422, 0.0
      %v2487 = vmax.f32 %v2423, 0.0
      %v2488 = vmax.f32 %v2424, 0.0
      %v2489 = vmax.f32 %v2425, 0.0
      %v2490 = vmax.f32 %v2426, 0.0
      %v2491 = vmax.f32 %v2427, 0.0
      %v2492 = vmax.f32 %v2428, 0.0
      %v2493 = vmax.f32 %v2429, 0.0
      %v2494 = vmax.f32 %v2430, 0.0
      %v2495 = vmax.f32 %v2431, 0.0
      %v2496 = vmax.f32 %v2432, 0.0
      %v2497 = vmax.f32 %v2433, 0.0
      %v2498 = vadd.f32 %v2434, %v2435
      %2499 = vadd.xlane.f32.xlu0 %v2498
      %v2500 = vpop.xlane.xlu0 %2499
      %v2501 = vadd.f32 %v2436, %v2437
      %2502 = vadd.xlane.f32.xlu0 %v2501
      %v2503 = vpop.xlane.xlu0 %2502
      %v2504 = vadd.f32 %v2438, %v2439
      %2505 = vadd.xlane.f32.xlu0 %v2504
      %v2506 = vpop.xlane.xlu0 %2505
      %v2507 = vadd.f32 %v2440, %v2441
      %2508 = vadd.xlane.f32.xlu0 %v2507
      %v2509 = vpop.xlane.xlu0 %2508
      %v2510 = vadd.f32 %v2442, %v2443
      %2511 = vadd.xlane.f32.xlu0 %v2510
      %v2512 = vpop.xlane.xlu0 %2511
      %v2513 = vadd.f32 %v2444, %v2445
      %2514 = vadd.xlane.f32.xlu0 %v2513
      %v2515 = vpop.xlane.xlu0 %2514
      %v2516 = vadd.f32 %v2446, %v2447
      %2517 = vadd.xlane.f32.xlu0 %v2516
      %v2518 = vpop.xlane.xlu0 %2517
      %v2519 = vadd.f32 %v2448, %v2449
      %2520 = vadd.xlane.f32.xlu0 %v2519
      %v2521 = vpop.xlane.xlu0 %2520
      %v2522 = vadd.f32 %v2450, %v2451
      %2523 = vadd.xlane.f32.xlu0 %v2522
      %v2524 = vpop.xlane.xlu0 %2523
      %v2525 = vadd.f32 %v2452, %v2453
      %2526 = vadd.xlane.f32.xlu0 %v2525
      %v2527 = vpop.xlane.xlu0 %2526
      %v2528 = vadd.f32 %v2454, %v2455
      %2529 = vadd.xlane.f32.xlu0 %v2528
      %v2530 = vpop.xlane.xlu0 %2529
      %v2531 = vadd.f32 %v2456, %v2457
      %2532 = vadd.xlane.f32.xlu0 %v2531
      %v2533 = vpop.xlane.xlu0 %2532
      %v2534 = vadd.f32 %v2458, %v2459
      %2535 = vadd.xlane.f32.xlu0 %v2534
      %v2536 = vpop.xlane.xlu0 %2535
      %v2537 = vadd.f32 %v2460, %v2461
      %2538 = vadd.xlane.f32.xlu0 %v2537
      %v2539 = vpop.xlane.xlu0 %2538
      %v2540 = vadd.f32 %v2462, %v2463
      %2541 = vadd.xlane.f32.xlu0 %v2540
      %v2542 = vpop.xlane.xlu0 %2541
      %v2543 = vadd.f32 %v2464, %v2465
      %2544 = vadd.xlane.f32.xlu0 %v2543
      %v2545 = vpop.xlane.xlu0 %2544
      %v2546 = vadd.f32 %v2466, %v2467
      %2547 = vadd.xlane.f32.xlu0 %v2546
      %v2548 = vpop.xlane.xlu0 %2547
      %v2549 = vadd.f32 %v2468, %v2469
      %2550 = vadd.xlane.f32.xlu0 %v2549
      %v2551 = vpop.xlane.xlu0 %2550
      %v2552 = vadd.f32 %v2470, %v2471
      %2553 = vadd.xlane.f32.xlu0 %v2552
      %v2554 = vpop.xlane.xlu0 %2553
      %v2555 = vadd.f32 %v2472, %v2473
      %2556 = vadd.xlane.f32.xlu0 %v2555
      %v2557 = vpop.xlane.xlu0 %2556
      %v2558 = vadd.f32 %v2474, %v2475
      %2559 = vadd.xlane.f32.xlu0 %v2558
      %v2560 = vpop.xlane.xlu0 %2559
      %v2561 = vadd.f32 %v2476, %v2477
      %2562 = vadd.xlane.f32.xlu0 %v2561
      %v2563 = vpop.xlane.xlu0 %2562
      %v2564 = vadd.f32 %v2478, %v2479
      %2565 = vadd.xlane.f32.xlu0 %v2564
      %v2566 = vpop.xlane.xlu0 %2565
      %v2567 = vadd.f32 %v2480, %v2481
      %2568 = vadd.xlane.f32.xlu0 %v2567
      %v2569 = vpop.xlane.xlu0 %2568
      %v2570 = vadd.f32 %v2482, %v2483
      %2571 = vadd.xlane.f32.xlu0 %v2570
      %v2572 = vpop.xlane.xlu0 %2571
      %v2573 = vadd.f32 %v2484, %v2485
      %2574 = vadd.xlane.f32.xlu0 %v2573
      %v2575 = vpop.xlane.xlu0 %2574
      %v2576 = vadd.f32 %v2486, %v2487
      %2577 = vadd.xlane.f32.xlu0 %v2576
      %v2578 = vpop.xlane.xlu0 %2577
      %v2579 = vadd.f32 %v2488, %v2489
      %2580 = vadd.xlane.f32.xlu0 %v2579
      %v2581 = vpop.xlane.xlu0 %2580
      %v2582 = vadd.f32 %v2490, %v2491
      %2583 = vadd.xlane.f32.xlu0 %v2582
      %v2584 = vpop.xlane.xlu0 %2583
      %v2585 = vadd.f32 %v2492, %v2493
      %2586 = vadd.xlane.f32.xlu0 %v2585
      %v2587 = vpop.xlane.xlu0 %2586
      %v2588 = vadd.f32 %v2494, %v2495
      %2589 = vadd.xlane.f32.xlu0 %v2588
      %v2590 = vpop.xlane.xlu0 %2589
      %v2591 = vadd.f32 %v2496, %v2497
      %2592 = vadd.xlane.f32.xlu0 %v2591
      %v2593 = vpop.xlane.xlu0 %2592
      %vm2594 = vcmp.ge.f32.partialorder %v2500, 1.0
      %vm2595 = vcmp.ge.f32.partialorder %v2503, 1.0
      %vm2596 = vcmp.ge.f32.partialorder %v2506, 1.0
      %vm2597 = vcmp.ge.f32.partialorder %v2509, 1.0
      %vm2598 = vcmp.ge.f32.partialorder %v2512, 1.0
      %vm2599 = vcmp.ge.f32.partialorder %v2515, 1.0
      %vm2600 = vcmp.ge.f32.partialorder %v2518, 1.0
      %vm2601 = vcmp.ge.f32.partialorder %v2521, 1.0
      %vm2602 = vcmp.ge.f32.partialorder %v2524, 1.0
      %vm2603 = vcmp.ge.f32.partialorder %v2527, 1.0
      %vm2604 = vcmp.ge.f32.partialorder %v2530, 1.0
      %vm2605 = vcmp.ge.f32.partialorder %v2533, 1.0
      %vm2606 = vcmp.ge.f32.partialorder %v2536, 1.0
      %vm2607 = vcmp.ge.f32.partialorder %v2539, 1.0
      %vm2608 = vcmp.ge.f32.partialorder %v2542, 1.0
      %vm2609 = vcmp.ge.f32.partialorder %v2545, 1.0
      %vm2610 = vcmp.ge.f32.partialorder %v2548, 1.0
      %vm2611 = vcmp.ge.f32.partialorder %v2551, 1.0
      %vm2612 = vcmp.ge.f32.partialorder %v2554, 1.0
      %vm2613 = vcmp.ge.f32.partialorder %v2557, 1.0
      %vm2614 = vcmp.ge.f32.partialorder %v2560, 1.0
      %vm2615 = vcmp.ge.f32.partialorder %v2563, 1.0
      %vm2616 = vcmp.ge.f32.partialorder %v2566, 1.0
      %vm2617 = vcmp.ge.f32.partialorder %v2569, 1.0
      %vm2618 = vcmp.ge.f32.partialorder %v2572, 1.0
      %vm2619 = vcmp.ge.f32.partialorder %v2575, 1.0
      %vm2620 = vcmp.ge.f32.partialorder %v2578, 1.0
      %vm2621 = vcmp.ge.f32.partialorder %v2581, 1.0
      %vm2622 = vcmp.ge.f32.partialorder %v2584, 1.0
      %vm2623 = vcmp.ge.f32.partialorder %v2587, 1.0
      %vm2624 = vcmp.ge.f32.partialorder %v2590, 1.0
      %vm2625 = vcmp.ge.f32.partialorder %v2593, 1.0
      %v2626 = vsel %vm2594, %v2338, %v2242
      %v2627 = vsel %vm2595, %v2339, %v2243
      %v2628 = vsel %vm2596, %v2340, %v2244
      %v2629 = vsel %vm2597, %v2341, %v2245
      %v2630 = vsel %vm2598, %v2342, %v2246
      %v2631 = vsel %vm2599, %v2343, %v2247
      %v2632 = vsel %vm2600, %v2344, %v2248
      %v2633 = vsel %vm2601, %v2345, %v2249
      %v2634 = vsel %vm2602, %v2346, %v2250
      %v2635 = vsel %vm2603, %v2347, %v2251
      %v2636 = vsel %vm2604, %v2348, %v2252
      %v2637 = vsel %vm2605, %v2349, %v2253
      %v2638 = vsel %vm2606, %v2350, %v2254
      %v2639 = vsel %vm2607, %v2351, %v2255
      %v2640 = vsel %vm2608, %v2352, %v2256
      %v2641 = vsel %vm2609, %v2353, %v2257
      %v2642 = vsel %vm2610, %v2354, %v2258
      %v2643 = vsel %vm2611, %v2355, %v2259
      %v2644 = vsel %vm2612, %v2356, %v2260
      %v2645 = vsel %vm2613, %v2357, %v2261
      %v2646 = vsel %vm2614, %v2358, %v2262
      %v2647 = vsel %vm2615, %v2359, %v2263
      %v2648 = vsel %vm2616, %v2360, %v2264
      %v2649 = vsel %vm2617, %v2361, %v2265
      %v2650 = vsel %vm2618, %v2362, %v2266
      %v2651 = vsel %vm2619, %v2363, %v2267
      %v2652 = vsel %vm2620, %v2364, %v2268
      %v2653 = vsel %vm2621, %v2365, %v2269
      %v2654 = vsel %vm2622, %v2366, %v2270
      %v2655 = vsel %vm2623, %v2367, %v2271
      %v2656 = vsel %vm2624, %v2368, %v2272
      %v2657 = vsel %vm2625, %v2369, %v2273
      %v2658 = vsel %vm2594, %v2274, %v2338
      %v2659 = vsel %vm2595, %v2275, %v2339
      %v2660 = vsel %vm2596, %v2276, %v2340
      %v2661 = vsel %vm2597, %v2277, %v2341
      %v2662 = vsel %vm2598, %v2278, %v2342
      %v2663 = vsel %vm2599, %v2279, %v2343
      %v2664 = vsel %vm2600, %v2280, %v2344
      %v2665 = vsel %vm2601, %v2281, %v2345
      %v2666 = vsel %vm2602, %v2282, %v2346
      %v2667 = vsel %vm2603, %v2283, %v2347
      %v2668 = vsel %vm2604, %v2284, %v2348
      %v2669 = vsel %vm2605, %v2285, %v2349
      %v2670 = vsel %vm2606, %v2286, %v2350
      %v2671 = vsel %vm2607, %v2287, %v2351
      %v2672 = vsel %vm2608, %v2288, %v2352
      %v2673 = vsel %vm2609, %v2289, %v2353
      %v2674 = vsel %vm2610, %v2290, %v2354
      %v2675 = vsel %vm2611, %v2291, %v2355
      %v2676 = vsel %vm2612, %v2292, %v2356
      %v2677 = vsel %vm2613, %v2293, %v2357
      %v2678 = vsel %vm2614, %v2294, %v2358
      %v2679 = vsel %vm2615, %v2295, %v2359
      %v2680 = vsel %vm2616, %v2296, %v2360
      %v2681 = vsel %vm2617, %v2297, %v2361
      %v2682 = vsel %vm2618, %v2298, %v2362
      %v2683 = vsel %vm2619, %v2299, %v2363
      %v2684 = vsel %vm2620, %v2300, %v2364
      %v2685 = vsel %vm2621, %v2301, %v2365
      %v2686 = vsel %vm2622, %v2302, %v2366
      %v2687 = vsel %vm2623, %v2303, %v2367
      %v2688 = vsel %vm2624, %v2304, %v2368
      %v2689 = vsel %vm2625, %v2305, %v2369
      %v2690 = vadd.f32 %v2626, %v2658
      %v2691 = vadd.f32 %v2627, %v2659
      %v2692 = vadd.f32 %v2628, %v2660
      %v2693 = vadd.f32 %v2629, %v2661
      %v2694 = vadd.f32 %v2630, %v2662
      %v2695 = vadd.f32 %v2631, %v2663
      %v2696 = vadd.f32 %v2632, %v2664
      %v2697 = vadd.f32 %v2633, %v2665
      %v2698 = vadd.f32 %v2634, %v2666
      %v2699 = vadd.f32 %v2635, %v2667
      %v2700 = vadd.f32 %v2636, %v2668
      %v2701 = vadd.f32 %v2637, %v2669
      %v2702 = vadd.f32 %v2638, %v2670
      %v2703 = vadd.f32 %v2639, %v2671
      %v2704 = vadd.f32 %v2640, %v2672
      %v2705 = vadd.f32 %v2641, %v2673
      %v2706 = vadd.f32 %v2642, %v2674
      %v2707 = vadd.f32 %v2643, %v2675
      %v2708 = vadd.f32 %v2644, %v2676
      %v2709 = vadd.f32 %v2645, %v2677
      %v2710 = vadd.f32 %v2646, %v2678
      %v2711 = vadd.f32 %v2647, %v2679
      %v2712 = vadd.f32 %v2648, %v2680
      %v2713 = vadd.f32 %v2649, %v2681
      %v2714 = vadd.f32 %v2650, %v2682
      %v2715 = vadd.f32 %v2651, %v2683
      %v2716 = vadd.f32 %v2652, %v2684
      %v2717 = vadd.f32 %v2653, %v2685
      %v2718 = vadd.f32 %v2654, %v2686
      %v2719 = vadd.f32 %v2655, %v2687
      %v2720 = vadd.f32 %v2656, %v2688
      %v2721 = vadd.f32 %v2657, %v2689
      %v2722 = vmul.f32 %v2690, 0.5
      %v2723 = vmul.f32 %v2691, 0.5
      %v2724 = vmul.f32 %v2692, 0.5
      %v2725 = vmul.f32 %v2693, 0.5
      %v2726 = vmul.f32 %v2694, 0.5
      %v2727 = vmul.f32 %v2695, 0.5
      %v2728 = vmul.f32 %v2696, 0.5
      %v2729 = vmul.f32 %v2697, 0.5
      %v2730 = vmul.f32 %v2698, 0.5
      %v2731 = vmul.f32 %v2699, 0.5
      %v2732 = vmul.f32 %v2700, 0.5
      %v2733 = vmul.f32 %v2701, 0.5
      %v2734 = vmul.f32 %v2702, 0.5
      %v2735 = vmul.f32 %v2703, 0.5
      %v2736 = vmul.f32 %v2704, 0.5
      %v2737 = vmul.f32 %v2705, 0.5
      %v2738 = vmul.f32 %v2706, 0.5
      %v2739 = vmul.f32 %v2707, 0.5
      %v2740 = vmul.f32 %v2708, 0.5
      %v2741 = vmul.f32 %v2709, 0.5
      %v2742 = vmul.f32 %v2710, 0.5
      %v2743 = vmul.f32 %v2711, 0.5
      %v2744 = vmul.f32 %v2712, 0.5
      %v2745 = vmul.f32 %v2713, 0.5
      %v2746 = vmul.f32 %v2714, 0.5
      %v2747 = vmul.f32 %v2715, 0.5
      %v2748 = vmul.f32 %v2716, 0.5
      %v2749 = vmul.f32 %v2717, 0.5
      %v2750 = vmul.f32 %v2718, 0.5
      %v2751 = vmul.f32 %v2719, 0.5
      %v2752 = vmul.f32 %v2720, 0.5
      %v2753 = vmul.f32 %v2721, 0.5
      %v2754 = vsub.f32 %v770, %v2722
      %v2755 = vsub.f32 %v771, %v2722
      %v2756 = vsub.f32 %v772, %v2723
      %v2757 = vsub.f32 %v773, %v2723
      %v2758 = vsub.f32 %v774, %v2724
      %v2759 = vsub.f32 %v775, %v2724
      %v2760 = vsub.f32 %v776, %v2725
      %v2761 = vsub.f32 %v777, %v2725
      %v2762 = vsub.f32 %v778, %v2726
      %v2763 = vsub.f32 %v779, %v2726
      %v2764 = vsub.f32 %v780, %v2727
      %v2765 = vsub.f32 %v781, %v2727
      %v2766 = vsub.f32 %v782, %v2728
      %v2767 = vsub.f32 %v783, %v2728
      %v2768 = vsub.f32 %v784, %v2729
      %v2769 = vsub.f32 %v785, %v2729
      %v2770 = vsub.f32 %v786, %v2730
      %v2771 = vsub.f32 %v787, %v2730
      %v2772 = vsub.f32 %v788, %v2731
      %v2773 = vsub.f32 %v789, %v2731
      %v2774 = vsub.f32 %v790, %v2732
      %v2775 = vsub.f32 %v791, %v2732
      %v2776 = vsub.f32 %v792, %v2733
      %v2777 = vsub.f32 %v793, %v2733
      %v2778 = vsub.f32 %v794, %v2734
      %v2779 = vsub.f32 %v795, %v2734
      %v2780 = vsub.f32 %v796, %v2735
      %v2781 = vsub.f32 %v797, %v2735
      %v2782 = vsub.f32 %v798, %v2736
      %v2783 = vsub.f32 %v799, %v2736
      %v2784 = vsub.f32 %v800, %v2737
      %v2785 = vsub.f32 %v801, %v2737
      %v2786 = vsub.f32 %v802, %v2738
      %v2787 = vsub.f32 %v803, %v2738
      %v2788 = vsub.f32 %v804, %v2739
      %v2789 = vsub.f32 %v805, %v2739
      %v2790 = vsub.f32 %v806, %v2740
      %v2791 = vsub.f32 %v807, %v2740
      %v2792 = vsub.f32 %v808, %v2741
      %v2793 = vsub.f32 %v809, %v2741
      %v2794 = vsub.f32 %v810, %v2742
      %v2795 = vsub.f32 %v811, %v2742
      %v2796 = vsub.f32 %v812, %v2743
      %v2797 = vsub.f32 %v813, %v2743
      %v2798 = vsub.f32 %v814, %v2744
      %v2799 = vsub.f32 %v815, %v2744
      %v2800 = vsub.f32 %v816, %v2745
      %v2801 = vsub.f32 %v817, %v2745
      %v2802 = vsub.f32 %v818, %v2746
      %v2803 = vsub.f32 %v819, %v2746
      %v2804 = vsub.f32 %v820, %v2747
      %v2805 = vsub.f32 %v821, %v2747
      %v2806 = vsub.f32 %v822, %v2748
      %v2807 = vsub.f32 %v823, %v2748
      %v2808 = vsub.f32 %v824, %v2749
      %v2809 = vsub.f32 %v825, %v2749
      %v2810 = vsub.f32 %v826, %v2750
      %v2811 = vsub.f32 %v827, %v2750
      %v2812 = vsub.f32 %v828, %v2751
      %v2813 = vsub.f32 %v829, %v2751
      %v2814 = vsub.f32 %v830, %v2752
      %v2815 = vsub.f32 %v831, %v2752
      %v2816 = vsub.f32 %v832, %v2753
      %v2817 = vsub.f32 %v833, %v2753
      %v2818 = vmax.f32 %v2754, 0.0
      %v2819 = vmax.f32 %v2755, 0.0
      %v2820 = vmax.f32 %v2756, 0.0
      %v2821 = vmax.f32 %v2757, 0.0
      %v2822 = vmax.f32 %v2758, 0.0
      %v2823 = vmax.f32 %v2759, 0.0
      %v2824 = vmax.f32 %v2760, 0.0
      %v2825 = vmax.f32 %v2761, 0.0
      %v2826 = vmax.f32 %v2762, 0.0
      %v2827 = vmax.f32 %v2763, 0.0
      %v2828 = vmax.f32 %v2764, 0.0
      %v2829 = vmax.f32 %v2765, 0.0
      %v2830 = vmax.f32 %v2766, 0.0
      %v2831 = vmax.f32 %v2767, 0.0
      %v2832 = vmax.f32 %v2768, 0.0
      %v2833 = vmax.f32 %v2769, 0.0
      %v2834 = vmax.f32 %v2770, 0.0
      %v2835 = vmax.f32 %v2771, 0.0
      %v2836 = vmax.f32 %v2772, 0.0
      %v2837 = vmax.f32 %v2773, 0.0
      %v2838 = vmax.f32 %v2774, 0.0
      %v2839 = vmax.f32 %v2775, 0.0
      %v2840 = vmax.f32 %v2776, 0.0
      %v2841 = vmax.f32 %v2777, 0.0
      %v2842 = vmax.f32 %v2778, 0.0
      %v2843 = vmax.f32 %v2779, 0.0
      %v2844 = vmax.f32 %v2780, 0.0
      %v2845 = vmax.f32 %v2781, 0.0
      %v2846 = vmax.f32 %v2782, 0.0
      %v2847 = vmax.f32 %v2783, 0.0
      %v2848 = vmax.f32 %v2784, 0.0
      %v2849 = vmax.f32 %v2785, 0.0
      %v2850 = vmax.f32 %v2786, 0.0
      %v2851 = vmax.f32 %v2787, 0.0
      %v2852 = vmax.f32 %v2788, 0.0
      %v2853 = vmax.f32 %v2789, 0.0
      %v2854 = vmax.f32 %v2790, 0.0
      %v2855 = vmax.f32 %v2791, 0.0
      %v2856 = vmax.f32 %v2792, 0.0
      %v2857 = vmax.f32 %v2793, 0.0
      %v2858 = vmax.f32 %v2794, 0.0
      %v2859 = vmax.f32 %v2795, 0.0
      %v2860 = vmax.f32 %v2796, 0.0
      %v2861 = vmax.f32 %v2797, 0.0
      %v2862 = vmax.f32 %v2798, 0.0
      %v2863 = vmax.f32 %v2799, 0.0
      %v2864 = vmax.f32 %v2800, 0.0
      %v2865 = vmax.f32 %v2801, 0.0
      %v2866 = vmax.f32 %v2802, 0.0
      %v2867 = vmax.f32 %v2803, 0.0
      %v2868 = vmax.f32 %v2804, 0.0
      %v2869 = vmax.f32 %v2805, 0.0
      %v2870 = vmax.f32 %v2806, 0.0
      %v2871 = vmax.f32 %v2807, 0.0
      %v2872 = vmax.f32 %v2808, 0.0
      %v2873 = vmax.f32 %v2809, 0.0
      %v2874 = vmax.f32 %v2810, 0.0
      %v2875 = vmax.f32 %v2811, 0.0
      %v2876 = vmax.f32 %v2812, 0.0
      %v2877 = vmax.f32 %v2813, 0.0
      %v2878 = vmax.f32 %v2814, 0.0
      %v2879 = vmax.f32 %v2815, 0.0
      %v2880 = vmax.f32 %v2816, 0.0
      %v2881 = vmax.f32 %v2817, 0.0
      %v2882 = vadd.f32 %v2818, %v2819
      %2883 = vadd.xlane.f32.xlu0 %v2882
      %v2884 = vpop.xlane.xlu0 %2883
      %v2885 = vadd.f32 %v2820, %v2821
      %2886 = vadd.xlane.f32.xlu0 %v2885
      %v2887 = vpop.xlane.xlu0 %2886
      %v2888 = vadd.f32 %v2822, %v2823
      %2889 = vadd.xlane.f32.xlu0 %v2888
      %v2890 = vpop.xlane.xlu0 %2889
      %v2891 = vadd.f32 %v2824, %v2825
      %2892 = vadd.xlane.f32.xlu0 %v2891
      %v2893 = vpop.xlane.xlu0 %2892
      %v2894 = vadd.f32 %v2826, %v2827
      %2895 = vadd.xlane.f32.xlu0 %v2894
      %v2896 = vpop.xlane.xlu0 %2895
      %v2897 = vadd.f32 %v2828, %v2829
      %2898 = vadd.xlane.f32.xlu0 %v2897
      %v2899 = vpop.xlane.xlu0 %2898
      %v2900 = vadd.f32 %v2830, %v2831
      %2901 = vadd.xlane.f32.xlu0 %v2900
      %v2902 = vpop.xlane.xlu0 %2901
      %v2903 = vadd.f32 %v2832, %v2833
      %2904 = vadd.xlane.f32.xlu0 %v2903
      %v2905 = vpop.xlane.xlu0 %2904
      %v2906 = vadd.f32 %v2834, %v2835
      %2907 = vadd.xlane.f32.xlu0 %v2906
      %v2908 = vpop.xlane.xlu0 %2907
      %v2909 = vadd.f32 %v2836, %v2837
      %2910 = vadd.xlane.f32.xlu0 %v2909
      %v2911 = vpop.xlane.xlu0 %2910
      %v2912 = vadd.f32 %v2838, %v2839
      %2913 = vadd.xlane.f32.xlu0 %v2912
      %v2914 = vpop.xlane.xlu0 %2913
      %v2915 = vadd.f32 %v2840, %v2841
      %2916 = vadd.xlane.f32.xlu0 %v2915
      %v2917 = vpop.xlane.xlu0 %2916
      %v2918 = vadd.f32 %v2842, %v2843
      %2919 = vadd.xlane.f32.xlu0 %v2918
      %v2920 = vpop.xlane.xlu0 %2919
      %v2921 = vadd.f32 %v2844, %v2845
      %2922 = vadd.xlane.f32.xlu0 %v2921
      %v2923 = vpop.xlane.xlu0 %2922
      %v2924 = vadd.f32 %v2846, %v2847
      %2925 = vadd.xlane.f32.xlu0 %v2924
      %v2926 = vpop.xlane.xlu0 %2925
      %v2927 = vadd.f32 %v2848, %v2849
      %2928 = vadd.xlane.f32.xlu0 %v2927
      %v2929 = vpop.xlane.xlu0 %2928
      %v2930 = vadd.f32 %v2850, %v2851
      %2931 = vadd.xlane.f32.xlu0 %v2930
      %v2932 = vpop.xlane.xlu0 %2931
      %v2933 = vadd.f32 %v2852, %v2853
      %2934 = vadd.xlane.f32.xlu0 %v2933
      %v2935 = vpop.xlane.xlu0 %2934
      %v2936 = vadd.f32 %v2854, %v2855
      %2937 = vadd.xlane.f32.xlu0 %v2936
      %v2938 = vpop.xlane.xlu0 %2937
      %v2939 = vadd.f32 %v2856, %v2857
      %2940 = vadd.xlane.f32.xlu0 %v2939
      %v2941 = vpop.xlane.xlu0 %2940
      %v2942 = vadd.f32 %v2858, %v2859
      %2943 = vadd.xlane.f32.xlu0 %v2942
      %v2944 = vpop.xlane.xlu0 %2943
      %v2945 = vadd.f32 %v2860, %v2861
      %2946 = vadd.xlane.f32.xlu0 %v2945
      %v2947 = vpop.xlane.xlu0 %2946
      %v2948 = vadd.f32 %v2862, %v2863
      %2949 = vadd.xlane.f32.xlu0 %v2948
      %v2950 = vpop.xlane.xlu0 %2949
      %v2951 = vadd.f32 %v2864, %v2865
      %2952 = vadd.xlane.f32.xlu0 %v2951
      %v2953 = vpop.xlane.xlu0 %2952
      %v2954 = vadd.f32 %v2866, %v2867
      %2955 = vadd.xlane.f32.xlu0 %v2954
      %v2956 = vpop.xlane.xlu0 %2955
      %v2957 = vadd.f32 %v2868, %v2869
      %2958 = vadd.xlane.f32.xlu0 %v2957
      %v2959 = vpop.xlane.xlu0 %2958
      %v2960 = vadd.f32 %v2870, %v2871
      %2961 = vadd.xlane.f32.xlu0 %v2960
      %v2962 = vpop.xlane.xlu0 %2961
      %v2963 = vadd.f32 %v2872, %v2873
      %2964 = vadd.xlane.f32.xlu0 %v2963
      %v2965 = vpop.xlane.xlu0 %2964
      %v2966 = vadd.f32 %v2874, %v2875
      %2967 = vadd.xlane.f32.xlu0 %v2966
      %v2968 = vpop.xlane.xlu0 %2967
      %v2969 = vadd.f32 %v2876, %v2877
      %2970 = vadd.xlane.f32.xlu0 %v2969
      %v2971 = vpop.xlane.xlu0 %2970
      %v2972 = vadd.f32 %v2878, %v2879
      %2973 = vadd.xlane.f32.xlu0 %v2972
      %v2974 = vpop.xlane.xlu0 %2973
      %v2975 = vadd.f32 %v2880, %v2881
      %2976 = vadd.xlane.f32.xlu0 %v2975
      %v2977 = vpop.xlane.xlu0 %2976
      %vm2978 = vcmp.ge.f32.partialorder %v2884, 1.0
      %vm2979 = vcmp.ge.f32.partialorder %v2887, 1.0
      %vm2980 = vcmp.ge.f32.partialorder %v2890, 1.0
      %vm2981 = vcmp.ge.f32.partialorder %v2893, 1.0
      %vm2982 = vcmp.ge.f32.partialorder %v2896, 1.0
      %vm2983 = vcmp.ge.f32.partialorder %v2899, 1.0
      %vm2984 = vcmp.ge.f32.partialorder %v2902, 1.0
      %vm2985 = vcmp.ge.f32.partialorder %v2905, 1.0
      %vm2986 = vcmp.ge.f32.partialorder %v2908, 1.0
      %vm2987 = vcmp.ge.f32.partialorder %v2911, 1.0
      %vm2988 = vcmp.ge.f32.partialorder %v2914, 1.0
      %vm2989 = vcmp.ge.f32.partialorder %v2917, 1.0
      %vm2990 = vcmp.ge.f32.partialorder %v2920, 1.0
      %vm2991 = vcmp.ge.f32.partialorder %v2923, 1.0
      %vm2992 = vcmp.ge.f32.partialorder %v2926, 1.0
      %vm2993 = vcmp.ge.f32.partialorder %v2929, 1.0
      %vm2994 = vcmp.ge.f32.partialorder %v2932, 1.0
      %vm2995 = vcmp.ge.f32.partialorder %v2935, 1.0
      %vm2996 = vcmp.ge.f32.partialorder %v2938, 1.0
      %vm2997 = vcmp.ge.f32.partialorder %v2941, 1.0
      %vm2998 = vcmp.ge.f32.partialorder %v2944, 1.0
      %vm2999 = vcmp.ge.f32.partialorder %v2947, 1.0
      %vm3000 = vcmp.ge.f32.partialorder %v2950, 1.0
      %vm3001 = vcmp.ge.f32.partialorder %v2953, 1.0
      %vm3002 = vcmp.ge.f32.partialorder %v2956, 1.0
      %vm3003 = vcmp.ge.f32.partialorder %v2959, 1.0
      %vm3004 = vcmp.ge.f32.partialorder %v2962, 1.0
      %vm3005 = vcmp.ge.f32.partialorder %v2965, 1.0
      %vm3006 = vcmp.ge.f32.partialorder %v2968, 1.0
      %vm3007 = vcmp.ge.f32.partialorder %v2971, 1.0
      %vm3008 = vcmp.ge.f32.partialorder %v2974, 1.0
      %vm3009 = vcmp.ge.f32.partialorder %v2977, 1.0
      %v3010 = vsel %vm2978, %v2722, %v2626
      %v3011 = vsel %vm2979, %v2723, %v2627
      %v3012 = vsel %vm2980, %v2724, %v2628
      %v3013 = vsel %vm2981, %v2725, %v2629
      %v3014 = vsel %vm2982, %v2726, %v2630
      %v3015 = vsel %vm2983, %v2727, %v2631
      %v3016 = vsel %vm2984, %v2728, %v2632
      %v3017 = vsel %vm2985, %v2729, %v2633
      %v3018 = vsel %vm2986, %v2730, %v2634
      %v3019 = vsel %vm2987, %v2731, %v2635
      %v3020 = vsel %vm2988, %v2732, %v2636
      %v3021 = vsel %vm2989, %v2733, %v2637
      %v3022 = vsel %vm2990, %v2734, %v2638
      %v3023 = vsel %vm2991, %v2735, %v2639
      %v3024 = vsel %vm2992, %v2736, %v2640
      %v3025 = vsel %vm2993, %v2737, %v2641
      %v3026 = vsel %vm2994, %v2738, %v2642
      %v3027 = vsel %vm2995, %v2739, %v2643
      %v3028 = vsel %vm2996, %v2740, %v2644
      %v3029 = vsel %vm2997, %v2741, %v2645
      %v3030 = vsel %vm2998, %v2742, %v2646
      %v3031 = vsel %vm2999, %v2743, %v2647
      %v3032 = vsel %vm3000, %v2744, %v2648
      %v3033 = vsel %vm3001, %v2745, %v2649
      %v3034 = vsel %vm3002, %v2746, %v2650
      %v3035 = vsel %vm3003, %v2747, %v2651
      %v3036 = vsel %vm3004, %v2748, %v2652
      %v3037 = vsel %vm3005, %v2749, %v2653
      %v3038 = vsel %vm3006, %v2750, %v2654
      %v3039 = vsel %vm3007, %v2751, %v2655
      %v3040 = vsel %vm3008, %v2752, %v2656
      %v3041 = vsel %vm3009, %v2753, %v2657
      %v3042 = vsel %vm2978, %v2658, %v2722
      %v3043 = vsel %vm2979, %v2659, %v2723
      %v3044 = vsel %vm2980, %v2660, %v2724
      %v3045 = vsel %vm2981, %v2661, %v2725
      %v3046 = vsel %vm2982, %v2662, %v2726
      %v3047 = vsel %vm2983, %v2663, %v2727
      %v3048 = vsel %vm2984, %v2664, %v2728
      %v3049 = vsel %vm2985, %v2665, %v2729
      %v3050 = vsel %vm2986, %v2666, %v2730
      %v3051 = vsel %vm2987, %v2667, %v2731
      %v3052 = vsel %vm2988, %v2668, %v2732
      %v3053 = vsel %vm2989, %v2669, %v2733
      %v3054 = vsel %vm2990, %v2670, %v2734
      %v3055 = vsel %vm2991, %v2671, %v2735
      %v3056 = vsel %vm2992, %v2672, %v2736
      %v3057 = vsel %vm2993, %v2673, %v2737
      %v3058 = vsel %vm2994, %v2674, %v2738
      %v3059 = vsel %vm2995, %v2675, %v2739
      %v3060 = vsel %vm2996, %v2676, %v2740
      %v3061 = vsel %vm2997, %v2677, %v2741
      %v3062 = vsel %vm2998, %v2678, %v2742
      %v3063 = vsel %vm2999, %v2679, %v2743
      %v3064 = vsel %vm3000, %v2680, %v2744
      %v3065 = vsel %vm3001, %v2681, %v2745
      %v3066 = vsel %vm3002, %v2682, %v2746
      %v3067 = vsel %vm3003, %v2683, %v2747
      %v3068 = vsel %vm3004, %v2684, %v2748
      %v3069 = vsel %vm3005, %v2685, %v2749
      %v3070 = vsel %vm3006, %v2686, %v2750
      %v3071 = vsel %vm3007, %v2687, %v2751
      %v3072 = vsel %vm3008, %v2688, %v2752
      %v3073 = vsel %vm3009, %v2689, %v2753
      %v3074 = vadd.f32 %v3010, %v3042
      %v3075 = vadd.f32 %v3011, %v3043
      %v3076 = vadd.f32 %v3012, %v3044
      %v3077 = vadd.f32 %v3013, %v3045
      %v3078 = vadd.f32 %v3014, %v3046
      %v3079 = vadd.f32 %v3015, %v3047
      %v3080 = vadd.f32 %v3016, %v3048
      %v3081 = vadd.f32 %v3017, %v3049
      %v3082 = vadd.f32 %v3018, %v3050
      %v3083 = vadd.f32 %v3019, %v3051
      %v3084 = vadd.f32 %v3020, %v3052
      %v3085 = vadd.f32 %v3021, %v3053
      %v3086 = vadd.f32 %v3022, %v3054
      %v3087 = vadd.f32 %v3023, %v3055
      %v3088 = vadd.f32 %v3024, %v3056
      %v3089 = vadd.f32 %v3025, %v3057
      %v3090 = vadd.f32 %v3026, %v3058
      %v3091 = vadd.f32 %v3027, %v3059
      %v3092 = vadd.f32 %v3028, %v3060
      %v3093 = vadd.f32 %v3029, %v3061
      %v3094 = vadd.f32 %v3030, %v3062
      %v3095 = vadd.f32 %v3031, %v3063
      %v3096 = vadd.f32 %v3032, %v3064
      %v3097 = vadd.f32 %v3033, %v3065
      %v3098 = vadd.f32 %v3034, %v3066
      %v3099 = vadd.f32 %v3035, %v3067
      %v3100 = vadd.f32 %v3036, %v3068
      %v3101 = vadd.f32 %v3037, %v3069
      %v3102 = vadd.f32 %v3038, %v3070
      %v3103 = vadd.f32 %v3039, %v3071
      %v3104 = vadd.f32 %v3040, %v3072
      %v3105 = vadd.f32 %v3041, %v3073
      %v3106 = vmul.f32 %v3074, 0.5
      %v3107 = vmul.f32 %v3075, 0.5
      %v3108 = vmul.f32 %v3076, 0.5
      %v3109 = vmul.f32 %v3077, 0.5
      %v3110 = vmul.f32 %v3078, 0.5
      %v3111 = vmul.f32 %v3079, 0.5
      %v3112 = vmul.f32 %v3080, 0.5
      %v3113 = vmul.f32 %v3081, 0.5
      %v3114 = vmul.f32 %v3082, 0.5
      %v3115 = vmul.f32 %v3083, 0.5
      %v3116 = vmul.f32 %v3084, 0.5
      %v3117 = vmul.f32 %v3085, 0.5
      %v3118 = vmul.f32 %v3086, 0.5
      %v3119 = vmul.f32 %v3087, 0.5
      %v3120 = vmul.f32 %v3088, 0.5
      %v3121 = vmul.f32 %v3089, 0.5
      %v3122 = vmul.f32 %v3090, 0.5
      %v3123 = vmul.f32 %v3091, 0.5
      %v3124 = vmul.f32 %v3092, 0.5
      %v3125 = vmul.f32 %v3093, 0.5
      %v3126 = vmul.f32 %v3094, 0.5
      %v3127 = vmul.f32 %v3095, 0.5
      %v3128 = vmul.f32 %v3096, 0.5
      %v3129 = vmul.f32 %v3097, 0.5
      %v3130 = vmul.f32 %v3098, 0.5
      %v3131 = vmul.f32 %v3099, 0.5
      %v3132 = vmul.f32 %v3100, 0.5
      %v3133 = vmul.f32 %v3101, 0.5
      %v3134 = vmul.f32 %v3102, 0.5
      %v3135 = vmul.f32 %v3103, 0.5
      %v3136 = vmul.f32 %v3104, 0.5
      %v3137 = vmul.f32 %v3105, 0.5
      %v3138 = vsub.f32 %v770, %v3106
      %v3139 = vsub.f32 %v771, %v3106
      %v3140 = vsub.f32 %v772, %v3107
      %v3141 = vsub.f32 %v773, %v3107
      %v3142 = vsub.f32 %v774, %v3108
      %v3143 = vsub.f32 %v775, %v3108
      %v3144 = vsub.f32 %v776, %v3109
      %v3145 = vsub.f32 %v777, %v3109
      %v3146 = vsub.f32 %v778, %v3110
      %v3147 = vsub.f32 %v779, %v3110
      %v3148 = vsub.f32 %v780, %v3111
      %v3149 = vsub.f32 %v781, %v3111
      %v3150 = vsub.f32 %v782, %v3112
      %v3151 = vsub.f32 %v783, %v3112
      %v3152 = vsub.f32 %v784, %v3113
      %v3153 = vsub.f32 %v785, %v3113
      %v3154 = vsub.f32 %v786, %v3114
      %v3155 = vsub.f32 %v787, %v3114
      %v3156 = vsub.f32 %v788, %v3115
      %v3157 = vsub.f32 %v789, %v3115
      %v3158 = vsub.f32 %v790, %v3116
      %v3159 = vsub.f32 %v791, %v3116
      %v3160 = vsub.f32 %v792, %v3117
      %v3161 = vsub.f32 %v793, %v3117
      %v3162 = vsub.f32 %v794, %v3118
      %v3163 = vsub.f32 %v795, %v3118
      %v3164 = vsub.f32 %v796, %v3119
      %v3165 = vsub.f32 %v797, %v3119
      %v3166 = vsub.f32 %v798, %v3120
      %v3167 = vsub.f32 %v799, %v3120
      %v3168 = vsub.f32 %v800, %v3121
      %v3169 = vsub.f32 %v801, %v3121
      %v3170 = vsub.f32 %v802, %v3122
      %v3171 = vsub.f32 %v803, %v3122
      %v3172 = vsub.f32 %v804, %v3123
      %v3173 = vsub.f32 %v805, %v3123
      %v3174 = vsub.f32 %v806, %v3124
      %v3175 = vsub.f32 %v807, %v3124
      %v3176 = vsub.f32 %v808, %v3125
      %v3177 = vsub.f32 %v809, %v3125
      %v3178 = vsub.f32 %v810, %v3126
      %v3179 = vsub.f32 %v811, %v3126
      %v3180 = vsub.f32 %v812, %v3127
      %v3181 = vsub.f32 %v813, %v3127
      %v3182 = vsub.f32 %v814, %v3128
      %v3183 = vsub.f32 %v815, %v3128
      %v3184 = vsub.f32 %v816, %v3129
      %v3185 = vsub.f32 %v817, %v3129
      %v3186 = vsub.f32 %v818, %v3130
      %v3187 = vsub.f32 %v819, %v3130
      %v3188 = vsub.f32 %v820, %v3131
      %v3189 = vsub.f32 %v821, %v3131
      %v3190 = vsub.f32 %v822, %v3132
      %v3191 = vsub.f32 %v823, %v3132
      %v3192 = vsub.f32 %v824, %v3133
      %v3193 = vsub.f32 %v825, %v3133
      %v3194 = vsub.f32 %v826, %v3134
      %v3195 = vsub.f32 %v827, %v3134
      %v3196 = vsub.f32 %v828, %v3135
      %v3197 = vsub.f32 %v829, %v3135
      %v3198 = vsub.f32 %v830, %v3136
      %v3199 = vsub.f32 %v831, %v3136
      %v3200 = vsub.f32 %v832, %v3137
      %v3201 = vsub.f32 %v833, %v3137
      %v3202 = vmax.f32 %v3138, 0.0
      %v3203 = vmax.f32 %v3139, 0.0
      %v3204 = vmax.f32 %v3140, 0.0
      %v3205 = vmax.f32 %v3141, 0.0
      %v3206 = vmax.f32 %v3142, 0.0
      %v3207 = vmax.f32 %v3143, 0.0
      %v3208 = vmax.f32 %v3144, 0.0
      %v3209 = vmax.f32 %v3145, 0.0
      %v3210 = vmax.f32 %v3146, 0.0
      %v3211 = vmax.f32 %v3147, 0.0
      %v3212 = vmax.f32 %v3148, 0.0
      %v3213 = vmax.f32 %v3149, 0.0
      %v3214 = vmax.f32 %v3150, 0.0
      %v3215 = vmax.f32 %v3151, 0.0
      %v3216 = vmax.f32 %v3152, 0.0
      %v3217 = vmax.f32 %v3153, 0.0
      %v3218 = vmax.f32 %v3154, 0.0
      %v3219 = vmax.f32 %v3155, 0.0
      %v3220 = vmax.f32 %v3156, 0.0
      %v3221 = vmax.f32 %v3157, 0.0
      %v3222 = vmax.f32 %v3158, 0.0
      %v3223 = vmax.f32 %v3159, 0.0
      %v3224 = vmax.f32 %v3160, 0.0
      %v3225 = vmax.f32 %v3161, 0.0
      %v3226 = vmax.f32 %v3162, 0.0
      %v3227 = vmax.f32 %v3163, 0.0
      %v3228 = vmax.f32 %v3164, 0.0
      %v3229 = vmax.f32 %v3165, 0.0
      %v3230 = vmax.f32 %v3166, 0.0
      %v3231 = vmax.f32 %v3167, 0.0
      %v3232 = vmax.f32 %v3168, 0.0
      %v3233 = vmax.f32 %v3169, 0.0
      %v3234 = vmax.f32 %v3170, 0.0
      %v3235 = vmax.f32 %v3171, 0.0
      %v3236 = vmax.f32 %v3172, 0.0
      %v3237 = vmax.f32 %v3173, 0.0
      %v3238 = vmax.f32 %v3174, 0.0
      %v3239 = vmax.f32 %v3175, 0.0
      %v3240 = vmax.f32 %v3176, 0.0
      %v3241 = vmax.f32 %v3177, 0.0
      %v3242 = vmax.f32 %v3178, 0.0
      %v3243 = vmax.f32 %v3179, 0.0
      %v3244 = vmax.f32 %v3180, 0.0
      %v3245 = vmax.f32 %v3181, 0.0
      %v3246 = vmax.f32 %v3182, 0.0
      %v3247 = vmax.f32 %v3183, 0.0
      %v3248 = vmax.f32 %v3184, 0.0
      %v3249 = vmax.f32 %v3185, 0.0
      %v3250 = vmax.f32 %v3186, 0.0
      %v3251 = vmax.f32 %v3187, 0.0
      %v3252 = vmax.f32 %v3188, 0.0
      %v3253 = vmax.f32 %v3189, 0.0
      %v3254 = vmax.f32 %v3190, 0.0
      %v3255 = vmax.f32 %v3191, 0.0
      %v3256 = vmax.f32 %v3192, 0.0
      %v3257 = vmax.f32 %v3193, 0.0
      %v3258 = vmax.f32 %v3194, 0.0
      %v3259 = vmax.f32 %v3195, 0.0
      %v3260 = vmax.f32 %v3196, 0.0
      %v3261 = vmax.f32 %v3197, 0.0
      %v3262 = vmax.f32 %v3198, 0.0
      %v3263 = vmax.f32 %v3199, 0.0
      %v3264 = vmax.f32 %v3200, 0.0
      %v3265 = vmax.f32 %v3201, 0.0
      %v3266 = vadd.f32 %v3202, %v3203
      %3267 = vadd.xlane.f32.xlu0 %v3266
      %v3268 = vpop.xlane.xlu0 %3267
      %v3269 = vadd.f32 %v3204, %v3205
      %3270 = vadd.xlane.f32.xlu0 %v3269
      %v3271 = vpop.xlane.xlu0 %3270
      %v3272 = vadd.f32 %v3206, %v3207
      %3273 = vadd.xlane.f32.xlu0 %v3272
      %v3274 = vpop.xlane.xlu0 %3273
      %v3275 = vadd.f32 %v3208, %v3209
      %3276 = vadd.xlane.f32.xlu0 %v3275
      %v3277 = vpop.xlane.xlu0 %3276
      %v3278 = vadd.f32 %v3210, %v3211
      %3279 = vadd.xlane.f32.xlu0 %v3278
      %v3280 = vpop.xlane.xlu0 %3279
      %v3281 = vadd.f32 %v3212, %v3213
      %3282 = vadd.xlane.f32.xlu0 %v3281
      %v3283 = vpop.xlane.xlu0 %3282
      %v3284 = vadd.f32 %v3214, %v3215
      %3285 = vadd.xlane.f32.xlu0 %v3284
      %v3286 = vpop.xlane.xlu0 %3285
      %v3287 = vadd.f32 %v3216, %v3217
      %3288 = vadd.xlane.f32.xlu0 %v3287
      %v3289 = vpop.xlane.xlu0 %3288
      %v3290 = vadd.f32 %v3218, %v3219
      %3291 = vadd.xlane.f32.xlu0 %v3290
      %v3292 = vpop.xlane.xlu0 %3291
      %v3293 = vadd.f32 %v3220, %v3221
      %3294 = vadd.xlane.f32.xlu0 %v3293
      %v3295 = vpop.xlane.xlu0 %3294
      %v3296 = vadd.f32 %v3222, %v3223
      %3297 = vadd.xlane.f32.xlu0 %v3296
      %v3298 = vpop.xlane.xlu0 %3297
      %v3299 = vadd.f32 %v3224, %v3225
      %3300 = vadd.xlane.f32.xlu0 %v3299
      %v3301 = vpop.xlane.xlu0 %3300
      %v3302 = vadd.f32 %v3226, %v3227
      %3303 = vadd.xlane.f32.xlu0 %v3302
      %v3304 = vpop.xlane.xlu0 %3303
      %v3305 = vadd.f32 %v3228, %v3229
      %3306 = vadd.xlane.f32.xlu0 %v3305
      %v3307 = vpop.xlane.xlu0 %3306
      %v3308 = vadd.f32 %v3230, %v3231
      %3309 = vadd.xlane.f32.xlu0 %v3308
      %v3310 = vpop.xlane.xlu0 %3309
      %v3311 = vadd.f32 %v3232, %v3233
      %3312 = vadd.xlane.f32.xlu0 %v3311
      %v3313 = vpop.xlane.xlu0 %3312
      %v3314 = vadd.f32 %v3234, %v3235
      %3315 = vadd.xlane.f32.xlu0 %v3314
      %v3316 = vpop.xlane.xlu0 %3315
      %v3317 = vadd.f32 %v3236, %v3237
      %3318 = vadd.xlane.f32.xlu0 %v3317
      %v3319 = vpop.xlane.xlu0 %3318
      %v3320 = vadd.f32 %v3238, %v3239
      %3321 = vadd.xlane.f32.xlu0 %v3320
      %v3322 = vpop.xlane.xlu0 %3321
      %v3323 = vadd.f32 %v3240, %v3241
      %3324 = vadd.xlane.f32.xlu0 %v3323
      %v3325 = vpop.xlane.xlu0 %3324
      %v3326 = vadd.f32 %v3242, %v3243
      %3327 = vadd.xlane.f32.xlu0 %v3326
      %v3328 = vpop.xlane.xlu0 %3327
      %v3329 = vadd.f32 %v3244, %v3245
      %3330 = vadd.xlane.f32.xlu0 %v3329
      %v3331 = vpop.xlane.xlu0 %3330
      %v3332 = vadd.f32 %v3246, %v3247
      %3333 = vadd.xlane.f32.xlu0 %v3332
      %v3334 = vpop.xlane.xlu0 %3333
      %v3335 = vadd.f32 %v3248, %v3249
      %3336 = vadd.xlane.f32.xlu0 %v3335
      %v3337 = vpop.xlane.xlu0 %3336
      %v3338 = vadd.f32 %v3250, %v3251
      %3339 = vadd.xlane.f32.xlu0 %v3338
      %v3340 = vpop.xlane.xlu0 %3339
      %v3341 = vadd.f32 %v3252, %v3253
      %3342 = vadd.xlane.f32.xlu0 %v3341
      %v3343 = vpop.xlane.xlu0 %3342
      %v3344 = vadd.f32 %v3254, %v3255
      %3345 = vadd.xlane.f32.xlu0 %v3344
      %v3346 = vpop.xlane.xlu0 %3345
      %v3347 = vadd.f32 %v3256, %v3257
      %3348 = vadd.xlane.f32.xlu0 %v3347
      %v3349 = vpop.xlane.xlu0 %3348
      %v3350 = vadd.f32 %v3258, %v3259
      %3351 = vadd.xlane.f32.xlu0 %v3350
      %v3352 = vpop.xlane.xlu0 %3351
      %v3353 = vadd.f32 %v3260, %v3261
      %3354 = vadd.xlane.f32.xlu0 %v3353
      %v3355 = vpop.xlane.xlu0 %3354
      %v3356 = vadd.f32 %v3262, %v3263
      %3357 = vadd.xlane.f32.xlu0 %v3356
      %v3358 = vpop.xlane.xlu0 %3357
      %v3359 = vadd.f32 %v3264, %v3265
      %3360 = vadd.xlane.f32.xlu0 %v3359
      %v3361 = vpop.xlane.xlu0 %3360
      %vm3362 = vcmp.ge.f32.partialorder %v3268, 1.0
      %vm3363 = vcmp.ge.f32.partialorder %v3271, 1.0
      %vm3364 = vcmp.ge.f32.partialorder %v3274, 1.0
      %vm3365 = vcmp.ge.f32.partialorder %v3277, 1.0
      %vm3366 = vcmp.ge.f32.partialorder %v3280, 1.0
      %vm3367 = vcmp.ge.f32.partialorder %v3283, 1.0
      %vm3368 = vcmp.ge.f32.partialorder %v3286, 1.0
      %vm3369 = vcmp.ge.f32.partialorder %v3289, 1.0
      %vm3370 = vcmp.ge.f32.partialorder %v3292, 1.0
      %vm3371 = vcmp.ge.f32.partialorder %v3295, 1.0
      %vm3372 = vcmp.ge.f32.partialorder %v3298, 1.0
      %vm3373 = vcmp.ge.f32.partialorder %v3301, 1.0
      %vm3374 = vcmp.ge.f32.partialorder %v3304, 1.0
      %vm3375 = vcmp.ge.f32.partialorder %v3307, 1.0
      %vm3376 = vcmp.ge.f32.partialorder %v3310, 1.0
      %vm3377 = vcmp.ge.f32.partialorder %v3313, 1.0
      %vm3378 = vcmp.ge.f32.partialorder %v3316, 1.0
      %vm3379 = vcmp.ge.f32.partialorder %v3319, 1.0
      %vm3380 = vcmp.ge.f32.partialorder %v3322, 1.0
      %vm3381 = vcmp.ge.f32.partialorder %v3325, 1.0
      %vm3382 = vcmp.ge.f32.partialorder %v3328, 1.0
      %vm3383 = vcmp.ge.f32.partialorder %v3331, 1.0
      %vm3384 = vcmp.ge.f32.partialorder %v3334, 1.0
      %vm3385 = vcmp.ge.f32.partialorder %v3337, 1.0
      %vm3386 = vcmp.ge.f32.partialorder %v3340, 1.0
      %vm3387 = vcmp.ge.f32.partialorder %v3343, 1.0
      %vm3388 = vcmp.ge.f32.partialorder %v3346, 1.0
      %vm3389 = vcmp.ge.f32.partialorder %v3349, 1.0
      %vm3390 = vcmp.ge.f32.partialorder %v3352, 1.0
      %vm3391 = vcmp.ge.f32.partialorder %v3355, 1.0
      %vm3392 = vcmp.ge.f32.partialorder %v3358, 1.0
      %vm3393 = vcmp.ge.f32.partialorder %v3361, 1.0
      %v3394 = vsel %vm3362, %v3106, %v3010
      %v3395 = vsel %vm3363, %v3107, %v3011
      %v3396 = vsel %vm3364, %v3108, %v3012
      %v3397 = vsel %vm3365, %v3109, %v3013
      %v3398 = vsel %vm3366, %v3110, %v3014
      %v3399 = vsel %vm3367, %v3111, %v3015
      %v3400 = vsel %vm3368, %v3112, %v3016
      %v3401 = vsel %vm3369, %v3113, %v3017
      %v3402 = vsel %vm3370, %v3114, %v3018
      %v3403 = vsel %vm3371, %v3115, %v3019
      %v3404 = vsel %vm3372, %v3116, %v3020
      %v3405 = vsel %vm3373, %v3117, %v3021
      %v3406 = vsel %vm3374, %v3118, %v3022
      %v3407 = vsel %vm3375, %v3119, %v3023
      %v3408 = vsel %vm3376, %v3120, %v3024
      %v3409 = vsel %vm3377, %v3121, %v3025
      %v3410 = vsel %vm3378, %v3122, %v3026
      %v3411 = vsel %vm3379, %v3123, %v3027
      %v3412 = vsel %vm3380, %v3124, %v3028
      %v3413 = vsel %vm3381, %v3125, %v3029
      %v3414 = vsel %vm3382, %v3126, %v3030
      %v3415 = vsel %vm3383, %v3127, %v3031
      %v3416 = vsel %vm3384, %v3128, %v3032
      %v3417 = vsel %vm3385, %v3129, %v3033
      %v3418 = vsel %vm3386, %v3130, %v3034
      %v3419 = vsel %vm3387, %v3131, %v3035
      %v3420 = vsel %vm3388, %v3132, %v3036
      %v3421 = vsel %vm3389, %v3133, %v3037
      %v3422 = vsel %vm3390, %v3134, %v3038
      %v3423 = vsel %vm3391, %v3135, %v3039
      %v3424 = vsel %vm3392, %v3136, %v3040
      %v3425 = vsel %vm3393, %v3137, %v3041
      %v3426 = vsel %vm3362, %v3042, %v3106
      %v3427 = vsel %vm3363, %v3043, %v3107
      %v3428 = vsel %vm3364, %v3044, %v3108
      %v3429 = vsel %vm3365, %v3045, %v3109
      %v3430 = vsel %vm3366, %v3046, %v3110
      %v3431 = vsel %vm3367, %v3047, %v3111
      %v3432 = vsel %vm3368, %v3048, %v3112
      %v3433 = vsel %vm3369, %v3049, %v3113
      %v3434 = vsel %vm3370, %v3050, %v3114
      %v3435 = vsel %vm3371, %v3051, %v3115
      %v3436 = vsel %vm3372, %v3052, %v3116
      %v3437 = vsel %vm3373, %v3053, %v3117
      %v3438 = vsel %vm3374, %v3054, %v3118
      %v3439 = vsel %vm3375, %v3055, %v3119
      %v3440 = vsel %vm3376, %v3056, %v3120
      %v3441 = vsel %vm3377, %v3057, %v3121
      %v3442 = vsel %vm3378, %v3058, %v3122
      %v3443 = vsel %vm3379, %v3059, %v3123
      %v3444 = vsel %vm3380, %v3060, %v3124
      %v3445 = vsel %vm3381, %v3061, %v3125
      %v3446 = vsel %vm3382, %v3062, %v3126
      %v3447 = vsel %vm3383, %v3063, %v3127
      %v3448 = vsel %vm3384, %v3064, %v3128
      %v3449 = vsel %vm3385, %v3065, %v3129
      %v3450 = vsel %vm3386, %v3066, %v3130
      %v3451 = vsel %vm3387, %v3067, %v3131
      %v3452 = vsel %vm3388, %v3068, %v3132
      %v3453 = vsel %vm3389, %v3069, %v3133
      %v3454 = vsel %vm3390, %v3070, %v3134
      %v3455 = vsel %vm3391, %v3071, %v3135
      %v3456 = vsel %vm3392, %v3072, %v3136
      %v3457 = vsel %vm3393, %v3073, %v3137
      %v3458 = vadd.f32 %v3394, %v3426
      %v3459 = vadd.f32 %v3395, %v3427
      %v3460 = vadd.f32 %v3396, %v3428
      %v3461 = vadd.f32 %v3397, %v3429
      %v3462 = vadd.f32 %v3398, %v3430
      %v3463 = vadd.f32 %v3399, %v3431
      %v3464 = vadd.f32 %v3400, %v3432
      %v3465 = vadd.f32 %v3401, %v3433
      %v3466 = vadd.f32 %v3402, %v3434
      %v3467 = vadd.f32 %v3403, %v3435
      %v3468 = vadd.f32 %v3404, %v3436
      %v3469 = vadd.f32 %v3405, %v3437
      %v3470 = vadd.f32 %v3406, %v3438
      %v3471 = vadd.f32 %v3407, %v3439
      %v3472 = vadd.f32 %v3408, %v3440
      %v3473 = vadd.f32 %v3409, %v3441
      %v3474 = vadd.f32 %v3410, %v3442
      %v3475 = vadd.f32 %v3411, %v3443
      %v3476 = vadd.f32 %v3412, %v3444
      %v3477 = vadd.f32 %v3413, %v3445
      %v3478 = vadd.f32 %v3414, %v3446
      %v3479 = vadd.f32 %v3415, %v3447
      %v3480 = vadd.f32 %v3416, %v3448
      %v3481 = vadd.f32 %v3417, %v3449
      %v3482 = vadd.f32 %v3418, %v3450
      %v3483 = vadd.f32 %v3419, %v3451
      %v3484 = vadd.f32 %v3420, %v3452
      %v3485 = vadd.f32 %v3421, %v3453
      %v3486 = vadd.f32 %v3422, %v3454
      %v3487 = vadd.f32 %v3423, %v3455
      %v3488 = vadd.f32 %v3424, %v3456
      %v3489 = vadd.f32 %v3425, %v3457
      %v3490 = vmul.f32 %v3458, 0.5
      %v3491 = vmul.f32 %v3459, 0.5
      %v3492 = vmul.f32 %v3460, 0.5
      %v3493 = vmul.f32 %v3461, 0.5
      %v3494 = vmul.f32 %v3462, 0.5
      %v3495 = vmul.f32 %v3463, 0.5
      %v3496 = vmul.f32 %v3464, 0.5
      %v3497 = vmul.f32 %v3465, 0.5
      %v3498 = vmul.f32 %v3466, 0.5
      %v3499 = vmul.f32 %v3467, 0.5
      %v3500 = vmul.f32 %v3468, 0.5
      %v3501 = vmul.f32 %v3469, 0.5
      %v3502 = vmul.f32 %v3470, 0.5
      %v3503 = vmul.f32 %v3471, 0.5
      %v3504 = vmul.f32 %v3472, 0.5
      %v3505 = vmul.f32 %v3473, 0.5
      %v3506 = vmul.f32 %v3474, 0.5
      %v3507 = vmul.f32 %v3475, 0.5
      %v3508 = vmul.f32 %v3476, 0.5
      %v3509 = vmul.f32 %v3477, 0.5
      %v3510 = vmul.f32 %v3478, 0.5
      %v3511 = vmul.f32 %v3479, 0.5
      %v3512 = vmul.f32 %v3480, 0.5
      %v3513 = vmul.f32 %v3481, 0.5
      %v3514 = vmul.f32 %v3482, 0.5
      %v3515 = vmul.f32 %v3483, 0.5
      %v3516 = vmul.f32 %v3484, 0.5
      %v3517 = vmul.f32 %v3485, 0.5
      %v3518 = vmul.f32 %v3486, 0.5
      %v3519 = vmul.f32 %v3487, 0.5
      %v3520 = vmul.f32 %v3488, 0.5
      %v3521 = vmul.f32 %v3489, 0.5
      %v3522 = vsub.f32 %v770, %v3490
      %v3523 = vsub.f32 %v771, %v3490
      %v3524 = vsub.f32 %v772, %v3491
      %v3525 = vsub.f32 %v773, %v3491
      %v3526 = vsub.f32 %v774, %v3492
      %v3527 = vsub.f32 %v775, %v3492
      %v3528 = vsub.f32 %v776, %v3493
      %v3529 = vsub.f32 %v777, %v3493
      %v3530 = vsub.f32 %v778, %v3494
      %v3531 = vsub.f32 %v779, %v3494
      %v3532 = vsub.f32 %v780, %v3495
      %v3533 = vsub.f32 %v781, %v3495
      %v3534 = vsub.f32 %v782, %v3496
      %v3535 = vsub.f32 %v783, %v3496
      %v3536 = vsub.f32 %v784, %v3497
      %v3537 = vsub.f32 %v785, %v3497
      %v3538 = vsub.f32 %v786, %v3498
      %v3539 = vsub.f32 %v787, %v3498
      %v3540 = vsub.f32 %v788, %v3499
      %v3541 = vsub.f32 %v789, %v3499
      %v3542 = vsub.f32 %v790, %v3500
      %v3543 = vsub.f32 %v791, %v3500
      %v3544 = vsub.f32 %v792, %v3501
      %v3545 = vsub.f32 %v793, %v3501
      %v3546 = vsub.f32 %v794, %v3502
      %v3547 = vsub.f32 %v795, %v3502
      %v3548 = vsub.f32 %v796, %v3503
      %v3549 = vsub.f32 %v797, %v3503
      %v3550 = vsub.f32 %v798, %v3504
      %v3551 = vsub.f32 %v799, %v3504
      %v3552 = vsub.f32 %v800, %v3505
      %v3553 = vsub.f32 %v801, %v3505
      %v3554 = vsub.f32 %v802, %v3506
      %v3555 = vsub.f32 %v803, %v3506
      %v3556 = vsub.f32 %v804, %v3507
      %v3557 = vsub.f32 %v805, %v3507
      %v3558 = vsub.f32 %v806, %v3508
      %v3559 = vsub.f32 %v807, %v3508
      %v3560 = vsub.f32 %v808, %v3509
      %v3561 = vsub.f32 %v809, %v3509
      %v3562 = vsub.f32 %v810, %v3510
      %v3563 = vsub.f32 %v811, %v3510
      %v3564 = vsub.f32 %v812, %v3511
      %v3565 = vsub.f32 %v813, %v3511
      %v3566 = vsub.f32 %v814, %v3512
      %v3567 = vsub.f32 %v815, %v3512
      %v3568 = vsub.f32 %v816, %v3513
      %v3569 = vsub.f32 %v817, %v3513
      %v3570 = vsub.f32 %v818, %v3514
      %v3571 = vsub.f32 %v819, %v3514
      %v3572 = vsub.f32 %v820, %v3515
      %v3573 = vsub.f32 %v821, %v3515
      %v3574 = vsub.f32 %v822, %v3516
      %v3575 = vsub.f32 %v823, %v3516
      %v3576 = vsub.f32 %v824, %v3517
      %v3577 = vsub.f32 %v825, %v3517
      %v3578 = vsub.f32 %v826, %v3518
      %v3579 = vsub.f32 %v827, %v3518
      %v3580 = vsub.f32 %v828, %v3519
      %v3581 = vsub.f32 %v829, %v3519
      %v3582 = vsub.f32 %v830, %v3520
      %v3583 = vsub.f32 %v831, %v3520
      %v3584 = vsub.f32 %v832, %v3521
      %v3585 = vsub.f32 %v833, %v3521
      %v3586 = vmax.f32 %v3522, 0.0
      %v3587 = vmax.f32 %v3523, 0.0
      %v3588 = vmax.f32 %v3524, 0.0
      %v3589 = vmax.f32 %v3525, 0.0
      %v3590 = vmax.f32 %v3526, 0.0
      %v3591 = vmax.f32 %v3527, 0.0
      %v3592 = vmax.f32 %v3528, 0.0
      %v3593 = vmax.f32 %v3529, 0.0
      %v3594 = vmax.f32 %v3530, 0.0
      %v3595 = vmax.f32 %v3531, 0.0
      %v3596 = vmax.f32 %v3532, 0.0
      %v3597 = vmax.f32 %v3533, 0.0
      %v3598 = vmax.f32 %v3534, 0.0
      %v3599 = vmax.f32 %v3535, 0.0
      %v3600 = vmax.f32 %v3536, 0.0
      %v3601 = vmax.f32 %v3537, 0.0
      %v3602 = vmax.f32 %v3538, 0.0
      %v3603 = vmax.f32 %v3539, 0.0
      %v3604 = vmax.f32 %v3540, 0.0
      %v3605 = vmax.f32 %v3541, 0.0
      %v3606 = vmax.f32 %v3542, 0.0
      %v3607 = vmax.f32 %v3543, 0.0
      %v3608 = vmax.f32 %v3544, 0.0
      %v3609 = vmax.f32 %v3545, 0.0
      %v3610 = vmax.f32 %v3546, 0.0
      %v3611 = vmax.f32 %v3547, 0.0
      %v3612 = vmax.f32 %v3548, 0.0
      %v3613 = vmax.f32 %v3549, 0.0
      %v3614 = vmax.f32 %v3550, 0.0
      %v3615 = vmax.f32 %v3551, 0.0
      %v3616 = vmax.f32 %v3552, 0.0
      %v3617 = vmax.f32 %v3553, 0.0
      %v3618 = vmax.f32 %v3554, 0.0
      %v3619 = vmax.f32 %v3555, 0.0
      %v3620 = vmax.f32 %v3556, 0.0
      %v3621 = vmax.f32 %v3557, 0.0
      %v3622 = vmax.f32 %v3558, 0.0
      %v3623 = vmax.f32 %v3559, 0.0
      %v3624 = vmax.f32 %v3560, 0.0
      %v3625 = vmax.f32 %v3561, 0.0
      %v3626 = vmax.f32 %v3562, 0.0
      %v3627 = vmax.f32 %v3563, 0.0
      %v3628 = vmax.f32 %v3564, 0.0
      %v3629 = vmax.f32 %v3565, 0.0
      %v3630 = vmax.f32 %v3566, 0.0
      %v3631 = vmax.f32 %v3567, 0.0
      %v3632 = vmax.f32 %v3568, 0.0
      %v3633 = vmax.f32 %v3569, 0.0
      %v3634 = vmax.f32 %v3570, 0.0
      %v3635 = vmax.f32 %v3571, 0.0
      %v3636 = vmax.f32 %v3572, 0.0
      %v3637 = vmax.f32 %v3573, 0.0
      %v3638 = vmax.f32 %v3574, 0.0
      %v3639 = vmax.f32 %v3575, 0.0
      %v3640 = vmax.f32 %v3576, 0.0
      %v3641 = vmax.f32 %v3577, 0.0
      %v3642 = vmax.f32 %v3578, 0.0
      %v3643 = vmax.f32 %v3579, 0.0
      %v3644 = vmax.f32 %v3580, 0.0
      %v3645 = vmax.f32 %v3581, 0.0
      %v3646 = vmax.f32 %v3582, 0.0
      %v3647 = vmax.f32 %v3583, 0.0
      %v3648 = vmax.f32 %v3584, 0.0
      %v3649 = vmax.f32 %v3585, 0.0
      %v3650 = vadd.f32 %v3586, %v3587
      %3651 = vadd.xlane.f32.xlu0 %v3650
      %v3652 = vpop.xlane.xlu0 %3651
      %v3653 = vadd.f32 %v3588, %v3589
      %3654 = vadd.xlane.f32.xlu0 %v3653
      %v3655 = vpop.xlane.xlu0 %3654
      %v3656 = vadd.f32 %v3590, %v3591
      %3657 = vadd.xlane.f32.xlu0 %v3656
      %v3658 = vpop.xlane.xlu0 %3657
      %v3659 = vadd.f32 %v3592, %v3593
      %3660 = vadd.xlane.f32.xlu0 %v3659
      %v3661 = vpop.xlane.xlu0 %3660
      %v3662 = vadd.f32 %v3594, %v3595
      %3663 = vadd.xlane.f32.xlu0 %v3662
      %v3664 = vpop.xlane.xlu0 %3663
      %v3665 = vadd.f32 %v3596, %v3597
      %3666 = vadd.xlane.f32.xlu0 %v3665
      %v3667 = vpop.xlane.xlu0 %3666
      %v3668 = vadd.f32 %v3598, %v3599
      %3669 = vadd.xlane.f32.xlu0 %v3668
      %v3670 = vpop.xlane.xlu0 %3669
      %v3671 = vadd.f32 %v3600, %v3601
      %3672 = vadd.xlane.f32.xlu0 %v3671
      %v3673 = vpop.xlane.xlu0 %3672
      %v3674 = vadd.f32 %v3602, %v3603
      %3675 = vadd.xlane.f32.xlu0 %v3674
      %v3676 = vpop.xlane.xlu0 %3675
      %v3677 = vadd.f32 %v3604, %v3605
      %3678 = vadd.xlane.f32.xlu0 %v3677
      %v3679 = vpop.xlane.xlu0 %3678
      %v3680 = vadd.f32 %v3606, %v3607
      %3681 = vadd.xlane.f32.xlu0 %v3680
      %v3682 = vpop.xlane.xlu0 %3681
      %v3683 = vadd.f32 %v3608, %v3609
      %3684 = vadd.xlane.f32.xlu0 %v3683
      %v3685 = vpop.xlane.xlu0 %3684
      %v3686 = vadd.f32 %v3610, %v3611
      %3687 = vadd.xlane.f32.xlu0 %v3686
      %v3688 = vpop.xlane.xlu0 %3687
      %v3689 = vadd.f32 %v3612, %v3613
      %3690 = vadd.xlane.f32.xlu0 %v3689
      %v3691 = vpop.xlane.xlu0 %3690
      %v3692 = vadd.f32 %v3614, %v3615
      %3693 = vadd.xlane.f32.xlu0 %v3692
      %v3694 = vpop.xlane.xlu0 %3693
      %v3695 = vadd.f32 %v3616, %v3617
      %3696 = vadd.xlane.f32.xlu0 %v3695
      %v3697 = vpop.xlane.xlu0 %3696
      %v3698 = vadd.f32 %v3618, %v3619
      %3699 = vadd.xlane.f32.xlu0 %v3698
      %v3700 = vpop.xlane.xlu0 %3699
      %v3701 = vadd.f32 %v3620, %v3621
      %3702 = vadd.xlane.f32.xlu0 %v3701
      %v3703 = vpop.xlane.xlu0 %3702
      %v3704 = vadd.f32 %v3622, %v3623
      %3705 = vadd.xlane.f32.xlu0 %v3704
      %v3706 = vpop.xlane.xlu0 %3705
      %v3707 = vadd.f32 %v3624, %v3625
      %3708 = vadd.xlane.f32.xlu0 %v3707
      %v3709 = vpop.xlane.xlu0 %3708
      %v3710 = vadd.f32 %v3626, %v3627
      %3711 = vadd.xlane.f32.xlu0 %v3710
      %v3712 = vpop.xlane.xlu0 %3711
      %v3713 = vadd.f32 %v3628, %v3629
      %3714 = vadd.xlane.f32.xlu0 %v3713
      %v3715 = vpop.xlane.xlu0 %3714
      %v3716 = vadd.f32 %v3630, %v3631
      %3717 = vadd.xlane.f32.xlu0 %v3716
      %v3718 = vpop.xlane.xlu0 %3717
      %v3719 = vadd.f32 %v3632, %v3633
      %3720 = vadd.xlane.f32.xlu0 %v3719
      %v3721 = vpop.xlane.xlu0 %3720
      %v3722 = vadd.f32 %v3634, %v3635
      %3723 = vadd.xlane.f32.xlu0 %v3722
      %v3724 = vpop.xlane.xlu0 %3723
      %v3725 = vadd.f32 %v3636, %v3637
      %3726 = vadd.xlane.f32.xlu0 %v3725
      %v3727 = vpop.xlane.xlu0 %3726
      %v3728 = vadd.f32 %v3638, %v3639
      %3729 = vadd.xlane.f32.xlu0 %v3728
      %v3730 = vpop.xlane.xlu0 %3729
      %v3731 = vadd.f32 %v3640, %v3641
      %3732 = vadd.xlane.f32.xlu0 %v3731
      %v3733 = vpop.xlane.xlu0 %3732
      %v3734 = vadd.f32 %v3642, %v3643
      %3735 = vadd.xlane.f32.xlu0 %v3734
      %v3736 = vpop.xlane.xlu0 %3735
      %v3737 = vadd.f32 %v3644, %v3645
      %3738 = vadd.xlane.f32.xlu0 %v3737
      %v3739 = vpop.xlane.xlu0 %3738
      %v3740 = vadd.f32 %v3646, %v3647
      %3741 = vadd.xlane.f32.xlu0 %v3740
      %v3742 = vpop.xlane.xlu0 %3741
      %v3743 = vadd.f32 %v3648, %v3649
      %3744 = vadd.xlane.f32.xlu0 %v3743
      %v3745 = vpop.xlane.xlu0 %3744
      %vm3746 = vcmp.ge.f32.partialorder %v3652, 1.0
      %vm3747 = vcmp.ge.f32.partialorder %v3655, 1.0
      %vm3748 = vcmp.ge.f32.partialorder %v3658, 1.0
      %vm3749 = vcmp.ge.f32.partialorder %v3661, 1.0
      %vm3750 = vcmp.ge.f32.partialorder %v3664, 1.0
      %vm3751 = vcmp.ge.f32.partialorder %v3667, 1.0
      %vm3752 = vcmp.ge.f32.partialorder %v3670, 1.0
      %vm3753 = vcmp.ge.f32.partialorder %v3673, 1.0
      %vm3754 = vcmp.ge.f32.partialorder %v3676, 1.0
      %vm3755 = vcmp.ge.f32.partialorder %v3679, 1.0
      %vm3756 = vcmp.ge.f32.partialorder %v3682, 1.0
      %vm3757 = vcmp.ge.f32.partialorder %v3685, 1.0
      %vm3758 = vcmp.ge.f32.partialorder %v3688, 1.0
      %vm3759 = vcmp.ge.f32.partialorder %v3691, 1.0
      %vm3760 = vcmp.ge.f32.partialorder %v3694, 1.0
      %vm3761 = vcmp.ge.f32.partialorder %v3697, 1.0
      %vm3762 = vcmp.ge.f32.partialorder %v3700, 1.0
      %vm3763 = vcmp.ge.f32.partialorder %v3703, 1.0
      %vm3764 = vcmp.ge.f32.partialorder %v3706, 1.0
      %vm3765 = vcmp.ge.f32.partialorder %v3709, 1.0
      %vm3766 = vcmp.ge.f32.partialorder %v3712, 1.0
      %vm3767 = vcmp.ge.f32.partialorder %v3715, 1.0
      %vm3768 = vcmp.ge.f32.partialorder %v3718, 1.0
      %vm3769 = vcmp.ge.f32.partialorder %v3721, 1.0
      %vm3770 = vcmp.ge.f32.partialorder %v3724, 1.0
      %vm3771 = vcmp.ge.f32.partialorder %v3727, 1.0
      %vm3772 = vcmp.ge.f32.partialorder %v3730, 1.0
      %vm3773 = vcmp.ge.f32.partialorder %v3733, 1.0
      %vm3774 = vcmp.ge.f32.partialorder %v3736, 1.0
      %vm3775 = vcmp.ge.f32.partialorder %v3739, 1.0
      %vm3776 = vcmp.ge.f32.partialorder %v3742, 1.0
      %vm3777 = vcmp.ge.f32.partialorder %v3745, 1.0
      %v3778 = vsel %vm3746, %v3490, %v3394
      %v3779 = vsel %vm3747, %v3491, %v3395
      %v3780 = vsel %vm3748, %v3492, %v3396
      %v3781 = vsel %vm3749, %v3493, %v3397
      %v3782 = vsel %vm3750, %v3494, %v3398
      %v3783 = vsel %vm3751, %v3495, %v3399
      %v3784 = vsel %vm3752, %v3496, %v3400
      %v3785 = vsel %vm3753, %v3497, %v3401
      %v3786 = vsel %vm3754, %v3498, %v3402
      %v3787 = vsel %vm3755, %v3499, %v3403
      %v3788 = vsel %vm3756, %v3500, %v3404
      %v3789 = vsel %vm3757, %v3501, %v3405
      %v3790 = vsel %vm3758, %v3502, %v3406
      %v3791 = vsel %vm3759, %v3503, %v3407
      %v3792 = vsel %vm3760, %v3504, %v3408
      %v3793 = vsel %vm3761, %v3505, %v3409
      %v3794 = vsel %vm3762, %v3506, %v3410
      %v3795 = vsel %vm3763, %v3507, %v3411
      %v3796 = vsel %vm3764, %v3508, %v3412
      %v3797 = vsel %vm3765, %v3509, %v3413
      %v3798 = vsel %vm3766, %v3510, %v3414
      %v3799 = vsel %vm3767, %v3511, %v3415
      %v3800 = vsel %vm3768, %v3512, %v3416
      %v3801 = vsel %vm3769, %v3513, %v3417
      %v3802 = vsel %vm3770, %v3514, %v3418
      %v3803 = vsel %vm3771, %v3515, %v3419
      %v3804 = vsel %vm3772, %v3516, %v3420
      %v3805 = vsel %vm3773, %v3517, %v3421
      %v3806 = vsel %vm3774, %v3518, %v3422
      %v3807 = vsel %vm3775, %v3519, %v3423
      %v3808 = vsel %vm3776, %v3520, %v3424
      %v3809 = vsel %vm3777, %v3521, %v3425
      %v3810 = vsel %vm3746, %v3426, %v3490
      %v3811 = vsel %vm3747, %v3427, %v3491
      %v3812 = vsel %vm3748, %v3428, %v3492
      %v3813 = vsel %vm3749, %v3429, %v3493
      %v3814 = vsel %vm3750, %v3430, %v3494
      %v3815 = vsel %vm3751, %v3431, %v3495
      %v3816 = vsel %vm3752, %v3432, %v3496
      %v3817 = vsel %vm3753, %v3433, %v3497
      %v3818 = vsel %vm3754, %v3434, %v3498
      %v3819 = vsel %vm3755, %v3435, %v3499
      %v3820 = vsel %vm3756, %v3436, %v3500
      %v3821 = vsel %vm3757, %v3437, %v3501
      %v3822 = vsel %vm3758, %v3438, %v3502
      %v3823 = vsel %vm3759, %v3439, %v3503
      %v3824 = vsel %vm3760, %v3440, %v3504
      %v3825 = vsel %vm3761, %v3441, %v3505
      %v3826 = vsel %vm3762, %v3442, %v3506
      %v3827 = vsel %vm3763, %v3443, %v3507
      %v3828 = vsel %vm3764, %v3444, %v3508
      %v3829 = vsel %vm3765, %v3445, %v3509
      %v3830 = vsel %vm3766, %v3446, %v3510
      %v3831 = vsel %vm3767, %v3447, %v3511
      %v3832 = vsel %vm3768, %v3448, %v3512
      %v3833 = vsel %vm3769, %v3449, %v3513
      %v3834 = vsel %vm3770, %v3450, %v3514
      %v3835 = vsel %vm3771, %v3451, %v3515
      %v3836 = vsel %vm3772, %v3452, %v3516
      %v3837 = vsel %vm3773, %v3453, %v3517
      %v3838 = vsel %vm3774, %v3454, %v3518
      %v3839 = vsel %vm3775, %v3455, %v3519
      %v3840 = vsel %vm3776, %v3456, %v3520
      %v3841 = vsel %vm3777, %v3457, %v3521
      %v3842 = vadd.f32 %v3778, %v3810
      %v3843 = vadd.f32 %v3779, %v3811
      %v3844 = vadd.f32 %v3780, %v3812
      %v3845 = vadd.f32 %v3781, %v3813
      %v3846 = vadd.f32 %v3782, %v3814
      %v3847 = vadd.f32 %v3783, %v3815
      %v3848 = vadd.f32 %v3784, %v3816
      %v3849 = vadd.f32 %v3785, %v3817
      %v3850 = vadd.f32 %v3786, %v3818
      %v3851 = vadd.f32 %v3787, %v3819
      %v3852 = vadd.f32 %v3788, %v3820
      %v3853 = vadd.f32 %v3789, %v3821
      %v3854 = vadd.f32 %v3790, %v3822
      %v3855 = vadd.f32 %v3791, %v3823
      %v3856 = vadd.f32 %v3792, %v3824
      %v3857 = vadd.f32 %v3793, %v3825
      %v3858 = vadd.f32 %v3794, %v3826
      %v3859 = vadd.f32 %v3795, %v3827
      %v3860 = vadd.f32 %v3796, %v3828
      %v3861 = vadd.f32 %v3797, %v3829
      %v3862 = vadd.f32 %v3798, %v3830
      %v3863 = vadd.f32 %v3799, %v3831
      %v3864 = vadd.f32 %v3800, %v3832
      %v3865 = vadd.f32 %v3801, %v3833
      %v3866 = vadd.f32 %v3802, %v3834
      %v3867 = vadd.f32 %v3803, %v3835
      %v3868 = vadd.f32 %v3804, %v3836
      %v3869 = vadd.f32 %v3805, %v3837
      %v3870 = vadd.f32 %v3806, %v3838
      %v3871 = vadd.f32 %v3807, %v3839
      %v3872 = vadd.f32 %v3808, %v3840
      %v3873 = vadd.f32 %v3809, %v3841
      %v3874 = vmul.f32 %v3842, 0.5
      %v3875 = vmul.f32 %v3843, 0.5
      %v3876 = vmul.f32 %v3844, 0.5
      %v3877 = vmul.f32 %v3845, 0.5
      %v3878 = vmul.f32 %v3846, 0.5
      %v3879 = vmul.f32 %v3847, 0.5
      %v3880 = vmul.f32 %v3848, 0.5
      %v3881 = vmul.f32 %v3849, 0.5
      %v3882 = vmul.f32 %v3850, 0.5
      %v3883 = vmul.f32 %v3851, 0.5
      %v3884 = vmul.f32 %v3852, 0.5
      %v3885 = vmul.f32 %v3853, 0.5
      %v3886 = vmul.f32 %v3854, 0.5
      %v3887 = vmul.f32 %v3855, 0.5
      %v3888 = vmul.f32 %v3856, 0.5
      %v3889 = vmul.f32 %v3857, 0.5
      %v3890 = vmul.f32 %v3858, 0.5
      %v3891 = vmul.f32 %v3859, 0.5
      %v3892 = vmul.f32 %v3860, 0.5
      %v3893 = vmul.f32 %v3861, 0.5
      %v3894 = vmul.f32 %v3862, 0.5
      %v3895 = vmul.f32 %v3863, 0.5
      %v3896 = vmul.f32 %v3864, 0.5
      %v3897 = vmul.f32 %v3865, 0.5
      %v3898 = vmul.f32 %v3866, 0.5
      %v3899 = vmul.f32 %v3867, 0.5
      %v3900 = vmul.f32 %v3868, 0.5
      %v3901 = vmul.f32 %v3869, 0.5
      %v3902 = vmul.f32 %v3870, 0.5
      %v3903 = vmul.f32 %v3871, 0.5
      %v3904 = vmul.f32 %v3872, 0.5
      %v3905 = vmul.f32 %v3873, 0.5
      %v3906 = vsub.f32 %v770, %v3874
      %v3907 = vsub.f32 %v771, %v3874
      %v3908 = vsub.f32 %v772, %v3875
      %v3909 = vsub.f32 %v773, %v3875
      %v3910 = vsub.f32 %v774, %v3876
      %v3911 = vsub.f32 %v775, %v3876
      %v3912 = vsub.f32 %v776, %v3877
      %v3913 = vsub.f32 %v777, %v3877
      %v3914 = vsub.f32 %v778, %v3878
      %v3915 = vsub.f32 %v779, %v3878
      %v3916 = vsub.f32 %v780, %v3879
      %v3917 = vsub.f32 %v781, %v3879
      %v3918 = vsub.f32 %v782, %v3880
      %v3919 = vsub.f32 %v783, %v3880
      %v3920 = vsub.f32 %v784, %v3881
      %v3921 = vsub.f32 %v785, %v3881
      %v3922 = vsub.f32 %v786, %v3882
      %v3923 = vsub.f32 %v787, %v3882
      %v3924 = vsub.f32 %v788, %v3883
      %v3925 = vsub.f32 %v789, %v3883
      %v3926 = vsub.f32 %v790, %v3884
      %v3927 = vsub.f32 %v791, %v3884
      %v3928 = vsub.f32 %v792, %v3885
      %v3929 = vsub.f32 %v793, %v3885
      %v3930 = vsub.f32 %v794, %v3886
      %v3931 = vsub.f32 %v795, %v3886
      %v3932 = vsub.f32 %v796, %v3887
      %v3933 = vsub.f32 %v797, %v3887
      %v3934 = vsub.f32 %v798, %v3888
      %v3935 = vsub.f32 %v799, %v3888
      %v3936 = vsub.f32 %v800, %v3889
      %v3937 = vsub.f32 %v801, %v3889
      %v3938 = vsub.f32 %v802, %v3890
      %v3939 = vsub.f32 %v803, %v3890
      %v3940 = vsub.f32 %v804, %v3891
      %v3941 = vsub.f32 %v805, %v3891
      %v3942 = vsub.f32 %v806, %v3892
      %v3943 = vsub.f32 %v807, %v3892
      %v3944 = vsub.f32 %v808, %v3893
      %v3945 = vsub.f32 %v809, %v3893
      %v3946 = vsub.f32 %v810, %v3894
      %v3947 = vsub.f32 %v811, %v3894
      %v3948 = vsub.f32 %v812, %v3895
      %v3949 = vsub.f32 %v813, %v3895
      %v3950 = vsub.f32 %v814, %v3896
      %v3951 = vsub.f32 %v815, %v3896
      %v3952 = vsub.f32 %v816, %v3897
      %v3953 = vsub.f32 %v817, %v3897
      %v3954 = vsub.f32 %v818, %v3898
      %v3955 = vsub.f32 %v819, %v3898
      %v3956 = vsub.f32 %v820, %v3899
      %v3957 = vsub.f32 %v821, %v3899
      %v3958 = vsub.f32 %v822, %v3900
      %v3959 = vsub.f32 %v823, %v3900
      %v3960 = vsub.f32 %v824, %v3901
      %v3961 = vsub.f32 %v825, %v3901
      %v3962 = vsub.f32 %v826, %v3902
      %v3963 = vsub.f32 %v827, %v3902
      %v3964 = vsub.f32 %v828, %v3903
      %v3965 = vsub.f32 %v829, %v3903
      %v3966 = vsub.f32 %v830, %v3904
      %v3967 = vsub.f32 %v831, %v3904
      %v3968 = vsub.f32 %v832, %v3905
      %v3969 = vsub.f32 %v833, %v3905
      %v3970 = vmax.f32 %v3906, 0.0
      %v3971 = vmax.f32 %v3907, 0.0
      %v3972 = vmax.f32 %v3908, 0.0
      %v3973 = vmax.f32 %v3909, 0.0
      %v3974 = vmax.f32 %v3910, 0.0
      %v3975 = vmax.f32 %v3911, 0.0
      %v3976 = vmax.f32 %v3912, 0.0
      %v3977 = vmax.f32 %v3913, 0.0
      %v3978 = vmax.f32 %v3914, 0.0
      %v3979 = vmax.f32 %v3915, 0.0
      %v3980 = vmax.f32 %v3916, 0.0
      %v3981 = vmax.f32 %v3917, 0.0
      %v3982 = vmax.f32 %v3918, 0.0
      %v3983 = vmax.f32 %v3919, 0.0
      %v3984 = vmax.f32 %v3920, 0.0
      %v3985 = vmax.f32 %v3921, 0.0
      %v3986 = vmax.f32 %v3922, 0.0
      %v3987 = vmax.f32 %v3923, 0.0
      %v3988 = vmax.f32 %v3924, 0.0
      %v3989 = vmax.f32 %v3925, 0.0
      %v3990 = vmax.f32 %v3926, 0.0
      %v3991 = vmax.f32 %v3927, 0.0
      %v3992 = vmax.f32 %v3928, 0.0
      %v3993 = vmax.f32 %v3929, 0.0
      %v3994 = vmax.f32 %v3930, 0.0
      %v3995 = vmax.f32 %v3931, 0.0
      %v3996 = vmax.f32 %v3932, 0.0
      %v3997 = vmax.f32 %v3933, 0.0
      %v3998 = vmax.f32 %v3934, 0.0
      %v3999 = vmax.f32 %v3935, 0.0
      %v4000 = vmax.f32 %v3936, 0.0
      %v4001 = vmax.f32 %v3937, 0.0
      %v4002 = vmax.f32 %v3938, 0.0
      %v4003 = vmax.f32 %v3939, 0.0
      %v4004 = vmax.f32 %v3940, 0.0
      %v4005 = vmax.f32 %v3941, 0.0
      %v4006 = vmax.f32 %v3942, 0.0
      %v4007 = vmax.f32 %v3943, 0.0
      %v4008 = vmax.f32 %v3944, 0.0
      %v4009 = vmax.f32 %v3945, 0.0
      %v4010 = vmax.f32 %v3946, 0.0
      %v4011 = vmax.f32 %v3947, 0.0
      %v4012 = vmax.f32 %v3948, 0.0
      %v4013 = vmax.f32 %v3949, 0.0
      %v4014 = vmax.f32 %v3950, 0.0
      %v4015 = vmax.f32 %v3951, 0.0
      %v4016 = vmax.f32 %v3952, 0.0
      %v4017 = vmax.f32 %v3953, 0.0
      %v4018 = vmax.f32 %v3954, 0.0
      %v4019 = vmax.f32 %v3955, 0.0
      %v4020 = vmax.f32 %v3956, 0.0
      %v4021 = vmax.f32 %v3957, 0.0
      %v4022 = vmax.f32 %v3958, 0.0
      %v4023 = vmax.f32 %v3959, 0.0
      %v4024 = vmax.f32 %v3960, 0.0
      %v4025 = vmax.f32 %v3961, 0.0
      %v4026 = vmax.f32 %v3962, 0.0
      %v4027 = vmax.f32 %v3963, 0.0
      %v4028 = vmax.f32 %v3964, 0.0
      %v4029 = vmax.f32 %v3965, 0.0
      %v4030 = vmax.f32 %v3966, 0.0
      %v4031 = vmax.f32 %v3967, 0.0
      %v4032 = vmax.f32 %v3968, 0.0
      %v4033 = vmax.f32 %v3969, 0.0
      %v4034 = vadd.f32 %v3970, %v3971
      %4035 = vadd.xlane.f32.xlu0 %v4034
      %v4036 = vpop.xlane.xlu0 %4035
      %v4037 = vadd.f32 %v3972, %v3973
      %4038 = vadd.xlane.f32.xlu0 %v4037
      %v4039 = vpop.xlane.xlu0 %4038
      %v4040 = vadd.f32 %v3974, %v3975
      %4041 = vadd.xlane.f32.xlu0 %v4040
      %v4042 = vpop.xlane.xlu0 %4041
      %v4043 = vadd.f32 %v3976, %v3977
      %4044 = vadd.xlane.f32.xlu0 %v4043
      %v4045 = vpop.xlane.xlu0 %4044
      %v4046 = vadd.f32 %v3978, %v3979
      %4047 = vadd.xlane.f32.xlu0 %v4046
      %v4048 = vpop.xlane.xlu0 %4047
      %v4049 = vadd.f32 %v3980, %v3981
      %4050 = vadd.xlane.f32.xlu0 %v4049
      %v4051 = vpop.xlane.xlu0 %4050
      %v4052 = vadd.f32 %v3982, %v3983
      %4053 = vadd.xlane.f32.xlu0 %v4052
      %v4054 = vpop.xlane.xlu0 %4053
      %v4055 = vadd.f32 %v3984, %v3985
      %4056 = vadd.xlane.f32.xlu0 %v4055
      %v4057 = vpop.xlane.xlu0 %4056
      %v4058 = vadd.f32 %v3986, %v3987
      %4059 = vadd.xlane.f32.xlu0 %v4058
      %v4060 = vpop.xlane.xlu0 %4059
      %v4061 = vadd.f32 %v3988, %v3989
      %4062 = vadd.xlane.f32.xlu0 %v4061
      %v4063 = vpop.xlane.xlu0 %4062
      %v4064 = vadd.f32 %v3990, %v3991
      %4065 = vadd.xlane.f32.xlu0 %v4064
      %v4066 = vpop.xlane.xlu0 %4065
      %v4067 = vadd.f32 %v3992, %v3993
      %4068 = vadd.xlane.f32.xlu0 %v4067
      %v4069 = vpop.xlane.xlu0 %4068
      %v4070 = vadd.f32 %v3994, %v3995
      %4071 = vadd.xlane.f32.xlu0 %v4070
      %v4072 = vpop.xlane.xlu0 %4071
      %v4073 = vadd.f32 %v3996, %v3997
      %4074 = vadd.xlane.f32.xlu0 %v4073
      %v4075 = vpop.xlane.xlu0 %4074
      %v4076 = vadd.f32 %v3998, %v3999
      %4077 = vadd.xlane.f32.xlu0 %v4076
      %v4078 = vpop.xlane.xlu0 %4077
      %v4079 = vadd.f32 %v4000, %v4001
      %4080 = vadd.xlane.f32.xlu0 %v4079
      %v4081 = vpop.xlane.xlu0 %4080
      %v4082 = vadd.f32 %v4002, %v4003
      %4083 = vadd.xlane.f32.xlu0 %v4082
      %v4084 = vpop.xlane.xlu0 %4083
      %v4085 = vadd.f32 %v4004, %v4005
      %4086 = vadd.xlane.f32.xlu0 %v4085
      %v4087 = vpop.xlane.xlu0 %4086
      %v4088 = vadd.f32 %v4006, %v4007
      %4089 = vadd.xlane.f32.xlu0 %v4088
      %v4090 = vpop.xlane.xlu0 %4089
      %v4091 = vadd.f32 %v4008, %v4009
      %4092 = vadd.xlane.f32.xlu0 %v4091
      %v4093 = vpop.xlane.xlu0 %4092
      %v4094 = vadd.f32 %v4010, %v4011
      %4095 = vadd.xlane.f32.xlu0 %v4094
      %v4096 = vpop.xlane.xlu0 %4095
      %v4097 = vadd.f32 %v4012, %v4013
      %4098 = vadd.xlane.f32.xlu0 %v4097
      %v4099 = vpop.xlane.xlu0 %4098
      %v4100 = vadd.f32 %v4014, %v4015
      %4101 = vadd.xlane.f32.xlu0 %v4100
      %v4102 = vpop.xlane.xlu0 %4101
      %v4103 = vadd.f32 %v4016, %v4017
      %4104 = vadd.xlane.f32.xlu0 %v4103
      %v4105 = vpop.xlane.xlu0 %4104
      %v4106 = vadd.f32 %v4018, %v4019
      %4107 = vadd.xlane.f32.xlu0 %v4106
      %v4108 = vpop.xlane.xlu0 %4107
      %v4109 = vadd.f32 %v4020, %v4021
      %4110 = vadd.xlane.f32.xlu0 %v4109
      %v4111 = vpop.xlane.xlu0 %4110
      %v4112 = vadd.f32 %v4022, %v4023
      %4113 = vadd.xlane.f32.xlu0 %v4112
      %v4114 = vpop.xlane.xlu0 %4113
      %v4115 = vadd.f32 %v4024, %v4025
      %4116 = vadd.xlane.f32.xlu0 %v4115
      %v4117 = vpop.xlane.xlu0 %4116
      %v4118 = vadd.f32 %v4026, %v4027
      %4119 = vadd.xlane.f32.xlu0 %v4118
      %v4120 = vpop.xlane.xlu0 %4119
      %v4121 = vadd.f32 %v4028, %v4029
      %4122 = vadd.xlane.f32.xlu0 %v4121
      %v4123 = vpop.xlane.xlu0 %4122
      %v4124 = vadd.f32 %v4030, %v4031
      %4125 = vadd.xlane.f32.xlu0 %v4124
      %v4126 = vpop.xlane.xlu0 %4125
      %v4127 = vadd.f32 %v4032, %v4033
      %4128 = vadd.xlane.f32.xlu0 %v4127
      %v4129 = vpop.xlane.xlu0 %4128
      %vm4130 = vcmp.ge.f32.partialorder %v4036, 1.0
      %vm4131 = vcmp.ge.f32.partialorder %v4039, 1.0
      %vm4132 = vcmp.ge.f32.partialorder %v4042, 1.0
      %vm4133 = vcmp.ge.f32.partialorder %v4045, 1.0
      %vm4134 = vcmp.ge.f32.partialorder %v4048, 1.0
      %vm4135 = vcmp.ge.f32.partialorder %v4051, 1.0
      %vm4136 = vcmp.ge.f32.partialorder %v4054, 1.0
      %vm4137 = vcmp.ge.f32.partialorder %v4057, 1.0
      %vm4138 = vcmp.ge.f32.partialorder %v4060, 1.0
      %vm4139 = vcmp.ge.f32.partialorder %v4063, 1.0
      %vm4140 = vcmp.ge.f32.partialorder %v4066, 1.0
      %vm4141 = vcmp.ge.f32.partialorder %v4069, 1.0
      %vm4142 = vcmp.ge.f32.partialorder %v4072, 1.0
      %vm4143 = vcmp.ge.f32.partialorder %v4075, 1.0
      %vm4144 = vcmp.ge.f32.partialorder %v4078, 1.0
      %vm4145 = vcmp.ge.f32.partialorder %v4081, 1.0
      %vm4146 = vcmp.ge.f32.partialorder %v4084, 1.0
      %vm4147 = vcmp.ge.f32.partialorder %v4087, 1.0
      %vm4148 = vcmp.ge.f32.partialorder %v4090, 1.0
      %vm4149 = vcmp.ge.f32.partialorder %v4093, 1.0
      %vm4150 = vcmp.ge.f32.partialorder %v4096, 1.0
      %vm4151 = vcmp.ge.f32.partialorder %v4099, 1.0
      %vm4152 = vcmp.ge.f32.partialorder %v4102, 1.0
      %vm4153 = vcmp.ge.f32.partialorder %v4105, 1.0
      %vm4154 = vcmp.ge.f32.partialorder %v4108, 1.0
      %vm4155 = vcmp.ge.f32.partialorder %v4111, 1.0
      %vm4156 = vcmp.ge.f32.partialorder %v4114, 1.0
      %vm4157 = vcmp.ge.f32.partialorder %v4117, 1.0
      %vm4158 = vcmp.ge.f32.partialorder %v4120, 1.0
      %vm4159 = vcmp.ge.f32.partialorder %v4123, 1.0
      %vm4160 = vcmp.ge.f32.partialorder %v4126, 1.0
      %vm4161 = vcmp.ge.f32.partialorder %v4129, 1.0
      %v4162 = vsel %vm4130, %v3874, %v3778
      %v4163 = vsel %vm4131, %v3875, %v3779
      %v4164 = vsel %vm4132, %v3876, %v3780
      %v4165 = vsel %vm4133, %v3877, %v3781
      %v4166 = vsel %vm4134, %v3878, %v3782
      %v4167 = vsel %vm4135, %v3879, %v3783
      %v4168 = vsel %vm4136, %v3880, %v3784
      %v4169 = vsel %vm4137, %v3881, %v3785
      %v4170 = vsel %vm4138, %v3882, %v3786
      %v4171 = vsel %vm4139, %v3883, %v3787
      %v4172 = vsel %vm4140, %v3884, %v3788
      %v4173 = vsel %vm4141, %v3885, %v3789
      %v4174 = vsel %vm4142, %v3886, %v3790
      %v4175 = vsel %vm4143, %v3887, %v3791
      %v4176 = vsel %vm4144, %v3888, %v3792
      %v4177 = vsel %vm4145, %v3889, %v3793
      %v4178 = vsel %vm4146, %v3890, %v3794
      %v4179 = vsel %vm4147, %v3891, %v3795
      %v4180 = vsel %vm4148, %v3892, %v3796
      %v4181 = vsel %vm4149, %v3893, %v3797
      %v4182 = vsel %vm4150, %v3894, %v3798
      %v4183 = vsel %vm4151, %v3895, %v3799
      %v4184 = vsel %vm4152, %v3896, %v3800
      %v4185 = vsel %vm4153, %v3897, %v3801
      %v4186 = vsel %vm4154, %v3898, %v3802
      %v4187 = vsel %vm4155, %v3899, %v3803
      %v4188 = vsel %vm4156, %v3900, %v3804
      %v4189 = vsel %vm4157, %v3901, %v3805
      %v4190 = vsel %vm4158, %v3902, %v3806
      %v4191 = vsel %vm4159, %v3903, %v3807
      %v4192 = vsel %vm4160, %v3904, %v3808
      %v4193 = vsel %vm4161, %v3905, %v3809
      %v4194 = vsel %vm4130, %v3810, %v3874
      %v4195 = vsel %vm4131, %v3811, %v3875
      %v4196 = vsel %vm4132, %v3812, %v3876
      %v4197 = vsel %vm4133, %v3813, %v3877
      %v4198 = vsel %vm4134, %v3814, %v3878
      %v4199 = vsel %vm4135, %v3815, %v3879
      %v4200 = vsel %vm4136, %v3816, %v3880
      %v4201 = vsel %vm4137, %v3817, %v3881
      %v4202 = vsel %vm4138, %v3818, %v3882
      %v4203 = vsel %vm4139, %v3819, %v3883
      %v4204 = vsel %vm4140, %v3820, %v3884
      %v4205 = vsel %vm4141, %v3821, %v3885
      %v4206 = vsel %vm4142, %v3822, %v3886
      %v4207 = vsel %vm4143, %v3823, %v3887
      %v4208 = vsel %vm4144, %v3824, %v3888
      %v4209 = vsel %vm4145, %v3825, %v3889
      %v4210 = vsel %vm4146, %v3826, %v3890
      %v4211 = vsel %vm4147, %v3827, %v3891
      %v4212 = vsel %vm4148, %v3828, %v3892
      %v4213 = vsel %vm4149, %v3829, %v3893
      %v4214 = vsel %vm4150, %v3830, %v3894
      %v4215 = vsel %vm4151, %v3831, %v3895
      %v4216 = vsel %vm4152, %v3832, %v3896
      %v4217 = vsel %vm4153, %v3833, %v3897
      %v4218 = vsel %vm4154, %v3834, %v3898
      %v4219 = vsel %vm4155, %v3835, %v3899
      %v4220 = vsel %vm4156, %v3836, %v3900
      %v4221 = vsel %vm4157, %v3837, %v3901
      %v4222 = vsel %vm4158, %v3838, %v3902
      %v4223 = vsel %vm4159, %v3839, %v3903
      %v4224 = vsel %vm4160, %v3840, %v3904
      %v4225 = vsel %vm4161, %v3841, %v3905
      %v4226 = vadd.f32 %v4162, %v4194
      %v4227 = vadd.f32 %v4163, %v4195
      %v4228 = vadd.f32 %v4164, %v4196
      %v4229 = vadd.f32 %v4165, %v4197
      %v4230 = vadd.f32 %v4166, %v4198
      %v4231 = vadd.f32 %v4167, %v4199
      %v4232 = vadd.f32 %v4168, %v4200
      %v4233 = vadd.f32 %v4169, %v4201
      %v4234 = vadd.f32 %v4170, %v4202
      %v4235 = vadd.f32 %v4171, %v4203
      %v4236 = vadd.f32 %v4172, %v4204
      %v4237 = vadd.f32 %v4173, %v4205
      %v4238 = vadd.f32 %v4174, %v4206
      %v4239 = vadd.f32 %v4175, %v4207
      %v4240 = vadd.f32 %v4176, %v4208
      %v4241 = vadd.f32 %v4177, %v4209
      %v4242 = vadd.f32 %v4178, %v4210
      %v4243 = vadd.f32 %v4179, %v4211
      %v4244 = vadd.f32 %v4180, %v4212
      %v4245 = vadd.f32 %v4181, %v4213
      %v4246 = vadd.f32 %v4182, %v4214
      %v4247 = vadd.f32 %v4183, %v4215
      %v4248 = vadd.f32 %v4184, %v4216
      %v4249 = vadd.f32 %v4185, %v4217
      %v4250 = vadd.f32 %v4186, %v4218
      %v4251 = vadd.f32 %v4187, %v4219
      %v4252 = vadd.f32 %v4188, %v4220
      %v4253 = vadd.f32 %v4189, %v4221
      %v4254 = vadd.f32 %v4190, %v4222
      %v4255 = vadd.f32 %v4191, %v4223
      %v4256 = vadd.f32 %v4192, %v4224
      %v4257 = vadd.f32 %v4193, %v4225
      %v4258 = vmul.f32 %v4226, 0.5
      %v4259 = vmul.f32 %v4227, 0.5
      %v4260 = vmul.f32 %v4228, 0.5
      %v4261 = vmul.f32 %v4229, 0.5
      %v4262 = vmul.f32 %v4230, 0.5
      %v4263 = vmul.f32 %v4231, 0.5
      %v4264 = vmul.f32 %v4232, 0.5
      %v4265 = vmul.f32 %v4233, 0.5
      %v4266 = vmul.f32 %v4234, 0.5
      %v4267 = vmul.f32 %v4235, 0.5
      %v4268 = vmul.f32 %v4236, 0.5
      %v4269 = vmul.f32 %v4237, 0.5
      %v4270 = vmul.f32 %v4238, 0.5
      %v4271 = vmul.f32 %v4239, 0.5
      %v4272 = vmul.f32 %v4240, 0.5
      %v4273 = vmul.f32 %v4241, 0.5
      %v4274 = vmul.f32 %v4242, 0.5
      %v4275 = vmul.f32 %v4243, 0.5
      %v4276 = vmul.f32 %v4244, 0.5
      %v4277 = vmul.f32 %v4245, 0.5
      %v4278 = vmul.f32 %v4246, 0.5
      %v4279 = vmul.f32 %v4247, 0.5
      %v4280 = vmul.f32 %v4248, 0.5
      %v4281 = vmul.f32 %v4249, 0.5
      %v4282 = vmul.f32 %v4250, 0.5
      %v4283 = vmul.f32 %v4251, 0.5
      %v4284 = vmul.f32 %v4252, 0.5
      %v4285 = vmul.f32 %v4253, 0.5
      %v4286 = vmul.f32 %v4254, 0.5
      %v4287 = vmul.f32 %v4255, 0.5
      %v4288 = vmul.f32 %v4256, 0.5
      %v4289 = vmul.f32 %v4257, 0.5
      %v4290 = vsub.f32 %v770, %v4258
      %v4291 = vsub.f32 %v771, %v4258
      %v4292 = vsub.f32 %v772, %v4259
      %v4293 = vsub.f32 %v773, %v4259
      %v4294 = vsub.f32 %v774, %v4260
      %v4295 = vsub.f32 %v775, %v4260
      %v4296 = vsub.f32 %v776, %v4261
      %v4297 = vsub.f32 %v777, %v4261
      %v4298 = vsub.f32 %v778, %v4262
      %v4299 = vsub.f32 %v779, %v4262
      %v4300 = vsub.f32 %v780, %v4263
      %v4301 = vsub.f32 %v781, %v4263
      %v4302 = vsub.f32 %v782, %v4264
      %v4303 = vsub.f32 %v783, %v4264
      %v4304 = vsub.f32 %v784, %v4265
      %v4305 = vsub.f32 %v785, %v4265
      %v4306 = vsub.f32 %v786, %v4266
      %v4307 = vsub.f32 %v787, %v4266
      %v4308 = vsub.f32 %v788, %v4267
      %v4309 = vsub.f32 %v789, %v4267
      %v4310 = vsub.f32 %v790, %v4268
      %v4311 = vsub.f32 %v791, %v4268
      %v4312 = vsub.f32 %v792, %v4269
      %v4313 = vsub.f32 %v793, %v4269
      %v4314 = vsub.f32 %v794, %v4270
      %v4315 = vsub.f32 %v795, %v4270
      %v4316 = vsub.f32 %v796, %v4271
      %v4317 = vsub.f32 %v797, %v4271
      %v4318 = vsub.f32 %v798, %v4272
      %v4319 = vsub.f32 %v799, %v4272
      %v4320 = vsub.f32 %v800, %v4273
      %v4321 = vsub.f32 %v801, %v4273
      %v4322 = vsub.f32 %v802, %v4274
      %v4323 = vsub.f32 %v803, %v4274
      %v4324 = vsub.f32 %v804, %v4275
      %v4325 = vsub.f32 %v805, %v4275
      %v4326 = vsub.f32 %v806, %v4276
      %v4327 = vsub.f32 %v807, %v4276
      %v4328 = vsub.f32 %v808, %v4277
      %v4329 = vsub.f32 %v809, %v4277
      %v4330 = vsub.f32 %v810, %v4278
      %v4331 = vsub.f32 %v811, %v4278
      %v4332 = vsub.f32 %v812, %v4279
      %v4333 = vsub.f32 %v813, %v4279
      %v4334 = vsub.f32 %v814, %v4280
      %v4335 = vsub.f32 %v815, %v4280
      %v4336 = vsub.f32 %v816, %v4281
      %v4337 = vsub.f32 %v817, %v4281
      %v4338 = vsub.f32 %v818, %v4282
      %v4339 = vsub.f32 %v819, %v4282
      %v4340 = vsub.f32 %v820, %v4283
      %v4341 = vsub.f32 %v821, %v4283
      %v4342 = vsub.f32 %v822, %v4284
      %v4343 = vsub.f32 %v823, %v4284
      %v4344 = vsub.f32 %v824, %v4285
      %v4345 = vsub.f32 %v825, %v4285
      %v4346 = vsub.f32 %v826, %v4286
      %v4347 = vsub.f32 %v827, %v4286
      %v4348 = vsub.f32 %v828, %v4287
      %v4349 = vsub.f32 %v829, %v4287
      %v4350 = vsub.f32 %v830, %v4288
      %v4351 = vsub.f32 %v831, %v4288
      %v4352 = vsub.f32 %v832, %v4289
      %v4353 = vsub.f32 %v833, %v4289
      %v4354 = vmax.f32 %v4290, 0.0
      %v4355 = vmax.f32 %v4291, 0.0
      %v4356 = vmax.f32 %v4292, 0.0
      %v4357 = vmax.f32 %v4293, 0.0
      %v4358 = vmax.f32 %v4294, 0.0
      %v4359 = vmax.f32 %v4295, 0.0
      %v4360 = vmax.f32 %v4296, 0.0
      %v4361 = vmax.f32 %v4297, 0.0
      %v4362 = vmax.f32 %v4298, 0.0
      %v4363 = vmax.f32 %v4299, 0.0
      %v4364 = vmax.f32 %v4300, 0.0
      %v4365 = vmax.f32 %v4301, 0.0
      %v4366 = vmax.f32 %v4302, 0.0
      %v4367 = vmax.f32 %v4303, 0.0
      %v4368 = vmax.f32 %v4304, 0.0
      %v4369 = vmax.f32 %v4305, 0.0
      %v4370 = vmax.f32 %v4306, 0.0
      %v4371 = vmax.f32 %v4307, 0.0
      %v4372 = vmax.f32 %v4308, 0.0
      %v4373 = vmax.f32 %v4309, 0.0
      %v4374 = vmax.f32 %v4310, 0.0
      %v4375 = vmax.f32 %v4311, 0.0
      %v4376 = vmax.f32 %v4312, 0.0
      %v4377 = vmax.f32 %v4313, 0.0
      %v4378 = vmax.f32 %v4314, 0.0
      %v4379 = vmax.f32 %v4315, 0.0
      %v4380 = vmax.f32 %v4316, 0.0
      %v4381 = vmax.f32 %v4317, 0.0
      %v4382 = vmax.f32 %v4318, 0.0
      %v4383 = vmax.f32 %v4319, 0.0
      %v4384 = vmax.f32 %v4320, 0.0
      %v4385 = vmax.f32 %v4321, 0.0
      %v4386 = vmax.f32 %v4322, 0.0
      %v4387 = vmax.f32 %v4323, 0.0
      %v4388 = vmax.f32 %v4324, 0.0
      %v4389 = vmax.f32 %v4325, 0.0
      %v4390 = vmax.f32 %v4326, 0.0
      %v4391 = vmax.f32 %v4327, 0.0
      %v4392 = vmax.f32 %v4328, 0.0
      %v4393 = vmax.f32 %v4329, 0.0
      %v4394 = vmax.f32 %v4330, 0.0
      %v4395 = vmax.f32 %v4331, 0.0
      %v4396 = vmax.f32 %v4332, 0.0
      %v4397 = vmax.f32 %v4333, 0.0
      %v4398 = vmax.f32 %v4334, 0.0
      %v4399 = vmax.f32 %v4335, 0.0
      %v4400 = vmax.f32 %v4336, 0.0
      %v4401 = vmax.f32 %v4337, 0.0
      %v4402 = vmax.f32 %v4338, 0.0
      %v4403 = vmax.f32 %v4339, 0.0
      %v4404 = vmax.f32 %v4340, 0.0
      %v4405 = vmax.f32 %v4341, 0.0
      %v4406 = vmax.f32 %v4342, 0.0
      %v4407 = vmax.f32 %v4343, 0.0
      %v4408 = vmax.f32 %v4344, 0.0
      %v4409 = vmax.f32 %v4345, 0.0
      %v4410 = vmax.f32 %v4346, 0.0
      %v4411 = vmax.f32 %v4347, 0.0
      %v4412 = vmax.f32 %v4348, 0.0
      %v4413 = vmax.f32 %v4349, 0.0
      %v4414 = vmax.f32 %v4350, 0.0
      %v4415 = vmax.f32 %v4351, 0.0
      %v4416 = vmax.f32 %v4352, 0.0
      %v4417 = vmax.f32 %v4353, 0.0
      %v4418 = vadd.f32 %v4354, %v4355
      %4419 = vadd.xlane.f32.xlu0 %v4418
      %v4420 = vpop.xlane.xlu0 %4419
      %v4421 = vadd.f32 %v4356, %v4357
      %4422 = vadd.xlane.f32.xlu0 %v4421
      %v4423 = vpop.xlane.xlu0 %4422
      %v4424 = vadd.f32 %v4358, %v4359
      %4425 = vadd.xlane.f32.xlu0 %v4424
      %v4426 = vpop.xlane.xlu0 %4425
      %v4427 = vadd.f32 %v4360, %v4361
      %4428 = vadd.xlane.f32.xlu0 %v4427
      %v4429 = vpop.xlane.xlu0 %4428
      %v4430 = vadd.f32 %v4362, %v4363
      %4431 = vadd.xlane.f32.xlu0 %v4430
      %v4432 = vpop.xlane.xlu0 %4431
      %v4433 = vadd.f32 %v4364, %v4365
      %4434 = vadd.xlane.f32.xlu0 %v4433
      %v4435 = vpop.xlane.xlu0 %4434
      %v4436 = vadd.f32 %v4366, %v4367
      %4437 = vadd.xlane.f32.xlu0 %v4436
      %v4438 = vpop.xlane.xlu0 %4437
      %v4439 = vadd.f32 %v4368, %v4369
      %4440 = vadd.xlane.f32.xlu0 %v4439
      %v4441 = vpop.xlane.xlu0 %4440
      %v4442 = vadd.f32 %v4370, %v4371
      %4443 = vadd.xlane.f32.xlu0 %v4442
      %v4444 = vpop.xlane.xlu0 %4443
      %v4445 = vadd.f32 %v4372, %v4373
      %4446 = vadd.xlane.f32.xlu0 %v4445
      %v4447 = vpop.xlane.xlu0 %4446
      %v4448 = vadd.f32 %v4374, %v4375
      %4449 = vadd.xlane.f32.xlu0 %v4448
      %v4450 = vpop.xlane.xlu0 %4449
      %v4451 = vadd.f32 %v4376, %v4377
      %4452 = vadd.xlane.f32.xlu0 %v4451
      %v4453 = vpop.xlane.xlu0 %4452
      %v4454 = vadd.f32 %v4378, %v4379
      %4455 = vadd.xlane.f32.xlu0 %v4454
      %v4456 = vpop.xlane.xlu0 %4455
      %v4457 = vadd.f32 %v4380, %v4381
      %4458 = vadd.xlane.f32.xlu0 %v4457
      %v4459 = vpop.xlane.xlu0 %4458
      %v4460 = vadd.f32 %v4382, %v4383
      %4461 = vadd.xlane.f32.xlu0 %v4460
      %v4462 = vpop.xlane.xlu0 %4461
      %v4463 = vadd.f32 %v4384, %v4385
      %4464 = vadd.xlane.f32.xlu0 %v4463
      %v4465 = vpop.xlane.xlu0 %4464
      %v4466 = vadd.f32 %v4386, %v4387
      %4467 = vadd.xlane.f32.xlu0 %v4466
      %v4468 = vpop.xlane.xlu0 %4467
      %v4469 = vadd.f32 %v4388, %v4389
      %4470 = vadd.xlane.f32.xlu0 %v4469
      %v4471 = vpop.xlane.xlu0 %4470
      %v4472 = vadd.f32 %v4390, %v4391
      %4473 = vadd.xlane.f32.xlu0 %v4472
      %v4474 = vpop.xlane.xlu0 %4473
      %v4475 = vadd.f32 %v4392, %v4393
      %4476 = vadd.xlane.f32.xlu0 %v4475
      %v4477 = vpop.xlane.xlu0 %4476
      %v4478 = vadd.f32 %v4394, %v4395
      %4479 = vadd.xlane.f32.xlu0 %v4478
      %v4480 = vpop.xlane.xlu0 %4479
      %v4481 = vadd.f32 %v4396, %v4397
      %4482 = vadd.xlane.f32.xlu0 %v4481
      %v4483 = vpop.xlane.xlu0 %4482
      %v4484 = vadd.f32 %v4398, %v4399
      %4485 = vadd.xlane.f32.xlu0 %v4484
      %v4486 = vpop.xlane.xlu0 %4485
      %v4487 = vadd.f32 %v4400, %v4401
      %4488 = vadd.xlane.f32.xlu0 %v4487
      %v4489 = vpop.xlane.xlu0 %4488
      %v4490 = vadd.f32 %v4402, %v4403
      %4491 = vadd.xlane.f32.xlu0 %v4490
      %v4492 = vpop.xlane.xlu0 %4491
      %v4493 = vadd.f32 %v4404, %v4405
      %4494 = vadd.xlane.f32.xlu0 %v4493
      %v4495 = vpop.xlane.xlu0 %4494
      %v4496 = vadd.f32 %v4406, %v4407
      %4497 = vadd.xlane.f32.xlu0 %v4496
      %v4498 = vpop.xlane.xlu0 %4497
      %v4499 = vadd.f32 %v4408, %v4409
      %4500 = vadd.xlane.f32.xlu0 %v4499
      %v4501 = vpop.xlane.xlu0 %4500
      %v4502 = vadd.f32 %v4410, %v4411
      %4503 = vadd.xlane.f32.xlu0 %v4502
      %v4504 = vpop.xlane.xlu0 %4503
      %v4505 = vadd.f32 %v4412, %v4413
      %4506 = vadd.xlane.f32.xlu0 %v4505
      %v4507 = vpop.xlane.xlu0 %4506
      %v4508 = vadd.f32 %v4414, %v4415
      %4509 = vadd.xlane.f32.xlu0 %v4508
      %v4510 = vpop.xlane.xlu0 %4509
      %v4511 = vadd.f32 %v4416, %v4417
      %4512 = vadd.xlane.f32.xlu0 %v4511
      %v4513 = vpop.xlane.xlu0 %4512
      %vm4514 = vcmp.ge.f32.partialorder %v4420, 1.0
      %vm4515 = vcmp.ge.f32.partialorder %v4423, 1.0
      %vm4516 = vcmp.ge.f32.partialorder %v4426, 1.0
      %vm4517 = vcmp.ge.f32.partialorder %v4429, 1.0
      %vm4518 = vcmp.ge.f32.partialorder %v4432, 1.0
      %vm4519 = vcmp.ge.f32.partialorder %v4435, 1.0
      %vm4520 = vcmp.ge.f32.partialorder %v4438, 1.0
      %vm4521 = vcmp.ge.f32.partialorder %v4441, 1.0
      %vm4522 = vcmp.ge.f32.partialorder %v4444, 1.0
      %vm4523 = vcmp.ge.f32.partialorder %v4447, 1.0
      %vm4524 = vcmp.ge.f32.partialorder %v4450, 1.0
      %vm4525 = vcmp.ge.f32.partialorder %v4453, 1.0
      %vm4526 = vcmp.ge.f32.partialorder %v4456, 1.0
      %vm4527 = vcmp.ge.f32.partialorder %v4459, 1.0
      %vm4528 = vcmp.ge.f32.partialorder %v4462, 1.0
      %vm4529 = vcmp.ge.f32.partialorder %v4465, 1.0
      %vm4530 = vcmp.ge.f32.partialorder %v4468, 1.0
      %vm4531 = vcmp.ge.f32.partialorder %v4471, 1.0
      %vm4532 = vcmp.ge.f32.partialorder %v4474, 1.0
      %vm4533 = vcmp.ge.f32.partialorder %v4477, 1.0
      %vm4534 = vcmp.ge.f32.partialorder %v4480, 1.0
      %vm4535 = vcmp.ge.f32.partialorder %v4483, 1.0
      %vm4536 = vcmp.ge.f32.partialorder %v4486, 1.0
      %vm4537 = vcmp.ge.f32.partialorder %v4489, 1.0
      %vm4538 = vcmp.ge.f32.partialorder %v4492, 1.0
      %vm4539 = vcmp.ge.f32.partialorder %v4495, 1.0
      %vm4540 = vcmp.ge.f32.partialorder %v4498, 1.0
      %vm4541 = vcmp.ge.f32.partialorder %v4501, 1.0
      %vm4542 = vcmp.ge.f32.partialorder %v4504, 1.0
      %vm4543 = vcmp.ge.f32.partialorder %v4507, 1.0
      %vm4544 = vcmp.ge.f32.partialorder %v4510, 1.0
      %vm4545 = vcmp.ge.f32.partialorder %v4513, 1.0
      %v4546 = vsel %vm4514, %v4258, %v4162
      %v4547 = vsel %vm4515, %v4259, %v4163
      %v4548 = vsel %vm4516, %v4260, %v4164
      %v4549 = vsel %vm4517, %v4261, %v4165
      %v4550 = vsel %vm4518, %v4262, %v4166
      %v4551 = vsel %vm4519, %v4263, %v4167
      %v4552 = vsel %vm4520, %v4264, %v4168
      %v4553 = vsel %vm4521, %v4265, %v4169
      %v4554 = vsel %vm4522, %v4266, %v4170
      %v4555 = vsel %vm4523, %v4267, %v4171
      %v4556 = vsel %vm4524, %v4268, %v4172
      %v4557 = vsel %vm4525, %v4269, %v4173
      %v4558 = vsel %vm4526, %v4270, %v4174
      %v4559 = vsel %vm4527, %v4271, %v4175
      %v4560 = vsel %vm4528, %v4272, %v4176
      %v4561 = vsel %vm4529, %v4273, %v4177
      %v4562 = vsel %vm4530, %v4274, %v4178
      %v4563 = vsel %vm4531, %v4275, %v4179
      %v4564 = vsel %vm4532, %v4276, %v4180
      %v4565 = vsel %vm4533, %v4277, %v4181
      %v4566 = vsel %vm4534, %v4278, %v4182
      %v4567 = vsel %vm4535, %v4279, %v4183
      %v4568 = vsel %vm4536, %v4280, %v4184
      %v4569 = vsel %vm4537, %v4281, %v4185
      %v4570 = vsel %vm4538, %v4282, %v4186
      %v4571 = vsel %vm4539, %v4283, %v4187
      %v4572 = vsel %vm4540, %v4284, %v4188
      %v4573 = vsel %vm4541, %v4285, %v4189
      %v4574 = vsel %vm4542, %v4286, %v4190
      %v4575 = vsel %vm4543, %v4287, %v4191
      %v4576 = vsel %vm4544, %v4288, %v4192
      %v4577 = vsel %vm4545, %v4289, %v4193
      %v4578 = vsel %vm4514, %v4194, %v4258
      %v4579 = vsel %vm4515, %v4195, %v4259
      %v4580 = vsel %vm4516, %v4196, %v4260
      %v4581 = vsel %vm4517, %v4197, %v4261
      %v4582 = vsel %vm4518, %v4198, %v4262
      %v4583 = vsel %vm4519, %v4199, %v4263
      %v4584 = vsel %vm4520, %v4200, %v4264
      %v4585 = vsel %vm4521, %v4201, %v4265
      %v4586 = vsel %vm4522, %v4202, %v4266
      %v4587 = vsel %vm4523, %v4203, %v4267
      %v4588 = vsel %vm4524, %v4204, %v4268
      %v4589 = vsel %vm4525, %v4205, %v4269
      %v4590 = vsel %vm4526, %v4206, %v4270
      %v4591 = vsel %vm4527, %v4207, %v4271
      %v4592 = vsel %vm4528, %v4208, %v4272
      %v4593 = vsel %vm4529, %v4209, %v4273
      %v4594 = vsel %vm4530, %v4210, %v4274
      %v4595 = vsel %vm4531, %v4211, %v4275
      %v4596 = vsel %vm4532, %v4212, %v4276
      %v4597 = vsel %vm4533, %v4213, %v4277
      %v4598 = vsel %vm4534, %v4214, %v4278
      %v4599 = vsel %vm4535, %v4215, %v4279
      %v4600 = vsel %vm4536, %v4216, %v4280
      %v4601 = vsel %vm4537, %v4217, %v4281
      %v4602 = vsel %vm4538, %v4218, %v4282
      %v4603 = vsel %vm4539, %v4219, %v4283
      %v4604 = vsel %vm4540, %v4220, %v4284
      %v4605 = vsel %vm4541, %v4221, %v4285
      %v4606 = vsel %vm4542, %v4222, %v4286
      %v4607 = vsel %vm4543, %v4223, %v4287
      %v4608 = vsel %vm4544, %v4224, %v4288
      %v4609 = vsel %vm4545, %v4225, %v4289
      %v4610 = vadd.f32 %v4546, %v4578
      %v4611 = vadd.f32 %v4547, %v4579
      %v4612 = vadd.f32 %v4548, %v4580
      %v4613 = vadd.f32 %v4549, %v4581
      %v4614 = vadd.f32 %v4550, %v4582
      %v4615 = vadd.f32 %v4551, %v4583
      %v4616 = vadd.f32 %v4552, %v4584
      %v4617 = vadd.f32 %v4553, %v4585
      %v4618 = vadd.f32 %v4554, %v4586
      %v4619 = vadd.f32 %v4555, %v4587
      %v4620 = vadd.f32 %v4556, %v4588
      %v4621 = vadd.f32 %v4557, %v4589
      %v4622 = vadd.f32 %v4558, %v4590
      %v4623 = vadd.f32 %v4559, %v4591
      %v4624 = vadd.f32 %v4560, %v4592
      %v4625 = vadd.f32 %v4561, %v4593
      %v4626 = vadd.f32 %v4562, %v4594
      %v4627 = vadd.f32 %v4563, %v4595
      %v4628 = vadd.f32 %v4564, %v4596
      %v4629 = vadd.f32 %v4565, %v4597
      %v4630 = vadd.f32 %v4566, %v4598
      %v4631 = vadd.f32 %v4567, %v4599
      %v4632 = vadd.f32 %v4568, %v4600
      %v4633 = vadd.f32 %v4569, %v4601
      %v4634 = vadd.f32 %v4570, %v4602
      %v4635 = vadd.f32 %v4571, %v4603
      %v4636 = vadd.f32 %v4572, %v4604
      %v4637 = vadd.f32 %v4573, %v4605
      %v4638 = vadd.f32 %v4574, %v4606
      %v4639 = vadd.f32 %v4575, %v4607
      %v4640 = vadd.f32 %v4576, %v4608
      %v4641 = vadd.f32 %v4577, %v4609
      %v4642 = vmul.f32 %v4610, 0.5
      %v4643 = vmul.f32 %v4611, 0.5
      %v4644 = vmul.f32 %v4612, 0.5
      %v4645 = vmul.f32 %v4613, 0.5
      %v4646 = vmul.f32 %v4614, 0.5
      %v4647 = vmul.f32 %v4615, 0.5
      %v4648 = vmul.f32 %v4616, 0.5
      %v4649 = vmul.f32 %v4617, 0.5
      %v4650 = vmul.f32 %v4618, 0.5
      %v4651 = vmul.f32 %v4619, 0.5
      %v4652 = vmul.f32 %v4620, 0.5
      %v4653 = vmul.f32 %v4621, 0.5
      %v4654 = vmul.f32 %v4622, 0.5
      %v4655 = vmul.f32 %v4623, 0.5
      %v4656 = vmul.f32 %v4624, 0.5
      %v4657 = vmul.f32 %v4625, 0.5
      %v4658 = vmul.f32 %v4626, 0.5
      %v4659 = vmul.f32 %v4627, 0.5
      %v4660 = vmul.f32 %v4628, 0.5
      %v4661 = vmul.f32 %v4629, 0.5
      %v4662 = vmul.f32 %v4630, 0.5
      %v4663 = vmul.f32 %v4631, 0.5
      %v4664 = vmul.f32 %v4632, 0.5
      %v4665 = vmul.f32 %v4633, 0.5
      %v4666 = vmul.f32 %v4634, 0.5
      %v4667 = vmul.f32 %v4635, 0.5
      %v4668 = vmul.f32 %v4636, 0.5
      %v4669 = vmul.f32 %v4637, 0.5
      %v4670 = vmul.f32 %v4638, 0.5
      %v4671 = vmul.f32 %v4639, 0.5
      %v4672 = vmul.f32 %v4640, 0.5
      %v4673 = vmul.f32 %v4641, 0.5
      %v4674 = vsub.f32 %v770, %v4642
      %v4675 = vsub.f32 %v771, %v4642
      %v4676 = vsub.f32 %v772, %v4643
      %v4677 = vsub.f32 %v773, %v4643
      %v4678 = vsub.f32 %v774, %v4644
      %v4679 = vsub.f32 %v775, %v4644
      %v4680 = vsub.f32 %v776, %v4645
      %v4681 = vsub.f32 %v777, %v4645
      %v4682 = vsub.f32 %v778, %v4646
      %v4683 = vsub.f32 %v779, %v4646
      %v4684 = vsub.f32 %v780, %v4647
      %v4685 = vsub.f32 %v781, %v4647
      %v4686 = vsub.f32 %v782, %v4648
      %v4687 = vsub.f32 %v783, %v4648
      %v4688 = vsub.f32 %v784, %v4649
      %v4689 = vsub.f32 %v785, %v4649
      %v4690 = vsub.f32 %v786, %v4650
      %v4691 = vsub.f32 %v787, %v4650
      %v4692 = vsub.f32 %v788, %v4651
      %v4693 = vsub.f32 %v789, %v4651
      %v4694 = vsub.f32 %v790, %v4652
      %v4695 = vsub.f32 %v791, %v4652
      %v4696 = vsub.f32 %v792, %v4653
      %v4697 = vsub.f32 %v793, %v4653
      %v4698 = vsub.f32 %v794, %v4654
      %v4699 = vsub.f32 %v795, %v4654
      %v4700 = vsub.f32 %v796, %v4655
      %v4701 = vsub.f32 %v797, %v4655
      %v4702 = vsub.f32 %v798, %v4656
      %v4703 = vsub.f32 %v799, %v4656
      %v4704 = vsub.f32 %v800, %v4657
      %v4705 = vsub.f32 %v801, %v4657
      %v4706 = vsub.f32 %v802, %v4658
      %v4707 = vsub.f32 %v803, %v4658
      %v4708 = vsub.f32 %v804, %v4659
      %v4709 = vsub.f32 %v805, %v4659
      %v4710 = vsub.f32 %v806, %v4660
      %v4711 = vsub.f32 %v807, %v4660
      %v4712 = vsub.f32 %v808, %v4661
      %v4713 = vsub.f32 %v809, %v4661
      %v4714 = vsub.f32 %v810, %v4662
      %v4715 = vsub.f32 %v811, %v4662
      %v4716 = vsub.f32 %v812, %v4663
      %v4717 = vsub.f32 %v813, %v4663
      %v4718 = vsub.f32 %v814, %v4664
      %v4719 = vsub.f32 %v815, %v4664
      %v4720 = vsub.f32 %v816, %v4665
      %v4721 = vsub.f32 %v817, %v4665
      %v4722 = vsub.f32 %v818, %v4666
      %v4723 = vsub.f32 %v819, %v4666
      %v4724 = vsub.f32 %v820, %v4667
      %v4725 = vsub.f32 %v821, %v4667
      %v4726 = vsub.f32 %v822, %v4668
      %v4727 = vsub.f32 %v823, %v4668
      %v4728 = vsub.f32 %v824, %v4669
      %v4729 = vsub.f32 %v825, %v4669
      %v4730 = vsub.f32 %v826, %v4670
      %v4731 = vsub.f32 %v827, %v4670
      %v4732 = vsub.f32 %v828, %v4671
      %v4733 = vsub.f32 %v829, %v4671
      %v4734 = vsub.f32 %v830, %v4672
      %v4735 = vsub.f32 %v831, %v4672
      %v4736 = vsub.f32 %v832, %v4673
      %v4737 = vsub.f32 %v833, %v4673
      %v4738 = vmax.f32 %v4674, 0.0
      %v4739 = vmax.f32 %v4675, 0.0
      %v4740 = vmax.f32 %v4676, 0.0
      %v4741 = vmax.f32 %v4677, 0.0
      %v4742 = vmax.f32 %v4678, 0.0
      %v4743 = vmax.f32 %v4679, 0.0
      %v4744 = vmax.f32 %v4680, 0.0
      %v4745 = vmax.f32 %v4681, 0.0
      %v4746 = vmax.f32 %v4682, 0.0
      %v4747 = vmax.f32 %v4683, 0.0
      %v4748 = vmax.f32 %v4684, 0.0
      %v4749 = vmax.f32 %v4685, 0.0
      %v4750 = vmax.f32 %v4686, 0.0
      %v4751 = vmax.f32 %v4687, 0.0
      %v4752 = vmax.f32 %v4688, 0.0
      %v4753 = vmax.f32 %v4689, 0.0
      %v4754 = vmax.f32 %v4690, 0.0
      %v4755 = vmax.f32 %v4691, 0.0
      %v4756 = vmax.f32 %v4692, 0.0
      %v4757 = vmax.f32 %v4693, 0.0
      %v4758 = vmax.f32 %v4694, 0.0
      %v4759 = vmax.f32 %v4695, 0.0
      %v4760 = vmax.f32 %v4696, 0.0
      %v4761 = vmax.f32 %v4697, 0.0
      %v4762 = vmax.f32 %v4698, 0.0
      %v4763 = vmax.f32 %v4699, 0.0
      %v4764 = vmax.f32 %v4700, 0.0
      %v4765 = vmax.f32 %v4701, 0.0
      %v4766 = vmax.f32 %v4702, 0.0
      %v4767 = vmax.f32 %v4703, 0.0
      %v4768 = vmax.f32 %v4704, 0.0
      %v4769 = vmax.f32 %v4705, 0.0
      %v4770 = vmax.f32 %v4706, 0.0
      %v4771 = vmax.f32 %v4707, 0.0
      %v4772 = vmax.f32 %v4708, 0.0
      %v4773 = vmax.f32 %v4709, 0.0
      %v4774 = vmax.f32 %v4710, 0.0
      %v4775 = vmax.f32 %v4711, 0.0
      %v4776 = vmax.f32 %v4712, 0.0
      %v4777 = vmax.f32 %v4713, 0.0
      %v4778 = vmax.f32 %v4714, 0.0
      %v4779 = vmax.f32 %v4715, 0.0
      %v4780 = vmax.f32 %v4716, 0.0
      %v4781 = vmax.f32 %v4717, 0.0
      %v4782 = vmax.f32 %v4718, 0.0
      %v4783 = vmax.f32 %v4719, 0.0
      %v4784 = vmax.f32 %v4720, 0.0
      %v4785 = vmax.f32 %v4721, 0.0
      %v4786 = vmax.f32 %v4722, 0.0
      %v4787 = vmax.f32 %v4723, 0.0
      %v4788 = vmax.f32 %v4724, 0.0
      %v4789 = vmax.f32 %v4725, 0.0
      %v4790 = vmax.f32 %v4726, 0.0
      %v4791 = vmax.f32 %v4727, 0.0
      %v4792 = vmax.f32 %v4728, 0.0
      %v4793 = vmax.f32 %v4729, 0.0
      %v4794 = vmax.f32 %v4730, 0.0
      %v4795 = vmax.f32 %v4731, 0.0
      %v4796 = vmax.f32 %v4732, 0.0
      %v4797 = vmax.f32 %v4733, 0.0
      %v4798 = vmax.f32 %v4734, 0.0
      %v4799 = vmax.f32 %v4735, 0.0
      %v4800 = vmax.f32 %v4736, 0.0
      %v4801 = vmax.f32 %v4737, 0.0
      %v4802 = vadd.f32 %v4738, %v4739
      %4803 = vadd.xlane.f32.xlu0 %v4802
      %v4804 = vpop.xlane.xlu0 %4803
      %v4805 = vadd.f32 %v4740, %v4741
      %4806 = vadd.xlane.f32.xlu0 %v4805
      %v4807 = vpop.xlane.xlu0 %4806
      %v4808 = vadd.f32 %v4742, %v4743
      %4809 = vadd.xlane.f32.xlu0 %v4808
      %v4810 = vpop.xlane.xlu0 %4809
      %v4811 = vadd.f32 %v4744, %v4745
      %4812 = vadd.xlane.f32.xlu0 %v4811
      %v4813 = vpop.xlane.xlu0 %4812
      %v4814 = vadd.f32 %v4746, %v4747
      %4815 = vadd.xlane.f32.xlu0 %v4814
      %v4816 = vpop.xlane.xlu0 %4815
      %v4817 = vadd.f32 %v4748, %v4749
      %4818 = vadd.xlane.f32.xlu0 %v4817
      %v4819 = vpop.xlane.xlu0 %4818
      %v4820 = vadd.f32 %v4750, %v4751
      %4821 = vadd.xlane.f32.xlu0 %v4820
      %v4822 = vpop.xlane.xlu0 %4821
      %v4823 = vadd.f32 %v4752, %v4753
      %4824 = vadd.xlane.f32.xlu0 %v4823
      %v4825 = vpop.xlane.xlu0 %4824
      %v4826 = vadd.f32 %v4754, %v4755
      %4827 = vadd.xlane.f32.xlu0 %v4826
      %v4828 = vpop.xlane.xlu0 %4827
      %v4829 = vadd.f32 %v4756, %v4757
      %4830 = vadd.xlane.f32.xlu0 %v4829
      %v4831 = vpop.xlane.xlu0 %4830
      %v4832 = vadd.f32 %v4758, %v4759
      %4833 = vadd.xlane.f32.xlu0 %v4832
      %v4834 = vpop.xlane.xlu0 %4833
      %v4835 = vadd.f32 %v4760, %v4761
      %4836 = vadd.xlane.f32.xlu0 %v4835
      %v4837 = vpop.xlane.xlu0 %4836
      %v4838 = vadd.f32 %v4762, %v4763
      %4839 = vadd.xlane.f32.xlu0 %v4838
      %v4840 = vpop.xlane.xlu0 %4839
      %v4841 = vadd.f32 %v4764, %v4765
      %4842 = vadd.xlane.f32.xlu0 %v4841
      %v4843 = vpop.xlane.xlu0 %4842
      %v4844 = vadd.f32 %v4766, %v4767
      %4845 = vadd.xlane.f32.xlu0 %v4844
      %v4846 = vpop.xlane.xlu0 %4845
      %v4847 = vadd.f32 %v4768, %v4769
      %4848 = vadd.xlane.f32.xlu0 %v4847
      %v4849 = vpop.xlane.xlu0 %4848
      %v4850 = vadd.f32 %v4770, %v4771
      %4851 = vadd.xlane.f32.xlu0 %v4850
      %v4852 = vpop.xlane.xlu0 %4851
      %v4853 = vadd.f32 %v4772, %v4773
      %4854 = vadd.xlane.f32.xlu0 %v4853
      %v4855 = vpop.xlane.xlu0 %4854
      %v4856 = vadd.f32 %v4774, %v4775
      %4857 = vadd.xlane.f32.xlu0 %v4856
      %v4858 = vpop.xlane.xlu0 %4857
      %v4859 = vadd.f32 %v4776, %v4777
      %4860 = vadd.xlane.f32.xlu0 %v4859
      %v4861 = vpop.xlane.xlu0 %4860
      %v4862 = vadd.f32 %v4778, %v4779
      %4863 = vadd.xlane.f32.xlu0 %v4862
      %v4864 = vpop.xlane.xlu0 %4863
      %v4865 = vadd.f32 %v4780, %v4781
      %4866 = vadd.xlane.f32.xlu0 %v4865
      %v4867 = vpop.xlane.xlu0 %4866
      %v4868 = vadd.f32 %v4782, %v4783
      %4869 = vadd.xlane.f32.xlu0 %v4868
      %v4870 = vpop.xlane.xlu0 %4869
      %v4871 = vadd.f32 %v4784, %v4785
      %4872 = vadd.xlane.f32.xlu0 %v4871
      %v4873 = vpop.xlane.xlu0 %4872
      %v4874 = vadd.f32 %v4786, %v4787
      %4875 = vadd.xlane.f32.xlu0 %v4874
      %v4876 = vpop.xlane.xlu0 %4875
      %v4877 = vadd.f32 %v4788, %v4789
      %4878 = vadd.xlane.f32.xlu0 %v4877
      %v4879 = vpop.xlane.xlu0 %4878
      %v4880 = vadd.f32 %v4790, %v4791
      %4881 = vadd.xlane.f32.xlu0 %v4880
      %v4882 = vpop.xlane.xlu0 %4881
      %v4883 = vadd.f32 %v4792, %v4793
      %4884 = vadd.xlane.f32.xlu0 %v4883
      %v4885 = vpop.xlane.xlu0 %4884
      %v4886 = vadd.f32 %v4794, %v4795
      %4887 = vadd.xlane.f32.xlu0 %v4886
      %v4888 = vpop.xlane.xlu0 %4887
      %v4889 = vadd.f32 %v4796, %v4797
      %4890 = vadd.xlane.f32.xlu0 %v4889
      %v4891 = vpop.xlane.xlu0 %4890
      %v4892 = vadd.f32 %v4798, %v4799
      %4893 = vadd.xlane.f32.xlu0 %v4892
      %v4894 = vpop.xlane.xlu0 %4893
      %v4895 = vadd.f32 %v4800, %v4801
      %4896 = vadd.xlane.f32.xlu0 %v4895
      %v4897 = vpop.xlane.xlu0 %4896
      %vm4898 = vcmp.ge.f32.partialorder %v4804, 1.0
      %vm4899 = vcmp.ge.f32.partialorder %v4807, 1.0
      %vm4900 = vcmp.ge.f32.partialorder %v4810, 1.0
      %vm4901 = vcmp.ge.f32.partialorder %v4813, 1.0
      %vm4902 = vcmp.ge.f32.partialorder %v4816, 1.0
      %vm4903 = vcmp.ge.f32.partialorder %v4819, 1.0
      %vm4904 = vcmp.ge.f32.partialorder %v4822, 1.0
      %vm4905 = vcmp.ge.f32.partialorder %v4825, 1.0
      %vm4906 = vcmp.ge.f32.partialorder %v4828, 1.0
      %vm4907 = vcmp.ge.f32.partialorder %v4831, 1.0
      %vm4908 = vcmp.ge.f32.partialorder %v4834, 1.0
      %vm4909 = vcmp.ge.f32.partialorder %v4837, 1.0
      %vm4910 = vcmp.ge.f32.partialorder %v4840, 1.0
      %vm4911 = vcmp.ge.f32.partialorder %v4843, 1.0
      %vm4912 = vcmp.ge.f32.partialorder %v4846, 1.0
      %vm4913 = vcmp.ge.f32.partialorder %v4849, 1.0
      %vm4914 = vcmp.ge.f32.partialorder %v4852, 1.0
      %vm4915 = vcmp.ge.f32.partialorder %v4855, 1.0
      %vm4916 = vcmp.ge.f32.partialorder %v4858, 1.0
      %vm4917 = vcmp.ge.f32.partialorder %v4861, 1.0
      %vm4918 = vcmp.ge.f32.partialorder %v4864, 1.0
      %vm4919 = vcmp.ge.f32.partialorder %v4867, 1.0
      %vm4920 = vcmp.ge.f32.partialorder %v4870, 1.0
      %vm4921 = vcmp.ge.f32.partialorder %v4873, 1.0
      %vm4922 = vcmp.ge.f32.partialorder %v4876, 1.0
      %vm4923 = vcmp.ge.f32.partialorder %v4879, 1.0
      %vm4924 = vcmp.ge.f32.partialorder %v4882, 1.0
      %vm4925 = vcmp.ge.f32.partialorder %v4885, 1.0
      %vm4926 = vcmp.ge.f32.partialorder %v4888, 1.0
      %vm4927 = vcmp.ge.f32.partialorder %v4891, 1.0
      %vm4928 = vcmp.ge.f32.partialorder %v4894, 1.0
      %vm4929 = vcmp.ge.f32.partialorder %v4897, 1.0
      %v4930 = vsel %vm4898, %v4642, %v4546
      %v4931 = vsel %vm4899, %v4643, %v4547
      %v4932 = vsel %vm4900, %v4644, %v4548
      %v4933 = vsel %vm4901, %v4645, %v4549
      %v4934 = vsel %vm4902, %v4646, %v4550
      %v4935 = vsel %vm4903, %v4647, %v4551
      %v4936 = vsel %vm4904, %v4648, %v4552
      %v4937 = vsel %vm4905, %v4649, %v4553
      %v4938 = vsel %vm4906, %v4650, %v4554
      %v4939 = vsel %vm4907, %v4651, %v4555
      %v4940 = vsel %vm4908, %v4652, %v4556
      %v4941 = vsel %vm4909, %v4653, %v4557
      %v4942 = vsel %vm4910, %v4654, %v4558
      %v4943 = vsel %vm4911, %v4655, %v4559
      %v4944 = vsel %vm4912, %v4656, %v4560
      %v4945 = vsel %vm4913, %v4657, %v4561
      %v4946 = vsel %vm4914, %v4658, %v4562
      %v4947 = vsel %vm4915, %v4659, %v4563
      %v4948 = vsel %vm4916, %v4660, %v4564
      %v4949 = vsel %vm4917, %v4661, %v4565
      %v4950 = vsel %vm4918, %v4662, %v4566
      %v4951 = vsel %vm4919, %v4663, %v4567
      %v4952 = vsel %vm4920, %v4664, %v4568
      %v4953 = vsel %vm4921, %v4665, %v4569
      %v4954 = vsel %vm4922, %v4666, %v4570
      %v4955 = vsel %vm4923, %v4667, %v4571
      %v4956 = vsel %vm4924, %v4668, %v4572
      %v4957 = vsel %vm4925, %v4669, %v4573
      %v4958 = vsel %vm4926, %v4670, %v4574
      %v4959 = vsel %vm4927, %v4671, %v4575
      %v4960 = vsel %vm4928, %v4672, %v4576
      %v4961 = vsel %vm4929, %v4673, %v4577
      %v4962 = vsel %vm4898, %v4578, %v4642
      %v4963 = vsel %vm4899, %v4579, %v4643
      %v4964 = vsel %vm4900, %v4580, %v4644
      %v4965 = vsel %vm4901, %v4581, %v4645
      %v4966 = vsel %vm4902, %v4582, %v4646
      %v4967 = vsel %vm4903, %v4583, %v4647
      %v4968 = vsel %vm4904, %v4584, %v4648
      %v4969 = vsel %vm4905, %v4585, %v4649
      %v4970 = vsel %vm4906, %v4586, %v4650
      %v4971 = vsel %vm4907, %v4587, %v4651
      %v4972 = vsel %vm4908, %v4588, %v4652
      %v4973 = vsel %vm4909, %v4589, %v4653
      %v4974 = vsel %vm4910, %v4590, %v4654
      %v4975 = vsel %vm4911, %v4591, %v4655
      %v4976 = vsel %vm4912, %v4592, %v4656
      %v4977 = vsel %vm4913, %v4593, %v4657
      %v4978 = vsel %vm4914, %v4594, %v4658
      %v4979 = vsel %vm4915, %v4595, %v4659
      %v4980 = vsel %vm4916, %v4596, %v4660
      %v4981 = vsel %vm4917, %v4597, %v4661
      %v4982 = vsel %vm4918, %v4598, %v4662
      %v4983 = vsel %vm4919, %v4599, %v4663
      %v4984 = vsel %vm4920, %v4600, %v4664
      %v4985 = vsel %vm4921, %v4601, %v4665
      %v4986 = vsel %vm4922, %v4602, %v4666
      %v4987 = vsel %vm4923, %v4603, %v4667
      %v4988 = vsel %vm4924, %v4604, %v4668
      %v4989 = vsel %vm4925, %v4605, %v4669
      %v4990 = vsel %vm4926, %v4606, %v4670
      %v4991 = vsel %vm4927, %v4607, %v4671
      %v4992 = vsel %vm4928, %v4608, %v4672
      %v4993 = vsel %vm4929, %v4609, %v4673
      %v4994 = vadd.f32 %v4930, %v4962
      %v4995 = vadd.f32 %v4931, %v4963
      %v4996 = vadd.f32 %v4932, %v4964
      %v4997 = vadd.f32 %v4933, %v4965
      %v4998 = vadd.f32 %v4934, %v4966
      %v4999 = vadd.f32 %v4935, %v4967
      %v5000 = vadd.f32 %v4936, %v4968
      %v5001 = vadd.f32 %v4937, %v4969
      %v5002 = vadd.f32 %v4938, %v4970
      %v5003 = vadd.f32 %v4939, %v4971
      %v5004 = vadd.f32 %v4940, %v4972
      %v5005 = vadd.f32 %v4941, %v4973
      %v5006 = vadd.f32 %v4942, %v4974
      %v5007 = vadd.f32 %v4943, %v4975
      %v5008 = vadd.f32 %v4944, %v4976
      %v5009 = vadd.f32 %v4945, %v4977
      %v5010 = vadd.f32 %v4946, %v4978
      %v5011 = vadd.f32 %v4947, %v4979
      %v5012 = vadd.f32 %v4948, %v4980
      %v5013 = vadd.f32 %v4949, %v4981
      %v5014 = vadd.f32 %v4950, %v4982
      %v5015 = vadd.f32 %v4951, %v4983
      %v5016 = vadd.f32 %v4952, %v4984
      %v5017 = vadd.f32 %v4953, %v4985
      %v5018 = vadd.f32 %v4954, %v4986
      %v5019 = vadd.f32 %v4955, %v4987
      %v5020 = vadd.f32 %v4956, %v4988
      %v5021 = vadd.f32 %v4957, %v4989
      %v5022 = vadd.f32 %v4958, %v4990
      %v5023 = vadd.f32 %v4959, %v4991
      %v5024 = vadd.f32 %v4960, %v4992
      %v5025 = vadd.f32 %v4961, %v4993
      %v5026 = vmul.f32 %v4994, 0.5
      %v5027 = vmul.f32 %v4995, 0.5
      %v5028 = vmul.f32 %v4996, 0.5
      %v5029 = vmul.f32 %v4997, 0.5
      %v5030 = vmul.f32 %v4998, 0.5
      %v5031 = vmul.f32 %v4999, 0.5
      %v5032 = vmul.f32 %v5000, 0.5
      %v5033 = vmul.f32 %v5001, 0.5
      %v5034 = vmul.f32 %v5002, 0.5
      %v5035 = vmul.f32 %v5003, 0.5
      %v5036 = vmul.f32 %v5004, 0.5
      %v5037 = vmul.f32 %v5005, 0.5
      %v5038 = vmul.f32 %v5006, 0.5
      %v5039 = vmul.f32 %v5007, 0.5
      %v5040 = vmul.f32 %v5008, 0.5
      %v5041 = vmul.f32 %v5009, 0.5
      %v5042 = vmul.f32 %v5010, 0.5
      %v5043 = vmul.f32 %v5011, 0.5
      %v5044 = vmul.f32 %v5012, 0.5
      %v5045 = vmul.f32 %v5013, 0.5
      %v5046 = vmul.f32 %v5014, 0.5
      %v5047 = vmul.f32 %v5015, 0.5
      %v5048 = vmul.f32 %v5016, 0.5
      %v5049 = vmul.f32 %v5017, 0.5
      %v5050 = vmul.f32 %v5018, 0.5
      %v5051 = vmul.f32 %v5019, 0.5
      %v5052 = vmul.f32 %v5020, 0.5
      %v5053 = vmul.f32 %v5021, 0.5
      %v5054 = vmul.f32 %v5022, 0.5
      %v5055 = vmul.f32 %v5023, 0.5
      %v5056 = vmul.f32 %v5024, 0.5
      %v5057 = vmul.f32 %v5025, 0.5
      %v5058 = vsub.f32 %v770, %v5026
      %v5059 = vsub.f32 %v771, %v5026
      %v5060 = vsub.f32 %v772, %v5027
      %v5061 = vsub.f32 %v773, %v5027
      %v5062 = vsub.f32 %v774, %v5028
      %v5063 = vsub.f32 %v775, %v5028
      %v5064 = vsub.f32 %v776, %v5029
      %v5065 = vsub.f32 %v777, %v5029
      %v5066 = vsub.f32 %v778, %v5030
      %v5067 = vsub.f32 %v779, %v5030
      %v5068 = vsub.f32 %v780, %v5031
      %v5069 = vsub.f32 %v781, %v5031
      %v5070 = vsub.f32 %v782, %v5032
      %v5071 = vsub.f32 %v783, %v5032
      %v5072 = vsub.f32 %v784, %v5033
      %v5073 = vsub.f32 %v785, %v5033
      %v5074 = vsub.f32 %v786, %v5034
      %v5075 = vsub.f32 %v787, %v5034
      %v5076 = vsub.f32 %v788, %v5035
      %v5077 = vsub.f32 %v789, %v5035
      %v5078 = vsub.f32 %v790, %v5036
      %v5079 = vsub.f32 %v791, %v5036
      %v5080 = vsub.f32 %v792, %v5037
      %v5081 = vsub.f32 %v793, %v5037
      %v5082 = vsub.f32 %v794, %v5038
      %v5083 = vsub.f32 %v795, %v5038
      %v5084 = vsub.f32 %v796, %v5039
      %v5085 = vsub.f32 %v797, %v5039
      %v5086 = vsub.f32 %v798, %v5040
      %v5087 = vsub.f32 %v799, %v5040
      %v5088 = vsub.f32 %v800, %v5041
      %v5089 = vsub.f32 %v801, %v5041
      %v5090 = vsub.f32 %v802, %v5042
      %v5091 = vsub.f32 %v803, %v5042
      %v5092 = vsub.f32 %v804, %v5043
      %v5093 = vsub.f32 %v805, %v5043
      %v5094 = vsub.f32 %v806, %v5044
      %v5095 = vsub.f32 %v807, %v5044
      %v5096 = vsub.f32 %v808, %v5045
      %v5097 = vsub.f32 %v809, %v5045
      %v5098 = vsub.f32 %v810, %v5046
      %v5099 = vsub.f32 %v811, %v5046
      %v5100 = vsub.f32 %v812, %v5047
      %v5101 = vsub.f32 %v813, %v5047
      %v5102 = vsub.f32 %v814, %v5048
      %v5103 = vsub.f32 %v815, %v5048
      %v5104 = vsub.f32 %v816, %v5049
      %v5105 = vsub.f32 %v817, %v5049
      %v5106 = vsub.f32 %v818, %v5050
      %v5107 = vsub.f32 %v819, %v5050
      %v5108 = vsub.f32 %v820, %v5051
      %v5109 = vsub.f32 %v821, %v5051
      %v5110 = vsub.f32 %v822, %v5052
      %v5111 = vsub.f32 %v823, %v5052
      %v5112 = vsub.f32 %v824, %v5053
      %v5113 = vsub.f32 %v825, %v5053
      %v5114 = vsub.f32 %v826, %v5054
      %v5115 = vsub.f32 %v827, %v5054
      %v5116 = vsub.f32 %v828, %v5055
      %v5117 = vsub.f32 %v829, %v5055
      %v5118 = vsub.f32 %v830, %v5056
      %v5119 = vsub.f32 %v831, %v5056
      %v5120 = vsub.f32 %v832, %v5057
      %v5121 = vsub.f32 %v833, %v5057
      %v5122 = vmax.f32 %v5058, 0.0
      %v5123 = vmax.f32 %v5059, 0.0
      %v5124 = vmax.f32 %v5060, 0.0
      %v5125 = vmax.f32 %v5061, 0.0
      %v5126 = vmax.f32 %v5062, 0.0
      %v5127 = vmax.f32 %v5063, 0.0
      %v5128 = vmax.f32 %v5064, 0.0
      %v5129 = vmax.f32 %v5065, 0.0
      %v5130 = vmax.f32 %v5066, 0.0
      %v5131 = vmax.f32 %v5067, 0.0
      %v5132 = vmax.f32 %v5068, 0.0
      %v5133 = vmax.f32 %v5069, 0.0
      %v5134 = vmax.f32 %v5070, 0.0
      %v5135 = vmax.f32 %v5071, 0.0
      %v5136 = vmax.f32 %v5072, 0.0
      %v5137 = vmax.f32 %v5073, 0.0
      %v5138 = vmax.f32 %v5074, 0.0
      %v5139 = vmax.f32 %v5075, 0.0
      %v5140 = vmax.f32 %v5076, 0.0
      %v5141 = vmax.f32 %v5077, 0.0
      %v5142 = vmax.f32 %v5078, 0.0
      %v5143 = vmax.f32 %v5079, 0.0
      %v5144 = vmax.f32 %v5080, 0.0
      %v5145 = vmax.f32 %v5081, 0.0
      %v5146 = vmax.f32 %v5082, 0.0
      %v5147 = vmax.f32 %v5083, 0.0
      %v5148 = vmax.f32 %v5084, 0.0
      %v5149 = vmax.f32 %v5085, 0.0
      %v5150 = vmax.f32 %v5086, 0.0
      %v5151 = vmax.f32 %v5087, 0.0
      %v5152 = vmax.f32 %v5088, 0.0
      %v5153 = vmax.f32 %v5089, 0.0
      %v5154 = vmax.f32 %v5090, 0.0
      %v5155 = vmax.f32 %v5091, 0.0
      %v5156 = vmax.f32 %v5092, 0.0
      %v5157 = vmax.f32 %v5093, 0.0
      %v5158 = vmax.f32 %v5094, 0.0
      %v5159 = vmax.f32 %v5095, 0.0
      %v5160 = vmax.f32 %v5096, 0.0
      %v5161 = vmax.f32 %v5097, 0.0
      %v5162 = vmax.f32 %v5098, 0.0
      %v5163 = vmax.f32 %v5099, 0.0
      %v5164 = vmax.f32 %v5100, 0.0
      %v5165 = vmax.f32 %v5101, 0.0
      %v5166 = vmax.f32 %v5102, 0.0
      %v5167 = vmax.f32 %v5103, 0.0
      %v5168 = vmax.f32 %v5104, 0.0
      %v5169 = vmax.f32 %v5105, 0.0
      %v5170 = vmax.f32 %v5106, 0.0
      %v5171 = vmax.f32 %v5107, 0.0
      %v5172 = vmax.f32 %v5108, 0.0
      %v5173 = vmax.f32 %v5109, 0.0
      %v5174 = vmax.f32 %v5110, 0.0
      %v5175 = vmax.f32 %v5111, 0.0
      %v5176 = vmax.f32 %v5112, 0.0
      %v5177 = vmax.f32 %v5113, 0.0
      %v5178 = vmax.f32 %v5114, 0.0
      %v5179 = vmax.f32 %v5115, 0.0
      %v5180 = vmax.f32 %v5116, 0.0
      %v5181 = vmax.f32 %v5117, 0.0
      %v5182 = vmax.f32 %v5118, 0.0
      %v5183 = vmax.f32 %v5119, 0.0
      %v5184 = vmax.f32 %v5120, 0.0
      %v5185 = vmax.f32 %v5121, 0.0
      %v5186 = vadd.f32 %v5122, %v5123
      %5187 = vadd.xlane.f32.xlu0 %v5186
      %v5188 = vpop.xlane.xlu0 %5187
      %v5189 = vadd.f32 %v5124, %v5125
      %5190 = vadd.xlane.f32.xlu0 %v5189
      %v5191 = vpop.xlane.xlu0 %5190
      %v5192 = vadd.f32 %v5126, %v5127
      %5193 = vadd.xlane.f32.xlu0 %v5192
      %v5194 = vpop.xlane.xlu0 %5193
      %v5195 = vadd.f32 %v5128, %v5129
      %5196 = vadd.xlane.f32.xlu0 %v5195
      %v5197 = vpop.xlane.xlu0 %5196
      %v5198 = vadd.f32 %v5130, %v5131
      %5199 = vadd.xlane.f32.xlu0 %v5198
      %v5200 = vpop.xlane.xlu0 %5199
      %v5201 = vadd.f32 %v5132, %v5133
      %5202 = vadd.xlane.f32.xlu0 %v5201
      %v5203 = vpop.xlane.xlu0 %5202
      %v5204 = vadd.f32 %v5134, %v5135
      %5205 = vadd.xlane.f32.xlu0 %v5204
      %v5206 = vpop.xlane.xlu0 %5205
      %v5207 = vadd.f32 %v5136, %v5137
      %5208 = vadd.xlane.f32.xlu0 %v5207
      %v5209 = vpop.xlane.xlu0 %5208
      %v5210 = vadd.f32 %v5138, %v5139
      %5211 = vadd.xlane.f32.xlu0 %v5210
      %v5212 = vpop.xlane.xlu0 %5211
      %v5213 = vadd.f32 %v5140, %v5141
      %5214 = vadd.xlane.f32.xlu0 %v5213
      %v5215 = vpop.xlane.xlu0 %5214
      %v5216 = vadd.f32 %v5142, %v5143
      %5217 = vadd.xlane.f32.xlu0 %v5216
      %v5218 = vpop.xlane.xlu0 %5217
      %v5219 = vadd.f32 %v5144, %v5145
      %5220 = vadd.xlane.f32.xlu0 %v5219
      %v5221 = vpop.xlane.xlu0 %5220
      %v5222 = vadd.f32 %v5146, %v5147
      %5223 = vadd.xlane.f32.xlu0 %v5222
      %v5224 = vpop.xlane.xlu0 %5223
      %v5225 = vadd.f32 %v5148, %v5149
      %5226 = vadd.xlane.f32.xlu0 %v5225
      %v5227 = vpop.xlane.xlu0 %5226
      %v5228 = vadd.f32 %v5150, %v5151
      %5229 = vadd.xlane.f32.xlu0 %v5228
      %v5230 = vpop.xlane.xlu0 %5229
      %v5231 = vadd.f32 %v5152, %v5153
      %5232 = vadd.xlane.f32.xlu0 %v5231
      %v5233 = vpop.xlane.xlu0 %5232
      %v5234 = vadd.f32 %v5154, %v5155
      %5235 = vadd.xlane.f32.xlu0 %v5234
      %v5236 = vpop.xlane.xlu0 %5235
      %v5237 = vadd.f32 %v5156, %v5157
      %5238 = vadd.xlane.f32.xlu0 %v5237
      %v5239 = vpop.xlane.xlu0 %5238
      %v5240 = vadd.f32 %v5158, %v5159
      %5241 = vadd.xlane.f32.xlu0 %v5240
      %v5242 = vpop.xlane.xlu0 %5241
      %v5243 = vadd.f32 %v5160, %v5161
      %5244 = vadd.xlane.f32.xlu0 %v5243
      %v5245 = vpop.xlane.xlu0 %5244
      %v5246 = vadd.f32 %v5162, %v5163
      %5247 = vadd.xlane.f32.xlu0 %v5246
      %v5248 = vpop.xlane.xlu0 %5247
      %v5249 = vadd.f32 %v5164, %v5165
      %5250 = vadd.xlane.f32.xlu0 %v5249
      %v5251 = vpop.xlane.xlu0 %5250
      %v5252 = vadd.f32 %v5166, %v5167
      %5253 = vadd.xlane.f32.xlu0 %v5252
      %v5254 = vpop.xlane.xlu0 %5253
      %v5255 = vadd.f32 %v5168, %v5169
      %5256 = vadd.xlane.f32.xlu0 %v5255
      %v5257 = vpop.xlane.xlu0 %5256
      %v5258 = vadd.f32 %v5170, %v5171
      %5259 = vadd.xlane.f32.xlu0 %v5258
      %v5260 = vpop.xlane.xlu0 %5259
      %v5261 = vadd.f32 %v5172, %v5173
      %5262 = vadd.xlane.f32.xlu0 %v5261
      %v5263 = vpop.xlane.xlu0 %5262
      %v5264 = vadd.f32 %v5174, %v5175
      %5265 = vadd.xlane.f32.xlu0 %v5264
      %v5266 = vpop.xlane.xlu0 %5265
      %v5267 = vadd.f32 %v5176, %v5177
      %5268 = vadd.xlane.f32.xlu0 %v5267
      %v5269 = vpop.xlane.xlu0 %5268
      %v5270 = vadd.f32 %v5178, %v5179
      %5271 = vadd.xlane.f32.xlu0 %v5270
      %v5272 = vpop.xlane.xlu0 %5271
      %v5273 = vadd.f32 %v5180, %v5181
      %5274 = vadd.xlane.f32.xlu0 %v5273
      %v5275 = vpop.xlane.xlu0 %5274
      %v5276 = vadd.f32 %v5182, %v5183
      %5277 = vadd.xlane.f32.xlu0 %v5276
      %v5278 = vpop.xlane.xlu0 %5277
      %v5279 = vadd.f32 %v5184, %v5185
      %5280 = vadd.xlane.f32.xlu0 %v5279
      %v5281 = vpop.xlane.xlu0 %5280
      %vm5282 = vcmp.ge.f32.partialorder %v5188, 1.0
      %vm5283 = vcmp.ge.f32.partialorder %v5191, 1.0
      %vm5284 = vcmp.ge.f32.partialorder %v5194, 1.0
      %vm5285 = vcmp.ge.f32.partialorder %v5197, 1.0
      %vm5286 = vcmp.ge.f32.partialorder %v5200, 1.0
      %vm5287 = vcmp.ge.f32.partialorder %v5203, 1.0
      %vm5288 = vcmp.ge.f32.partialorder %v5206, 1.0
      %vm5289 = vcmp.ge.f32.partialorder %v5209, 1.0
      %vm5290 = vcmp.ge.f32.partialorder %v5212, 1.0
      %vm5291 = vcmp.ge.f32.partialorder %v5215, 1.0
      %vm5292 = vcmp.ge.f32.partialorder %v5218, 1.0
      %vm5293 = vcmp.ge.f32.partialorder %v5221, 1.0
      %vm5294 = vcmp.ge.f32.partialorder %v5224, 1.0
      %vm5295 = vcmp.ge.f32.partialorder %v5227, 1.0
      %vm5296 = vcmp.ge.f32.partialorder %v5230, 1.0
      %vm5297 = vcmp.ge.f32.partialorder %v5233, 1.0
      %vm5298 = vcmp.ge.f32.partialorder %v5236, 1.0
      %vm5299 = vcmp.ge.f32.partialorder %v5239, 1.0
      %vm5300 = vcmp.ge.f32.partialorder %v5242, 1.0
      %vm5301 = vcmp.ge.f32.partialorder %v5245, 1.0
      %vm5302 = vcmp.ge.f32.partialorder %v5248, 1.0
      %vm5303 = vcmp.ge.f32.partialorder %v5251, 1.0
      %vm5304 = vcmp.ge.f32.partialorder %v5254, 1.0
      %vm5305 = vcmp.ge.f32.partialorder %v5257, 1.0
      %vm5306 = vcmp.ge.f32.partialorder %v5260, 1.0
      %vm5307 = vcmp.ge.f32.partialorder %v5263, 1.0
      %vm5308 = vcmp.ge.f32.partialorder %v5266, 1.0
      %vm5309 = vcmp.ge.f32.partialorder %v5269, 1.0
      %vm5310 = vcmp.ge.f32.partialorder %v5272, 1.0
      %vm5311 = vcmp.ge.f32.partialorder %v5275, 1.0
      %vm5312 = vcmp.ge.f32.partialorder %v5278, 1.0
      %vm5313 = vcmp.ge.f32.partialorder %v5281, 1.0
      %v5314 = vsel %vm5282, %v5026, %v4930
      %v5315 = vsel %vm5283, %v5027, %v4931
      %v5316 = vsel %vm5284, %v5028, %v4932
      %v5317 = vsel %vm5285, %v5029, %v4933
      %v5318 = vsel %vm5286, %v5030, %v4934
      %v5319 = vsel %vm5287, %v5031, %v4935
      %v5320 = vsel %vm5288, %v5032, %v4936
      %v5321 = vsel %vm5289, %v5033, %v4937
      %v5322 = vsel %vm5290, %v5034, %v4938
      %v5323 = vsel %vm5291, %v5035, %v4939
      %v5324 = vsel %vm5292, %v5036, %v4940
      %v5325 = vsel %vm5293, %v5037, %v4941
      %v5326 = vsel %vm5294, %v5038, %v4942
      %v5327 = vsel %vm5295, %v5039, %v4943
      %v5328 = vsel %vm5296, %v5040, %v4944
      %v5329 = vsel %vm5297, %v5041, %v4945
      %v5330 = vsel %vm5298, %v5042, %v4946
      %v5331 = vsel %vm5299, %v5043, %v4947
      %v5332 = vsel %vm5300, %v5044, %v4948
      %v5333 = vsel %vm5301, %v5045, %v4949
      %v5334 = vsel %vm5302, %v5046, %v4950
      %v5335 = vsel %vm5303, %v5047, %v4951
      %v5336 = vsel %vm5304, %v5048, %v4952
      %v5337 = vsel %vm5305, %v5049, %v4953
      %v5338 = vsel %vm5306, %v5050, %v4954
      %v5339 = vsel %vm5307, %v5051, %v4955
      %v5340 = vsel %vm5308, %v5052, %v4956
      %v5341 = vsel %vm5309, %v5053, %v4957
      %v5342 = vsel %vm5310, %v5054, %v4958
      %v5343 = vsel %vm5311, %v5055, %v4959
      %v5344 = vsel %vm5312, %v5056, %v4960
      %v5345 = vsel %vm5313, %v5057, %v4961
      %v5346 = vsel %vm5282, %v4962, %v5026
      %v5347 = vsel %vm5283, %v4963, %v5027
      %v5348 = vsel %vm5284, %v4964, %v5028
      %v5349 = vsel %vm5285, %v4965, %v5029
      %v5350 = vsel %vm5286, %v4966, %v5030
      %v5351 = vsel %vm5287, %v4967, %v5031
      %v5352 = vsel %vm5288, %v4968, %v5032
      %v5353 = vsel %vm5289, %v4969, %v5033
      %v5354 = vsel %vm5290, %v4970, %v5034
      %v5355 = vsel %vm5291, %v4971, %v5035
      %v5356 = vsel %vm5292, %v4972, %v5036
      %v5357 = vsel %vm5293, %v4973, %v5037
      %v5358 = vsel %vm5294, %v4974, %v5038
      %v5359 = vsel %vm5295, %v4975, %v5039
      %v5360 = vsel %vm5296, %v4976, %v5040
      %v5361 = vsel %vm5297, %v4977, %v5041
      %v5362 = vsel %vm5298, %v4978, %v5042
      %v5363 = vsel %vm5299, %v4979, %v5043
      %v5364 = vsel %vm5300, %v4980, %v5044
      %v5365 = vsel %vm5301, %v4981, %v5045
      %v5366 = vsel %vm5302, %v4982, %v5046
      %v5367 = vsel %vm5303, %v4983, %v5047
      %v5368 = vsel %vm5304, %v4984, %v5048
      %v5369 = vsel %vm5305, %v4985, %v5049
      %v5370 = vsel %vm5306, %v4986, %v5050
      %v5371 = vsel %vm5307, %v4987, %v5051
      %v5372 = vsel %vm5308, %v4988, %v5052
      %v5373 = vsel %vm5309, %v4989, %v5053
      %v5374 = vsel %vm5310, %v4990, %v5054
      %v5375 = vsel %vm5311, %v4991, %v5055
      %v5376 = vsel %vm5312, %v4992, %v5056
      %v5377 = vsel %vm5313, %v4993, %v5057
      %v5378 = vadd.f32 %v5314, %v5346
      %v5379 = vadd.f32 %v5315, %v5347
      %v5380 = vadd.f32 %v5316, %v5348
      %v5381 = vadd.f32 %v5317, %v5349
      %v5382 = vadd.f32 %v5318, %v5350
      %v5383 = vadd.f32 %v5319, %v5351
      %v5384 = vadd.f32 %v5320, %v5352
      %v5385 = vadd.f32 %v5321, %v5353
      %v5386 = vadd.f32 %v5322, %v5354
      %v5387 = vadd.f32 %v5323, %v5355
      %v5388 = vadd.f32 %v5324, %v5356
      %v5389 = vadd.f32 %v5325, %v5357
      %v5390 = vadd.f32 %v5326, %v5358
      %v5391 = vadd.f32 %v5327, %v5359
      %v5392 = vadd.f32 %v5328, %v5360
      %v5393 = vadd.f32 %v5329, %v5361
      %v5394 = vadd.f32 %v5330, %v5362
      %v5395 = vadd.f32 %v5331, %v5363
      %v5396 = vadd.f32 %v5332, %v5364
      %v5397 = vadd.f32 %v5333, %v5365
      %v5398 = vadd.f32 %v5334, %v5366
      %v5399 = vadd.f32 %v5335, %v5367
      %v5400 = vadd.f32 %v5336, %v5368
      %v5401 = vadd.f32 %v5337, %v5369
      %v5402 = vadd.f32 %v5338, %v5370
      %v5403 = vadd.f32 %v5339, %v5371
      %v5404 = vadd.f32 %v5340, %v5372
      %v5405 = vadd.f32 %v5341, %v5373
      %v5406 = vadd.f32 %v5342, %v5374
      %v5407 = vadd.f32 %v5343, %v5375
      %v5408 = vadd.f32 %v5344, %v5376
      %v5409 = vadd.f32 %v5345, %v5377
      %v5410 = vmul.f32 %v5378, 0.5
      %v5411 = vmul.f32 %v5379, 0.5
      %v5412 = vmul.f32 %v5380, 0.5
      %v5413 = vmul.f32 %v5381, 0.5
      %v5414 = vmul.f32 %v5382, 0.5
      %v5415 = vmul.f32 %v5383, 0.5
      %v5416 = vmul.f32 %v5384, 0.5
      %v5417 = vmul.f32 %v5385, 0.5
      %v5418 = vmul.f32 %v5386, 0.5
      %v5419 = vmul.f32 %v5387, 0.5
      %v5420 = vmul.f32 %v5388, 0.5
      %v5421 = vmul.f32 %v5389, 0.5
      %v5422 = vmul.f32 %v5390, 0.5
      %v5423 = vmul.f32 %v5391, 0.5
      %v5424 = vmul.f32 %v5392, 0.5
      %v5425 = vmul.f32 %v5393, 0.5
      %v5426 = vmul.f32 %v5394, 0.5
      %v5427 = vmul.f32 %v5395, 0.5
      %v5428 = vmul.f32 %v5396, 0.5
      %v5429 = vmul.f32 %v5397, 0.5
      %v5430 = vmul.f32 %v5398, 0.5
      %v5431 = vmul.f32 %v5399, 0.5
      %v5432 = vmul.f32 %v5400, 0.5
      %v5433 = vmul.f32 %v5401, 0.5
      %v5434 = vmul.f32 %v5402, 0.5
      %v5435 = vmul.f32 %v5403, 0.5
      %v5436 = vmul.f32 %v5404, 0.5
      %v5437 = vmul.f32 %v5405, 0.5
      %v5438 = vmul.f32 %v5406, 0.5
      %v5439 = vmul.f32 %v5407, 0.5
      %v5440 = vmul.f32 %v5408, 0.5
      %v5441 = vmul.f32 %v5409, 0.5
      %vm5442 = vcmp.gt.f32.partialorder %v770, %v5410
      %vm5443 = vcmp.gt.f32.partialorder %v771, %v5410
      %vm5444 = vcmp.gt.f32.partialorder %v772, %v5411
      %vm5445 = vcmp.gt.f32.partialorder %v773, %v5411
      %vm5446 = vcmp.gt.f32.partialorder %v774, %v5412
      %vm5447 = vcmp.gt.f32.partialorder %v775, %v5412
      %vm5448 = vcmp.gt.f32.partialorder %v776, %v5413
      %vm5449 = vcmp.gt.f32.partialorder %v777, %v5413
      %vm5450 = vcmp.gt.f32.partialorder %v778, %v5414
      %vm5451 = vcmp.gt.f32.partialorder %v779, %v5414
      %vm5452 = vcmp.gt.f32.partialorder %v780, %v5415
      %vm5453 = vcmp.gt.f32.partialorder %v781, %v5415
      %vm5454 = vcmp.gt.f32.partialorder %v782, %v5416
      %vm5455 = vcmp.gt.f32.partialorder %v783, %v5416
      %vm5456 = vcmp.gt.f32.partialorder %v784, %v5417
      %vm5457 = vcmp.gt.f32.partialorder %v785, %v5417
      %vm5458 = vcmp.gt.f32.partialorder %v786, %v5418
      %vm5459 = vcmp.gt.f32.partialorder %v787, %v5418
      %vm5460 = vcmp.gt.f32.partialorder %v788, %v5419
      %vm5461 = vcmp.gt.f32.partialorder %v789, %v5419
      %vm5462 = vcmp.gt.f32.partialorder %v790, %v5420
      %vm5463 = vcmp.gt.f32.partialorder %v791, %v5420
      %vm5464 = vcmp.gt.f32.partialorder %v792, %v5421
      %vm5465 = vcmp.gt.f32.partialorder %v793, %v5421
      %vm5466 = vcmp.gt.f32.partialorder %v794, %v5422
      %vm5467 = vcmp.gt.f32.partialorder %v795, %v5422
      %vm5468 = vcmp.gt.f32.partialorder %v796, %v5423
      %vm5469 = vcmp.gt.f32.partialorder %v797, %v5423
      %vm5470 = vcmp.gt.f32.partialorder %v798, %v5424
      %vm5471 = vcmp.gt.f32.partialorder %v799, %v5424
      %vm5472 = vcmp.gt.f32.partialorder %v800, %v5425
      %vm5473 = vcmp.gt.f32.partialorder %v801, %v5425
      %vm5474 = vcmp.gt.f32.partialorder %v802, %v5426
      %vm5475 = vcmp.gt.f32.partialorder %v803, %v5426
      %vm5476 = vcmp.gt.f32.partialorder %v804, %v5427
      %vm5477 = vcmp.gt.f32.partialorder %v805, %v5427
      %vm5478 = vcmp.gt.f32.partialorder %v806, %v5428
      %vm5479 = vcmp.gt.f32.partialorder %v807, %v5428
      %vm5480 = vcmp.gt.f32.partialorder %v808, %v5429
      %vm5481 = vcmp.gt.f32.partialorder %v809, %v5429
      %vm5482 = vcmp.gt.f32.partialorder %v810, %v5430
      %vm5483 = vcmp.gt.f32.partialorder %v811, %v5430
      %vm5484 = vcmp.gt.f32.partialorder %v812, %v5431
      %vm5485 = vcmp.gt.f32.partialorder %v813, %v5431
      %vm5486 = vcmp.gt.f32.partialorder %v814, %v5432
      %vm5487 = vcmp.gt.f32.partialorder %v815, %v5432
      %vm5488 = vcmp.gt.f32.partialorder %v816, %v5433
      %vm5489 = vcmp.gt.f32.partialorder %v817, %v5433
      %vm5490 = vcmp.gt.f32.partialorder %v818, %v5434
      %vm5491 = vcmp.gt.f32.partialorder %v819, %v5434
      %vm5492 = vcmp.gt.f32.partialorder %v820, %v5435
      %vm5493 = vcmp.gt.f32.partialorder %v821, %v5435
      %vm5494 = vcmp.gt.f32.partialorder %v822, %v5436
      %vm5495 = vcmp.gt.f32.partialorder %v823, %v5436
      %vm5496 = vcmp.gt.f32.partialorder %v824, %v5437
      %vm5497 = vcmp.gt.f32.partialorder %v825, %v5437
      %vm5498 = vcmp.gt.f32.partialorder %v826, %v5438
      %vm5499 = vcmp.gt.f32.partialorder %v827, %v5438
      %vm5500 = vcmp.gt.f32.partialorder %v828, %v5439
      %vm5501 = vcmp.gt.f32.partialorder %v829, %v5439
      %vm5502 = vcmp.gt.f32.partialorder %v830, %v5440
      %vm5503 = vcmp.gt.f32.partialorder %v831, %v5440
      %vm5504 = vcmp.gt.f32.partialorder %v832, %v5441
      %vm5505 = vcmp.gt.f32.partialorder %v833, %v5441
      %v5506 = vsel %vm5442, 1, 0
      %v5507 = vsel %vm5443, 1, 0
      %v5508 = vsel %vm5444, 1, 0
      %v5509 = vsel %vm5445, 1, 0
      %v5510 = vsel %vm5446, 1, 0
      %v5511 = vsel %vm5447, 1, 0
      %v5512 = vsel %vm5448, 1, 0
      %v5513 = vsel %vm5449, 1, 0
      %v5514 = vsel %vm5450, 1, 0
      %v5515 = vsel %vm5451, 1, 0
      %v5516 = vsel %vm5452, 1, 0
      %v5517 = vsel %vm5453, 1, 0
      %v5518 = vsel %vm5454, 1, 0
      %v5519 = vsel %vm5455, 1, 0
      %v5520 = vsel %vm5456, 1, 0
      %v5521 = vsel %vm5457, 1, 0
      %v5522 = vsel %vm5458, 1, 0
      %v5523 = vsel %vm5459, 1, 0
      %v5524 = vsel %vm5460, 1, 0
      %v5525 = vsel %vm5461, 1, 0
      %v5526 = vsel %vm5462, 1, 0
      %v5527 = vsel %vm5463, 1, 0
      %v5528 = vsel %vm5464, 1, 0
      %v5529 = vsel %vm5465, 1, 0
      %v5530 = vsel %vm5466, 1, 0
      %v5531 = vsel %vm5467, 1, 0
      %v5532 = vsel %vm5468, 1, 0
      %v5533 = vsel %vm5469, 1, 0
      %v5534 = vsel %vm5470, 1, 0
      %v5535 = vsel %vm5471, 1, 0
      %v5536 = vsel %vm5472, 1, 0
      %v5537 = vsel %vm5473, 1, 0
      %v5538 = vsel %vm5474, 1, 0
      %v5539 = vsel %vm5475, 1, 0
      %v5540 = vsel %vm5476, 1, 0
      %v5541 = vsel %vm5477, 1, 0
      %v5542 = vsel %vm5478, 1, 0
      %v5543 = vsel %vm5479, 1, 0
      %v5544 = vsel %vm5480, 1, 0
      %v5545 = vsel %vm5481, 1, 0
      %v5546 = vsel %vm5482, 1, 0
      %v5547 = vsel %vm5483, 1, 0
      %v5548 = vsel %vm5484, 1, 0
      %v5549 = vsel %vm5485, 1, 0
      %v5550 = vsel %vm5486, 1, 0
      %v5551 = vsel %vm5487, 1, 0
      %v5552 = vsel %vm5488, 1, 0
      %v5553 = vsel %vm5489, 1, 0
      %v5554 = vsel %vm5490, 1, 0
      %v5555 = vsel %vm5491, 1, 0
      %v5556 = vsel %vm5492, 1, 0
      %v5557 = vsel %vm5493, 1, 0
      %v5558 = vsel %vm5494, 1, 0
      %v5559 = vsel %vm5495, 1, 0
      %v5560 = vsel %vm5496, 1, 0
      %v5561 = vsel %vm5497, 1, 0
      %v5562 = vsel %vm5498, 1, 0
      %v5563 = vsel %vm5499, 1, 0
      %v5564 = vsel %vm5500, 1, 0
      %v5565 = vsel %vm5501, 1, 0
      %v5566 = vsel %vm5502, 1, 0
      %v5567 = vsel %vm5503, 1, 0
      %v5568 = vsel %vm5504, 1, 0
      %v5569 = vsel %vm5505, 1, 0
      %v5570 = vcvt.s32.f32 %v5506
      %v5571 = vcvt.s32.f32 %v5507
      %v5572 = vcvt.s32.f32 %v5508
      %v5573 = vcvt.s32.f32 %v5509
      %v5574 = vcvt.s32.f32 %v5510
      %v5575 = vcvt.s32.f32 %v5511
      %v5576 = vcvt.s32.f32 %v5512
      %v5577 = vcvt.s32.f32 %v5513
      %v5578 = vcvt.s32.f32 %v5514
      %v5579 = vcvt.s32.f32 %v5515
      %v5580 = vcvt.s32.f32 %v5516
      %v5581 = vcvt.s32.f32 %v5517
      %v5582 = vcvt.s32.f32 %v5518
      %v5583 = vcvt.s32.f32 %v5519
      %v5584 = vcvt.s32.f32 %v5520
      %v5585 = vcvt.s32.f32 %v5521
      %v5586 = vcvt.s32.f32 %v5522
      %v5587 = vcvt.s32.f32 %v5523
      %v5588 = vcvt.s32.f32 %v5524
      %v5589 = vcvt.s32.f32 %v5525
      %v5590 = vcvt.s32.f32 %v5526
      %v5591 = vcvt.s32.f32 %v5527
      %v5592 = vcvt.s32.f32 %v5528
      %v5593 = vcvt.s32.f32 %v5529
      %v5594 = vcvt.s32.f32 %v5530
      %v5595 = vcvt.s32.f32 %v5531
      %v5596 = vcvt.s32.f32 %v5532
      %v5597 = vcvt.s32.f32 %v5533
      %v5598 = vcvt.s32.f32 %v5534
      %v5599 = vcvt.s32.f32 %v5535
      %v5600 = vcvt.s32.f32 %v5536
      %v5601 = vcvt.s32.f32 %v5537
      %v5602 = vcvt.s32.f32 %v5538
      %v5603 = vcvt.s32.f32 %v5539
      %v5604 = vcvt.s32.f32 %v5540
      %v5605 = vcvt.s32.f32 %v5541
      %v5606 = vcvt.s32.f32 %v5542
      %v5607 = vcvt.s32.f32 %v5543
      %v5608 = vcvt.s32.f32 %v5544
      %v5609 = vcvt.s32.f32 %v5545
      %v5610 = vcvt.s32.f32 %v5546
      %v5611 = vcvt.s32.f32 %v5547
      %v5612 = vcvt.s32.f32 %v5548
      %v5613 = vcvt.s32.f32 %v5549
      %v5614 = vcvt.s32.f32 %v5550
      %v5615 = vcvt.s32.f32 %v5551
      %v5616 = vcvt.s32.f32 %v5552
      %v5617 = vcvt.s32.f32 %v5553
      %v5618 = vcvt.s32.f32 %v5554
      %v5619 = vcvt.s32.f32 %v5555
      %v5620 = vcvt.s32.f32 %v5556
      %v5621 = vcvt.s32.f32 %v5557
      %v5622 = vcvt.s32.f32 %v5558
      %v5623 = vcvt.s32.f32 %v5559
      %v5624 = vcvt.s32.f32 %v5560
      %v5625 = vcvt.s32.f32 %v5561
      %v5626 = vcvt.s32.f32 %v5562
      %v5627 = vcvt.s32.f32 %v5563
      %v5628 = vcvt.s32.f32 %v5564
      %v5629 = vcvt.s32.f32 %v5565
      %v5630 = vcvt.s32.f32 %v5566
      %v5631 = vcvt.s32.f32 %v5567
      %v5632 = vcvt.s32.f32 %v5568
      %v5633 = vcvt.s32.f32 %v5569
      %v5634 = vadd.f32 %v5570, %v5571
      %5635 = vadd.xlane.f32.xlu0 %v5634
      %v5636 = vpop.xlane.xlu0 %5635
      %v5637 = vadd.f32 %v5572, %v5573
      %5638 = vadd.xlane.f32.xlu0 %v5637
      %v5639 = vpop.xlane.xlu0 %5638
      %v5640 = vadd.f32 %v5574, %v5575
      %5641 = vadd.xlane.f32.xlu0 %v5640
      %v5642 = vpop.xlane.xlu0 %5641
      %v5643 = vadd.f32 %v5576, %v5577
      %5644 = vadd.xlane.f32.xlu0 %v5643
      %v5645 = vpop.xlane.xlu0 %5644
      %v5646 = vadd.f32 %v5578, %v5579
      %5647 = vadd.xlane.f32.xlu0 %v5646
      %v5648 = vpop.xlane.xlu0 %5647
      %v5649 = vadd.f32 %v5580, %v5581
      %5650 = vadd.xlane.f32.xlu0 %v5649
      %v5651 = vpop.xlane.xlu0 %5650
      %v5652 = vadd.f32 %v5582, %v5583
      %5653 = vadd.xlane.f32.xlu0 %v5652
      %v5654 = vpop.xlane.xlu0 %5653
      %v5655 = vadd.f32 %v5584, %v5585
      %5656 = vadd.xlane.f32.xlu0 %v5655
      %v5657 = vpop.xlane.xlu0 %5656
      %v5658 = vadd.f32 %v5586, %v5587
      %5659 = vadd.xlane.f32.xlu0 %v5658
      %v5660 = vpop.xlane.xlu0 %5659
      %v5661 = vadd.f32 %v5588, %v5589
      %5662 = vadd.xlane.f32.xlu0 %v5661
      %v5663 = vpop.xlane.xlu0 %5662
      %v5664 = vadd.f32 %v5590, %v5591
      %5665 = vadd.xlane.f32.xlu0 %v5664
      %v5666 = vpop.xlane.xlu0 %5665
      %v5667 = vadd.f32 %v5592, %v5593
      %5668 = vadd.xlane.f32.xlu0 %v5667
      %v5669 = vpop.xlane.xlu0 %5668
      %v5670 = vadd.f32 %v5594, %v5595
      %5671 = vadd.xlane.f32.xlu0 %v5670
      %v5672 = vpop.xlane.xlu0 %5671
      %v5673 = vadd.f32 %v5596, %v5597
      %5674 = vadd.xlane.f32.xlu0 %v5673
      %v5675 = vpop.xlane.xlu0 %5674
      %v5676 = vadd.f32 %v5598, %v5599
      %5677 = vadd.xlane.f32.xlu0 %v5676
      %v5678 = vpop.xlane.xlu0 %5677
      %v5679 = vadd.f32 %v5600, %v5601
      %5680 = vadd.xlane.f32.xlu0 %v5679
      %v5681 = vpop.xlane.xlu0 %5680
      %v5682 = vadd.f32 %v5602, %v5603
      %5683 = vadd.xlane.f32.xlu0 %v5682
      %v5684 = vpop.xlane.xlu0 %5683
      %v5685 = vadd.f32 %v5604, %v5605
      %5686 = vadd.xlane.f32.xlu0 %v5685
      %v5687 = vpop.xlane.xlu0 %5686
      %v5688 = vadd.f32 %v5606, %v5607
      %5689 = vadd.xlane.f32.xlu0 %v5688
      %v5690 = vpop.xlane.xlu0 %5689
      %v5691 = vadd.f32 %v5608, %v5609
      %5692 = vadd.xlane.f32.xlu0 %v5691
      %v5693 = vpop.xlane.xlu0 %5692
      %v5694 = vadd.f32 %v5610, %v5611
      %5695 = vadd.xlane.f32.xlu0 %v5694
      %v5696 = vpop.xlane.xlu0 %5695
      %v5697 = vadd.f32 %v5612, %v5613
      %5698 = vadd.xlane.f32.xlu0 %v5697
      %v5699 = vpop.xlane.xlu0 %5698
      %v5700 = vadd.f32 %v5614, %v5615
      %5701 = vadd.xlane.f32.xlu0 %v5700
      %v5702 = vpop.xlane.xlu0 %5701
      %v5703 = vadd.f32 %v5616, %v5617
      %5704 = vadd.xlane.f32.xlu0 %v5703
      %v5705 = vpop.xlane.xlu0 %5704
      %v5706 = vadd.f32 %v5618, %v5619
      %5707 = vadd.xlane.f32.xlu0 %v5706
      %v5708 = vpop.xlane.xlu0 %5707
      %v5709 = vadd.f32 %v5620, %v5621
      %5710 = vadd.xlane.f32.xlu0 %v5709
      %v5711 = vpop.xlane.xlu0 %5710
      %v5712 = vadd.f32 %v5622, %v5623
      %5713 = vadd.xlane.f32.xlu0 %v5712
      %v5714 = vpop.xlane.xlu0 %5713
      %v5715 = vadd.f32 %v5624, %v5625
      %5716 = vadd.xlane.f32.xlu0 %v5715
      %v5717 = vpop.xlane.xlu0 %5716
      %v5718 = vadd.f32 %v5626, %v5627
      %5719 = vadd.xlane.f32.xlu0 %v5718
      %v5720 = vpop.xlane.xlu0 %5719
      %v5721 = vadd.f32 %v5628, %v5629
      %5722 = vadd.xlane.f32.xlu0 %v5721
      %v5723 = vpop.xlane.xlu0 %5722
      %v5724 = vadd.f32 %v5630, %v5631
      %5725 = vadd.xlane.f32.xlu0 %v5724
      %v5726 = vpop.xlane.xlu0 %5725
      %v5727 = vadd.f32 %v5632, %v5633
      %5728 = vadd.xlane.f32.xlu0 %v5727
      %v5729 = vpop.xlane.xlu0 %5728
      %v5730 = vsel %vm5442, %v770, 0.0
      %v5731 = vsel %vm5443, %v771, 0.0
      %v5732 = vsel %vm5444, %v772, 0.0
      %v5733 = vsel %vm5445, %v773, 0.0
      %v5734 = vsel %vm5446, %v774, 0.0
      %v5735 = vsel %vm5447, %v775, 0.0
      %v5736 = vsel %vm5448, %v776, 0.0
      %v5737 = vsel %vm5449, %v777, 0.0
      %v5738 = vsel %vm5450, %v778, 0.0
      %v5739 = vsel %vm5451, %v779, 0.0
      %v5740 = vsel %vm5452, %v780, 0.0
      %v5741 = vsel %vm5453, %v781, 0.0
      %v5742 = vsel %vm5454, %v782, 0.0
      %v5743 = vsel %vm5455, %v783, 0.0
      %v5744 = vsel %vm5456, %v784, 0.0
      %v5745 = vsel %vm5457, %v785, 0.0
      %v5746 = vsel %vm5458, %v786, 0.0
      %v5747 = vsel %vm5459, %v787, 0.0
      %v5748 = vsel %vm5460, %v788, 0.0
      %v5749 = vsel %vm5461, %v789, 0.0
      %v5750 = vsel %vm5462, %v790, 0.0
      %v5751 = vsel %vm5463, %v791, 0.0
      %v5752 = vsel %vm5464, %v792, 0.0
      %v5753 = vsel %vm5465, %v793, 0.0
      %v5754 = vsel %vm5466, %v794, 0.0
      %v5755 = vsel %vm5467, %v795, 0.0
      %v5756 = vsel %vm5468, %v796, 0.0
      %v5757 = vsel %vm5469, %v797, 0.0
      %v5758 = vsel %vm5470, %v798, 0.0
      %v5759 = vsel %vm5471, %v799, 0.0
      %v5760 = vsel %vm5472, %v800, 0.0
      %v5761 = vsel %vm5473, %v801, 0.0
      %v5762 = vsel %vm5474, %v802, 0.0
      %v5763 = vsel %vm5475, %v803, 0.0
      %v5764 = vsel %vm5476, %v804, 0.0
      %v5765 = vsel %vm5477, %v805, 0.0
      %v5766 = vsel %vm5478, %v806, 0.0
      %v5767 = vsel %vm5479, %v807, 0.0
      %v5768 = vsel %vm5480, %v808, 0.0
      %v5769 = vsel %vm5481, %v809, 0.0
      %v5770 = vsel %vm5482, %v810, 0.0
      %v5771 = vsel %vm5483, %v811, 0.0
      %v5772 = vsel %vm5484, %v812, 0.0
      %v5773 = vsel %vm5485, %v813, 0.0
      %v5774 = vsel %vm5486, %v814, 0.0
      %v5775 = vsel %vm5487, %v815, 0.0
      %v5776 = vsel %vm5488, %v816, 0.0
      %v5777 = vsel %vm5489, %v817, 0.0
      %v5778 = vsel %vm5490, %v818, 0.0
      %v5779 = vsel %vm5491, %v819, 0.0
      %v5780 = vsel %vm5492, %v820, 0.0
      %v5781 = vsel %vm5493, %v821, 0.0
      %v5782 = vsel %vm5494, %v822, 0.0
      %v5783 = vsel %vm5495, %v823, 0.0
      %v5784 = vsel %vm5496, %v824, 0.0
      %v5785 = vsel %vm5497, %v825, 0.0
      %v5786 = vsel %vm5498, %v826, 0.0
      %v5787 = vsel %vm5499, %v827, 0.0
      %v5788 = vsel %vm5500, %v828, 0.0
      %v5789 = vsel %vm5501, %v829, 0.0
      %v5790 = vsel %vm5502, %v830, 0.0
      %v5791 = vsel %vm5503, %v831, 0.0
      %v5792 = vsel %vm5504, %v832, 0.0
      %v5793 = vsel %vm5505, %v833, 0.0
      %v5794 = vadd.f32 %v5730, %v5731
      %5795 = vadd.xlane.f32.xlu0 %v5794
      %v5796 = vpop.xlane.xlu0 %5795
      %v5797 = vadd.f32 %v5732, %v5733
      %5798 = vadd.xlane.f32.xlu0 %v5797
      %v5799 = vpop.xlane.xlu0 %5798
      %v5800 = vadd.f32 %v5734, %v5735
      %5801 = vadd.xlane.f32.xlu0 %v5800
      %v5802 = vpop.xlane.xlu0 %5801
      %v5803 = vadd.f32 %v5736, %v5737
      %5804 = vadd.xlane.f32.xlu0 %v5803
      %v5805 = vpop.xlane.xlu0 %5804
      %v5806 = vadd.f32 %v5738, %v5739
      %5807 = vadd.xlane.f32.xlu0 %v5806
      %v5808 = vpop.xlane.xlu0 %5807
      %v5809 = vadd.f32 %v5740, %v5741
      %5810 = vadd.xlane.f32.xlu0 %v5809
      %v5811 = vpop.xlane.xlu0 %5810
      %v5812 = vadd.f32 %v5742, %v5743
      %5813 = vadd.xlane.f32.xlu0 %v5812
      %v5814 = vpop.xlane.xlu0 %5813
      %v5815 = vadd.f32 %v5744, %v5745
      %5816 = vadd.xlane.f32.xlu0 %v5815
      %v5817 = vpop.xlane.xlu0 %5816
      %v5818 = vadd.f32 %v5746, %v5747
      %5819 = vadd.xlane.f32.xlu0 %v5818
      %v5820 = vpop.xlane.xlu0 %5819
      %v5821 = vadd.f32 %v5748, %v5749
      %5822 = vadd.xlane.f32.xlu0 %v5821
      %v5823 = vpop.xlane.xlu0 %5822
      %v5824 = vadd.f32 %v5750, %v5751
      %5825 = vadd.xlane.f32.xlu0 %v5824
      %v5826 = vpop.xlane.xlu0 %5825
      %v5827 = vadd.f32 %v5752, %v5753
      %5828 = vadd.xlane.f32.xlu0 %v5827
      %v5829 = vpop.xlane.xlu0 %5828
      %v5830 = vadd.f32 %v5754, %v5755
      %5831 = vadd.xlane.f32.xlu0 %v5830
      %v5832 = vpop.xlane.xlu0 %5831
      %v5833 = vadd.f32 %v5756, %v5757
      %5834 = vadd.xlane.f32.xlu0 %v5833
      %v5835 = vpop.xlane.xlu0 %5834
      %v5836 = vadd.f32 %v5758, %v5759
      %5837 = vadd.xlane.f32.xlu0 %v5836
      %v5838 = vpop.xlane.xlu0 %5837
      %v5839 = vadd.f32 %v5760, %v5761
      %5840 = vadd.xlane.f32.xlu0 %v5839
      %v5841 = vpop.xlane.xlu0 %5840
      %v5842 = vadd.f32 %v5762, %v5763
      %5843 = vadd.xlane.f32.xlu0 %v5842
      %v5844 = vpop.xlane.xlu0 %5843
      %v5845 = vadd.f32 %v5764, %v5765
      %5846 = vadd.xlane.f32.xlu0 %v5845
      %v5847 = vpop.xlane.xlu0 %5846
      %v5848 = vadd.f32 %v5766, %v5767
      %5849 = vadd.xlane.f32.xlu0 %v5848
      %v5850 = vpop.xlane.xlu0 %5849
      %v5851 = vadd.f32 %v5768, %v5769
      %5852 = vadd.xlane.f32.xlu0 %v5851
      %v5853 = vpop.xlane.xlu0 %5852
      %v5854 = vadd.f32 %v5770, %v5771
      %5855 = vadd.xlane.f32.xlu0 %v5854
      %v5856 = vpop.xlane.xlu0 %5855
      %v5857 = vadd.f32 %v5772, %v5773
      %5858 = vadd.xlane.f32.xlu0 %v5857
      %v5859 = vpop.xlane.xlu0 %5858
      %v5860 = vadd.f32 %v5774, %v5775
      %5861 = vadd.xlane.f32.xlu0 %v5860
      %v5862 = vpop.xlane.xlu0 %5861
      %v5863 = vadd.f32 %v5776, %v5777
      %5864 = vadd.xlane.f32.xlu0 %v5863
      %v5865 = vpop.xlane.xlu0 %5864
      %v5866 = vadd.f32 %v5778, %v5779
      %5867 = vadd.xlane.f32.xlu0 %v5866
      %v5868 = vpop.xlane.xlu0 %5867
      %v5869 = vadd.f32 %v5780, %v5781
      %5870 = vadd.xlane.f32.xlu0 %v5869
      %v5871 = vpop.xlane.xlu0 %5870
      %v5872 = vadd.f32 %v5782, %v5783
      %5873 = vadd.xlane.f32.xlu0 %v5872
      %v5874 = vpop.xlane.xlu0 %5873
      %v5875 = vadd.f32 %v5784, %v5785
      %5876 = vadd.xlane.f32.xlu0 %v5875
      %v5877 = vpop.xlane.xlu0 %5876
      %v5878 = vadd.f32 %v5786, %v5787
      %5879 = vadd.xlane.f32.xlu0 %v5878
      %v5880 = vpop.xlane.xlu0 %5879
      %v5881 = vadd.f32 %v5788, %v5789
      %5882 = vadd.xlane.f32.xlu0 %v5881
      %v5883 = vpop.xlane.xlu0 %5882
      %v5884 = vadd.f32 %v5790, %v5791
      %5885 = vadd.xlane.f32.xlu0 %v5884
      %v5886 = vpop.xlane.xlu0 %5885
      %v5887 = vadd.f32 %v5792, %v5793
      %5888 = vadd.xlane.f32.xlu0 %v5887
      %v5889 = vpop.xlane.xlu0 %5888
      %v5890 = vsub.f32 %v5796, 1.0
      %v5891 = vsub.f32 %v5799, 1.0
      %v5892 = vsub.f32 %v5802, 1.0
      %v5893 = vsub.f32 %v5805, 1.0
      %v5894 = vsub.f32 %v5808, 1.0
      %v5895 = vsub.f32 %v5811, 1.0
      %v5896 = vsub.f32 %v5814, 1.0
      %v5897 = vsub.f32 %v5817, 1.0
      %v5898 = vsub.f32 %v5820, 1.0
      %v5899 = vsub.f32 %v5823, 1.0
      %v5900 = vsub.f32 %v5826, 1.0
      %v5901 = vsub.f32 %v5829, 1.0
      %v5902 = vsub.f32 %v5832, 1.0
      %v5903 = vsub.f32 %v5835, 1.0
      %v5904 = vsub.f32 %v5838, 1.0
      %v5905 = vsub.f32 %v5841, 1.0
      %v5906 = vsub.f32 %v5844, 1.0
      %v5907 = vsub.f32 %v5847, 1.0
      %v5908 = vsub.f32 %v5850, 1.0
      %v5909 = vsub.f32 %v5853, 1.0
      %v5910 = vsub.f32 %v5856, 1.0
      %v5911 = vsub.f32 %v5859, 1.0
      %v5912 = vsub.f32 %v5862, 1.0
      %v5913 = vsub.f32 %v5865, 1.0
      %v5914 = vsub.f32 %v5868, 1.0
      %v5915 = vsub.f32 %v5871, 1.0
      %v5916 = vsub.f32 %v5874, 1.0
      %v5917 = vsub.f32 %v5877, 1.0
      %v5918 = vsub.f32 %v5880, 1.0
      %v5919 = vsub.f32 %v5883, 1.0
      %v5920 = vsub.f32 %v5886, 1.0
      %v5921 = vsub.f32 %v5889, 1.0
      %v5922 = vrcp.pop %v5636
      %v5923 = vmul.f32 %v5890, %v5922
      %v5924 = vrcp.pop %v5639
      %v5925 = vmul.f32 %v5891, %v5924
      %v5926 = vrcp.pop %v5642
      %v5927 = vmul.f32 %v5892, %v5926
      %v5928 = vrcp.pop %v5645
      %v5929 = vmul.f32 %v5893, %v5928
      %v5930 = vrcp.pop %v5648
      %v5931 = vmul.f32 %v5894, %v5930
      %v5932 = vrcp.pop %v5651
      %v5933 = vmul.f32 %v5895, %v5932
      %v5934 = vrcp.pop %v5654
      %v5935 = vmul.f32 %v5896, %v5934
      %v5936 = vrcp.pop %v5657
      %v5937 = vmul.f32 %v5897, %v5936
      %v5938 = vrcp.pop %v5660
      %v5939 = vmul.f32 %v5898, %v5938
      %v5940 = vrcp.pop %v5663
      %v5941 = vmul.f32 %v5899, %v5940
      %v5942 = vrcp.pop %v5666
      %v5943 = vmul.f32 %v5900, %v5942
      %v5944 = vrcp.pop %v5669
      %v5945 = vmul.f32 %v5901, %v5944
      %v5946 = vrcp.pop %v5672
      %v5947 = vmul.f32 %v5902, %v5946
      %v5948 = vrcp.pop %v5675
      %v5949 = vmul.f32 %v5903, %v5948
      %v5950 = vrcp.pop %v5678
      %v5951 = vmul.f32 %v5904, %v5950
      %v5952 = vrcp.pop %v5681
      %v5953 = vmul.f32 %v5905, %v5952
      %v5954 = vrcp.pop %v5684
      %v5955 = vmul.f32 %v5906, %v5954
      %v5956 = vrcp.pop %v5687
      %v5957 = vmul.f32 %v5907, %v5956
      %v5958 = vrcp.pop %v5690
      %v5959 = vmul.f32 %v5908, %v5958
      %v5960 = vrcp.pop %v5693
      %v5961 = vmul.f32 %v5909, %v5960
      %v5962 = vrcp.pop %v5696
      %v5963 = vmul.f32 %v5910, %v5962
      %v5964 = vrcp.pop %v5699
      %v5965 = vmul.f32 %v5911, %v5964
      %v5966 = vrcp.pop %v5702
      %v5967 = vmul.f32 %v5912, %v5966
      %v5968 = vrcp.pop %v5705
      %v5969 = vmul.f32 %v5913, %v5968
      %v5970 = vrcp.pop %v5708
      %v5971 = vmul.f32 %v5914, %v5970
      %v5972 = vrcp.pop %v5711
      %v5973 = vmul.f32 %v5915, %v5972
      %v5974 = vrcp.pop %v5714
      %v5975 = vmul.f32 %v5916, %v5974
      %v5976 = vrcp.pop %v5717
      %v5977 = vmul.f32 %v5917, %v5976
      %v5978 = vrcp.pop %v5720
      %v5979 = vmul.f32 %v5918, %v5978
      %v5980 = vrcp.pop %v5723
      %v5981 = vmul.f32 %v5919, %v5980
      %v5982 = vrcp.pop %v5726
      %v5983 = vmul.f32 %v5920, %v5982
      %v5984 = vrcp.pop %v5729
      %v5985 = vmul.f32 %v5921, %v5984
      %vm5986 = vcmp.gt.f32.partialorder %v770, %v5923
      %vm5987 = vcmp.gt.f32.partialorder %v771, %v5923
      %vm5988 = vcmp.gt.f32.partialorder %v772, %v5925
      %vm5989 = vcmp.gt.f32.partialorder %v773, %v5925
      %vm5990 = vcmp.gt.f32.partialorder %v774, %v5927
      %vm5991 = vcmp.gt.f32.partialorder %v775, %v5927
      %vm5992 = vcmp.gt.f32.partialorder %v776, %v5929
      %vm5993 = vcmp.gt.f32.partialorder %v777, %v5929
      %vm5994 = vcmp.gt.f32.partialorder %v778, %v5931
      %vm5995 = vcmp.gt.f32.partialorder %v779, %v5931
      %vm5996 = vcmp.gt.f32.partialorder %v780, %v5933
      %vm5997 = vcmp.gt.f32.partialorder %v781, %v5933
      %vm5998 = vcmp.gt.f32.partialorder %v782, %v5935
      %vm5999 = vcmp.gt.f32.partialorder %v783, %v5935
      %vm6000 = vcmp.gt.f32.partialorder %v784, %v5937
      %vm6001 = vcmp.gt.f32.partialorder %v785, %v5937
      %vm6002 = vcmp.gt.f32.partialorder %v786, %v5939
      %vm6003 = vcmp.gt.f32.partialorder %v787, %v5939
      %vm6004 = vcmp.gt.f32.partialorder %v788, %v5941
      %vm6005 = vcmp.gt.f32.partialorder %v789, %v5941
      %vm6006 = vcmp.gt.f32.partialorder %v790, %v5943
      %vm6007 = vcmp.gt.f32.partialorder %v791, %v5943
      %vm6008 = vcmp.gt.f32.partialorder %v792, %v5945
      %vm6009 = vcmp.gt.f32.partialorder %v793, %v5945
      %vm6010 = vcmp.gt.f32.partialorder %v794, %v5947
      %vm6011 = vcmp.gt.f32.partialorder %v795, %v5947
      %vm6012 = vcmp.gt.f32.partialorder %v796, %v5949
      %vm6013 = vcmp.gt.f32.partialorder %v797, %v5949
      %vm6014 = vcmp.gt.f32.partialorder %v798, %v5951
      %vm6015 = vcmp.gt.f32.partialorder %v799, %v5951
      %vm6016 = vcmp.gt.f32.partialorder %v800, %v5953
      %vm6017 = vcmp.gt.f32.partialorder %v801, %v5953
      %vm6018 = vcmp.gt.f32.partialorder %v802, %v5955
      %vm6019 = vcmp.gt.f32.partialorder %v803, %v5955
      %vm6020 = vcmp.gt.f32.partialorder %v804, %v5957
      %vm6021 = vcmp.gt.f32.partialorder %v805, %v5957
      %vm6022 = vcmp.gt.f32.partialorder %v806, %v5959
      %vm6023 = vcmp.gt.f32.partialorder %v807, %v5959
      %vm6024 = vcmp.gt.f32.partialorder %v808, %v5961
      %vm6025 = vcmp.gt.f32.partialorder %v809, %v5961
      %vm6026 = vcmp.gt.f32.partialorder %v810, %v5963
      %vm6027 = vcmp.gt.f32.partialorder %v811, %v5963
      %vm6028 = vcmp.gt.f32.partialorder %v812, %v5965
      %vm6029 = vcmp.gt.f32.partialorder %v813, %v5965
      %vm6030 = vcmp.gt.f32.partialorder %v814, %v5967
      %vm6031 = vcmp.gt.f32.partialorder %v815, %v5967
      %vm6032 = vcmp.gt.f32.partialorder %v816, %v5969
      %vm6033 = vcmp.gt.f32.partialorder %v817, %v5969
      %vm6034 = vcmp.gt.f32.partialorder %v818, %v5971
      %vm6035 = vcmp.gt.f32.partialorder %v819, %v5971
      %vm6036 = vcmp.gt.f32.partialorder %v820, %v5973
      %vm6037 = vcmp.gt.f32.partialorder %v821, %v5973
      %vm6038 = vcmp.gt.f32.partialorder %v822, %v5975
      %vm6039 = vcmp.gt.f32.partialorder %v823, %v5975
      %vm6040 = vcmp.gt.f32.partialorder %v824, %v5977
      %vm6041 = vcmp.gt.f32.partialorder %v825, %v5977
      %vm6042 = vcmp.gt.f32.partialorder %v826, %v5979
      %vm6043 = vcmp.gt.f32.partialorder %v827, %v5979
      %vm6044 = vcmp.gt.f32.partialorder %v828, %v5981
      %vm6045 = vcmp.gt.f32.partialorder %v829, %v5981
      %vm6046 = vcmp.gt.f32.partialorder %v830, %v5983
      %vm6047 = vcmp.gt.f32.partialorder %v831, %v5983
      %vm6048 = vcmp.gt.f32.partialorder %v832, %v5985
      %vm6049 = vcmp.gt.f32.partialorder %v833, %v5985
      %v6050 = vsel %vm5986, 1, 0
      %v6051 = vsel %vm5987, 1, 0
      %v6052 = vsel %vm5988, 1, 0
      %v6053 = vsel %vm5989, 1, 0
      %v6054 = vsel %vm5990, 1, 0
      %v6055 = vsel %vm5991, 1, 0
      %v6056 = vsel %vm5992, 1, 0
      %v6057 = vsel %vm5993, 1, 0
      %v6058 = vsel %vm5994, 1, 0
      %v6059 = vsel %vm5995, 1, 0
      %v6060 = vsel %vm5996, 1, 0
      %v6061 = vsel %vm5997, 1, 0
      %v6062 = vsel %vm5998, 1, 0
      %v6063 = vsel %vm5999, 1, 0
      %v6064 = vsel %vm6000, 1, 0
      %v6065 = vsel %vm6001, 1, 0
      %v6066 = vsel %vm6002, 1, 0
      %v6067 = vsel %vm6003, 1, 0
      %v6068 = vsel %vm6004, 1, 0
      %v6069 = vsel %vm6005, 1, 0
      %v6070 = vsel %vm6006, 1, 0
      %v6071 = vsel %vm6007, 1, 0
      %v6072 = vsel %vm6008, 1, 0
      %v6073 = vsel %vm6009, 1, 0
      %v6074 = vsel %vm6010, 1, 0
      %v6075 = vsel %vm6011, 1, 0
      %v6076 = vsel %vm6012, 1, 0
      %v6077 = vsel %vm6013, 1, 0
      %v6078 = vsel %vm6014, 1, 0
      %v6079 = vsel %vm6015, 1, 0
      %v6080 = vsel %vm6016, 1, 0
      %v6081 = vsel %vm6017, 1, 0
      %v6082 = vsel %vm6018, 1, 0
      %v6083 = vsel %vm6019, 1, 0
      %v6084 = vsel %vm6020, 1, 0
      %v6085 = vsel %vm6021, 1, 0
      %v6086 = vsel %vm6022, 1, 0
      %v6087 = vsel %vm6023, 1, 0
      %v6088 = vsel %vm6024, 1, 0
      %v6089 = vsel %vm6025, 1, 0
      %v6090 = vsel %vm6026, 1, 0
      %v6091 = vsel %vm6027, 1, 0
      %v6092 = vsel %vm6028, 1, 0
      %v6093 = vsel %vm6029, 1, 0
      %v6094 = vsel %vm6030, 1, 0
      %v6095 = vsel %vm6031, 1, 0
      %v6096 = vsel %vm6032, 1, 0
      %v6097 = vsel %vm6033, 1, 0
      %v6098 = vsel %vm6034, 1, 0
      %v6099 = vsel %vm6035, 1, 0
      %v6100 = vsel %vm6036, 1, 0
      %v6101 = vsel %vm6037, 1, 0
      %v6102 = vsel %vm6038, 1, 0
      %v6103 = vsel %vm6039, 1, 0
      %v6104 = vsel %vm6040, 1, 0
      %v6105 = vsel %vm6041, 1, 0
      %v6106 = vsel %vm6042, 1, 0
      %v6107 = vsel %vm6043, 1, 0
      %v6108 = vsel %vm6044, 1, 0
      %v6109 = vsel %vm6045, 1, 0
      %v6110 = vsel %vm6046, 1, 0
      %v6111 = vsel %vm6047, 1, 0
      %v6112 = vsel %vm6048, 1, 0
      %v6113 = vsel %vm6049, 1, 0
      %v6114 = vcvt.s32.f32 %v6050
      %v6115 = vcvt.s32.f32 %v6051
      %v6116 = vcvt.s32.f32 %v6052
      %v6117 = vcvt.s32.f32 %v6053
      %v6118 = vcvt.s32.f32 %v6054
      %v6119 = vcvt.s32.f32 %v6055
      %v6120 = vcvt.s32.f32 %v6056
      %v6121 = vcvt.s32.f32 %v6057
      %v6122 = vcvt.s32.f32 %v6058
      %v6123 = vcvt.s32.f32 %v6059
      %v6124 = vcvt.s32.f32 %v6060
      %v6125 = vcvt.s32.f32 %v6061
      %v6126 = vcvt.s32.f32 %v6062
      %v6127 = vcvt.s32.f32 %v6063
      %v6128 = vcvt.s32.f32 %v6064
      %v6129 = vcvt.s32.f32 %v6065
      %v6130 = vcvt.s32.f32 %v6066
      %v6131 = vcvt.s32.f32 %v6067
      %v6132 = vcvt.s32.f32 %v6068
      %v6133 = vcvt.s32.f32 %v6069
      %v6134 = vcvt.s32.f32 %v6070
      %v6135 = vcvt.s32.f32 %v6071
      %v6136 = vcvt.s32.f32 %v6072
      %v6137 = vcvt.s32.f32 %v6073
      %v6138 = vcvt.s32.f32 %v6074
      %v6139 = vcvt.s32.f32 %v6075
      %v6140 = vcvt.s32.f32 %v6076
      %v6141 = vcvt.s32.f32 %v6077
      %v6142 = vcvt.s32.f32 %v6078
      %v6143 = vcvt.s32.f32 %v6079
      %v6144 = vcvt.s32.f32 %v6080
      %v6145 = vcvt.s32.f32 %v6081
      %v6146 = vcvt.s32.f32 %v6082
      %v6147 = vcvt.s32.f32 %v6083
      %v6148 = vcvt.s32.f32 %v6084
      %v6149 = vcvt.s32.f32 %v6085
      %v6150 = vcvt.s32.f32 %v6086
      %v6151 = vcvt.s32.f32 %v6087
      %v6152 = vcvt.s32.f32 %v6088
      %v6153 = vcvt.s32.f32 %v6089
      %v6154 = vcvt.s32.f32 %v6090
      %v6155 = vcvt.s32.f32 %v6091
      %v6156 = vcvt.s32.f32 %v6092
      %v6157 = vcvt.s32.f32 %v6093
      %v6158 = vcvt.s32.f32 %v6094
      %v6159 = vcvt.s32.f32 %v6095
      %v6160 = vcvt.s32.f32 %v6096
      %v6161 = vcvt.s32.f32 %v6097
      %v6162 = vcvt.s32.f32 %v6098
      %v6163 = vcvt.s32.f32 %v6099
      %v6164 = vcvt.s32.f32 %v6100
      %v6165 = vcvt.s32.f32 %v6101
      %v6166 = vcvt.s32.f32 %v6102
      %v6167 = vcvt.s32.f32 %v6103
      %v6168 = vcvt.s32.f32 %v6104
      %v6169 = vcvt.s32.f32 %v6105
      %v6170 = vcvt.s32.f32 %v6106
      %v6171 = vcvt.s32.f32 %v6107
      %v6172 = vcvt.s32.f32 %v6108
      %v6173 = vcvt.s32.f32 %v6109
      %v6174 = vcvt.s32.f32 %v6110
      %v6175 = vcvt.s32.f32 %v6111
      %v6176 = vcvt.s32.f32 %v6112
      %v6177 = vcvt.s32.f32 %v6113
      %v6178 = vadd.f32 %v6114, %v6115
      %6179 = vadd.xlane.f32.xlu0 %v6178
      %v6180 = vpop.xlane.xlu0 %6179
      %v6181 = vadd.f32 %v6116, %v6117
      %6182 = vadd.xlane.f32.xlu0 %v6181
      %v6183 = vpop.xlane.xlu0 %6182
      %v6184 = vadd.f32 %v6118, %v6119
      %6185 = vadd.xlane.f32.xlu0 %v6184
      %v6186 = vpop.xlane.xlu0 %6185
      %v6187 = vadd.f32 %v6120, %v6121
      %6188 = vadd.xlane.f32.xlu0 %v6187
      %v6189 = vpop.xlane.xlu0 %6188
      %v6190 = vadd.f32 %v6122, %v6123
      %6191 = vadd.xlane.f32.xlu0 %v6190
      %v6192 = vpop.xlane.xlu0 %6191
      %v6193 = vadd.f32 %v6124, %v6125
      %6194 = vadd.xlane.f32.xlu0 %v6193
      %v6195 = vpop.xlane.xlu0 %6194
      %v6196 = vadd.f32 %v6126, %v6127
      %6197 = vadd.xlane.f32.xlu0 %v6196
      %v6198 = vpop.xlane.xlu0 %6197
      %v6199 = vadd.f32 %v6128, %v6129
      %6200 = vadd.xlane.f32.xlu0 %v6199
      %v6201 = vpop.xlane.xlu0 %6200
      %v6202 = vadd.f32 %v6130, %v6131
      %6203 = vadd.xlane.f32.xlu0 %v6202
      %v6204 = vpop.xlane.xlu0 %6203
      %v6205 = vadd.f32 %v6132, %v6133
      %6206 = vadd.xlane.f32.xlu0 %v6205
      %v6207 = vpop.xlane.xlu0 %6206
      %v6208 = vadd.f32 %v6134, %v6135
      %6209 = vadd.xlane.f32.xlu0 %v6208
      %v6210 = vpop.xlane.xlu0 %6209
      %v6211 = vadd.f32 %v6136, %v6137
      %6212 = vadd.xlane.f32.xlu0 %v6211
      %v6213 = vpop.xlane.xlu0 %6212
      %v6214 = vadd.f32 %v6138, %v6139
      %6215 = vadd.xlane.f32.xlu0 %v6214
      %v6216 = vpop.xlane.xlu0 %6215
      %v6217 = vadd.f32 %v6140, %v6141
      %6218 = vadd.xlane.f32.xlu0 %v6217
      %v6219 = vpop.xlane.xlu0 %6218
      %v6220 = vadd.f32 %v6142, %v6143
      %6221 = vadd.xlane.f32.xlu0 %v6220
      %v6222 = vpop.xlane.xlu0 %6221
      %v6223 = vadd.f32 %v6144, %v6145
      %6224 = vadd.xlane.f32.xlu0 %v6223
      %v6225 = vpop.xlane.xlu0 %6224
      %v6226 = vadd.f32 %v6146, %v6147
      %6227 = vadd.xlane.f32.xlu0 %v6226
      %v6228 = vpop.xlane.xlu0 %6227
      %v6229 = vadd.f32 %v6148, %v6149
      %6230 = vadd.xlane.f32.xlu0 %v6229
      %v6231 = vpop.xlane.xlu0 %6230
      %v6232 = vadd.f32 %v6150, %v6151
      %6233 = vadd.xlane.f32.xlu0 %v6232
      %v6234 = vpop.xlane.xlu0 %6233
      %v6235 = vadd.f32 %v6152, %v6153
      %6236 = vadd.xlane.f32.xlu0 %v6235
      %v6237 = vpop.xlane.xlu0 %6236
      %v6238 = vadd.f32 %v6154, %v6155
      %6239 = vadd.xlane.f32.xlu0 %v6238
      %v6240 = vpop.xlane.xlu0 %6239
      %v6241 = vadd.f32 %v6156, %v6157
      %6242 = vadd.xlane.f32.xlu0 %v6241
      %v6243 = vpop.xlane.xlu0 %6242
      %v6244 = vadd.f32 %v6158, %v6159
      %6245 = vadd.xlane.f32.xlu0 %v6244
      %v6246 = vpop.xlane.xlu0 %6245
      %v6247 = vadd.f32 %v6160, %v6161
      %6248 = vadd.xlane.f32.xlu0 %v6247
      %v6249 = vpop.xlane.xlu0 %6248
      %v6250 = vadd.f32 %v6162, %v6163
      %6251 = vadd.xlane.f32.xlu0 %v6250
      %v6252 = vpop.xlane.xlu0 %6251
      %v6253 = vadd.f32 %v6164, %v6165
      %6254 = vadd.xlane.f32.xlu0 %v6253
      %v6255 = vpop.xlane.xlu0 %6254
      %v6256 = vadd.f32 %v6166, %v6167
      %6257 = vadd.xlane.f32.xlu0 %v6256
      %v6258 = vpop.xlane.xlu0 %6257
      %v6259 = vadd.f32 %v6168, %v6169
      %6260 = vadd.xlane.f32.xlu0 %v6259
      %v6261 = vpop.xlane.xlu0 %6260
      %v6262 = vadd.f32 %v6170, %v6171
      %6263 = vadd.xlane.f32.xlu0 %v6262
      %v6264 = vpop.xlane.xlu0 %6263
      %v6265 = vadd.f32 %v6172, %v6173
      %6266 = vadd.xlane.f32.xlu0 %v6265
      %v6267 = vpop.xlane.xlu0 %6266
      %v6268 = vadd.f32 %v6174, %v6175
      %6269 = vadd.xlane.f32.xlu0 %v6268
      %v6270 = vpop.xlane.xlu0 %6269
      %v6271 = vadd.f32 %v6176, %v6177
      %6272 = vadd.xlane.f32.xlu0 %v6271
      %v6273 = vpop.xlane.xlu0 %6272
      %v6274 = vsel %vm5986, %v770, 0.0
      %v6275 = vsel %vm5987, %v771, 0.0
      %v6276 = vsel %vm5988, %v772, 0.0
      %v6277 = vsel %vm5989, %v773, 0.0
      %v6278 = vsel %vm5990, %v774, 0.0
      %v6279 = vsel %vm5991, %v775, 0.0
      %v6280 = vsel %vm5992, %v776, 0.0
      %v6281 = vsel %vm5993, %v777, 0.0
      %v6282 = vsel %vm5994, %v778, 0.0
      %v6283 = vsel %vm5995, %v779, 0.0
      %v6284 = vsel %vm5996, %v780, 0.0
      %v6285 = vsel %vm5997, %v781, 0.0
      %v6286 = vsel %vm5998, %v782, 0.0
      %v6287 = vsel %vm5999, %v783, 0.0
      %v6288 = vsel %vm6000, %v784, 0.0
      %v6289 = vsel %vm6001, %v785, 0.0
      %v6290 = vsel %vm6002, %v786, 0.0
      %v6291 = vsel %vm6003, %v787, 0.0
      %v6292 = vsel %vm6004, %v788, 0.0
      %v6293 = vsel %vm6005, %v789, 0.0
      %v6294 = vsel %vm6006, %v790, 0.0
      %v6295 = vsel %vm6007, %v791, 0.0
      %v6296 = vsel %vm6008, %v792, 0.0
      %v6297 = vsel %vm6009, %v793, 0.0
      %v6298 = vsel %vm6010, %v794, 0.0
      %v6299 = vsel %vm6011, %v795, 0.0
      %v6300 = vsel %vm6012, %v796, 0.0
      %v6301 = vsel %vm6013, %v797, 0.0
      %v6302 = vsel %vm6014, %v798, 0.0
      %v6303 = vsel %vm6015, %v799, 0.0
      %v6304 = vsel %vm6016, %v800, 0.0
      %v6305 = vsel %vm6017, %v801, 0.0
      %v6306 = vsel %vm6018, %v802, 0.0
      %v6307 = vsel %vm6019, %v803, 0.0
      %v6308 = vsel %vm6020, %v804, 0.0
      %v6309 = vsel %vm6021, %v805, 0.0
      %v6310 = vsel %vm6022, %v806, 0.0
      %v6311 = vsel %vm6023, %v807, 0.0
      %v6312 = vsel %vm6024, %v808, 0.0
      %v6313 = vsel %vm6025, %v809, 0.0
      %v6314 = vsel %vm6026, %v810, 0.0
      %v6315 = vsel %vm6027, %v811, 0.0
      %v6316 = vsel %vm6028, %v812, 0.0
      %v6317 = vsel %vm6029, %v813, 0.0
      %v6318 = vsel %vm6030, %v814, 0.0
      %v6319 = vsel %vm6031, %v815, 0.0
      %v6320 = vsel %vm6032, %v816, 0.0
      %v6321 = vsel %vm6033, %v817, 0.0
      %v6322 = vsel %vm6034, %v818, 0.0
      %v6323 = vsel %vm6035, %v819, 0.0
      %v6324 = vsel %vm6036, %v820, 0.0
      %v6325 = vsel %vm6037, %v821, 0.0
      %v6326 = vsel %vm6038, %v822, 0.0
      %v6327 = vsel %vm6039, %v823, 0.0
      %v6328 = vsel %vm6040, %v824, 0.0
      %v6329 = vsel %vm6041, %v825, 0.0
      %v6330 = vsel %vm6042, %v826, 0.0
      %v6331 = vsel %vm6043, %v827, 0.0
      %v6332 = vsel %vm6044, %v828, 0.0
      %v6333 = vsel %vm6045, %v829, 0.0
      %v6334 = vsel %vm6046, %v830, 0.0
      %v6335 = vsel %vm6047, %v831, 0.0
      %v6336 = vsel %vm6048, %v832, 0.0
      %v6337 = vsel %vm6049, %v833, 0.0
      %v6338 = vadd.f32 %v6274, %v6275
      %6339 = vadd.xlane.f32.xlu0 %v6338
      %v6340 = vpop.xlane.xlu0 %6339
      %v6341 = vadd.f32 %v6276, %v6277
      %6342 = vadd.xlane.f32.xlu0 %v6341
      %v6343 = vpop.xlane.xlu0 %6342
      %v6344 = vadd.f32 %v6278, %v6279
      %6345 = vadd.xlane.f32.xlu0 %v6344
      %v6346 = vpop.xlane.xlu0 %6345
      %v6347 = vadd.f32 %v6280, %v6281
      %6348 = vadd.xlane.f32.xlu0 %v6347
      %v6349 = vpop.xlane.xlu0 %6348
      %v6350 = vadd.f32 %v6282, %v6283
      %6351 = vadd.xlane.f32.xlu0 %v6350
      %v6352 = vpop.xlane.xlu0 %6351
      %v6353 = vadd.f32 %v6284, %v6285
      %6354 = vadd.xlane.f32.xlu0 %v6353
      %v6355 = vpop.xlane.xlu0 %6354
      %v6356 = vadd.f32 %v6286, %v6287
      %6357 = vadd.xlane.f32.xlu0 %v6356
      %v6358 = vpop.xlane.xlu0 %6357
      %v6359 = vadd.f32 %v6288, %v6289
      %6360 = vadd.xlane.f32.xlu0 %v6359
      %v6361 = vpop.xlane.xlu0 %6360
      %v6362 = vadd.f32 %v6290, %v6291
      %6363 = vadd.xlane.f32.xlu0 %v6362
      %v6364 = vpop.xlane.xlu0 %6363
      %v6365 = vadd.f32 %v6292, %v6293
      %6366 = vadd.xlane.f32.xlu0 %v6365
      %v6367 = vpop.xlane.xlu0 %6366
      %v6368 = vadd.f32 %v6294, %v6295
      %6369 = vadd.xlane.f32.xlu0 %v6368
      %v6370 = vpop.xlane.xlu0 %6369
      %v6371 = vadd.f32 %v6296, %v6297
      %6372 = vadd.xlane.f32.xlu0 %v6371
      %v6373 = vpop.xlane.xlu0 %6372
      %v6374 = vadd.f32 %v6298, %v6299
      %6375 = vadd.xlane.f32.xlu0 %v6374
      %v6376 = vpop.xlane.xlu0 %6375
      %v6377 = vadd.f32 %v6300, %v6301
      %6378 = vadd.xlane.f32.xlu0 %v6377
      %v6379 = vpop.xlane.xlu0 %6378
      %v6380 = vadd.f32 %v6302, %v6303
      %6381 = vadd.xlane.f32.xlu0 %v6380
      %v6382 = vpop.xlane.xlu0 %6381
      %v6383 = vadd.f32 %v6304, %v6305
      %6384 = vadd.xlane.f32.xlu0 %v6383
      %v6385 = vpop.xlane.xlu0 %6384
      %v6386 = vadd.f32 %v6306, %v6307
      %6387 = vadd.xlane.f32.xlu0 %v6386
      %v6388 = vpop.xlane.xlu0 %6387
      %v6389 = vadd.f32 %v6308, %v6309
      %6390 = vadd.xlane.f32.xlu0 %v6389
      %v6391 = vpop.xlane.xlu0 %6390
      %v6392 = vadd.f32 %v6310, %v6311
      %6393 = vadd.xlane.f32.xlu0 %v6392
      %v6394 = vpop.xlane.xlu0 %6393
      %v6395 = vadd.f32 %v6312, %v6313
      %6396 = vadd.xlane.f32.xlu0 %v6395
      %v6397 = vpop.xlane.xlu0 %6396
      %v6398 = vadd.f32 %v6314, %v6315
      %6399 = vadd.xlane.f32.xlu0 %v6398
      %v6400 = vpop.xlane.xlu0 %6399
      %v6401 = vadd.f32 %v6316, %v6317
      %6402 = vadd.xlane.f32.xlu0 %v6401
      %v6403 = vpop.xlane.xlu0 %6402
      %v6404 = vadd.f32 %v6318, %v6319
      %6405 = vadd.xlane.f32.xlu0 %v6404
      %v6406 = vpop.xlane.xlu0 %6405
      %v6407 = vadd.f32 %v6320, %v6321
      %6408 = vadd.xlane.f32.xlu0 %v6407
      %v6409 = vpop.xlane.xlu0 %6408
      %v6410 = vadd.f32 %v6322, %v6323
      %6411 = vadd.xlane.f32.xlu0 %v6410
      %v6412 = vpop.xlane.xlu0 %6411
      %v6413 = vadd.f32 %v6324, %v6325
      %6414 = vadd.xlane.f32.xlu0 %v6413
      %v6415 = vpop.xlane.xlu0 %6414
      %v6416 = vadd.f32 %v6326, %v6327
      %6417 = vadd.xlane.f32.xlu0 %v6416
      %v6418 = vpop.xlane.xlu0 %6417
      %v6419 = vadd.f32 %v6328, %v6329
      %6420 = vadd.xlane.f32.xlu0 %v6419
      %v6421 = vpop.xlane.xlu0 %6420
      %v6422 = vadd.f32 %v6330, %v6331
      %6423 = vadd.xlane.f32.xlu0 %v6422
      %v6424 = vpop.xlane.xlu0 %6423
      %v6425 = vadd.f32 %v6332, %v6333
      %6426 = vadd.xlane.f32.xlu0 %v6425
      %v6427 = vpop.xlane.xlu0 %6426
      %v6428 = vadd.f32 %v6334, %v6335
      %6429 = vadd.xlane.f32.xlu0 %v6428
      %v6430 = vpop.xlane.xlu0 %6429
      %v6431 = vadd.f32 %v6336, %v6337
      %6432 = vadd.xlane.f32.xlu0 %v6431
      %v6433 = vpop.xlane.xlu0 %6432
      %v6434 = vsub.f32 %v6340, 1.0
      %v6435 = vsub.f32 %v6343, 1.0
      %v6436 = vsub.f32 %v6346, 1.0
      %v6437 = vsub.f32 %v6349, 1.0
      %v6438 = vsub.f32 %v6352, 1.0
      %v6439 = vsub.f32 %v6355, 1.0
      %v6440 = vsub.f32 %v6358, 1.0
      %v6441 = vsub.f32 %v6361, 1.0
      %v6442 = vsub.f32 %v6364, 1.0
      %v6443 = vsub.f32 %v6367, 1.0
      %v6444 = vsub.f32 %v6370, 1.0
      %v6445 = vsub.f32 %v6373, 1.0
      %v6446 = vsub.f32 %v6376, 1.0
      %v6447 = vsub.f32 %v6379, 1.0
      %v6448 = vsub.f32 %v6382, 1.0
      %v6449 = vsub.f32 %v6385, 1.0
      %v6450 = vsub.f32 %v6388, 1.0
      %v6451 = vsub.f32 %v6391, 1.0
      %v6452 = vsub.f32 %v6394, 1.0
      %v6453 = vsub.f32 %v6397, 1.0
      %v6454 = vsub.f32 %v6400, 1.0
      %v6455 = vsub.f32 %v6403, 1.0
      %v6456 = vsub.f32 %v6406, 1.0
      %v6457 = vsub.f32 %v6409, 1.0
      %v6458 = vsub.f32 %v6412, 1.0
      %v6459 = vsub.f32 %v6415, 1.0
      %v6460 = vsub.f32 %v6418, 1.0
      %v6461 = vsub.f32 %v6421, 1.0
      %v6462 = vsub.f32 %v6424, 1.0
      %v6463 = vsub.f32 %v6427, 1.0
      %v6464 = vsub.f32 %v6430, 1.0
      %v6465 = vsub.f32 %v6433, 1.0
      %v6466 = vrcp.pop %v6180
      %v6467 = vmul.f32 %v6434, %v6466
      %v6468 = vrcp.pop %v6183
      %v6469 = vmul.f32 %v6435, %v6468
      %v6470 = vrcp.pop %v6186
      %v6471 = vmul.f32 %v6436, %v6470
      %v6472 = vrcp.pop %v6189
      %v6473 = vmul.f32 %v6437, %v6472
      %v6474 = vrcp.pop %v6192
      %v6475 = vmul.f32 %v6438, %v6474
      %v6476 = vrcp.pop %v6195
      %v6477 = vmul.f32 %v6439, %v6476
      %v6478 = vrcp.pop %v6198
      %v6479 = vmul.f32 %v6440, %v6478
      %v6480 = vrcp.pop %v6201
      %v6481 = vmul.f32 %v6441, %v6480
      %v6482 = vrcp.pop %v6204
      %v6483 = vmul.f32 %v6442, %v6482
      %v6484 = vrcp.pop %v6207
      %v6485 = vmul.f32 %v6443, %v6484
      %v6486 = vrcp.pop %v6210
      %v6487 = vmul.f32 %v6444, %v6486
      %v6488 = vrcp.pop %v6213
      %v6489 = vmul.f32 %v6445, %v6488
      %v6490 = vrcp.pop %v6216
      %v6491 = vmul.f32 %v6446, %v6490
      %v6492 = vrcp.pop %v6219
      %v6493 = vmul.f32 %v6447, %v6492
      %v6494 = vrcp.pop %v6222
      %v6495 = vmul.f32 %v6448, %v6494
      %v6496 = vrcp.pop %v6225
      %v6497 = vmul.f32 %v6449, %v6496
      %v6498 = vrcp.pop %v6228
      %v6499 = vmul.f32 %v6450, %v6498
      %v6500 = vrcp.pop %v6231
      %v6501 = vmul.f32 %v6451, %v6500
      %v6502 = vrcp.pop %v6234
      %v6503 = vmul.f32 %v6452, %v6502
      %v6504 = vrcp.pop %v6237
      %v6505 = vmul.f32 %v6453, %v6504
      %v6506 = vrcp.pop %v6240
      %v6507 = vmul.f32 %v6454, %v6506
      %v6508 = vrcp.pop %v6243
      %v6509 = vmul.f32 %v6455, %v6508
      %v6510 = vrcp.pop %v6246
      %v6511 = vmul.f32 %v6456, %v6510
      %v6512 = vrcp.pop %v6249
      %v6513 = vmul.f32 %v6457, %v6512
      %v6514 = vrcp.pop %v6252
      %v6515 = vmul.f32 %v6458, %v6514
      %v6516 = vrcp.pop %v6255
      %v6517 = vmul.f32 %v6459, %v6516
      %v6518 = vrcp.pop %v6258
      %v6519 = vmul.f32 %v6460, %v6518
      %v6520 = vrcp.pop %v6261
      %v6521 = vmul.f32 %v6461, %v6520
      %v6522 = vrcp.pop %v6264
      %v6523 = vmul.f32 %v6462, %v6522
      %v6524 = vrcp.pop %v6267
      %v6525 = vmul.f32 %v6463, %v6524
      %v6526 = vrcp.pop %v6270
      %v6527 = vmul.f32 %v6464, %v6526
      %v6528 = vrcp.pop %v6273
      %v6529 = vmul.f32 %v6465, %v6528
      %v6530 = vsub.f32 %v770, %v6467
      %v6531 = vsub.f32 %v771, %v6467
      %v6532 = vsub.f32 %v772, %v6469
      %v6533 = vsub.f32 %v773, %v6469
      %v6534 = vsub.f32 %v774, %v6471
      %v6535 = vsub.f32 %v775, %v6471
      %v6536 = vsub.f32 %v776, %v6473
      %v6537 = vsub.f32 %v777, %v6473
      %v6538 = vsub.f32 %v778, %v6475
      %v6539 = vsub.f32 %v779, %v6475
      %v6540 = vsub.f32 %v780, %v6477
      %v6541 = vsub.f32 %v781, %v6477
      %v6542 = vsub.f32 %v782, %v6479
      %v6543 = vsub.f32 %v783, %v6479
      %v6544 = vsub.f32 %v784, %v6481
      %v6545 = vsub.f32 %v785, %v6481
      %v6546 = vsub.f32 %v786, %v6483
      %v6547 = vsub.f32 %v787, %v6483
      %v6548 = vsub.f32 %v788, %v6485
      %v6549 = vsub.f32 %v789, %v6485
      %v6550 = vsub.f32 %v790, %v6487
      %v6551 = vsub.f32 %v791, %v6487
      %v6552 = vsub.f32 %v792, %v6489
      %v6553 = vsub.f32 %v793, %v6489
      %v6554 = vsub.f32 %v794, %v6491
      %v6555 = vsub.f32 %v795, %v6491
      %v6556 = vsub.f32 %v796, %v6493
      %v6557 = vsub.f32 %v797, %v6493
      %v6558 = vsub.f32 %v798, %v6495
      %v6559 = vsub.f32 %v799, %v6495
      %v6560 = vsub.f32 %v800, %v6497
      %v6561 = vsub.f32 %v801, %v6497
      %v6562 = vsub.f32 %v802, %v6499
      %v6563 = vsub.f32 %v803, %v6499
      %v6564 = vsub.f32 %v804, %v6501
      %v6565 = vsub.f32 %v805, %v6501
      %v6566 = vsub.f32 %v806, %v6503
      %v6567 = vsub.f32 %v807, %v6503
      %v6568 = vsub.f32 %v808, %v6505
      %v6569 = vsub.f32 %v809, %v6505
      %v6570 = vsub.f32 %v810, %v6507
      %v6571 = vsub.f32 %v811, %v6507
      %v6572 = vsub.f32 %v812, %v6509
      %v6573 = vsub.f32 %v813, %v6509
      %v6574 = vsub.f32 %v814, %v6511
      %v6575 = vsub.f32 %v815, %v6511
      %v6576 = vsub.f32 %v816, %v6513
      %v6577 = vsub.f32 %v817, %v6513
      %v6578 = vsub.f32 %v818, %v6515
      %v6579 = vsub.f32 %v819, %v6515
      %v6580 = vsub.f32 %v820, %v6517
      %v6581 = vsub.f32 %v821, %v6517
      %v6582 = vsub.f32 %v822, %v6519
      %v6583 = vsub.f32 %v823, %v6519
      %v6584 = vsub.f32 %v824, %v6521
      %v6585 = vsub.f32 %v825, %v6521
      %v6586 = vsub.f32 %v826, %v6523
      %v6587 = vsub.f32 %v827, %v6523
      %v6588 = vsub.f32 %v828, %v6525
      %v6589 = vsub.f32 %v829, %v6525
      %v6590 = vsub.f32 %v830, %v6527
      %v6591 = vsub.f32 %v831, %v6527
      %v6592 = vsub.f32 %v832, %v6529
      %v6593 = vsub.f32 %v833, %v6529
      %v6594 = vmax.f32 %v6530, 0.0
      %v6595 = vmax.f32 %v6531, 0.0
      %v6596 = vmax.f32 %v6532, 0.0
      %v6597 = vmax.f32 %v6533, 0.0
      %v6598 = vmax.f32 %v6534, 0.0
      %v6599 = vmax.f32 %v6535, 0.0
      %v6600 = vmax.f32 %v6536, 0.0
      %v6601 = vmax.f32 %v6537, 0.0
      %v6602 = vmax.f32 %v6538, 0.0
      %v6603 = vmax.f32 %v6539, 0.0
      %v6604 = vmax.f32 %v6540, 0.0
      %v6605 = vmax.f32 %v6541, 0.0
      %v6606 = vmax.f32 %v6542, 0.0
      %v6607 = vmax.f32 %v6543, 0.0
      %v6608 = vmax.f32 %v6544, 0.0
      %v6609 = vmax.f32 %v6545, 0.0
      %v6610 = vmax.f32 %v6546, 0.0
      %v6611 = vmax.f32 %v6547, 0.0
      %v6612 = vmax.f32 %v6548, 0.0
      %v6613 = vmax.f32 %v6549, 0.0
      %v6614 = vmax.f32 %v6550, 0.0
      %v6615 = vmax.f32 %v6551, 0.0
      %v6616 = vmax.f32 %v6552, 0.0
      %v6617 = vmax.f32 %v6553, 0.0
      %v6618 = vmax.f32 %v6554, 0.0
      %v6619 = vmax.f32 %v6555, 0.0
      %v6620 = vmax.f32 %v6556, 0.0
      %v6621 = vmax.f32 %v6557, 0.0
      %v6622 = vmax.f32 %v6558, 0.0
      %v6623 = vmax.f32 %v6559, 0.0
      %v6624 = vmax.f32 %v6560, 0.0
      %v6625 = vmax.f32 %v6561, 0.0
      %v6626 = vmax.f32 %v6562, 0.0
      %v6627 = vmax.f32 %v6563, 0.0
      %v6628 = vmax.f32 %v6564, 0.0
      %v6629 = vmax.f32 %v6565, 0.0
      %v6630 = vmax.f32 %v6566, 0.0
      %v6631 = vmax.f32 %v6567, 0.0
      %v6632 = vmax.f32 %v6568, 0.0
      %v6633 = vmax.f32 %v6569, 0.0
      %v6634 = vmax.f32 %v6570, 0.0
      %v6635 = vmax.f32 %v6571, 0.0
      %v6636 = vmax.f32 %v6572, 0.0
      %v6637 = vmax.f32 %v6573, 0.0
      %v6638 = vmax.f32 %v6574, 0.0
      %v6639 = vmax.f32 %v6575, 0.0
      %v6640 = vmax.f32 %v6576, 0.0
      %v6641 = vmax.f32 %v6577, 0.0
      %v6642 = vmax.f32 %v6578, 0.0
      %v6643 = vmax.f32 %v6579, 0.0
      %v6644 = vmax.f32 %v6580, 0.0
      %v6645 = vmax.f32 %v6581, 0.0
      %v6646 = vmax.f32 %v6582, 0.0
      %v6647 = vmax.f32 %v6583, 0.0
      %v6648 = vmax.f32 %v6584, 0.0
      %v6649 = vmax.f32 %v6585, 0.0
      %v6650 = vmax.f32 %v6586, 0.0
      %v6651 = vmax.f32 %v6587, 0.0
      %v6652 = vmax.f32 %v6588, 0.0
      %v6653 = vmax.f32 %v6589, 0.0
      %v6654 = vmax.f32 %v6590, 0.0
      %v6655 = vmax.f32 %v6591, 0.0
      %v6656 = vmax.f32 %v6592, 0.0
      %v6657 = vmax.f32 %v6593, 0.0
      %v6658 = vld [vmem:[%s227] sm:$0xff]
      %v6659 = vpack.c.bf16 %v6596, %v6594
      %v6660 = vpack.c.bf16 %v6597, %v6595
      %v6661 = vpack.c.bf16 %v6600, %v6598
      %v6662 = vpack.c.bf16 %v6601, %v6599
      %v6663 = vpack.c.bf16 %v6604, %v6602
      %v6664 = vpack.c.bf16 %v6605, %v6603
      %v6665 = vpack.c.bf16 %v6608, %v6606
      %v6666 = vpack.c.bf16 %v6609, %v6607
      %v6667 = vpack.c.bf16 %v6612, %v6610
      %v6668 = vpack.c.bf16 %v6613, %v6611
      %v6669 = vpack.c.bf16 %v6616, %v6614
      %v6670 = vpack.c.bf16 %v6617, %v6615
      %v6671 = vpack.c.bf16 %v6620, %v6618
      %v6672 = vpack.c.bf16 %v6621, %v6619
      %v6673 = vpack.c.bf16 %v6624, %v6622
      %v6674 = vpack.c.bf16 %v6625, %v6623
      %v6675 = vpack.c.bf16 %v6628, %v6626
      %v6676 = vpack.c.bf16 %v6629, %v6627
      %v6677 = vpack.c.bf16 %v6632, %v6630
      %v6678 = vpack.c.bf16 %v6633, %v6631
      %v6679 = vpack.c.bf16 %v6636, %v6634
      %v6680 = vpack.c.bf16 %v6637, %v6635
      %v6681 = vpack.c.bf16 %v6640, %v6638
      %v6682 = vpack.c.bf16 %v6641, %v6639
      %v6683 = vpack.c.bf16 %v6644, %v6642
      %v6684 = vpack.c.bf16 %v6645, %v6643
      %v6685 = vpack.c.bf16 %v6648, %v6646
      %v6686 = vpack.c.bf16 %v6649, %v6647
      %v6687 = vpack.c.bf16 %v6652, %v6650
      %v6688 = vpack.c.bf16 %v6653, %v6651
      %v6689 = vpack.c.bf16 %v6656, %v6654
      %v6690 = vpack.c.bf16 %v6657, %v6655
      %v6692 = vunpack.c.l.b16 %v6658
      %v6693 = vunpack.c.h.b16 %v6658
      %v6694 = vpack.c.b16 %v6692, %v6692
      %v6695 = vpack.c.b16 %v6693, %v6693
      %6698 = vmatprep.subr.bf16.mxu0 %v6660
      %6699 = vmatpush1.bf16.msra.mxu0 %v6659
      %6700 = vmatprep.subr.bf16.mxu0 %v6662
      %6701 = vmatpush1.bf16.msra.mxu0 %v6661
      %6702 = vmatprep.subr.bf16.mxu0 %v6664
      %6703 = vmatpush1.bf16.msra.mxu0 %v6663
      %6704 = vmatprep.subr.bf16.mxu0 %v6666
      %6705 = vmatpush1.bf16.msra.mxu0 %v6665
      %6706 = vmatprep.subr.bf16.mxu0 %v6668
      %6707 = vmatpush1.bf16.msra.mxu0 %v6667
      %6708 = vmatprep.subr.bf16.mxu0 %v6670
      %6709 = vmatpush1.bf16.msra.mxu0 %v6669
      %6710 = vmatprep.subr.bf16.mxu0 %v6672
      %6711 = vmatpush1.bf16.msra.mxu0 %v6671
      %6712 = vmatprep.subr.bf16.mxu0 %v6674
      %6713 = vmatpush1.bf16.msra.mxu0 %v6673
      %6714 = vmatprep.subr.bf16.mxu0 %v6676
      %6715 = vmatpush1.bf16.msra.mxu0 %v6675
      %6716 = vmatprep.subr.bf16.mxu0 %v6678
      %6717 = vmatpush1.bf16.msra.mxu0 %v6677
      %6718 = vmatprep.subr.bf16.mxu0 %v6680
      %6719 = vmatpush1.bf16.msra.mxu0 %v6679
      %6720 = vmatprep.subr.bf16.mxu0 %v6682
      %6721 = vmatpush1.bf16.msra.mxu0 %v6681
      %6722 = vmatprep.subr.bf16.mxu0 %v6684
      %6723 = vmatpush1.bf16.msra.mxu0 %v6683
      %6724 = vmatprep.subr.bf16.mxu0 %v6686
      %6725 = vmatpush1.bf16.msra.mxu0 %v6685
      %6726 = vmatprep.subr.bf16.mxu0 %v6688
      %6727 = vmatpush1.bf16.msra.mxu0 %v6687
      %6728 = vmatprep.subr.bf16.mxu0 %v6690
      %6729 = vmatpush1.bf16.msra.mxu0 %v6689
      %6730 = vmatprep.mubr.bf16.mxu0 %v6695
      %6731 = vmatmul.mubr.bf16.gmra.mrb[0].mxu0 %v6694
      %v6732 = vpop.f32.mrb[0].mxu0
      %v6733 = vadd.f32 0.0, %v6732
      %v6734 = vpop.f32.mrb[0].mxu0
      %v6735 = vadd.f32 0.0, %v6734
      %v6736 = vpop.f32.mrb[0].mxu0
      %v6737 = vpop.f32.mrb[0].mxu0
      %6738 = vdwg.mxu0
      %v6739 = vld [vmem:[%s233] sm:$0xff]
      %v6740 = vld [vmem:[%s233 + $0x8] sm:$0xff]
      %v6741 = vmul.f32 %v6733, 0.1
      %v6742 = vmul.f32 %v6735, 0.1
      %v6743 = vadd.f32 %v6739, %v6741
      %v6744 = vadd.f32 %v6740, %v6742
      %6745 = vst [vmem:[%s238] sm:$0xff] %v6743
      %6746 = vst [vmem:[%s238 + $0x8] sm:$0xff] %v6744
      %p6747 = scmp.lt.s32.totalorder %s18, 1
      %s6748 = scalar_select %p6747, %s18, 1
      %s6749 = smul.addr %s6748, 2
      %s6750 = smul.addr %s6749, 8
      %s6751 = scalar_lea.vmem %s3, %s6750
      // Predicated region
      $region33: #{tracking_hspa_forward.1} parent=31 // pred_check
        %p6752 = pneg %p124
      $region34: #{tracking_hspa_forward.1} parent=31 // pred_check_branch
        %6754 = sbr.rel (%p6752) target = $region36
      $region35: #{tracking_hspa_forward.1} parent=31 // pred_region
        _
      $region36: #{tracking_hspa_forward.1} parent=31 // pred_fallthru
        _
    $region32: #{tracking_hspa_forward.1} parent=5 // pred_fallthru
      _
    %p6755 = scmp.le.s32.totalorder 2, %s9
    // Predicated region
    $region37: #{tracking_hspa_forward.1} parent=5 // pred_check
      %p6756 = pneg %p6755
    $region38: #{tracking_hspa_forward.1} parent=5 // pred_check_branch
      %6758 = sbr.rel (%p6756) target = $region40
    $region39: #{tracking_hspa_forward.1} parent=5 // pred_region
      %s6759 = ssub.s32 %s9, 2
      // Predicated region
      $region41: #{tracking_hspa_forward.1} parent=39 // pred_check
        %p6760 = pneg %p130
      $region42: #{tracking_hspa_forward.1} parent=39 // pred_check_branch
        %6762 = sbr.rel (%p6760) target = $region44
      $region43: #{tracking_hspa_forward.1} parent=39 // pred_region
        %p6763 = scmp.lt.s32.totalorder %s20, 1
        %s6764 = scalar_select %p6763, %s20, 1
        %s6765 = smul.addr %s6764, 2
        %s6766 = smul.addr %s6765, 8
        %s6767 = scalar_lea.vmem %s3, %s6766
      $region44: #{tracking_hspa_forward.1} parent=39 // pred_fallthru
        _
    $region40: #{tracking_hspa_forward.1} parent=5 // pred_fallthru
      _
  $region6: #{tracking_hspa_forward.1} parent=0 // loop_footer
    %s13 = sadd.s32 1, %s9
  $region7: #{tracking_hspa_forward.1} parent=0 // loop_footer_branch
    %8 = sbr.rel target = $region3
  $region8: #{tracking_hspa_forward.1} parent=0 // loop_exit
    _

</llo_original>
